<compile_context>
chip_gen: v7x
topology: tpu7x:2x2x1
jax: 0.10.0
libtpu: 0.0.40
codegen_flags: <defaults>
</compile_context>

<pallas_src>
import math

import jax
import jax.numpy as jnp
from jax.experimental import pallas as pl
from jax.experimental.pallas import tpu as pltpu

BN_EPS = 1e-5
_CHANNELS = (64, 128, 256, 512)
N_UNITS = 13  # stem + (conv1[,ds],conv2) x 4 blocks + fc


# --------------------------------------------------------------------------- params

def _conv_weight(key, cout, cin, k):
    # PyTorch reference init: weight ~ N(0, sqrt(2 / (kernel_size * out_channels)))
    std = math.sqrt(2.0 / (k * cout))
    return std * jax.random.normal(key, (cout, cin, k), dtype=jnp.float32)


def _pack_conv_bn(w_oik):
    """Fold inference-form BatchNorm (gamma=1, beta=0, mean=0, var=1) into the conv
    weight and repack it as (K, Cin, Cout) bf16 for per-tap MXU matmuls."""
    cout = w_oik.shape[0]
    gamma = jnp.ones((cout,), jnp.float32)
    beta = jnp.zeros((cout,), jnp.float32)
    mean = jnp.zeros((cout,), jnp.float32)
    var = jnp.ones((cout,), jnp.float32)
    scale = gamma / jnp.sqrt(var + BN_EPS)
    bias = (beta - mean * scale).reshape(1, cout)
    w_kio = jnp.transpose(w_oik, (2, 1, 0)) * scale[None, None, :]
    return w_kio.astype(jnp.bfloat16), bias.astype(jnp.float32)


def make_resnet1d_params(key, in_channels, num_classes=1, final_len=2):
    """ResNet1D(BasicBlock, layers=[1,1,1,1]) parameters, pre-packed for the kernel."""
    keys = jax.random.split(key, N_UNITS + 1)
    ws, bs = [], []

    def add(k, cout, cin, ksize):
        w, b = _pack_conv_bn(_conv_weight(k, cout, cin, ksize))
        ws.append(w)
        bs.append(b)

    add(keys[0], 64, in_channels, 7)                     # stem conv (k7 s2 p3)
    inplanes = 64
    i = 1
    for planes, stride in zip(_CHANNELS, (1, 2, 2, 2)):
        add(keys[i], planes, inplanes, 3); i += 1        # conv1
        if stride != 1 or inplanes != planes:
            add(keys[i], planes, inplanes, 1); i += 1    # downsample 1x1 (stride 2)
        add(keys[i], planes, planes, 3); i += 1          # conv2
        inplanes = planes

    # fc: Linear(1024, num_classes).  PyTorch flattens the (C, L) activation with
    # feature index c*L + l; fold that permutation into the packed weight so the
    # kernel consumes the channels-last (L, C) activation directly, one tap per l.
    fc_in = _CHANNELS[-1] * final_len
    bound = 1.0 / math.sqrt(fc_in)
    fc_w = jax.random.uniform(keys[i], (fc_in, num_classes),
                              minval=-bound, maxval=bound, dtype=jnp.float32)
    fc_b = jax.random.uniform(keys[i + 1], (num_classes,),
                              minval=-bound, maxval=bound, dtype=jnp.float32)
    fc_pack = jnp.stack([fc_w[l::final_len, :] for l in range(final_len)], axis=0)
    ws.append(fc_pack.astype(jnp.bfloat16))               # (final_len, 512, num_classes)
    bs.append(fc_b.reshape(1, num_classes).astype(jnp.float32))
    assert len(ws) == N_UNITS and len(bs) == N_UNITS
    return {"w": ws, "b": bs}


# --------------------------------------------------------------------------- forward

def resnet1d_forward(params, x_ncl):
    """x_ncl: PyTorch-layout (B, C_in, L) input.  Returns (B, num_classes)."""
    B, c_in, L = x_ncl.shape
    num_classes = params["b"][-1].shape[-1]

    # Static length schedule.
    l_full = L + 2 * 3 - 7 + 1                 # stride-1 stem conv length
    l_stem = (L + 2 * 3 - 7) // 2 + 1          # stem conv output (stride 2)
    l_pool = (l_stem + 2 - 3) // 2 + 1         # MaxPool1d(3, 2, 1) output
    lens = [l_pool]
    for _ in range(3):
        lens.append((lens[-1] + 2 - 3) // 2 + 1)
    l1, l2, l3, l4 = lens
    assert 2 * (l_stem - 1) <= l_full - 1
    assert 4 * (l_pool - 1) + 2 <= l_full + 1
    # fc expects 1024 flattened features (512 channels * l4).
    assert params["w"][-1].shape == (l4, _CHANNELS[-1], num_classes)

    # One-time host glue on the raw input: channels-last layout + stem conv padding.
    x = jnp.transpose(x_ncl, (0, 2, 1)).astype(jnp.float32)   # (B, L, C_in)
    x_pad = jnp.pad(x, ((0, 0), (3, 3), (0, 0)))              # (B, L + 6, C_in)

    weights = params["w"]
    biases = params["b"]

    def kernel(*refs):
        x_ref = refs[0]
        w = refs[1:1 + N_UNITS]
        bias = refs[1 + N_UNITS:1 + 2 * N_UNITS]
        out_ref = refs[1 + 2 * N_UNITS]
        pool_buf = refs[2 + 2 * N_UNITS]
        pad_buf = {64: refs[3 + 2 * N_UNITS], 128: refs[4 + 2 * N_UNITS],
                   256: refs[5 + 2 * N_UNITS], 512: refs[6 + 2 * N_UNITS]}

        # Zero the scratch buffers once per grid step; only their padding rows stay
        # zero (interiors are fully overwritten before every use).
        pool_buf[...] = jnp.zeros_like(pool_buf)
        for buf in pad_buf.values():
            buf[...] = jnp.zeros_like(buf)

        sel_cache = {}

        def sel(out_len, in_len, stride):
            """(out_len, in_len) 0/1 matrix with S[i, stride*i] = 1: strided row
            selection expressed as a tiny MXU matmul (avoids strided VMEM reads)."""
            k = (out_len, in_len, stride)
            if k not in sel_cache:
                r = jax.lax.broadcasted_iota(jnp.int32, (out_len, in_len), 0)
                c = jax.lax.broadcasted_iota(jnp.int32, (out_len, in_len), 1)
                sel_cache[k] = jnp.where(c == stride * r, 1.0, 0.0).astype(jnp.float32)
            return sel_cache[k]

        def conv(idx, x_lc, *, k, pad, stride, relu, residual=None):
            """Conv1d (+folded BN bias) (+residual) (+ReLU) on a (L, C) activation.
            Taps are shifted slices (in-kernel im2col), one bf16 MXU matmul per tap
            with f32 accumulation; stride-2 = full-resolution conv + selection matmul."""
            l_in, c_in_ = x_lc.shape
            l_f = l_in + 2 * pad - k + 1
            if pad > 0:
                buf = pad_buf[c_in_]
                buf[pad:pad + l_in, :] = x_lc
                taps = [buf[j:j + l_f, :] for j in range(k)]
            else:
                taps = [x_lc[j:j + l_f, :] for j in range(k)]
            acc = None
            for j in range(k):
                d = jnp.dot(taps[j].astype(jnp.bfloat16), w[idx][j],
                            preferred_element_type=jnp.float32)
                acc = d if acc is None else acc + d
            if stride == 2:
                l_out = (l_in + 2 * pad - k) // 2 + 1
                acc = jnp.dot(sel(l_out, l_f, 2), acc,
                              preferred_element_type=jnp.float32)
            y = acc + bias[idx][...]
            if residual is not None:
                y = y + residual
            if relu:
                y = jnp.maximum(y, 0.0)
            return y

        # ---- stem: conv(k7, s2, p3) + BN + ReLU, fused with MaxPool1d(3, 2, 1).
        # The conv is evaluated at stride 1 over the pre-padded input, giving z[m];
        # the strided conv output is y[l] = z[2l] and the pooled output is
        # p[j] = max(y[2j-1], y[2j], y[2j+1]) = max(z[4j-2], z[4j], z[4j+2])
        # (zero padding is valid post-ReLU).
        x0 = x_ref[0]                                               # (L + 6, C_in)
        z = conv(0, x0, k=7, pad=0, stride=1, relu=True)            # (l_full, 64)
        pool_buf[2:2 + l_full, :] = z
        zmax = jnp.maximum(jnp.maximum(pool_buf[0:l_full, :], z),
                           pool_buf[4:4 + l_full, :])
        h = jnp.dot(sel(l_pool, l_full, 4), zmax,
                    preferred_element_type=jnp.float32)             # (l_pool, 64)

        # ---- layer1 (64 -> 64, stride 1, no downsample)
        idn = h
        h = conv(1, h, k=3, pad=1, stride=1, relu=True)
        h = conv(2, h, k=3, pad=1, stride=1, relu=True, residual=idn)

        # ---- layer2..layer4 (stride-2 blocks with 1x1 downsample)
        for base in (3, 6, 9):
            idn = conv(base + 1, h, k=1, pad=0, stride=2, relu=False)   # downsample
            o = conv(base, h, k=3, pad=1, stride=2, relu=True)          # conv1
            h = conv(base + 2, o, k=3, pad=1, stride=1, relu=True,      # conv2
                     residual=idn)

        # ---- avgpool(1) is the identity; fc over the flattened (C, L) features,
        # expressed as a kernel-size-l4 "conv" (flatten order folded into fc weight).
        y = conv(12, h, k=l4, pad=0, stride=1, relu=False)          # (1, num_classes)
        out_ref[...] = jnp.reshape(y, out_ref.shape)

    zero3 = lambda b: (0, 0, 0)
    zero2 = lambda b: (0, 0)
    in_specs = [pl.BlockSpec((1, L + 6, c_in), lambda b: (b, 0, 0))]
    in_specs += [pl.BlockSpec(wa.shape, zero3) for wa in weights]
    in_specs += [pl.BlockSpec(ba.shape, zero2) for ba in biases]

    out = pl.pallas_call(
        kernel,
        out_shape=jax.ShapeDtypeStruct((B, 1, num_classes), jnp.float32),
        grid=(B,),
        in_specs=in_specs,
        out_specs=pl.BlockSpec((1, 1, num_classes), lambda b: (b, 0, 0)),
        scratch_shapes=[
            pltpu.VMEM((l_full + 4, 64), jnp.float32),   # fused maxpool window buffer
            pltpu.VMEM((l1 + 2, 64), jnp.float32),       # conv pad buffers, keyed by C
            pltpu.VMEM((l2 + 2, 128), jnp.float32),
            pltpu.VMEM((l3 + 2, 256), jnp.float32),
            pltpu.VMEM((l4 + 2, 512), jnp.float32),
        ],
        compiler_params=pltpu.CompilerParams(
            dimension_semantics=("parallel",),           # batch items -> 2 TCs on v7x
            vmem_limit_bytes=32 * 1024 * 1024,
        ),
    )(x_pad, *weights, *biases)
    return out.reshape(B, num_classes)


# --------------------------------------------------------------------------- main

if __name__ == "__main__":
    key = jax.random.PRNGKey(0)
    k_param, k_x = jax.random.split(key)

    B, C_IN, L = 2, 4, 64   # L=64 -> final length 2 -> 512*2 = 1024 fc features
    params = make_resnet1d_params(k_param, in_channels=C_IN, num_classes=1)
    x = jax.random.normal(k_x, (B, C_IN, L), dtype=jnp.float32)   # PyTorch NCL layout

    fwd = jax.jit(resnet1d_forward)
    out = jax.block_until_ready(fwd(params, x))
    assert out.shape == (B, 1), out.shape
    assert bool(jnp.all(jnp.isfinite(out)))
    print("KERNEL_OK")
</pallas_src>

<mosaic_0001>
module attributes {stable_mosaic.version = 11 : i64} {
  func.func @kernel(%arg0: i32, %arg1: memref<1x70x4xf32, #tpu.memory_space<vmem>>, %arg2: memref<7x4x64xbf16, #tpu.memory_space<vmem>>, %arg3: memref<3x64x64xbf16, #tpu.memory_space<vmem>>, %arg4: memref<3x64x64xbf16, #tpu.memory_space<vmem>>, %arg5: memref<3x64x128xbf16, #tpu.memory_space<vmem>>, %arg6: memref<1x64x128xbf16, #tpu.memory_space<vmem>>, %arg7: memref<3x128x128xbf16, #tpu.memory_space<vmem>>, %arg8: memref<3x128x256xbf16, #tpu.memory_space<vmem>>, %arg9: memref<1x128x256xbf16, #tpu.memory_space<vmem>>, %arg10: memref<3x256x256xbf16, #tpu.memory_space<vmem>>, %arg11: memref<3x256x512xbf16, #tpu.memory_space<vmem>>, %arg12: memref<1x256x512xbf16, #tpu.memory_space<vmem>>, %arg13: memref<3x512x512xbf16, #tpu.memory_space<vmem>>, %arg14: memref<2x512x1xbf16, #tpu.memory_space<vmem>>, %arg15: memref<1x64xf32, #tpu.memory_space<vmem>>, %arg16: memref<1x64xf32, #tpu.memory_space<vmem>>, %arg17: memref<1x64xf32, #tpu.memory_space<vmem>>, %arg18: memref<1x128xf32, #tpu.memory_space<vmem>>, %arg19: memref<1x128xf32, #tpu.memory_space<vmem>>, %arg20: memref<1x128xf32, #tpu.memory_space<vmem>>, %arg21: memref<1x256xf32, #tpu.memory_space<vmem>>, %arg22: memref<1x256xf32, #tpu.memory_space<vmem>>, %arg23: memref<1x256xf32, #tpu.memory_space<vmem>>, %arg24: memref<1x512xf32, #tpu.memory_space<vmem>>, %arg25: memref<1x512xf32, #tpu.memory_space<vmem>>, %arg26: memref<1x512xf32, #tpu.memory_space<vmem>>, %arg27: memref<1x1xf32, #tpu.memory_space<vmem>>, %arg28: memref<1x1x1xf32, #tpu.memory_space<vmem>>, %arg29: memref<68x64xf32, #tpu.memory_space<vmem>>, %arg30: memref<18x64xf32, #tpu.memory_space<vmem>>, %arg31: memref<10x128xf32, #tpu.memory_space<vmem>>, %arg32: memref<6x256xf32, #tpu.memory_space<vmem>>, %arg33: memref<4x512xf32, #tpu.memory_space<vmem>>) attributes {dimension_semantics = [#tpu.dimension_semantics<parallel>], iteration_bounds = array<i64: 2>, scalar_prefetch = 0 : i64, scratch_operands = 5 : i64, tpu.core_type = #tpu.core_type<tc>, window_params = [{transform_indices = @transform_0, window_bounds = array<i64: 1, 70, 4>}, {pipeline_mode = #tpu.pipeline_mode<synchronous>, transform_indices = @transform_1, window_bounds = array<i64: 7, 4, 64>}, {pipeline_mode = #tpu.pipeline_mode<synchronous>, transform_indices = @transform_2, window_bounds = array<i64: 3, 64, 64>}, {pipeline_mode = #tpu.pipeline_mode<synchronous>, transform_indices = @transform_3, window_bounds = array<i64: 3, 64, 64>}, {pipeline_mode = #tpu.pipeline_mode<synchronous>, transform_indices = @transform_4, window_bounds = array<i64: 3, 64, 128>}, {pipeline_mode = #tpu.pipeline_mode<synchronous>, transform_indices = @transform_5, window_bounds = array<i64: 1, 64, 128>}, {pipeline_mode = #tpu.pipeline_mode<synchronous>, transform_indices = @transform_6, window_bounds = array<i64: 3, 128, 128>}, {pipeline_mode = #tpu.pipeline_mode<synchronous>, transform_indices = @transform_7, window_bounds = array<i64: 3, 128, 256>}, {pipeline_mode = #tpu.pipeline_mode<synchronous>, transform_indices = @transform_8, window_bounds = array<i64: 1, 128, 256>}, {pipeline_mode = #tpu.pipeline_mode<synchronous>, transform_indices = @transform_9, window_bounds = array<i64: 3, 256, 256>}, {pipeline_mode = #tpu.pipeline_mode<synchronous>, transform_indices = @transform_10, window_bounds = array<i64: 3, 256, 512>}, {pipeline_mode = #tpu.pipeline_mode<synchronous>, transform_indices = @transform_11, window_bounds = array<i64: 1, 256, 512>}, {pipeline_mode = #tpu.pipeline_mode<synchronous>, transform_indices = @transform_12, window_bounds = array<i64: 3, 512, 512>}, {pipeline_mode = #tpu.pipeline_mode<synchronous>, transform_indices = @transform_13, window_bounds = array<i64: 2, 512, 1>}, {pipeline_mode = #tpu.pipeline_mode<synchronous>, transform_indices = @transform_14, window_bounds = array<i64: 1, 64>}, {pipeline_mode = #tpu.pipeline_mode<synchronous>, transform_indices = @transform_15, window_bounds = array<i64: 1, 64>}, {pipeline_mode = #tpu.pipeline_mode<synchronous>, transform_indices = @transform_16, window_bounds = array<i64: 1, 64>}, {pipeline_mode = #tpu.pipeline_mode<synchronous>, transform_indices = @transform_17, window_bounds = array<i64: 1, 128>}, {pipeline_mode = #tpu.pipeline_mode<synchronous>, transform_indices = @transform_18, window_bounds = array<i64: 1, 128>}, {pipeline_mode = #tpu.pipeline_mode<synchronous>, transform_indices = @transform_19, window_bounds = array<i64: 1, 128>}, {pipeline_mode = #tpu.pipeline_mode<synchronous>, transform_indices = @transform_20, window_bounds = array<i64: 1, 256>}, {pipeline_mode = #tpu.pipeline_mode<synchronous>, transform_indices = @transform_21, window_bounds = array<i64: 1, 256>}, {pipeline_mode = #tpu.pipeline_mode<synchronous>, transform_indices = @transform_22, window_bounds = array<i64: 1, 256>}, {pipeline_mode = #tpu.pipeline_mode<synchronous>, transform_indices = @transform_23, window_bounds = array<i64: 1, 512>}, {pipeline_mode = #tpu.pipeline_mode<synchronous>, transform_indices = @transform_24, window_bounds = array<i64: 1, 512>}, {pipeline_mode = #tpu.pipeline_mode<synchronous>, transform_indices = @transform_25, window_bounds = array<i64: 1, 512>}, {pipeline_mode = #tpu.pipeline_mode<synchronous>, transform_indices = @transform_26, window_bounds = array<i64: 1, 1>}, {transform_indices = @transform_27, window_bounds = array<i64: 1, 1, 1>}]} {
    %cst = arith.constant 0.000000e+00 : f32
    %0 = vector.broadcast %cst : f32 to vector<68x64xf32>
    %c0 = arith.constant 0 : index
    %c0_0 = arith.constant 0 : index
    %1 = vector.load %arg29[%c0, %c0_0] : memref<68x64xf32, #tpu.memory_space<vmem>>, vector<68x64xf32>
    tpu.vector_store %arg29[%c0, %c0_0], %0 {strides = array<i32>} : memref<68x64xf32, #tpu.memory_space<vmem>>, vector<68x64xf32>,
    %cst_1 = arith.constant 0.000000e+00 : f32
    %2 = vector.broadcast %cst_1 : f32 to vector<18x64xf32>
    %c0_2 = arith.constant 0 : index
    %c0_3 = arith.constant 0 : index
    %3 = vector.load %arg30[%c0_2, %c0_3] : memref<18x64xf32, #tpu.memory_space<vmem>>, vector<18x64xf32>
    tpu.vector_store %arg30[%c0_2, %c0_3], %2 {strides = array<i32>} : memref<18x64xf32, #tpu.memory_space<vmem>>, vector<18x64xf32>,
    %cst_4 = arith.constant 0.000000e+00 : f32
    %4 = vector.broadcast %cst_4 : f32 to vector<10x128xf32>
    %c0_5 = arith.constant 0 : index
    %c0_6 = arith.constant 0 : index
    %5 = vector.load %arg31[%c0_5, %c0_6] : memref<10x128xf32, #tpu.memory_space<vmem>>, vector<10x128xf32>
    tpu.vector_store %arg31[%c0_5, %c0_6], %4 {strides = array<i32>} : memref<10x128xf32, #tpu.memory_space<vmem>>, vector<10x128xf32>,
    %cst_7 = arith.constant 0.000000e+00 : f32
    %6 = vector.broadcast %cst_7 : f32 to vector<6x256xf32>
    %c0_8 = arith.constant 0 : index
    %c0_9 = arith.constant 0 : index
    %7 = vector.load %arg32[%c0_8, %c0_9] : memref<6x256xf32, #tpu.memory_space<vmem>>, vector<6x256xf32>
    tpu.vector_store %arg32[%c0_8, %c0_9], %6 {strides = array<i32>} : memref<6x256xf32, #tpu.memory_space<vmem>>, vector<6x256xf32>,
    %cst_10 = arith.constant 0.000000e+00 : f32
    %8 = vector.broadcast %cst_10 : f32 to vector<4x512xf32>
    %c0_11 = arith.constant 0 : index
    %c0_12 = arith.constant 0 : index
    %9 = vector.load %arg33[%c0_11, %c0_12] : memref<4x512xf32, #tpu.memory_space<vmem>>, vector<4x512xf32>
    tpu.vector_store %arg33[%c0_11, %c0_12], %8 {strides = array<i32>} : memref<4x512xf32, #tpu.memory_space<vmem>>, vector<4x512xf32>,
    %c0_13 = arith.constant 0 : index
    %c0_14 = arith.constant 0 : index
    %c0_15 = arith.constant 0 : index
    %10 = vector.load %arg1[%c0_13, %c0_14, %c0_15] : memref<1x70x4xf32, #tpu.memory_space<vmem>>, vector<1x70x4xf32>
    %11 = vector.shape_cast %10 : vector<1x70x4xf32> to vector<70x4xf32>
    %12 = vector.extract_strided_slice %11 {offsets = [0, 0], sizes = [64, 4], strides = [1, 1]} : vector<70x4xf32> to vector<64x4xf32>
    %13 = vector.extract_strided_slice %11 {offsets = [1, 0], sizes = [64, 4], strides = [1, 1]} : vector<70x4xf32> to vector<64x4xf32>
    %14 = vector.extract_strided_slice %11 {offsets = [2, 0], sizes = [64, 4], strides = [1, 1]} : vector<70x4xf32> to vector<64x4xf32>
    %15 = vector.extract_strided_slice %11 {offsets = [3, 0], sizes = [64, 4], strides = [1, 1]} : vector<70x4xf32> to vector<64x4xf32>
    %16 = vector.extract_strided_slice %11 {offsets = [4, 0], sizes = [64, 4], strides = [1, 1]} : vector<70x4xf32> to vector<64x4xf32>
    %17 = vector.extract_strided_slice %11 {offsets = [5, 0], sizes = [64, 4], strides = [1, 1]} : vector<70x4xf32> to vector<64x4xf32>
    %18 = vector.extract_strided_slice %11 {offsets = [6, 0], sizes = [64, 4], strides = [1, 1]} : vector<70x4xf32> to vector<64x4xf32>
    %19 = arith.truncf %12 : vector<64x4xf32> to vector<64x4xbf16>
    %c0_16 = arith.constant 0 : index
    %c0_17 = arith.constant 0 : index
    %c0_18 = arith.constant 0 : index
    %20 = vector.load %arg2[%c0_16, %c0_17, %c0_18] : memref<7x4x64xbf16, #tpu.memory_space<vmem>>, vector<1x4x64xbf16>
    %21 = vector.shape_cast %20 : vector<1x4x64xbf16> to vector<4x64xbf16>
    %cst_19 = arith.constant dense<0.000000e+00> : vector<64x64xf32>
    %22 = tpu.matmul %19, %21, %cst_19 {dimension_numbers = #tpu.dot_dimension_numbers<[1], [0], [0], [1], [0, 0, 1, 1], [], []>} : vector<64x4xbf16>, vector<4x64xbf16>, vector<64x64xf32> -> vector<64x64xf32>
    %23 = arith.truncf %13 : vector<64x4xf32> to vector<64x4xbf16>
    %c1 = arith.constant 1 : index
    %c0_20 = arith.constant 0 : index
    %c0_21 = arith.constant 0 : index
    %24 = vector.load %arg2[%c1, %c0_20, %c0_21] : memref<7x4x64xbf16, #tpu.memory_space<vmem>>, vector<1x4x64xbf16>
    %25 = vector.shape_cast %24 : vector<1x4x64xbf16> to vector<4x64xbf16>
    %cst_22 = arith.constant dense<0.000000e+00> : vector<64x64xf32>
    %26 = tpu.matmul %23, %25, %cst_22 {dimension_numbers = #tpu.dot_dimension_numbers<[1], [0], [0], [1], [0, 0, 1, 1], [], []>} : vector<64x4xbf16>, vector<4x64xbf16>, vector<64x64xf32> -> vector<64x64xf32>
    %27 = arith.addf %22, %26 : vector<64x64xf32>
    %28 = arith.truncf %14 : vector<64x4xf32> to vector<64x4xbf16>
    %c2 = arith.constant 2 : index
    %c0_23 = arith.constant 0 : index
    %c0_24 = arith.constant 0 : index
    %29 = vector.load %arg2[%c2, %c0_23, %c0_24] : memref<7x4x64xbf16, #tpu.memory_space<vmem>>, vector<1x4x64xbf16>
    %30 = vector.shape_cast %29 : vector<1x4x64xbf16> to vector<4x64xbf16>
    %cst_25 = arith.constant dense<0.000000e+00> : vector<64x64xf32>
    %31 = tpu.matmul %28, %30, %cst_25 {dimension_numbers = #tpu.dot_dimension_numbers<[1], [0], [0], [1], [0, 0, 1, 1], [], []>} : vector<64x4xbf16>, vector<4x64xbf16>, vector<64x64xf32> -> vector<64x64xf32>
    %32 = arith.addf %27, %31 : vector<64x64xf32>
    %33 = arith.truncf %15 : vector<64x4xf32> to vector<64x4xbf16>
    %c3 = arith.constant 3 : index
    %c0_26 = arith.constant 0 : index
    %c0_27 = arith.constant 0 : index
    %34 = vector.load %arg2[%c3, %c0_26, %c0_27] : memref<7x4x64xbf16, #tpu.memory_space<vmem>>, vector<1x4x64xbf16>
    %35 = vector.shape_cast %34 : vector<1x4x64xbf16> to vector<4x64xbf16>
    %cst_28 = arith.constant dense<0.000000e+00> : vector<64x64xf32>
    %36 = tpu.matmul %33, %35, %cst_28 {dimension_numbers = #tpu.dot_dimension_numbers<[1], [0], [0], [1], [0, 0, 1, 1], [], []>} : vector<64x4xbf16>, vector<4x64xbf16>, vector<64x64xf32> -> vector<64x64xf32>
    %37 = arith.addf %32, %36 : vector<64x64xf32>
    %38 = arith.truncf %16 : vector<64x4xf32> to vector<64x4xbf16>
    %c4 = arith.constant 4 : index
    %c0_29 = arith.constant 0 : index
    %c0_30 = arith.constant 0 : index
    %39 = vector.load %arg2[%c4, %c0_29, %c0_30] : memref<7x4x64xbf16, #tpu.memory_space<vmem>>, vector<1x4x64xbf16>
    %40 = vector.shape_cast %39 : vector<1x4x64xbf16> to vector<4x64xbf16>
    %cst_31 = arith.constant dense<0.000000e+00> : vector<64x64xf32>
    %41 = tpu.matmul %38, %40, %cst_31 {dimension_numbers = #tpu.dot_dimension_numbers<[1], [0], [0], [1], [0, 0, 1, 1], [], []>} : vector<64x4xbf16>, vector<4x64xbf16>, vector<64x64xf32> -> vector<64x64xf32>
    %42 = arith.addf %37, %41 : vector<64x64xf32>
    %43 = arith.truncf %17 : vector<64x4xf32> to vector<64x4xbf16>
    %c5 = arith.constant 5 : index
    %c0_32 = arith.constant 0 : index
    %c0_33 = arith.constant 0 : index
    %44 = vector.load %arg2[%c5, %c0_32, %c0_33] : memref<7x4x64xbf16, #tpu.memory_space<vmem>>, vector<1x4x64xbf16>
    %45 = vector.shape_cast %44 : vector<1x4x64xbf16> to vector<4x64xbf16>
    %cst_34 = arith.constant dense<0.000000e+00> : vector<64x64xf32>
    %46 = tpu.matmul %43, %45, %cst_34 {dimension_numbers = #tpu.dot_dimension_numbers<[1], [0], [0], [1], [0, 0, 1, 1], [], []>} : vector<64x4xbf16>, vector<4x64xbf16>, vector<64x64xf32> -> vector<64x64xf32>
    %47 = arith.addf %42, %46 : vector<64x64xf32>
    %48 = arith.truncf %18 : vector<64x4xf32> to vector<64x4xbf16>
    %c6 = arith.constant 6 : index
    %c0_35 = arith.constant 0 : index
    %c0_36 = arith.constant 0 : index
    %49 = vector.load %arg2[%c6, %c0_35, %c0_36] : memref<7x4x64xbf16, #tpu.memory_space<vmem>>, vector<1x4x64xbf16>
    %50 = vector.shape_cast %49 : vector<1x4x64xbf16> to vector<4x64xbf16>
    %cst_37 = arith.constant dense<0.000000e+00> : vector<64x64xf32>
    %51 = tpu.matmul %48, %50, %cst_37 {dimension_numbers = #tpu.dot_dimension_numbers<[1], [0], [0], [1], [0, 0, 1, 1], [], []>} : vector<64x4xbf16>, vector<4x64xbf16>, vector<64x64xf32> -> vector<64x64xf32>
    %52 = arith.addf %47, %51 : vector<64x64xf32>
    %c0_38 = arith.constant 0 : index
    %c0_39 = arith.constant 0 : index
    %53 = vector.load %arg15[%c0_38, %c0_39] : memref<1x64xf32, #tpu.memory_space<vmem>>, vector<1x64xf32>
    %54 = vector.broadcast %53 : vector<1x64xf32> to vector<64x64xf32>
    %55 = arith.addf %52, %54 : vector<64x64xf32>
    %cst_40 = arith.constant 0.000000e+00 : f32
    %56 = vector.broadcast %cst_40 : f32 to vector<64x64xf32>
    %57 = arith.maximumf %55, %56 : vector<64x64xf32>
    %c2_41 = arith.constant 2 : index
    %c0_42 = arith.constant 0 : index
    %58 = vector.load %arg29[%c2_41, %c0_42] : memref<68x64xf32, #tpu.memory_space<vmem>>, vector<64x64xf32>
    tpu.vector_store %arg29[%c2_41, %c0_42], %57 {strides = array<i32>} : memref<68x64xf32, #tpu.memory_space<vmem>>, vector<64x64xf32>,
    %c0_43 = arith.constant 0 : index
    %c0_44 = arith.constant 0 : index
    %59 = vector.load %arg29[%c0_43, %c0_44] : memref<68x64xf32, #tpu.memory_space<vmem>>, vector<64x64xf32>
    %60 = arith.maximumf %59, %57 : vector<64x64xf32>
    %c4_45 = arith.constant 4 : index
    %c0_46 = arith.constant 0 : index
    %61 = vector.load %arg29[%c4_45, %c0_46] : memref<68x64xf32, #tpu.memory_space<vmem>>, vector<64x64xf32>
    %62 = arith.maximumf %60, %61 : vector<64x64xf32>
    %63 = tpu.iota {dimensions = array<i32: 0>} : vector<16x64xi32>
    %64 = tpu.iota {dimensions = array<i32: 1>} : vector<16x64xi32>
    %c4_i32 = arith.constant 4 : i32
    %65 = vector.broadcast %c4_i32 : i32 to vector<16x64xi32>
    %66 = arith.muli %65, %63 : vector<16x64xi32>
    %67 = arith.cmpi eq, %64, %66 : vector<16x64xi32>
    %cst_47 = arith.constant 1.000000e+00 : f32
    %cst_48 = arith.constant 0.000000e+00 : f32
    %68 = vector.broadcast %cst_47 : f32 to vector<16x64xf32>
    %69 = vector.broadcast %cst_48 : f32 to vector<16x64xf32>
    %70 = arith.select %67, %68, %69 : vector<16x64xi1>, vector<16x64xf32>
    %cst_49 = arith.constant dense<0.000000e+00> : vector<16x64xf32>
    %71 = tpu.matmul %70, %62, %cst_49 {dimension_numbers = #tpu.dot_dimension_numbers<[1], [0], [0], [1], [0, 0, 1, 1], [], []>} : vector<16x64xf32>, vector<64x64xf32>, vector<16x64xf32> -> vector<16x64xf32>
    %c1_50 = arith.constant 1 : index
    %c0_51 = arith.constant 0 : index
    %72 = vector.load %arg30[%c1_50, %c0_51] : memref<18x64xf32, #tpu.memory_space<vmem>>, vector<16x64xf32>
    tpu.vector_store %arg30[%c1_50, %c0_51], %71 {strides = array<i32>} : memref<18x64xf32, #tpu.memory_space<vmem>>, vector<16x64xf32>,
    %c0_52 = arith.constant 0 : index
    %c0_53 = arith.constant 0 : index
    %73 = vector.load %arg30[%c0_52, %c0_53] : memref<18x64xf32, #tpu.memory_space<vmem>>, vector<16x64xf32>
    %c1_54 = arith.constant 1 : index
    %c0_55 = arith.constant 0 : index
    %74 = vector.load %arg30[%c1_54, %c0_55] : memref<18x64xf32, #tpu.memory_space<vmem>>, vector<16x64xf32>
    %c2_56 = arith.constant 2 : index
    %c0_57 = arith.constant 0 : index
    %75 = vector.load %arg30[%c2_56, %c0_57] : memref<18x64xf32, #tpu.memory_space<vmem>>, vector<16x64xf32>
    %76 = arith.truncf %73 : vector<16x64xf32> to vector<16x64xbf16>
    %c0_58 = arith.constant 0 : index
    %c0_59 = arith.constant 0 : index
    %c0_60 = arith.constant 0 : index
    %77 = vector.load %arg3[%c0_58, %c0_59, %c0_60] : memref<3x64x64xbf16, #tpu.memory_space<vmem>>, vector<1x64x64xbf16>
    %78 = vector.shape_cast %77 : vector<1x64x64xbf16> to vector<64x64xbf16>
    %cst_61 = arith.constant dense<0.000000e+00> : vector<16x64xf32>
    %79 = tpu.matmul %76, %78, %cst_61 {dimension_numbers = #tpu.dot_dimension_numbers<[1], [0], [0], [1], [0, 0, 1, 1], [], []>} : vector<16x64xbf16>, vector<64x64xbf16>, vector<16x64xf32> -> vector<16x64xf32>
    %80 = arith.truncf %74 : vector<16x64xf32> to vector<16x64xbf16>
    %c1_62 = arith.constant 1 : index
    %c0_63 = arith.constant 0 : index
    %c0_64 = arith.constant 0 : index
    %81 = vector.load %arg3[%c1_62, %c0_63, %c0_64] : memref<3x64x64xbf16, #tpu.memory_space<vmem>>, vector<1x64x64xbf16>
    %82 = vector.shape_cast %81 : vector<1x64x64xbf16> to vector<64x64xbf16>
    %cst_65 = arith.constant dense<0.000000e+00> : vector<16x64xf32>
    %83 = tpu.matmul %80, %82, %cst_65 {dimension_numbers = #tpu.dot_dimension_numbers<[1], [0], [0], [1], [0, 0, 1, 1], [], []>} : vector<16x64xbf16>, vector<64x64xbf16>, vector<16x64xf32> -> vector<16x64xf32>
    %84 = arith.addf %79, %83 : vector<16x64xf32>
    %85 = arith.truncf %75 : vector<16x64xf32> to vector<16x64xbf16>
    %c2_66 = arith.constant 2 : index
    %c0_67 = arith.constant 0 : index
    %c0_68 = arith.constant 0 : index
    %86 = vector.load %arg3[%c2_66, %c0_67, %c0_68] : memref<3x64x64xbf16, #tpu.memory_space<vmem>>, vector<1x64x64xbf16>
    %87 = vector.shape_cast %86 : vector<1x64x64xbf16> to vector<64x64xbf16>
    %cst_69 = arith.constant dense<0.000000e+00> : vector<16x64xf32>
    %88 = tpu.matmul %85, %87, %cst_69 {dimension_numbers = #tpu.dot_dimension_numbers<[1], [0], [0], [1], [0, 0, 1, 1], [], []>} : vector<16x64xbf16>, vector<64x64xbf16>, vector<16x64xf32> -> vector<16x64xf32>
    %89 = arith.addf %84, %88 : vector<16x64xf32>
    %c0_70 = arith.constant 0 : index
    %c0_71 = arith.constant 0 : index
    %90 = vector.load %arg16[%c0_70, %c0_71] : memref<1x64xf32, #tpu.memory_space<vmem>>, vector<1x64xf32>
    %91 = vector.broadcast %90 : vector<1x64xf32> to vector<16x64xf32>
    %92 = arith.addf %89, %91 : vector<16x64xf32>
    %cst_72 = arith.constant 0.000000e+00 : f32
    %93 = vector.broadcast %cst_72 : f32 to vector<16x64xf32>
    %94 = arith.maximumf %92, %93 : vector<16x64xf32>
    %c1_73 = arith.constant 1 : index
    %c0_74 = arith.constant 0 : index
    %95 = vector.load %arg30[%c1_73, %c0_74] : memref<18x64xf32, #tpu.memory_space<vmem>>, vector<16x64xf32>
    tpu.vector_store %arg30[%c1_73, %c0_74], %94 {strides = array<i32>} : memref<18x64xf32, #tpu.memory_space<vmem>>, vector<16x64xf32>,
    %c0_75 = arith.constant 0 : index
    %c0_76 = arith.constant 0 : index
    %96 = vector.load %arg30[%c0_75, %c0_76] : memref<18x64xf32, #tpu.memory_space<vmem>>, vector<16x64xf32>
    %c1_77 = arith.constant 1 : index
    %c0_78 = arith.constant 0 : index
    %97 = vector.load %arg30[%c1_77, %c0_78] : memref<18x64xf32, #tpu.memory_space<vmem>>, vector<16x64xf32>
    %c2_79 = arith.constant 2 : index
    %c0_80 = arith.constant 0 : index
    %98 = vector.load %arg30[%c2_79, %c0_80] : memref<18x64xf32, #tpu.memory_space<vmem>>, vector<16x64xf32>
    %99 = arith.truncf %96 : vector<16x64xf32> to vector<16x64xbf16>
    %c0_81 = arith.constant 0 : index
    %c0_82 = arith.constant 0 : index
    %c0_83 = arith.constant 0 : index
    %100 = vector.load %arg4[%c0_81, %c0_82, %c0_83] : memref<3x64x64xbf16, #tpu.memory_space<vmem>>, vector<1x64x64xbf16>
    %101 = vector.shape_cast %100 : vector<1x64x64xbf16> to vector<64x64xbf16>
    %cst_84 = arith.constant dense<0.000000e+00> : vector<16x64xf32>
    %102 = tpu.matmul %99, %101, %cst_84 {dimension_numbers = #tpu.dot_dimension_numbers<[1], [0], [0], [1], [0, 0, 1, 1], [], []>} : vector<16x64xbf16>, vector<64x64xbf16>, vector<16x64xf32> -> vector<16x64xf32>
    %103 = arith.truncf %97 : vector<16x64xf32> to vector<16x64xbf16>
    %c1_85 = arith.constant 1 : index
    %c0_86 = arith.constant 0 : index
    %c0_87 = arith.constant 0 : index
    %104 = vector.load %arg4[%c1_85, %c0_86, %c0_87] : memref<3x64x64xbf16, #tpu.memory_space<vmem>>, vector<1x64x64xbf16>
    %105 = vector.shape_cast %104 : vector<1x64x64xbf16> to vector<64x64xbf16>
    %cst_88 = arith.constant dense<0.000000e+00> : vector<16x64xf32>
    %106 = tpu.matmul %103, %105, %cst_88 {dimension_numbers = #tpu.dot_dimension_numbers<[1], [0], [0], [1], [0, 0, 1, 1], [], []>} : vector<16x64xbf16>, vector<64x64xbf16>, vector<16x64xf32> -> vector<16x64xf32>
    %107 = arith.addf %102, %106 : vector<16x64xf32>
    %108 = arith.truncf %98 : vector<16x64xf32> to vector<16x64xbf16>
    %c2_89 = arith.constant 2 : index
    %c0_90 = arith.constant 0 : index
    %c0_91 = arith.constant 0 : index
    %109 = vector.load %arg4[%c2_89, %c0_90, %c0_91] : memref<3x64x64xbf16, #tpu.memory_space<vmem>>, vector<1x64x64xbf16>
    %110 = vector.shape_cast %109 : vector<1x64x64xbf16> to vector<64x64xbf16>
    %cst_92 = arith.constant dense<0.000000e+00> : vector<16x64xf32>
    %111 = tpu.matmul %108, %110, %cst_92 {dimension_numbers = #tpu.dot_dimension_numbers<[1], [0], [0], [1], [0, 0, 1, 1], [], []>} : vector<16x64xbf16>, vector<64x64xbf16>, vector<16x64xf32> -> vector<16x64xf32>
    %112 = arith.addf %107, %111 : vector<16x64xf32>
    %c0_93 = arith.constant 0 : index
    %c0_94 = arith.constant 0 : index
    %113 = vector.load %arg17[%c0_93, %c0_94] : memref<1x64xf32, #tpu.memory_space<vmem>>, vector<1x64xf32>
    %114 = vector.broadcast %113 : vector<1x64xf32> to vector<16x64xf32>
    %115 = arith.addf %112, %114 : vector<16x64xf32>
    %116 = arith.addf %115, %71 : vector<16x64xf32>
    %cst_95 = arith.constant 0.000000e+00 : f32
    %117 = vector.broadcast %cst_95 : f32 to vector<16x64xf32>
    %118 = arith.maximumf %116, %117 : vector<16x64xf32>
    %119 = arith.truncf %118 : vector<16x64xf32> to vector<16x64xbf16>
    %c0_96 = arith.constant 0 : index
    %c0_97 = arith.constant 0 : index
    %c0_98 = arith.constant 0 : index
    %120 = vector.load %arg6[%c0_96, %c0_97, %c0_98] : memref<1x64x128xbf16, #tpu.memory_space<vmem>>, vector<1x64x128xbf16>
    %121 = vector.shape_cast %120 : vector<1x64x128xbf16> to vector<64x128xbf16>
    %cst_99 = arith.constant dense<0.000000e+00> : vector<16x128xf32>
    %122 = tpu.matmul %119, %121, %cst_99 {dimension_numbers = #tpu.dot_dimension_numbers<[1], [0], [0], [1], [0, 0, 1, 1], [], []>} : vector<16x64xbf16>, vector<64x128xbf16>, vector<16x128xf32> -> vector<16x128xf32>
    %123 = tpu.iota {dimensions = array<i32: 0>} : vector<8x16xi32>
    %124 = tpu.iota {dimensions = array<i32: 1>} : vector<8x16xi32>
    %c2_i32 = arith.constant 2 : i32
    %125 = vector.broadcast %c2_i32 : i32 to vector<8x16xi32>
    %126 = arith.muli %125, %123 : vector<8x16xi32>
    %127 = arith.cmpi eq, %124, %126 : vector<8x16xi32>
    %cst_100 = arith.constant 1.000000e+00 : f32
    %cst_101 = arith.constant 0.000000e+00 : f32
    %128 = vector.broadcast %cst_100 : f32 to vector<8x16xf32>
    %129 = vector.broadcast %cst_101 : f32 to vector<8x16xf32>
    %130 = arith.select %127, %128, %129 : vector<8x16xi1>, vector<8x16xf32>
    %cst_102 = arith.constant dense<0.000000e+00> : vector<8x128xf32>
    %131 = tpu.matmul %130, %122, %cst_102 {dimension_numbers = #tpu.dot_dimension_numbers<[1], [0], [0], [1], [0, 0, 1, 1], [], []>} : vector<8x16xf32>, vector<16x128xf32>, vector<8x128xf32> -> vector<8x128xf32>
    %c0_103 = arith.constant 0 : index
    %c0_104 = arith.constant 0 : index
    %132 = vector.load %arg19[%c0_103, %c0_104] : memref<1x128xf32, #tpu.memory_space<vmem>>, vector<1x128xf32>
    %133 = vector.broadcast %132 : vector<1x128xf32> to vector<8x128xf32>
    %134 = arith.addf %131, %133 : vector<8x128xf32>
    %c1_105 = arith.constant 1 : index
    %c0_106 = arith.constant 0 : index
    %135 = vector.load %arg30[%c1_105, %c0_106] : memref<18x64xf32, #tpu.memory_space<vmem>>, vector<16x64xf32>
    tpu.vector_store %arg30[%c1_105, %c0_106], %118 {strides = array<i32>} : memref<18x64xf32, #tpu.memory_space<vmem>>, vector<16x64xf32>,
    %c0_107 = arith.constant 0 : index
    %c0_108 = arith.constant 0 : index
    %136 = vector.load %arg30[%c0_107, %c0_108] : memref<18x64xf32, #tpu.memory_space<vmem>>, vector<16x64xf32>
    %c1_109 = arith.constant 1 : index
    %c0_110 = arith.constant 0 : index
    %137 = vector.load %arg30[%c1_109, %c0_110] : memref<18x64xf32, #tpu.memory_space<vmem>>, vector<16x64xf32>
    %c2_111 = arith.constant 2 : index
    %c0_112 = arith.constant 0 : index
    %138 = vector.load %arg30[%c2_111, %c0_112] : memref<18x64xf32, #tpu.memory_space<vmem>>, vector<16x64xf32>
    %139 = arith.truncf %136 : vector<16x64xf32> to vector<16x64xbf16>
    %c0_113 = arith.constant 0 : index
    %c0_114 = arith.constant 0 : index
    %c0_115 = arith.constant 0 : index
    %140 = vector.load %arg5[%c0_113, %c0_114, %c0_115] : memref<3x64x128xbf16, #tpu.memory_space<vmem>>, vector<1x64x128xbf16>
    %141 = vector.shape_cast %140 : vector<1x64x128xbf16> to vector<64x128xbf16>
    %cst_116 = arith.constant dense<0.000000e+00> : vector<16x128xf32>
    %142 = tpu.matmul %139, %141, %cst_116 {dimension_numbers = #tpu.dot_dimension_numbers<[1], [0], [0], [1], [0, 0, 1, 1], [], []>} : vector<16x64xbf16>, vector<64x128xbf16>, vector<16x128xf32> -> vector<16x128xf32>
    %143 = arith.truncf %137 : vector<16x64xf32> to vector<16x64xbf16>
    %c1_117 = arith.constant 1 : index
    %c0_118 = arith.constant 0 : index
    %c0_119 = arith.constant 0 : index
    %144 = vector.load %arg5[%c1_117, %c0_118, %c0_119] : memref<3x64x128xbf16, #tpu.memory_space<vmem>>, vector<1x64x128xbf16>
    %145 = vector.shape_cast %144 : vector<1x64x128xbf16> to vector<64x128xbf16>
    %cst_120 = arith.constant dense<0.000000e+00> : vector<16x128xf32>
    %146 = tpu.matmul %143, %145, %cst_120 {dimension_numbers = #tpu.dot_dimension_numbers<[1], [0], [0], [1], [0, 0, 1, 1], [], []>} : vector<16x64xbf16>, vector<64x128xbf16>, vector<16x128xf32> -> vector<16x128xf32>
    %147 = arith.addf %142, %146 : vector<16x128xf32>
    %148 = arith.truncf %138 : vector<16x64xf32> to vector<16x64xbf16>
    %c2_121 = arith.constant 2 : index
    %c0_122 = arith.constant 0 : index
    %c0_123 = arith.constant 0 : index
    %149 = vector.load %arg5[%c2_121, %c0_122, %c0_123] : memref<3x64x128xbf16, #tpu.memory_space<vmem>>, vector<1x64x128xbf16>
    %150 = vector.shape_cast %149 : vector<1x64x128xbf16> to vector<64x128xbf16>
    %cst_124 = arith.constant dense<0.000000e+00> : vector<16x128xf32>
    %151 = tpu.matmul %148, %150, %cst_124 {dimension_numbers = #tpu.dot_dimension_numbers<[1], [0], [0], [1], [0, 0, 1, 1], [], []>} : vector<16x64xbf16>, vector<64x128xbf16>, vector<16x128xf32> -> vector<16x128xf32>
    %152 = arith.addf %147, %151 : vector<16x128xf32>
    %cst_125 = arith.constant dense<0.000000e+00> : vector<8x128xf32>
    %153 = tpu.matmul %130, %152, %cst_125 {dimension_numbers = #tpu.dot_dimension_numbers<[1], [0], [0], [1], [0, 0, 1, 1], [], []>} : vector<8x16xf32>, vector<16x128xf32>, vector<8x128xf32> -> vector<8x128xf32>
    %c0_126 = arith.constant 0 : index
    %c0_127 = arith.constant 0 : index
    %154 = vector.load %arg18[%c0_126, %c0_127] : memref<1x128xf32, #tpu.memory_space<vmem>>, vector<1x128xf32>
    %155 = vector.broadcast %154 : vector<1x128xf32> to vector<8x128xf32>
    %156 = arith.addf %153, %155 : vector<8x128xf32>
    %cst_128 = arith.constant 0.000000e+00 : f32
    %157 = vector.broadcast %cst_128 : f32 to vector<8x128xf32>
    %158 = arith.maximumf %156, %157 : vector<8x128xf32>
    %c1_129 = arith.constant 1 : index
    %c0_130 = arith.constant 0 : index
    %159 = vector.load %arg31[%c1_129, %c0_130] : memref<10x128xf32, #tpu.memory_space<vmem>>, vector<8x128xf32>
    tpu.vector_store %arg31[%c1_129, %c0_130], %158 {strides = array<i32>} : memref<10x128xf32, #tpu.memory_space<vmem>>, vector<8x128xf32>,
    %c0_131 = arith.constant 0 : index
    %c0_132 = arith.constant 0 : index
    %160 = vector.load %arg31[%c0_131, %c0_132] : memref<10x128xf32, #tpu.memory_space<vmem>>, vector<8x128xf32>
    %c1_133 = arith.constant 1 : index
    %c0_134 = arith.constant 0 : index
    %161 = vector.load %arg31[%c1_133, %c0_134] : memref<10x128xf32, #tpu.memory_space<vmem>>, vector<8x128xf32>
    %c2_135 = arith.constant 2 : index
    %c0_136 = arith.constant 0 : index
    %162 = vector.load %arg31[%c2_135, %c0_136] : memref<10x128xf32, #tpu.memory_space<vmem>>, vector<8x128xf32>
    %163 = arith.truncf %160 : vector<8x128xf32> to vector<8x128xbf16>
    %c0_137 = arith.constant 0 : index
    %c0_138 = arith.constant 0 : index
    %c0_139 = arith.constant 0 : index
    %164 = vector.load %arg7[%c0_137, %c0_138, %c0_139] : memref<3x128x128xbf16, #tpu.memory_space<vmem>>, vector<1x128x128xbf16>
    %165 = vector.shape_cast %164 : vector<1x128x128xbf16> to vector<128x128xbf16>
    %cst_140 = arith.constant dense<0.000000e+00> : vector<8x128xf32>
    %166 = tpu.matmul %163, %165, %cst_140 {dimension_numbers = #tpu.dot_dimension_numbers<[1], [0], [0], [1], [0, 0, 1, 1], [], []>} : vector<8x128xbf16>, vector<128x128xbf16>, vector<8x128xf32> -> vector<8x128xf32>
    %167 = arith.truncf %161 : vector<8x128xf32> to vector<8x128xbf16>
    %c1_141 = arith.constant 1 : index
    %c0_142 = arith.constant 0 : index
    %c0_143 = arith.constant 0 : index
    %168 = vector.load %arg7[%c1_141, %c0_142, %c0_143] : memref<3x128x128xbf16, #tpu.memory_space<vmem>>, vector<1x128x128xbf16>
    %169 = vector.shape_cast %168 : vector<1x128x128xbf16> to vector<128x128xbf16>
    %cst_144 = arith.constant dense<0.000000e+00> : vector<8x128xf32>
    %170 = tpu.matmul %167, %169, %cst_144 {dimension_numbers = #tpu.dot_dimension_numbers<[1], [0], [0], [1], [0, 0, 1, 1], [], []>} : vector<8x128xbf16>, vector<128x128xbf16>, vector<8x128xf32> -> vector<8x128xf32>
    %171 = arith.addf %166, %170 : vector<8x128xf32>
    %172 = arith.truncf %162 : vector<8x128xf32> to vector<8x128xbf16>
    %c2_145 = arith.constant 2 : index
    %c0_146 = arith.constant 0 : index
    %c0_147 = arith.constant 0 : index
    %173 = vector.load %arg7[%c2_145, %c0_146, %c0_147] : memref<3x128x128xbf16, #tpu.memory_space<vmem>>, vector<1x128x128xbf16>
    %174 = vector.shape_cast %173 : vector<1x128x128xbf16> to vector<128x128xbf16>
    %cst_148 = arith.constant dense<0.000000e+00> : vector<8x128xf32>
    %175 = tpu.matmul %172, %174, %cst_148 {dimension_numbers = #tpu.dot_dimension_numbers<[1], [0], [0], [1], [0, 0, 1, 1], [], []>} : vector<8x128xbf16>, vector<128x128xbf16>, vector<8x128xf32> -> vector<8x128xf32>
    %176 = arith.addf %171, %175 : vector<8x128xf32>
    %c0_149 = arith.constant 0 : index
    %c0_150 = arith.constant 0 : index
    %177 = vector.load %arg20[%c0_149, %c0_150] : memref<1x128xf32, #tpu.memory_space<vmem>>, vector<1x128xf32>
    %178 = vector.broadcast %177 : vector<1x128xf32> to vector<8x128xf32>
    %179 = arith.addf %176, %178 : vector<8x128xf32>
    %180 = arith.addf %179, %134 : vector<8x128xf32>
    %cst_151 = arith.constant 0.000000e+00 : f32
    %181 = vector.broadcast %cst_151 : f32 to vector<8x128xf32>
    %182 = arith.maximumf %180, %181 : vector<8x128xf32>
    %183 = arith.truncf %182 : vector<8x128xf32> to vector<8x128xbf16>
    %c0_152 = arith.constant 0 : index
    %c0_153 = arith.constant 0 : index
    %c0_154 = arith.constant 0 : index
    %184 = vector.load %arg9[%c0_152, %c0_153, %c0_154] : memref<1x128x256xbf16, #tpu.memory_space<vmem>>, vector<1x128x256xbf16>
    %185 = vector.shape_cast %184 : vector<1x128x256xbf16> to vector<128x256xbf16>
    %cst_155 = arith.constant dense<0.000000e+00> : vector<8x256xf32>
    %186 = tpu.matmul %183, %185, %cst_155 {dimension_numbers = #tpu.dot_dimension_numbers<[1], [0], [0], [1], [0, 0, 1, 1], [], []>} : vector<8x128xbf16>, vector<128x256xbf16>, vector<8x256xf32> -> vector<8x256xf32>
    %187 = tpu.iota {dimensions = array<i32: 0>} : vector<4x8xi32>
    %188 = tpu.iota {dimensions = array<i32: 1>} : vector<4x8xi32>
    %c2_i32_156 = arith.constant 2 : i32
    %189 = vector.broadcast %c2_i32_156 : i32 to vector<4x8xi32>
    %190 = arith.muli %189, %187 : vector<4x8xi32>
    %191 = arith.cmpi eq, %188, %190 : vector<4x8xi32>
    %cst_157 = arith.constant 1.000000e+00 : f32
    %cst_158 = arith.constant 0.000000e+00 : f32
    %192 = vector.broadcast %cst_157 : f32 to vector<4x8xf32>
    %193 = vector.broadcast %cst_158 : f32 to vector<4x8xf32>
    %194 = arith.select %191, %192, %193 : vector<4x8xi1>, vector<4x8xf32>
    %cst_159 = arith.constant dense<0.000000e+00> : vector<4x256xf32>
    %195 = tpu.matmul %194, %186, %cst_159 {dimension_numbers = #tpu.dot_dimension_numbers<[1], [0], [0], [1], [0, 0, 1, 1], [], []>} : vector<4x8xf32>, vector<8x256xf32>, vector<4x256xf32> -> vector<4x256xf32>
    %c0_160 = arith.constant 0 : index
    %c0_161 = arith.constant 0 : index
    %196 = vector.load %arg22[%c0_160, %c0_161] : memref<1x256xf32, #tpu.memory_space<vmem>>, vector<1x256xf32>
    %197 = vector.broadcast %196 : vector<1x256xf32> to vector<4x256xf32>
    %198 = arith.addf %195, %197 : vector<4x256xf32>
    %c1_162 = arith.constant 1 : index
    %c0_163 = arith.constant 0 : index
    %199 = vector.load %arg31[%c1_162, %c0_163] : memref<10x128xf32, #tpu.memory_space<vmem>>, vector<8x128xf32>
    tpu.vector_store %arg31[%c1_162, %c0_163], %182 {strides = array<i32>} : memref<10x128xf32, #tpu.memory_space<vmem>>, vector<8x128xf32>,
    %c0_164 = arith.constant 0 : index
    %c0_165 = arith.constant 0 : index
    %200 = vector.load %arg31[%c0_164, %c0_165] : memref<10x128xf32, #tpu.memory_space<vmem>>, vector<8x128xf32>
    %c1_166 = arith.constant 1 : index
    %c0_167 = arith.constant 0 : index
    %201 = vector.load %arg31[%c1_166, %c0_167] : memref<10x128xf32, #tpu.memory_space<vmem>>, vector<8x128xf32>
    %c2_168 = arith.constant 2 : index
    %c0_169 = arith.constant 0 : index
    %202 = vector.load %arg31[%c2_168, %c0_169] : memref<10x128xf32, #tpu.memory_space<vmem>>, vector<8x128xf32>
    %203 = arith.truncf %200 : vector<8x128xf32> to vector<8x128xbf16>
    %c0_170 = arith.constant 0 : index
    %c0_171 = arith.constant 0 : index
    %c0_172 = arith.constant 0 : index
    %204 = vector.load %arg8[%c0_170, %c0_171, %c0_172] : memref<3x128x256xbf16, #tpu.memory_space<vmem>>, vector<1x128x256xbf16>
    %205 = vector.shape_cast %204 : vector<1x128x256xbf16> to vector<128x256xbf16>
    %cst_173 = arith.constant dense<0.000000e+00> : vector<8x256xf32>
    %206 = tpu.matmul %203, %205, %cst_173 {dimension_numbers = #tpu.dot_dimension_numbers<[1], [0], [0], [1], [0, 0, 1, 1], [], []>} : vector<8x128xbf16>, vector<128x256xbf16>, vector<8x256xf32> -> vector<8x256xf32>
    %207 = arith.truncf %201 : vector<8x128xf32> to vector<8x128xbf16>
    %c1_174 = arith.constant 1 : index
    %c0_175 = arith.constant 0 : index
    %c0_176 = arith.constant 0 : index
    %208 = vector.load %arg8[%c1_174, %c0_175, %c0_176] : memref<3x128x256xbf16, #tpu.memory_space<vmem>>, vector<1x128x256xbf16>
    %209 = vector.shape_cast %208 : vector<1x128x256xbf16> to vector<128x256xbf16>
    %cst_177 = arith.constant dense<0.000000e+00> : vector<8x256xf32>
    %210 = tpu.matmul %207, %209, %cst_177 {dimension_numbers = #tpu.dot_dimension_numbers<[1], [0], [0], [1], [0, 0, 1, 1], [], []>} : vector<8x128xbf16>, vector<128x256xbf16>, vector<8x256xf32> -> vector<8x256xf32>
    %211 = arith.addf %206, %210 : vector<8x256xf32>
    %212 = arith.truncf %202 : vector<8x128xf32> to vector<8x128xbf16>
    %c2_178 = arith.constant 2 : index
    %c0_179 = arith.constant 0 : index
    %c0_180 = arith.constant 0 : index
    %213 = vector.load %arg8[%c2_178, %c0_179, %c0_180] : memref<3x128x256xbf16, #tpu.memory_space<vmem>>, vector<1x128x256xbf16>
    %214 = vector.shape_cast %213 : vector<1x128x256xbf16> to vector<128x256xbf16>
    %cst_181 = arith.constant dense<0.000000e+00> : vector<8x256xf32>
    %215 = tpu.matmul %212, %214, %cst_181 {dimension_numbers = #tpu.dot_dimension_numbers<[1], [0], [0], [1], [0, 0, 1, 1], [], []>} : vector<8x128xbf16>, vector<128x256xbf16>, vector<8x256xf32> -> vector<8x256xf32>
    %216 = arith.addf %211, %215 : vector<8x256xf32>
    %cst_182 = arith.constant dense<0.000000e+00> : vector<4x256xf32>
    %217 = tpu.matmul %194, %216, %cst_182 {dimension_numbers = #tpu.dot_dimension_numbers<[1], [0], [0], [1], [0, 0, 1, 1], [], []>} : vector<4x8xf32>, vector<8x256xf32>, vector<4x256xf32> -> vector<4x256xf32>
    %c0_183 = arith.constant 0 : index
    %c0_184 = arith.constant 0 : index
    %218 = vector.load %arg21[%c0_183, %c0_184] : memref<1x256xf32, #tpu.memory_space<vmem>>, vector<1x256xf32>
    %219 = vector.broadcast %218 : vector<1x256xf32> to vector<4x256xf32>
    %220 = arith.addf %217, %219 : vector<4x256xf32>
    %cst_185 = arith.constant 0.000000e+00 : f32
    %221 = vector.broadcast %cst_185 : f32 to vector<4x256xf32>
    %222 = arith.maximumf %220, %221 : vector<4x256xf32>
    %c1_186 = arith.constant 1 : index
    %c0_187 = arith.constant 0 : index
    %223 = vector.load %arg32[%c1_186, %c0_187] : memref<6x256xf32, #tpu.memory_space<vmem>>, vector<4x256xf32>
    tpu.vector_store %arg32[%c1_186, %c0_187], %222 {strides = array<i32>} : memref<6x256xf32, #tpu.memory_space<vmem>>, vector<4x256xf32>,
    %c0_188 = arith.constant 0 : index
    %c0_189 = arith.constant 0 : index
    %224 = vector.load %arg32[%c0_188, %c0_189] : memref<6x256xf32, #tpu.memory_space<vmem>>, vector<4x256xf32>
    %c1_190 = arith.constant 1 : index
    %c0_191 = arith.constant 0 : index
    %225 = vector.load %arg32[%c1_190, %c0_191] : memref<6x256xf32, #tpu.memory_space<vmem>>, vector<4x256xf32>
    %c2_192 = arith.constant 2 : index
    %c0_193 = arith.constant 0 : index
    %226 = vector.load %arg32[%c2_192, %c0_193] : memref<6x256xf32, #tpu.memory_space<vmem>>, vector<4x256xf32>
    %227 = arith.truncf %224 : vector<4x256xf32> to vector<4x256xbf16>
    %c0_194 = arith.constant 0 : index
    %c0_195 = arith.constant 0 : index
    %c0_196 = arith.constant 0 : index
    %228 = vector.load %arg10[%c0_194, %c0_195, %c0_196] : memref<3x256x256xbf16, #tpu.memory_space<vmem>>, vector<1x256x256xbf16>
    %229 = vector.shape_cast %228 : vector<1x256x256xbf16> to vector<256x256xbf16>
    %cst_197 = arith.constant dense<0.000000e+00> : vector<4x256xf32>
    %230 = tpu.matmul %227, %229, %cst_197 {dimension_numbers = #tpu.dot_dimension_numbers<[1], [0], [0], [1], [0, 0, 1, 1], [], []>} : vector<4x256xbf16>, vector<256x256xbf16>, vector<4x256xf32> -> vector<4x256xf32>
    %231 = arith.truncf %225 : vector<4x256xf32> to vector<4x256xbf16>
    %c1_198 = arith.constant 1 : index
    %c0_199 = arith.constant 0 : index
    %c0_200 = arith.constant 0 : index
    %232 = vector.load %arg10[%c1_198, %c0_199, %c0_200] : memref<3x256x256xbf16, #tpu.memory_space<vmem>>, vector<1x256x256xbf16>
    %233 = vector.shape_cast %232 : vector<1x256x256xbf16> to vector<256x256xbf16>
    %cst_201 = arith.constant dense<0.000000e+00> : vector<4x256xf32>
    %234 = tpu.matmul %231, %233, %cst_201 {dimension_numbers = #tpu.dot_dimension_numbers<[1], [0], [0], [1], [0, 0, 1, 1], [], []>} : vector<4x256xbf16>, vector<256x256xbf16>, vector<4x256xf32> -> vector<4x256xf32>
    %235 = arith.addf %230, %234 : vector<4x256xf32>
    %236 = arith.truncf %226 : vector<4x256xf32> to vector<4x256xbf16>
    %c2_202 = arith.constant 2 : index
    %c0_203 = arith.constant 0 : index
    %c0_204 = arith.constant 0 : index
    %237 = vector.load %arg10[%c2_202, %c0_203, %c0_204] : memref<3x256x256xbf16, #tpu.memory_space<vmem>>, vector<1x256x256xbf16>
    %238 = vector.shape_cast %237 : vector<1x256x256xbf16> to vector<256x256xbf16>
    %cst_205 = arith.constant dense<0.000000e+00> : vector<4x256xf32>
    %239 = tpu.matmul %236, %238, %cst_205 {dimension_numbers = #tpu.dot_dimension_numbers<[1], [0], [0], [1], [0, 0, 1, 1], [], []>} : vector<4x256xbf16>, vector<256x256xbf16>, vector<4x256xf32> -> vector<4x256xf32>
    %240 = arith.addf %235, %239 : vector<4x256xf32>
    %c0_206 = arith.constant 0 : index
    %c0_207 = arith.constant 0 : index
    %241 = vector.load %arg23[%c0_206, %c0_207] : memref<1x256xf32, #tpu.memory_space<vmem>>, vector<1x256xf32>
    %242 = vector.broadcast %241 : vector<1x256xf32> to vector<4x256xf32>
    %243 = arith.addf %240, %242 : vector<4x256xf32>
    %244 = arith.addf %243, %198 : vector<4x256xf32>
    %cst_208 = arith.constant 0.000000e+00 : f32
    %245 = vector.broadcast %cst_208 : f32 to vector<4x256xf32>
    %246 = arith.maximumf %244, %245 : vector<4x256xf32>
    %247 = arith.truncf %246 : vector<4x256xf32> to vector<4x256xbf16>
    %c0_209 = arith.constant 0 : index
    %c0_210 = arith.constant 0 : index
    %c0_211 = arith.constant 0 : index
    %248 = vector.load %arg12[%c0_209, %c0_210, %c0_211] : memref<1x256x512xbf16, #tpu.memory_space<vmem>>, vector<1x256x512xbf16>
    %249 = vector.shape_cast %248 : vector<1x256x512xbf16> to vector<256x512xbf16>
    %cst_212 = arith.constant dense<0.000000e+00> : vector<4x512xf32>
    %250 = tpu.matmul %247, %249, %cst_212 {dimension_numbers = #tpu.dot_dimension_numbers<[1], [0], [0], [1], [0, 0, 1, 1], [], []>} : vector<4x256xbf16>, vector<256x512xbf16>, vector<4x512xf32> -> vector<4x512xf32>
    %251 = tpu.iota {dimensions = array<i32: 0>} : vector<2x4xi32>
    %252 = tpu.iota {dimensions = array<i32: 1>} : vector<2x4xi32>
    %c2_i32_213 = arith.constant 2 : i32
    %253 = vector.broadcast %c2_i32_213 : i32 to vector<2x4xi32>
    %254 = arith.muli %253, %251 : vector<2x4xi32>
    %255 = arith.cmpi eq, %252, %254 : vector<2x4xi32>
    %cst_214 = arith.constant 1.000000e+00 : f32
    %cst_215 = arith.constant 0.000000e+00 : f32
    %256 = vector.broadcast %cst_214 : f32 to vector<2x4xf32>
    %257 = vector.broadcast %cst_215 : f32 to vector<2x4xf32>
    %258 = arith.select %255, %256, %257 : vector<2x4xi1>, vector<2x4xf32>
    %cst_216 = arith.constant dense<0.000000e+00> : vector<2x512xf32>
    %259 = tpu.matmul %258, %250, %cst_216 {dimension_numbers = #tpu.dot_dimension_numbers<[1], [0], [0], [1], [0, 0, 1, 1], [], []>} : vector<2x4xf32>, vector<4x512xf32>, vector<2x512xf32> -> vector<2x512xf32>
    %c0_217 = arith.constant 0 : index
    %c0_218 = arith.constant 0 : index
    %260 = vector.load %arg25[%c0_217, %c0_218] : memref<1x512xf32, #tpu.memory_space<vmem>>, vector<1x512xf32>
    %261 = vector.broadcast %260 : vector<1x512xf32> to vector<2x512xf32>
    %262 = arith.addf %259, %261 : vector<2x512xf32>
    %c1_219 = arith.constant 1 : index
    %c0_220 = arith.constant 0 : index
    %263 = vector.load %arg32[%c1_219, %c0_220] : memref<6x256xf32, #tpu.memory_space<vmem>>, vector<4x256xf32>
    tpu.vector_store %arg32[%c1_219, %c0_220], %246 {strides = array<i32>} : memref<6x256xf32, #tpu.memory_space<vmem>>, vector<4x256xf32>,
    %c0_221 = arith.constant 0 : index
    %c0_222 = arith.constant 0 : index
    %264 = vector.load %arg32[%c0_221, %c0_222] : memref<6x256xf32, #tpu.memory_space<vmem>>, vector<4x256xf32>
    %c1_223 = arith.constant 1 : index
    %c0_224 = arith.constant 0 : index
    %265 = vector.load %arg32[%c1_223, %c0_224] : memref<6x256xf32, #tpu.memory_space<vmem>>, vector<4x256xf32>
    %c2_225 = arith.constant 2 : index
    %c0_226 = arith.constant 0 : index
    %266 = vector.load %arg32[%c2_225, %c0_226] : memref<6x256xf32, #tpu.memory_space<vmem>>, vector<4x256xf32>
    %267 = arith.truncf %264 : vector<4x256xf32> to vector<4x256xbf16>
    %c0_227 = arith.constant 0 : index
    %c0_228 = arith.constant 0 : index
    %c0_229 = arith.constant 0 : index
    %268 = vector.load %arg11[%c0_227, %c0_228, %c0_229] : memref<3x256x512xbf16, #tpu.memory_space<vmem>>, vector<1x256x512xbf16>
    %269 = vector.shape_cast %268 : vector<1x256x512xbf16> to vector<256x512xbf16>
    %cst_230 = arith.constant dense<0.000000e+00> : vector<4x512xf32>
    %270 = tpu.matmul %267, %269, %cst_230 {dimension_numbers = #tpu.dot_dimension_numbers<[1], [0], [0], [1], [0, 0, 1, 1], [], []>} : vector<4x256xbf16>, vector<256x512xbf16>, vector<4x512xf32> -> vector<4x512xf32>
    %271 = arith.truncf %265 : vector<4x256xf32> to vector<4x256xbf16>
    %c1_231 = arith.constant 1 : index
    %c0_232 = arith.constant 0 : index
    %c0_233 = arith.constant 0 : index
    %272 = vector.load %arg11[%c1_231, %c0_232, %c0_233] : memref<3x256x512xbf16, #tpu.memory_space<vmem>>, vector<1x256x512xbf16>
    %273 = vector.shape_cast %272 : vector<1x256x512xbf16> to vector<256x512xbf16>
    %cst_234 = arith.constant dense<0.000000e+00> : vector<4x512xf32>
    %274 = tpu.matmul %271, %273, %cst_234 {dimension_numbers = #tpu.dot_dimension_numbers<[1], [0], [0], [1], [0, 0, 1, 1], [], []>} : vector<4x256xbf16>, vector<256x512xbf16>, vector<4x512xf32> -> vector<4x512xf32>
    %275 = arith.addf %270, %274 : vector<4x512xf32>
    %276 = arith.truncf %266 : vector<4x256xf32> to vector<4x256xbf16>
    %c2_235 = arith.constant 2 : index
    %c0_236 = arith.constant 0 : index
    %c0_237 = arith.constant 0 : index
    %277 = vector.load %arg11[%c2_235, %c0_236, %c0_237] : memref<3x256x512xbf16, #tpu.memory_space<vmem>>, vector<1x256x512xbf16>
    %278 = vector.shape_cast %277 : vector<1x256x512xbf16> to vector<256x512xbf16>
    %cst_238 = arith.constant dense<0.000000e+00> : vector<4x512xf32>
    %279 = tpu.matmul %276, %278, %cst_238 {dimension_numbers = #tpu.dot_dimension_numbers<[1], [0], [0], [1], [0, 0, 1, 1], [], []>} : vector<4x256xbf16>, vector<256x512xbf16>, vector<4x512xf32> -> vector<4x512xf32>
    %280 = arith.addf %275, %279 : vector<4x512xf32>
    %cst_239 = arith.constant dense<0.000000e+00> : vector<2x512xf32>
    %281 = tpu.matmul %258, %280, %cst_239 {dimension_numbers = #tpu.dot_dimension_numbers<[1], [0], [0], [1], [0, 0, 1, 1], [], []>} : vector<2x4xf32>, vector<4x512xf32>, vector<2x512xf32> -> vector<2x512xf32>
    %c0_240 = arith.constant 0 : index
    %c0_241 = arith.constant 0 : index
    %282 = vector.load %arg24[%c0_240, %c0_241] : memref<1x512xf32, #tpu.memory_space<vmem>>, vector<1x512xf32>
    %283 = vector.broadcast %282 : vector<1x512xf32> to vector<2x512xf32>
    %284 = arith.addf %281, %283 : vector<2x512xf32>
    %cst_242 = arith.constant 0.000000e+00 : f32
    %285 = vector.broadcast %cst_242 : f32 to vector<2x512xf32>
    %286 = arith.maximumf %284, %285 : vector<2x512xf32>
    %c1_243 = arith.constant 1 : index
    %c0_244 = arith.constant 0 : index
    %287 = vector.load %arg33[%c1_243, %c0_244] : memref<4x512xf32, #tpu.memory_space<vmem>>, vector<2x512xf32>
    tpu.vector_store %arg33[%c1_243, %c0_244], %286 {strides = array<i32>} : memref<4x512xf32, #tpu.memory_space<vmem>>, vector<2x512xf32>,
    %c0_245 = arith.constant 0 : index
    %c0_246 = arith.constant 0 : index
    %288 = vector.load %arg33[%c0_245, %c0_246] : memref<4x512xf32, #tpu.memory_space<vmem>>, vector<2x512xf32>
    %c1_247 = arith.constant 1 : index
    %c0_248 = arith.constant 0 : index
    %289 = vector.load %arg33[%c1_247, %c0_248] : memref<4x512xf32, #tpu.memory_space<vmem>>, vector<2x512xf32>
    %c2_249 = arith.constant 2 : index
    %c0_250 = arith.constant 0 : index
    %290 = vector.load %arg33[%c2_249, %c0_250] : memref<4x512xf32, #tpu.memory_space<vmem>>, vector<2x512xf32>
    %291 = arith.truncf %288 : vector<2x512xf32> to vector<2x512xbf16>
    %c0_251 = arith.constant 0 : index
    %c0_252 = arith.constant 0 : index
    %c0_253 = arith.constant 0 : index
    %292 = vector.load %arg13[%c0_251, %c0_252, %c0_253] : memref<3x512x512xbf16, #tpu.memory_space<vmem>>, vector<1x512x512xbf16>
    %293 = vector.shape_cast %292 : vector<1x512x512xbf16> to vector<512x512xbf16>
    %cst_254 = arith.constant dense<0.000000e+00> : vector<2x512xf32>
    %294 = tpu.matmul %291, %293, %cst_254 {dimension_numbers = #tpu.dot_dimension_numbers<[1], [0], [0], [1], [0, 0, 1, 1], [], []>} : vector<2x512xbf16>, vector<512x512xbf16>, vector<2x512xf32> -> vector<2x512xf32>
    %295 = arith.truncf %289 : vector<2x512xf32> to vector<2x512xbf16>
    %c1_255 = arith.constant 1 : index
    %c0_256 = arith.constant 0 : index
    %c0_257 = arith.constant 0 : index
    %296 = vector.load %arg13[%c1_255, %c0_256, %c0_257] : memref<3x512x512xbf16, #tpu.memory_space<vmem>>, vector<1x512x512xbf16>
    %297 = vector.shape_cast %296 : vector<1x512x512xbf16> to vector<512x512xbf16>
    %cst_258 = arith.constant dense<0.000000e+00> : vector<2x512xf32>
    %298 = tpu.matmul %295, %297, %cst_258 {dimension_numbers = #tpu.dot_dimension_numbers<[1], [0], [0], [1], [0, 0, 1, 1], [], []>} : vector<2x512xbf16>, vector<512x512xbf16>, vector<2x512xf32> -> vector<2x512xf32>
    %299 = arith.addf %294, %298 : vector<2x512xf32>
    %300 = arith.truncf %290 : vector<2x512xf32> to vector<2x512xbf16>
    %c2_259 = arith.constant 2 : index
    %c0_260 = arith.constant 0 : index
    %c0_261 = arith.constant 0 : index
    %301 = vector.load %arg13[%c2_259, %c0_260, %c0_261] : memref<3x512x512xbf16, #tpu.memory_space<vmem>>, vector<1x512x512xbf16>
    %302 = vector.shape_cast %301 : vector<1x512x512xbf16> to vector<512x512xbf16>
    %cst_262 = arith.constant dense<0.000000e+00> : vector<2x512xf32>
    %303 = tpu.matmul %300, %302, %cst_262 {dimension_numbers = #tpu.dot_dimension_numbers<[1], [0], [0], [1], [0, 0, 1, 1], [], []>} : vector<2x512xbf16>, vector<512x512xbf16>, vector<2x512xf32> -> vector<2x512xf32>
    %304 = arith.addf %299, %303 : vector<2x512xf32>
    %c0_263 = arith.constant 0 : index
    %c0_264 = arith.constant 0 : index
    %305 = vector.load %arg26[%c0_263, %c0_264] : memref<1x512xf32, #tpu.memory_space<vmem>>, vector<1x512xf32>
    %306 = vector.broadcast %305 : vector<1x512xf32> to vector<2x512xf32>
    %307 = arith.addf %304, %306 : vector<2x512xf32>
    %308 = arith.addf %307, %262 : vector<2x512xf32>
    %cst_265 = arith.constant 0.000000e+00 : f32
    %309 = vector.broadcast %cst_265 : f32 to vector<2x512xf32>
    %310 = arith.maximumf %308, %309 : vector<2x512xf32>
    %311 = vector.extract_strided_slice %310 {offsets = [0, 0], sizes = [1, 512], strides = [1, 1]} : vector<2x512xf32> to vector<1x512xf32>
    %312 = vector.extract_strided_slice %310 {offsets = [1, 0], sizes = [1, 512], strides = [1, 1]} : vector<2x512xf32> to vector<1x512xf32>
    %313 = arith.truncf %311 : vector<1x512xf32> to vector<1x512xbf16>
    %c0_266 = arith.constant 0 : index
    %c0_267 = arith.constant 0 : index
    %c0_268 = arith.constant 0 : index
    %314 = vector.load %arg14[%c0_266, %c0_267, %c0_268] : memref<2x512x1xbf16, #tpu.memory_space<vmem>>, vector<1x512x1xbf16>
    %315 = vector.shape_cast %314 : vector<1x512x1xbf16> to vector<512x1xbf16>
    %cst_269 = arith.constant dense<0.000000e+00> : vector<1x1xf32>
    %316 = tpu.matmul %313, %315, %cst_269 {dimension_numbers = #tpu.dot_dimension_numbers<[1], [0], [0], [1], [0, 0, 1, 1], [], []>} : vector<1x512xbf16>, vector<512x1xbf16>, vector<1x1xf32> -> vector<1x1xf32>
    %317 = arith.truncf %312 : vector<1x512xf32> to vector<1x512xbf16>
    %c1_270 = arith.constant 1 : index
    %c0_271 = arith.constant 0 : index
    %c0_272 = arith.constant 0 : index
    %318 = vector.load %arg14[%c1_270, %c0_271, %c0_272] : memref<2x512x1xbf16, #tpu.memory_space<vmem>>, vector<1x512x1xbf16>
    %319 = vector.shape_cast %318 : vector<1x512x1xbf16> to vector<512x1xbf16>
    %cst_273 = arith.constant dense<0.000000e+00> : vector<1x1xf32>
    %320 = tpu.matmul %317, %319, %cst_273 {dimension_numbers = #tpu.dot_dimension_numbers<[1], [0], [0], [1], [0, 0, 1, 1], [], []>} : vector<1x512xbf16>, vector<512x1xbf16>, vector<1x1xf32> -> vector<1x1xf32>
    %321 = arith.addf %316, %320 : vector<1x1xf32>
    %c0_274 = arith.constant 0 : index
    %c0_275 = arith.constant 0 : index
    %322 = vector.load %arg27[%c0_274, %c0_275] : memref<1x1xf32, #tpu.memory_space<vmem>>, vector<1x1xf32>
    %323 = arith.addf %321, %322 : vector<1x1xf32>
    %324 = vector.shape_cast %323 : vector<1x1xf32> to vector<1x1x1xf32>
    %c0_276 = arith.constant 0 : index
    %c0_277 = arith.constant 0 : index
    %c0_278 = arith.constant 0 : index
    %325 = vector.load %arg28[%c0_276, %c0_277, %c0_278] : memref<1x1x1xf32, #tpu.memory_space<vmem>>, vector<1x1x1xf32>
    tpu.vector_store %arg28[%c0_276, %c0_277, %c0_278], %324 {strides = array<i32>} : memref<1x1x1xf32, #tpu.memory_space<vmem>>, vector<1x1x1xf32>,
    return
  }
  func.func @transform_0(%arg0: i32) -> (i32, i32, i32) {
    %c0_i32 = arith.constant 0 : i32
    %c0_i32_0 = arith.constant 0 : i32
    %c0_i32_1 = arith.constant 0 : i32
    return %arg0, %c0_i32, %c0_i32_0 : i32, i32, i32
  }
  func.func @transform_1(%arg0: i32) -> (i32, i32, i32) {
    %c0_i32 = arith.constant 0 : i32
    %c0_i32_0 = arith.constant 0 : i32
    %c0_i32_1 = arith.constant 0 : i32
    %c0_i32_2 = arith.constant 0 : i32
    return %c0_i32, %c0_i32_0, %c0_i32_1 : i32, i32, i32
  }
  func.func @transform_2(%arg0: i32) -> (i32, i32, i32) {
    %c0_i32 = arith.constant 0 : i32
    %c0_i32_0 = arith.constant 0 : i32
    %c0_i32_1 = arith.constant 0 : i32
    %c0_i32_2 = arith.constant 0 : i32
    return %c0_i32, %c0_i32_0, %c0_i32_1 : i32, i32, i32
  }
  func.func @transform_3(%arg0: i32) -> (i32, i32, i32) {
    %c0_i32 = arith.constant 0 : i32
    %c0_i32_0 = arith.constant 0 : i32
    %c0_i32_1 = arith.constant 0 : i32
    %c0_i32_2 = arith.constant 0 : i32
    return %c0_i32, %c0_i32_0, %c0_i32_1 : i32, i32, i32
  }
  func.func @transform_4(%arg0: i32) -> (i32, i32, i32) {
    %c0_i32 = arith.constant 0 : i32
    %c0_i32_0 = arith.constant 0 : i32
    %c0_i32_1 = arith.constant 0 : i32
    %c0_i32_2 = arith.constant 0 : i32
    return %c0_i32, %c0_i32_0, %c0_i32_1 : i32, i32, i32
  }
  func.func @transform_5(%arg0: i32) -> (i32, i32, i32) {
    %c0_i32 = arith.constant 0 : i32
    %c0_i32_0 = arith.constant 0 : i32
    %c0_i32_1 = arith.constant 0 : i32
    %c0_i32_2 = arith.constant 0 : i32
    return %c0_i32, %c0_i32_0, %c0_i32_1 : i32, i32, i32
  }
  func.func @transform_6(%arg0: i32) -> (i32, i32, i32) {
    %c0_i32 = arith.constant 0 : i32
    %c0_i32_0 = arith.constant 0 : i32
    %c0_i32_1 = arith.constant 0 : i32
    %c0_i32_2 = arith.constant 0 : i32
    return %c0_i32, %c0_i32_0, %c0_i32_1 : i32, i32, i32
  }
  func.func @transform_7(%arg0: i32) -> (i32, i32, i32) {
    %c0_i32 = arith.constant 0 : i32
    %c0_i32_0 = arith.constant 0 : i32
    %c0_i32_1 = arith.constant 0 : i32
    %c0_i32_2 = arith.constant 0 : i32
    return %c0_i32, %c0_i32_0, %c0_i32_1 : i32, i32, i32
  }
  func.func @transform_8(%arg0: i32) -> (i32, i32, i32) {
    %c0_i32 = arith.constant 0 : i32
    %c0_i32_0 = arith.constant 0 : i32
    %c0_i32_1 = arith.constant 0 : i32
    %c0_i32_2 = arith.constant 0 : i32
    return %c0_i32, %c0_i32_0, %c0_i32_1 : i32, i32, i32
  }
  func.func @transform_9(%arg0: i32) -> (i32, i32, i32) {
    %c0_i32 = arith.constant 0 : i32
    %c0_i32_0 = arith.constant 0 : i32
    %c0_i32_1 = arith.constant 0 : i32
    %c0_i32_2 = arith.constant 0 : i32
    return %c0_i32, %c0_i32_0, %c0_i32_1 : i32, i32, i32
  }
  func.func @transform_10(%arg0: i32) -> (i32, i32, i32) {
    %c0_i32 = arith.constant 0 : i32
    %c0_i32_0 = arith.constant 0 : i32
    %c0_i32_1 = arith.constant 0 : i32
    %c0_i32_2 = arith.constant 0 : i32
    return %c0_i32, %c0_i32_0, %c0_i32_1 : i32, i32, i32
  }
  func.func @transform_11(%arg0: i32) -> (i32, i32, i32) {
    %c0_i32 = arith.constant 0 : i32
    %c0_i32_0 = arith.constant 0 : i32
    %c0_i32_1 = arith.constant 0 : i32
    %c0_i32_2 = arith.constant 0 : i32
    return %c0_i32, %c0_i32_0, %c0_i32_1 : i32, i32, i32
  }
  func.func @transform_12(%arg0: i32) -> (i32, i32, i32) {
    %c0_i32 = arith.constant 0 : i32
    %c0_i32_0 = arith.constant 0 : i32
    %c0_i32_1 = arith.constant 0 : i32
    %c0_i32_2 = arith.constant 0 : i32
    return %c0_i32, %c0_i32_0, %c0_i32_1 : i32, i32, i32
  }
  func.func @transform_13(%arg0: i32) -> (i32, i32, i32) {
    %c0_i32 = arith.constant 0 : i32
    %c0_i32_0 = arith.constant 0 : i32
    %c0_i32_1 = arith.constant 0 : i32
    %c0_i32_2 = arith.constant 0 : i32
    return %c0_i32, %c0_i32_0, %c0_i32_1 : i32, i32, i32
  }
  func.func @transform_14(%arg0: i32) -> (i32, i32) {
    %c0_i32 = arith.constant 0 : i32
    %c0_i32_0 = arith.constant 0 : i32
    %c0_i32_1 = arith.constant 0 : i32
    return %c0_i32, %c0_i32_0 : i32, i32
  }
  func.func @transform_15(%arg0: i32) -> (i32, i32) {
    %c0_i32 = arith.constant 0 : i32
    %c0_i32_0 = arith.constant 0 : i32
    %c0_i32_1 = arith.constant 0 : i32
    return %c0_i32, %c0_i32_0 : i32, i32
  }
  func.func @transform_16(%arg0: i32) -> (i32, i32) {
    %c0_i32 = arith.constant 0 : i32
    %c0_i32_0 = arith.constant 0 : i32
    %c0_i32_1 = arith.constant 0 : i32
    return %c0_i32, %c0_i32_0 : i32, i32
  }
  func.func @transform_17(%arg0: i32) -> (i32, i32) {
    %c0_i32 = arith.constant 0 : i32
    %c0_i32_0 = arith.constant 0 : i32
    %c0_i32_1 = arith.constant 0 : i32
    return %c0_i32, %c0_i32_0 : i32, i32
  }
  func.func @transform_18(%arg0: i32) -> (i32, i32) {
    %c0_i32 = arith.constant 0 : i32
    %c0_i32_0 = arith.constant 0 : i32
    %c0_i32_1 = arith.constant 0 : i32
    return %c0_i32, %c0_i32_0 : i32, i32
  }
  func.func @transform_19(%arg0: i32) -> (i32, i32) {
    %c0_i32 = arith.constant 0 : i32
    %c0_i32_0 = arith.constant 0 : i32
    %c0_i32_1 = arith.constant 0 : i32
    return %c0_i32, %c0_i32_0 : i32, i32
  }
  func.func @transform_20(%arg0: i32) -> (i32, i32) {
    %c0_i32 = arith.constant 0 : i32
    %c0_i32_0 = arith.constant 0 : i32
    %c0_i32_1 = arith.constant 0 : i32
    return %c0_i32, %c0_i32_0 : i32, i32
  }
  func.func @transform_21(%arg0: i32) -> (i32, i32) {
    %c0_i32 = arith.constant 0 : i32
    %c0_i32_0 = arith.constant 0 : i32
    %c0_i32_1 = arith.constant 0 : i32
    return %c0_i32, %c0_i32_0 : i32, i32
  }
  func.func @transform_22(%arg0: i32) -> (i32, i32) {
    %c0_i32 = arith.constant 0 : i32
    %c0_i32_0 = arith.constant 0 : i32
    %c0_i32_1 = arith.constant 0 : i32
    return %c0_i32, %c0_i32_0 : i32, i32
  }
  func.func @transform_23(%arg0: i32) -> (i32, i32) {
    %c0_i32 = arith.constant 0 : i32
    %c0_i32_0 = arith.constant 0 : i32
    %c0_i32_1 = arith.constant 0 : i32
    return %c0_i32, %c0_i32_0 : i32, i32
  }
  func.func @transform_24(%arg0: i32) -> (i32, i32) {
    %c0_i32 = arith.constant 0 : i32
    %c0_i32_0 = arith.constant 0 : i32
    %c0_i32_1 = arith.constant 0 : i32
    return %c0_i32, %c0_i32_0 : i32, i32
  }
  func.func @transform_25(%arg0: i32) -> (i32, i32) {
    %c0_i32 = arith.constant 0 : i32
    %c0_i32_0 = arith.constant 0 : i32
    %c0_i32_1 = arith.constant 0 : i32
    return %c0_i32, %c0_i32_0 : i32, i32
  }
  func.func @transform_26(%arg0: i32) -> (i32, i32) {
    %c0_i32 = arith.constant 0 : i32
    %c0_i32_0 = arith.constant 0 : i32
    %c0_i32_1 = arith.constant 0 : i32
    return %c0_i32, %c0_i32_0 : i32, i32
  }
  func.func @transform_27(%arg0: i32) -> (i32, i32, i32) {
    %c0_i32 = arith.constant 0 : i32
    %c0_i32_0 = arith.constant 0 : i32
    %c0_i32_1 = arith.constant 0 : i32
    return %arg0, %c0_i32, %c0_i32_0 : i32, i32, i32
  }
}

</mosaic_0001>

<llo_original>
// kernel: resnet1d_forward.1
$region0: #{resnet1d_forward.1}
  #allocation0 [shape = 'u32[]', space=smem, size = 0x4, offset = 0x4, fixed_abs, tag = 'smem constant byte address 0x4 - core index']
  #allocation1 [shape = 'u32[144,128]{1,0:T(1,128)}', space=vmem, size = 0x12000, scoped, tag = 'internal scratch']
  #allocation2 [shape = 'f32[68,64]{1,0:T(8,128)}', space=vmem, size = 0x9000, scoped, tag = 'scratch operand']
  #allocation3 [shape = 'f32[18,64]{1,0:T(8,128)}', space=vmem, size = 0x3000, scoped, tag = 'scratch operand']
  #allocation4 [shape = 'f32[10,128]{1,0:T(8,128)}', space=vmem, size = 0x2000, scoped, tag = 'scratch operand']
  #allocation5 [shape = 'f32[6,256]{1,0:T(8,128)}', space=vmem, size = 0x2000, scoped, tag = 'scratch operand']
  #allocation6 [shape = 'f32[4,512]{1,0:T(4,128)}', space=vmem, size = 0x2000, scoped, tag = 'scratch operand']
  #allocation7 [shape = 'f32[1,1]{1,0:T(1,128)S(1)}', space=vmem, size = 0x200, scoped, tag = 'scoped memory for resnet1d_forward.1']
  %s0 = inlined_call_operand.vmem [shape: f32[2,70,4], index: 0, kind: input, shape index: {}]
  %s1 = inlined_call_operand.hbm [shape: bf16[7,4,64], index: 1, kind: input, shape index: {}]
  %s2 = inlined_call_operand.hbm [shape: bf16[3,64,64], index: 2, kind: input, shape index: {}]
  %s3 = inlined_call_operand.hbm [shape: bf16[3,64,64], index: 3, kind: input, shape index: {}]
  %s4 = inlined_call_operand.hbm [shape: bf16[3,64,128], index: 4, kind: input, shape index: {}]
  %s5 = inlined_call_operand.hbm [shape: bf16[1,64,128], index: 5, kind: input, shape index: {}]
  %s6 = inlined_call_operand.hbm [shape: bf16[3,128,128], index: 6, kind: input, shape index: {}]
  %s7 = inlined_call_operand.hbm [shape: bf16[3,128,256], index: 7, kind: input, shape index: {}]
  %s8 = inlined_call_operand.hbm [shape: bf16[1,128,256], index: 8, kind: input, shape index: {}]
  %s9 = inlined_call_operand.hbm [shape: bf16[3,256,256], index: 9, kind: input, shape index: {}]
  %s10 = inlined_call_operand.hbm [shape: bf16[3,256,512], index: 10, kind: input, shape index: {}]
  %s11 = inlined_call_operand.hbm [shape: bf16[1,256,512], index: 11, kind: input, shape index: {}]
  %s12 = inlined_call_operand.hbm [shape: bf16[3,512,512], index: 12, kind: input, shape index: {}]
  %s13 = inlined_call_operand.vmem [shape: bf16[2,512,1], index: 13, kind: input, shape index: {}]
  %s14 = inlined_call_operand.hbm [shape: f32[1,64], index: 14, kind: input, shape index: {}]
  %s15 = inlined_call_operand.hbm [shape: f32[1,64], index: 15, kind: input, shape index: {}]
  %s16 = inlined_call_operand.hbm [shape: f32[1,64], index: 16, kind: input, shape index: {}]
  %s17 = inlined_call_operand.hbm [shape: f32[1,128], index: 17, kind: input, shape index: {}]
  %s18 = inlined_call_operand.hbm [shape: f32[1,128], index: 18, kind: input, shape index: {}]
  %s19 = inlined_call_operand.hbm [shape: f32[1,128], index: 19, kind: input, shape index: {}]
  %s20 = inlined_call_operand.hbm [shape: f32[1,256], index: 20, kind: input, shape index: {}]
  %s21 = inlined_call_operand.hbm [shape: f32[1,256], index: 21, kind: input, shape index: {}]
  %s22 = inlined_call_operand.hbm [shape: f32[1,256], index: 22, kind: input, shape index: {}]
  %s23 = inlined_call_operand.hbm [shape: f32[1,512], index: 23, kind: input, shape index: {}]
  %s24 = inlined_call_operand.hbm [shape: f32[1,512], index: 24, kind: input, shape index: {}]
  %s25 = inlined_call_operand.hbm [shape: f32[1,512], index: 25, kind: input, shape index: {}]
  %s26 = inlined_call_operand.<no memory space> [shape: f32[1,1], index: 26, kind: input, shape index: {}]
  %s27 = inlined_call_operand.vmem [shape: f32[2,1,1], index: 27, kind: output, shape index: {}]
  %s28 = sld [smem:[#allocation0]]
  $region237: #{resnet1d_forward.1} parent=0
    _
  %s30 = ssub.s32 1, %s28
  %s31 = scalar_select 0, %s30, %s28
  %v32 = vstv %s26
  %33 = vst [vmem:[#allocation7] sm:$0x1] %v32
  $region1: #{resnet1d_forward.1} parent=0
    #allocation8 [shape = 'u8[7168]{0}', space=vmem, size = 0x1c00, scoped, tag = 'input window, operand 1, single buffered']
    #allocation9 [shape = 's32[2]{0}', space=sflag, size = 0x8, scoped, tag = 'scoped memory for resnet1d_forward.1']
    #allocation10 [shape = 'u8[49152]{0}', space=vmem, size = 0xc000, scoped, tag = 'input window, operand 2, single buffered']
    #allocation11 [shape = 's32[1]{0}', space=sflag, size = 0x4, scoped, tag = 'scoped memory for resnet1d_forward.1']
    #allocation12 [shape = 'u8[49152]{0}', space=vmem, size = 0xc000, scoped, tag = 'input window, operand 3, single buffered']
    #allocation13 [shape = 'u8[49152]{0}', space=vmem, size = 0xc000, scoped, tag = 'input window, operand 4, single buffered']
    #allocation14 [shape = 's32[1]{0}', space=sflag, size = 0x4, scoped, tag = 'scoped memory for resnet1d_forward.1']
    #allocation15 [shape = 'u8[16384]{0}', space=vmem, size = 0x4000, scoped, tag = 'input window, operand 5, single buffered']
    #allocation16 [shape = 'u8[98304]{0}', space=vmem, size = 0x18000, scoped, tag = 'input window, operand 6, single buffered']
    #allocation17 [shape = 's32[1]{0}', space=sflag, size = 0x4, scoped, tag = 'scoped memory for resnet1d_forward.1']
    #allocation18 [shape = 'u8[196608]{0}', space=vmem, size = 0x30000, scoped, tag = 'input window, operand 7, single buffered']
    #allocation19 [shape = 'u8[65536]{0}', space=vmem, size = 0x10000, scoped, tag = 'input window, operand 8, single buffered']
    #allocation20 [shape = 's32[1]{0}', space=sflag, size = 0x4, scoped, tag = 'scoped memory for resnet1d_forward.1']
    #allocation21 [shape = 'u8[393216]{0}', space=vmem, size = 0x60000, scoped, tag = 'input window, operand 9, single buffered']
    #allocation22 [shape = 'u8[786432]{0}', space=vmem, size = 0xc0000, scoped, tag = 'input window, operand 10, single buffered']
    #allocation23 [shape = 's32[1]{0}', space=sflag, size = 0x4, scoped, tag = 'scoped memory for resnet1d_forward.1']
    #allocation24 [shape = 'u8[262144]{0}', space=vmem, size = 0x40000, scoped, tag = 'input window, operand 11, single buffered']
    #allocation25 [shape = 'u8[1572864]{0}', space=vmem, size = 0x180000, scoped, tag = 'input window, operand 12, single buffered']
    #allocation26 [shape = 's32[1]{0}', space=sflag, size = 0x4, scoped, tag = 'scoped memory for resnet1d_forward.1']
    #allocation27 [shape = 'u8[512]{0}', space=vmem, size = 0x400, scoped, tag = 'input window, operand 14, single buffered']
    #allocation28 [shape = 'u8[512]{0}', space=vmem, size = 0x400, scoped, tag = 'input window, operand 15, single buffered']
    #allocation29 [shape = 's32[1]{0}', space=sflag, size = 0x4, scoped, tag = 'scoped memory for resnet1d_forward.1']
    #allocation30 [shape = 'u8[512]{0}', space=vmem, size = 0x400, scoped, tag = 'input window, operand 16, single buffered']
    #allocation31 [shape = 'u8[512]{0}', space=vmem, size = 0x400, scoped, tag = 'input window, operand 17, single buffered']
    #allocation32 [shape = 's32[1]{0}', space=sflag, size = 0x4, scoped, tag = 'scoped memory for resnet1d_forward.1']
    #allocation33 [shape = 'u8[512]{0}', space=vmem, size = 0x400, scoped, tag = 'input window, operand 18, single buffered']
    #allocation34 [shape = 'u8[512]{0}', space=vmem, size = 0x400, scoped, tag = 'input window, operand 19, single buffered']
    #allocation35 [shape = 's32[1]{0}', space=sflag, size = 0x4, scoped, tag = 'scoped memory for resnet1d_forward.1']
    #allocation36 [shape = 'u8[1024]{0}', space=vmem, size = 0x400, scoped, tag = 'input window, operand 20, single buffered']
    #allocation37 [shape = 'u8[1024]{0}', space=vmem, size = 0x400, scoped, tag = 'input window, operand 21, single buffered']
    #allocation38 [shape = 's32[1]{0}', space=sflag, size = 0x4, scoped, tag = 'scoped memory for resnet1d_forward.1']
    #allocation39 [shape = 'u8[1024]{0}', space=vmem, size = 0x400, scoped, tag = 'input window, operand 22, single buffered']
    #allocation40 [shape = 'u8[2048]{0}', space=vmem, size = 0x800, scoped, tag = 'input window, operand 23, single buffered']
    #allocation41 [shape = 's32[1]{0}', space=sflag, size = 0x4, scoped, tag = 'scoped memory for resnet1d_forward.1']
    #allocation42 [shape = 'u8[2048]{0}', space=vmem, size = 0x800, scoped, tag = 'input window, operand 24, single buffered']
    #allocation43 [shape = 'u8[2048]{0}', space=vmem, size = 0x800, scoped, tag = 'input window, operand 25, single buffered']
    #allocation44 [shape = 's32[1]{0}', space=sflag, size = 0x4, scoped, tag = 'scoped memory for resnet1d_forward.1']
    %34 = vsyncpa [#allocation9], 0
    %35 = vsyncpa [#allocation11], 0
    %36 = vsyncpa [#allocation14], 0
    %37 = vsyncpa [#allocation17], 0
    %38 = vsyncpa [#allocation20], 0
    %39 = vsyncpa [#allocation23], 0
    %40 = vsyncpa [#allocation26], 0
    %41 = vsyncpa [#allocation29], 0
    %42 = vsyncpa [#allocation32], 0
    %43 = vsyncpa [#allocation35], 0
    %44 = vsyncpa [#allocation38], 0
    %45 = vsyncpa [#allocation41], 0
    %46 = vsyncpa [#allocation44], 0
    loop: start=0, step=1, limit=4
    $region2: #{resnet1d_forward.1} parent=1 // loop_pre_header
      _
    $region3: #{resnet1d_forward.1} parent=1 // loop_header
      %s48 = sphi 0, %s52
      %p49 = scmp.ge.s32.totalorder %s48, 4
      %s58 = sphi 0, %s60
      %s61 = sphi 0, %s58
      %s62 = sphi 0, %s61
      %s78 = sphi 0, %s62
      %s82 = sphi 0, %s82
      %s84 = sphi 0, %s82
      %s85 = sphi 0, %s84
      %s99 = sphi 0, %s85
      %s103 = sphi 0, %s103
      %s105 = sphi 0, %s103
      %s106 = sphi 0, %s105
      %s120 = sphi 0, %s106
      %s124 = sphi 0, %s124
      %s126 = sphi 0, %s124
      %s127 = sphi 0, %s126
      %s141 = sphi 0, %s127
      %s145 = sphi 0, %s145
      %s147 = sphi 0, %s145
      %s148 = sphi 0, %s147
      %s162 = sphi 0, %s148
      %s166 = sphi 0, %s166
      %s168 = sphi 0, %s166
      %s169 = sphi 0, %s168
      %s183 = sphi 0, %s169
      %s187 = sphi 0, %s187
      %s189 = sphi 0, %s187
      %s190 = sphi 0, %s189
      %s204 = sphi 0, %s190
      %s208 = sphi 0, %s208
      %s210 = sphi 0, %s208
      %s211 = sphi 0, %s210
      %s225 = sphi 0, %s211
      %s229 = sphi 0, %s229
      %s231 = sphi 0, %s229
      %s232 = sphi 0, %s231
      %s246 = sphi 0, %s232
      %s250 = sphi 0, %s250
      %s252 = sphi 0, %s250
      %s253 = sphi 0, %s252
      %s267 = sphi 0, %s253
      %s271 = sphi 0, %s271
      %s273 = sphi 0, %s271
      %s274 = sphi 0, %s273
      %s288 = sphi 0, %s274
      %s292 = sphi 0, %s292
      %s294 = sphi 0, %s292
      %s295 = sphi 0, %s294
      %s309 = sphi 0, %s295
      %s313 = sphi 0, %s313
      %s315 = sphi 0, %s313
      %s316 = sphi 0, %s315
      %s330 = sphi 0, %s316
      %s334 = sphi 0, %s334
      %s336 = sphi 0, %s334
      %s337 = sphi 0, %s336
      %s351 = sphi 0, %s337
      %s355 = sphi 0, %s355
      %s357 = sphi 0, %s355
      %s358 = sphi 0, %s357
      %s372 = sphi 0, %s358
      %s376 = sphi 0, %s376
      %s378 = sphi 0, %s376
      %s379 = sphi 0, %s378
      %s393 = sphi 0, %s379
      %s397 = sphi 0, %s397
      %s399 = sphi 0, %s397
      %s400 = sphi 0, %s399
      %s414 = sphi 0, %s400
      %s418 = sphi 0, %s418
      %s420 = sphi 0, %s418
      %s421 = sphi 0, %s420
      %s435 = sphi 0, %s421
      %s439 = sphi 0, %s439
      %s441 = sphi 0, %s439
      %s442 = sphi 0, %s441
      %s456 = sphi 0, %s442
      %s460 = sphi 0, %s460
      %s462 = sphi 0, %s460
      %s463 = sphi 0, %s462
      %s477 = sphi 0, %s463
      %s481 = sphi 0, %s481
      %s483 = sphi 0, %s481
      %s484 = sphi 0, %s483
      %s498 = sphi 0, %s484
      %s502 = sphi 0, %s502
      %s504 = sphi 0, %s502
      %s505 = sphi 0, %s504
      %s519 = sphi 0, %s505
      %s523 = sphi 0, %s523
      %s525 = sphi 0, %s523
      %s526 = sphi 0, %s525
      %s540 = sphi 0, %s526
      %s544 = sphi 0, %s544
      %s546 = sphi 0, %s544
      %s547 = sphi 0, %s546
      %s561 = sphi 0, %s547
      %s565 = sphi 0, %s565
      %s567 = sphi 0, %s565
      %s568 = sphi 0, %s567
      %s582 = sphi 0, %s568
      %s586 = sphi 0, %s586
      %s588 = sphi 0, %s586
      %s589 = sphi 0, %s588
      %s603 = sphi 0, %s589
      %s607 = sphi 0, %s607
      %s609 = sphi 0, %s607
      %s610 = sphi 0, %s609
      %s624 = sphi 0, %s610
      %s630 = sphi 0, %s632
      %s633 = sphi 0, %s630
      %s634 = sphi 0, %s633
      %s650 = sphi 0, %s634
    $region4: #{resnet1d_forward.1} parent=1 // loop_header_branch
      %51 = sbr.rel (%p49) target = $region8
    $region5: #{resnet1d_forward.1} parent=1 // loop_body
      %s53 = ssub.s32 %s48, 1
      %s54 = ssub.s32 %s48, 2
      %s55 = sadd.s32 %s48, 1
      %s56 = ssub.s32 %s48, %s55
      %p57 = scmp.eq.s32.totalorder %s56, 0
      %s59 = sadd.s32 %s58, 1
      %s60 = scalar_select %p57, %s58, %s59
      %p63 = pneg %p57
      %p64 = scmp.eq.s32.totalorder %s48, 1
      %p65 = por %p63, %p64
      %p66 = scmp.ne.s32.totalorder %s58, %s61
      %p67 = scmp.eq.s32.totalorder %s48, 0
      %p68 = por %p66, %p67
      %p69 = scmp.ne.s32.totalorder %s58, %s61
      %p70 = scmp.eq.s32.totalorder %s53, 1
      %p71 = por %p69, %p70
      %p72 = scmp.ne.s32.totalorder %s61, %s62
      %p73 = scmp.eq.s32.totalorder %s53, 0
      %p74 = por %p72, %p73
      %p75 = scmp.ne.s32.totalorder %s61, %s62
      %p76 = scmp.eq.s32.totalorder %s54, 1
      %p77 = por %p75, %p76
      %p79 = scmp.ne.s32.totalorder %s62, %s78
      %p80 = scmp.eq.s32.totalorder %s54, 0
      %p81 = por %p79, %p80
      %s83 = sadd.s32 %s82, 1
      %p86 = scmp.eq.s32.totalorder %s48, 1
      %p87 = scmp.ne.s32.totalorder %s82, %s84
      %p88 = scmp.eq.s32.totalorder %s48, 0
      %p89 = por %p87, %p88
      %p90 = scmp.ne.s32.totalorder %s82, %s84
      %p91 = scmp.eq.s32.totalorder %s53, 1
      %p92 = por %p90, %p91
      %p93 = scmp.ne.s32.totalorder %s84, %s85
      %p94 = scmp.eq.s32.totalorder %s53, 0
      %p95 = por %p93, %p94
      %p96 = scmp.ne.s32.totalorder %s84, %s85
      %p97 = scmp.eq.s32.totalorder %s54, 1
      %p98 = por %p96, %p97
      %p100 = scmp.ne.s32.totalorder %s85, %s99
      %p101 = scmp.eq.s32.totalorder %s54, 0
      %p102 = por %p100, %p101
      %s104 = sadd.s32 %s103, 1
      %p107 = scmp.eq.s32.totalorder %s48, 1
      %p108 = scmp.ne.s32.totalorder %s103, %s105
      %p109 = scmp.eq.s32.totalorder %s48, 0
      %p110 = por %p108, %p109
      %p111 = scmp.ne.s32.totalorder %s103, %s105
      %p112 = scmp.eq.s32.totalorder %s53, 1
      %p113 = por %p111, %p112
      %p114 = scmp.ne.s32.totalorder %s105, %s106
      %p115 = scmp.eq.s32.totalorder %s53, 0
      %p116 = por %p114, %p115
      %p117 = scmp.ne.s32.totalorder %s105, %s106
      %p118 = scmp.eq.s32.totalorder %s54, 1
      %p119 = por %p117, %p118
      %p121 = scmp.ne.s32.totalorder %s106, %s120
      %p122 = scmp.eq.s32.totalorder %s54, 0
      %p123 = por %p121, %p122
      %s125 = sadd.s32 %s124, 1
      %p128 = scmp.eq.s32.totalorder %s48, 1
      %p129 = scmp.ne.s32.totalorder %s124, %s126
      %p130 = scmp.eq.s32.totalorder %s48, 0
      %p131 = por %p129, %p130
      %p132 = scmp.ne.s32.totalorder %s124, %s126
      %p133 = scmp.eq.s32.totalorder %s53, 1
      %p134 = por %p132, %p133
      %p135 = scmp.ne.s32.totalorder %s126, %s127
      %p136 = scmp.eq.s32.totalorder %s53, 0
      %p137 = por %p135, %p136
      %p138 = scmp.ne.s32.totalorder %s126, %s127
      %p139 = scmp.eq.s32.totalorder %s54, 1
      %p140 = por %p138, %p139
      %p142 = scmp.ne.s32.totalorder %s127, %s141
      %p143 = scmp.eq.s32.totalorder %s54, 0
      %p144 = por %p142, %p143
      %s146 = sadd.s32 %s145, 1
      %p149 = scmp.eq.s32.totalorder %s48, 1
      %p150 = scmp.ne.s32.totalorder %s145, %s147
      %p151 = scmp.eq.s32.totalorder %s48, 0
      %p152 = por %p150, %p151
      %p153 = scmp.ne.s32.totalorder %s145, %s147
      %p154 = scmp.eq.s32.totalorder %s53, 1
      %p155 = por %p153, %p154
      %p156 = scmp.ne.s32.totalorder %s147, %s148
      %p157 = scmp.eq.s32.totalorder %s53, 0
      %p158 = por %p156, %p157
      %p159 = scmp.ne.s32.totalorder %s147, %s148
      %p160 = scmp.eq.s32.totalorder %s54, 1
      %p161 = por %p159, %p160
      %p163 = scmp.ne.s32.totalorder %s148, %s162
      %p164 = scmp.eq.s32.totalorder %s54, 0
      %p165 = por %p163, %p164
      %s167 = sadd.s32 %s166, 1
      %p170 = scmp.eq.s32.totalorder %s48, 1
      %p171 = scmp.ne.s32.totalorder %s166, %s168
      %p172 = scmp.eq.s32.totalorder %s48, 0
      %p173 = por %p171, %p172
      %p174 = scmp.ne.s32.totalorder %s166, %s168
      %p175 = scmp.eq.s32.totalorder %s53, 1
      %p176 = por %p174, %p175
      %p177 = scmp.ne.s32.totalorder %s168, %s169
      %p178 = scmp.eq.s32.totalorder %s53, 0
      %p179 = por %p177, %p178
      %p180 = scmp.ne.s32.totalorder %s168, %s169
      %p181 = scmp.eq.s32.totalorder %s54, 1
      %p182 = por %p180, %p181
      %p184 = scmp.ne.s32.totalorder %s169, %s183
      %p185 = scmp.eq.s32.totalorder %s54, 0
      %p186 = por %p184, %p185
      %s188 = sadd.s32 %s187, 1
      %p191 = scmp.eq.s32.totalorder %s48, 1
      %p192 = scmp.ne.s32.totalorder %s187, %s189
      %p193 = scmp.eq.s32.totalorder %s48, 0
      %p194 = por %p192, %p193
      %p195 = scmp.ne.s32.totalorder %s187, %s189
      %p196 = scmp.eq.s32.totalorder %s53, 1
      %p197 = por %p195, %p196
      %p198 = scmp.ne.s32.totalorder %s189, %s190
      %p199 = scmp.eq.s32.totalorder %s53, 0
      %p200 = por %p198, %p199
      %p201 = scmp.ne.s32.totalorder %s189, %s190
      %p202 = scmp.eq.s32.totalorder %s54, 1
      %p203 = por %p201, %p202
      %p205 = scmp.ne.s32.totalorder %s190, %s204
      %p206 = scmp.eq.s32.totalorder %s54, 0
      %p207 = por %p205, %p206
      %s209 = sadd.s32 %s208, 1
      %p212 = scmp.eq.s32.totalorder %s48, 1
      %p213 = scmp.ne.s32.totalorder %s208, %s210
      %p214 = scmp.eq.s32.totalorder %s48, 0
      %p215 = por %p213, %p214
      %p216 = scmp.ne.s32.totalorder %s208, %s210
      %p217 = scmp.eq.s32.totalorder %s53, 1
      %p218 = por %p216, %p217
      %p219 = scmp.ne.s32.totalorder %s210, %s211
      %p220 = scmp.eq.s32.totalorder %s53, 0
      %p221 = por %p219, %p220
      %p222 = scmp.ne.s32.totalorder %s210, %s211
      %p223 = scmp.eq.s32.totalorder %s54, 1
      %p224 = por %p222, %p223
      %p226 = scmp.ne.s32.totalorder %s211, %s225
      %p227 = scmp.eq.s32.totalorder %s54, 0
      %p228 = por %p226, %p227
      %s230 = sadd.s32 %s229, 1
      %p233 = scmp.eq.s32.totalorder %s48, 1
      %p234 = scmp.ne.s32.totalorder %s229, %s231
      %p235 = scmp.eq.s32.totalorder %s48, 0
      %p236 = por %p234, %p235
      %p237 = scmp.ne.s32.totalorder %s229, %s231
      %p238 = scmp.eq.s32.totalorder %s53, 1
      %p239 = por %p237, %p238
      %p240 = scmp.ne.s32.totalorder %s231, %s232
      %p241 = scmp.eq.s32.totalorder %s53, 0
      %p242 = por %p240, %p241
      %p243 = scmp.ne.s32.totalorder %s231, %s232
      %p244 = scmp.eq.s32.totalorder %s54, 1
      %p245 = por %p243, %p244
      %p247 = scmp.ne.s32.totalorder %s232, %s246
      %p248 = scmp.eq.s32.totalorder %s54, 0
      %p249 = por %p247, %p248
      %s251 = sadd.s32 %s250, 1
      %p254 = scmp.eq.s32.totalorder %s48, 1
      %p255 = scmp.ne.s32.totalorder %s250, %s252
      %p256 = scmp.eq.s32.totalorder %s48, 0
      %p257 = por %p255, %p256
      %p258 = scmp.ne.s32.totalorder %s250, %s252
      %p259 = scmp.eq.s32.totalorder %s53, 1
      %p260 = por %p258, %p259
      %p261 = scmp.ne.s32.totalorder %s252, %s253
      %p262 = scmp.eq.s32.totalorder %s53, 0
      %p263 = por %p261, %p262
      %p264 = scmp.ne.s32.totalorder %s252, %s253
      %p265 = scmp.eq.s32.totalorder %s54, 1
      %p266 = por %p264, %p265
      %p268 = scmp.ne.s32.totalorder %s253, %s267
      %p269 = scmp.eq.s32.totalorder %s54, 0
      %p270 = por %p268, %p269
      %s272 = sadd.s32 %s271, 1
      %p275 = scmp.eq.s32.totalorder %s48, 1
      %p276 = scmp.ne.s32.totalorder %s271, %s273
      %p277 = scmp.eq.s32.totalorder %s48, 0
      %p278 = por %p276, %p277
      %p279 = scmp.ne.s32.totalorder %s271, %s273
      %p280 = scmp.eq.s32.totalorder %s53, 1
      %p281 = por %p279, %p280
      %p282 = scmp.ne.s32.totalorder %s273, %s274
      %p283 = scmp.eq.s32.totalorder %s53, 0
      %p284 = por %p282, %p283
      %p285 = scmp.ne.s32.totalorder %s273, %s274
      %p286 = scmp.eq.s32.totalorder %s54, 1
      %p287 = por %p285, %p286
      %p289 = scmp.ne.s32.totalorder %s274, %s288
      %p290 = scmp.eq.s32.totalorder %s54, 0
      %p291 = por %p289, %p290
      %s293 = sadd.s32 %s292, 1
      %p296 = scmp.eq.s32.totalorder %s48, 1
      %p297 = scmp.ne.s32.totalorder %s292, %s294
      %p298 = scmp.eq.s32.totalorder %s48, 0
      %p299 = por %p297, %p298
      %p300 = scmp.ne.s32.totalorder %s292, %s294
      %p301 = scmp.eq.s32.totalorder %s53, 1
      %p302 = por %p300, %p301
      %p303 = scmp.ne.s32.totalorder %s294, %s295
      %p304 = scmp.eq.s32.totalorder %s53, 0
      %p305 = por %p303, %p304
      %p306 = scmp.ne.s32.totalorder %s294, %s295
      %p307 = scmp.eq.s32.totalorder %s54, 1
      %p308 = por %p306, %p307
      %p310 = scmp.ne.s32.totalorder %s295, %s309
      %p311 = scmp.eq.s32.totalorder %s54, 0
      %p312 = por %p310, %p311
      %s314 = sadd.s32 %s313, 1
      %p317 = scmp.eq.s32.totalorder %s48, 1
      %p318 = scmp.ne.s32.totalorder %s313, %s315
      %p319 = scmp.eq.s32.totalorder %s48, 0
      %p320 = por %p318, %p319
      %p321 = scmp.ne.s32.totalorder %s313, %s315
      %p322 = scmp.eq.s32.totalorder %s53, 1
      %p323 = por %p321, %p322
      %p324 = scmp.ne.s32.totalorder %s315, %s316
      %p325 = scmp.eq.s32.totalorder %s53, 0
      %p326 = por %p324, %p325
      %p327 = scmp.ne.s32.totalorder %s315, %s316
      %p328 = scmp.eq.s32.totalorder %s54, 1
      %p329 = por %p327, %p328
      %p331 = scmp.ne.s32.totalorder %s316, %s330
      %p332 = scmp.eq.s32.totalorder %s54, 0
      %p333 = por %p331, %p332
      %s335 = sadd.s32 %s334, 1
      %p338 = scmp.eq.s32.totalorder %s48, 1
      %p339 = scmp.ne.s32.totalorder %s334, %s336
      %p340 = scmp.eq.s32.totalorder %s48, 0
      %p341 = por %p339, %p340
      %p342 = scmp.ne.s32.totalorder %s334, %s336
      %p343 = scmp.eq.s32.totalorder %s53, 1
      %p344 = por %p342, %p343
      %p345 = scmp.ne.s32.totalorder %s336, %s337
      %p346 = scmp.eq.s32.totalorder %s53, 0
      %p347 = por %p345, %p346
      %p348 = scmp.ne.s32.totalorder %s336, %s337
      %p349 = scmp.eq.s32.totalorder %s54, 1
      %p350 = por %p348, %p349
      %p352 = scmp.ne.s32.totalorder %s337, %s351
      %p353 = scmp.eq.s32.totalorder %s54, 0
      %p354 = por %p352, %p353
      %s356 = sadd.s32 %s355, 1
      %p359 = scmp.eq.s32.totalorder %s48, 1
      %p360 = scmp.ne.s32.totalorder %s355, %s357
      %p361 = scmp.eq.s32.totalorder %s48, 0
      %p362 = por %p360, %p361
      %p363 = scmp.ne.s32.totalorder %s355, %s357
      %p364 = scmp.eq.s32.totalorder %s53, 1
      %p365 = por %p363, %p364
      %p366 = scmp.ne.s32.totalorder %s357, %s358
      %p367 = scmp.eq.s32.totalorder %s53, 0
      %p368 = por %p366, %p367
      %p369 = scmp.ne.s32.totalorder %s357, %s358
      %p370 = scmp.eq.s32.totalorder %s54, 1
      %p371 = por %p369, %p370
      %p373 = scmp.ne.s32.totalorder %s358, %s372
      %p374 = scmp.eq.s32.totalorder %s54, 0
      %p375 = por %p373, %p374
      %s377 = sadd.s32 %s376, 1
      %p380 = scmp.eq.s32.totalorder %s48, 1
      %p381 = scmp.ne.s32.totalorder %s376, %s378
      %p382 = scmp.eq.s32.totalorder %s48, 0
      %p383 = por %p381, %p382
      %p384 = scmp.ne.s32.totalorder %s376, %s378
      %p385 = scmp.eq.s32.totalorder %s53, 1
      %p386 = por %p384, %p385
      %p387 = scmp.ne.s32.totalorder %s378, %s379
      %p388 = scmp.eq.s32.totalorder %s53, 0
      %p389 = por %p387, %p388
      %p390 = scmp.ne.s32.totalorder %s378, %s379
      %p391 = scmp.eq.s32.totalorder %s54, 1
      %p392 = por %p390, %p391
      %p394 = scmp.ne.s32.totalorder %s379, %s393
      %p395 = scmp.eq.s32.totalorder %s54, 0
      %p396 = por %p394, %p395
      %s398 = sadd.s32 %s397, 1
      %p401 = scmp.eq.s32.totalorder %s48, 1
      %p402 = scmp.ne.s32.totalorder %s397, %s399
      %p403 = scmp.eq.s32.totalorder %s48, 0
      %p404 = por %p402, %p403
      %p405 = scmp.ne.s32.totalorder %s397, %s399
      %p406 = scmp.eq.s32.totalorder %s53, 1
      %p407 = por %p405, %p406
      %p408 = scmp.ne.s32.totalorder %s399, %s400
      %p409 = scmp.eq.s32.totalorder %s53, 0
      %p410 = por %p408, %p409
      %p411 = scmp.ne.s32.totalorder %s399, %s400
      %p412 = scmp.eq.s32.totalorder %s54, 1
      %p413 = por %p411, %p412
      %p415 = scmp.ne.s32.totalorder %s400, %s414
      %p416 = scmp.eq.s32.totalorder %s54, 0
      %p417 = por %p415, %p416
      %s419 = sadd.s32 %s418, 1
      %p422 = scmp.eq.s32.totalorder %s48, 1
      %p423 = scmp.ne.s32.totalorder %s418, %s420
      %p424 = scmp.eq.s32.totalorder %s48, 0
      %p425 = por %p423, %p424
      %p426 = scmp.ne.s32.totalorder %s418, %s420
      %p427 = scmp.eq.s32.totalorder %s53, 1
      %p428 = por %p426, %p427
      %p429 = scmp.ne.s32.totalorder %s420, %s421
      %p430 = scmp.eq.s32.totalorder %s53, 0
      %p431 = por %p429, %p430
      %p432 = scmp.ne.s32.totalorder %s420, %s421
      %p433 = scmp.eq.s32.totalorder %s54, 1
      %p434 = por %p432, %p433
      %p436 = scmp.ne.s32.totalorder %s421, %s435
      %p437 = scmp.eq.s32.totalorder %s54, 0
      %p438 = por %p436, %p437
      %s440 = sadd.s32 %s439, 1
      %p443 = scmp.eq.s32.totalorder %s48, 1
      %p444 = scmp.ne.s32.totalorder %s439, %s441
      %p445 = scmp.eq.s32.totalorder %s48, 0
      %p446 = por %p444, %p445
      %p447 = scmp.ne.s32.totalorder %s439, %s441
      %p448 = scmp.eq.s32.totalorder %s53, 1
      %p449 = por %p447, %p448
      %p450 = scmp.ne.s32.totalorder %s441, %s442
      %p451 = scmp.eq.s32.totalorder %s53, 0
      %p452 = por %p450, %p451
      %p453 = scmp.ne.s32.totalorder %s441, %s442
      %p454 = scmp.eq.s32.totalorder %s54, 1
      %p455 = por %p453, %p454
      %p457 = scmp.ne.s32.totalorder %s442, %s456
      %p458 = scmp.eq.s32.totalorder %s54, 0
      %p459 = por %p457, %p458
      %s461 = sadd.s32 %s460, 1
      %p464 = scmp.eq.s32.totalorder %s48, 1
      %p465 = scmp.ne.s32.totalorder %s460, %s462
      %p466 = scmp.eq.s32.totalorder %s48, 0
      %p467 = por %p465, %p466
      %p468 = scmp.ne.s32.totalorder %s460, %s462
      %p469 = scmp.eq.s32.totalorder %s53, 1
      %p470 = por %p468, %p469
      %p471 = scmp.ne.s32.totalorder %s462, %s463
      %p472 = scmp.eq.s32.totalorder %s53, 0
      %p473 = por %p471, %p472
      %p474 = scmp.ne.s32.totalorder %s462, %s463
      %p475 = scmp.eq.s32.totalorder %s54, 1
      %p476 = por %p474, %p475
      %p478 = scmp.ne.s32.totalorder %s463, %s477
      %p479 = scmp.eq.s32.totalorder %s54, 0
      %p480 = por %p478, %p479
      %s482 = sadd.s32 %s481, 1
      %p485 = scmp.eq.s32.totalorder %s48, 1
      %p486 = scmp.ne.s32.totalorder %s481, %s483
      %p487 = scmp.eq.s32.totalorder %s48, 0
      %p488 = por %p486, %p487
      %p489 = scmp.ne.s32.totalorder %s481, %s483
      %p490 = scmp.eq.s32.totalorder %s53, 1
      %p491 = por %p489, %p490
      %p492 = scmp.ne.s32.totalorder %s483, %s484
      %p493 = scmp.eq.s32.totalorder %s53, 0
      %p494 = por %p492, %p493
      %p495 = scmp.ne.s32.totalorder %s483, %s484
      %p496 = scmp.eq.s32.totalorder %s54, 1
      %p497 = por %p495, %p496
      %p499 = scmp.ne.s32.totalorder %s484, %s498
      %p500 = scmp.eq.s32.totalorder %s54, 0
      %p501 = por %p499, %p500
      %s503 = sadd.s32 %s502, 1
      %p506 = scmp.eq.s32.totalorder %s48, 1
      %p507 = scmp.ne.s32.totalorder %s502, %s504
      %p508 = scmp.eq.s32.totalorder %s48, 0
      %p509 = por %p507, %p508
      %p510 = scmp.ne.s32.totalorder %s502, %s504
      %p511 = scmp.eq.s32.totalorder %s53, 1
      %p512 = por %p510, %p511
      %p513 = scmp.ne.s32.totalorder %s504, %s505
      %p514 = scmp.eq.s32.totalorder %s53, 0
      %p515 = por %p513, %p514
      %p516 = scmp.ne.s32.totalorder %s504, %s505
      %p517 = scmp.eq.s32.totalorder %s54, 1
      %p518 = por %p516, %p517
      %p520 = scmp.ne.s32.totalorder %s505, %s519
      %p521 = scmp.eq.s32.totalorder %s54, 0
      %p522 = por %p520, %p521
      %s524 = sadd.s32 %s523, 1
      %p527 = scmp.eq.s32.totalorder %s48, 1
      %p528 = scmp.ne.s32.totalorder %s523, %s525
      %p529 = scmp.eq.s32.totalorder %s48, 0
      %p530 = por %p528, %p529
      %p531 = scmp.ne.s32.totalorder %s523, %s525
      %p532 = scmp.eq.s32.totalorder %s53, 1
      %p533 = por %p531, %p532
      %p534 = scmp.ne.s32.totalorder %s525, %s526
      %p535 = scmp.eq.s32.totalorder %s53, 0
      %p536 = por %p534, %p535
      %p537 = scmp.ne.s32.totalorder %s525, %s526
      %p538 = scmp.eq.s32.totalorder %s54, 1
      %p539 = por %p537, %p538
      %p541 = scmp.ne.s32.totalorder %s526, %s540
      %p542 = scmp.eq.s32.totalorder %s54, 0
      %p543 = por %p541, %p542
      %s545 = sadd.s32 %s544, 1
      %p548 = scmp.eq.s32.totalorder %s48, 1
      %p549 = scmp.ne.s32.totalorder %s544, %s546
      %p550 = scmp.eq.s32.totalorder %s48, 0
      %p551 = por %p549, %p550
      %p552 = scmp.ne.s32.totalorder %s544, %s546
      %p553 = scmp.eq.s32.totalorder %s53, 1
      %p554 = por %p552, %p553
      %p555 = scmp.ne.s32.totalorder %s546, %s547
      %p556 = scmp.eq.s32.totalorder %s53, 0
      %p557 = por %p555, %p556
      %p558 = scmp.ne.s32.totalorder %s546, %s547
      %p559 = scmp.eq.s32.totalorder %s54, 1
      %p560 = por %p558, %p559
      %p562 = scmp.ne.s32.totalorder %s547, %s561
      %p563 = scmp.eq.s32.totalorder %s54, 0
      %p564 = por %p562, %p563
      %s566 = sadd.s32 %s565, 1
      %p569 = scmp.eq.s32.totalorder %s48, 1
      %p570 = scmp.ne.s32.totalorder %s565, %s567
      %p571 = scmp.eq.s32.totalorder %s48, 0
      %p572 = por %p570, %p571
      %p573 = scmp.ne.s32.totalorder %s565, %s567
      %p574 = scmp.eq.s32.totalorder %s53, 1
      %p575 = por %p573, %p574
      %p576 = scmp.ne.s32.totalorder %s567, %s568
      %p577 = scmp.eq.s32.totalorder %s53, 0
      %p578 = por %p576, %p577
      %p579 = scmp.ne.s32.totalorder %s567, %s568
      %p580 = scmp.eq.s32.totalorder %s54, 1
      %p581 = por %p579, %p580
      %p583 = scmp.ne.s32.totalorder %s568, %s582
      %p584 = scmp.eq.s32.totalorder %s54, 0
      %p585 = por %p583, %p584
      %s587 = sadd.s32 %s586, 1
      %p590 = scmp.eq.s32.totalorder %s48, 1
      %p591 = scmp.ne.s32.totalorder %s586, %s588
      %p592 = scmp.eq.s32.totalorder %s48, 0
      %p593 = por %p591, %p592
      %p594 = scmp.ne.s32.totalorder %s586, %s588
      %p595 = scmp.eq.s32.totalorder %s53, 1
      %p596 = por %p594, %p595
      %p597 = scmp.ne.s32.totalorder %s588, %s589
      %p598 = scmp.eq.s32.totalorder %s53, 0
      %p599 = por %p597, %p598
      %p600 = scmp.ne.s32.totalorder %s588, %s589
      %p601 = scmp.eq.s32.totalorder %s54, 1
      %p602 = por %p600, %p601
      %p604 = scmp.ne.s32.totalorder %s589, %s603
      %p605 = scmp.eq.s32.totalorder %s54, 0
      %p606 = por %p604, %p605
      %s608 = sadd.s32 %s607, 1
      %p611 = scmp.eq.s32.totalorder %s48, 1
      %p612 = scmp.ne.s32.totalorder %s607, %s609
      %p613 = scmp.eq.s32.totalorder %s48, 0
      %p614 = por %p612, %p613
      %p615 = scmp.ne.s32.totalorder %s607, %s609
      %p616 = scmp.eq.s32.totalorder %s53, 1
      %p617 = por %p615, %p616
      %p618 = scmp.ne.s32.totalorder %s609, %s610
      %p619 = scmp.eq.s32.totalorder %s53, 0
      %p620 = por %p618, %p619
      %p621 = scmp.ne.s32.totalorder %s609, %s610
      %p622 = scmp.eq.s32.totalorder %s54, 1
      %p623 = por %p621, %p622
      %p625 = scmp.ne.s32.totalorder %s610, %s624
      %p626 = scmp.eq.s32.totalorder %s54, 0
      %p627 = por %p625, %p626
      %s628 = ssub.s32 %s48, %s55
      %p629 = scmp.eq.s32.totalorder %s628, 0
      %s631 = sadd.s32 %s630, 1
      %s632 = scalar_select %p629, %s630, %s631
      %p635 = pneg %p629
      %p636 = scmp.eq.s32.totalorder %s48, 1
      %p637 = por %p635, %p636
      %p638 = scmp.ne.s32.totalorder %s630, %s633
      %p639 = scmp.eq.s32.totalorder %s48, 0
      %p640 = por %p638, %p639
      %p641 = scmp.ne.s32.totalorder %s630, %s633
      %p642 = scmp.eq.s32.totalorder %s53, 1
      %p643 = por %p641, %p642
      %p644 = scmp.ne.s32.totalorder %s633, %s634
      %p645 = scmp.eq.s32.totalorder %s53, 0
      %p646 = por %p644, %p645
      %p647 = scmp.ne.s32.totalorder %s633, %s634
      %p648 = scmp.eq.s32.totalorder %s54, 1
      %p649 = por %p647, %p648
      %p651 = scmp.ne.s32.totalorder %s634, %s650
      %p652 = scmp.eq.s32.totalorder %s54, 0
      %p653 = por %p651, %p652
      %p654 = scmp.le.s32.totalorder 1, %s48
      %p655 = scmp.lt.s32.totalorder %s48, 3
      %p656 = pnand %p654, %p655
      %p657 = pneg %p656
      // Predicated region
      $region9: #{resnet1d_forward.1} parent=5 // pred_check
        _
      $region10: #{resnet1d_forward.1} parent=5 // pred_check_branch
        %659 = sbr.rel (%p656) target = $region12
      $region11: #{resnet1d_forward.1} parent=5 // pred_region
        %s660 = ssub.s32 %s48, 1
        // Predicated region
        $region13: #{resnet1d_forward.1} parent=11 // pred_check
          %p661 = pneg %p95
        $region14: #{resnet1d_forward.1} parent=11 // pred_check_branch
          %663 = sbr.rel (%p661) target = $region16
        $region15: #{resnet1d_forward.1} parent=11 // pred_region
          %s665 = ssub.s32 224, 224
          %666 = vsyncadd [#allocation9], %s665
          %s667 = sshll.u32 [#allocation8], 4
          %s668 = int_to_ptr.vmem [resolvable:$true] %s667
          %673 = dma.hbm_to_vmem [thread:$0]  %s1, 224, %s668, [#allocation9], 32, 32, 2
        $region16: #{resnet1d_forward.1} parent=11 // pred_fallthru
          _
        // Predicated region
        $region17: #{resnet1d_forward.1} parent=11 // pred_check
          %p674 = pneg %p116
        $region18: #{resnet1d_forward.1} parent=11 // pred_check_branch
          %676 = sbr.rel (%p674) target = $region20
        $region19: #{resnet1d_forward.1} parent=11 // pred_region
          %s678 = ssub.s32 1536, 1536
          %679 = vsyncadd [#allocation11], %s678
          %s680 = sshll.u32 [#allocation10], 4
          %s681 = int_to_ptr.vmem [resolvable:$true] %s680
          %686 = dma.hbm_to_vmem [thread:$0]  %s2, 1536, %s681, [#allocation11], 64, 64, 4
        $region20: #{resnet1d_forward.1} parent=11 // pred_fallthru
          _
        // Predicated region
        $region21: #{resnet1d_forward.1} parent=11 // pred_check
          %p687 = pneg %p137
        $region22: #{resnet1d_forward.1} parent=11 // pred_check_branch
          %689 = sbr.rel (%p687) target = $region24
        $region23: #{resnet1d_forward.1} parent=11 // pred_region
          %s691 = ssub.s32 1536, 1536
          %692 = vsyncadd [#allocation11], %s691
          %s693 = sshll.u32 [#allocation12], 4
          %s694 = int_to_ptr.vmem [resolvable:$true] %s693
          %699 = dma.hbm_to_vmem [thread:$0]  %s3, 1536, %s694, [#allocation11], 64, 64, 4
        $region24: #{resnet1d_forward.1} parent=11 // pred_fallthru
          _
        // Predicated region
        $region25: #{resnet1d_forward.1} parent=11 // pred_check
          %p700 = pneg %p158
        $region26: #{resnet1d_forward.1} parent=11 // pred_check_branch
          %702 = sbr.rel (%p700) target = $region28
        $region27: #{resnet1d_forward.1} parent=11 // pred_region
          %s704 = ssub.s32 1536, 1536
          %705 = vsyncadd [#allocation14], %s704
          %s706 = sshll.u32 [#allocation13], 4
          %s707 = int_to_ptr.vmem [resolvable:$true] %s706
          %712 = dma.hbm_to_vmem [thread:$0]  %s4, 1536, %s707, [#allocation14], 64, 64, 4
        $region28: #{resnet1d_forward.1} parent=11 // pred_fallthru
          _
        // Predicated region
        $region29: #{resnet1d_forward.1} parent=11 // pred_check
          %p713 = pneg %p179
        $region30: #{resnet1d_forward.1} parent=11 // pred_check_branch
          %715 = sbr.rel (%p713) target = $region32
        $region31: #{resnet1d_forward.1} parent=11 // pred_region
          %s717 = ssub.s32 512, 512
          %718 = vsyncadd [#allocation14], %s717
          %s719 = sshll.u32 [#allocation15], 4
          %s720 = int_to_ptr.vmem [resolvable:$true] %s719
          %725 = dma.hbm_to_vmem [thread:$0]  %s5, 512, %s720, [#allocation14], 64, 64, 4
        $region32: #{resnet1d_forward.1} parent=11 // pred_fallthru
          _
        // Predicated region
        $region33: #{resnet1d_forward.1} parent=11 // pred_check
          %p726 = pneg %p200
        $region34: #{resnet1d_forward.1} parent=11 // pred_check_branch
          %728 = sbr.rel (%p726) target = $region36
        $region35: #{resnet1d_forward.1} parent=11 // pred_region
          %s730 = ssub.s32 3072, 3072
          %731 = vsyncadd [#allocation17], %s730
          %s732 = sshll.u32 [#allocation16], 4
          %s733 = int_to_ptr.vmem [resolvable:$true] %s732
          %738 = dma.hbm_to_vmem [thread:$0]  %s6, 3072, %s733, [#allocation17], 64, 64, 4
        $region36: #{resnet1d_forward.1} parent=11 // pred_fallthru
          _
        // Predicated region
        $region37: #{resnet1d_forward.1} parent=11 // pred_check
          %p739 = pneg %p221
        $region38: #{resnet1d_forward.1} parent=11 // pred_check_branch
          %741 = sbr.rel (%p739) target = $region40
        $region39: #{resnet1d_forward.1} parent=11 // pred_region
          %s743 = ssub.s32 6144, 6144
          %744 = vsyncadd [#allocation17], %s743
          %s745 = sshll.u32 [#allocation18], 4
          %s746 = int_to_ptr.vmem [resolvable:$true] %s745
          %751 = dma.hbm_to_vmem [thread:$0]  %s7, 6144, %s746, [#allocation17], 128, 128, 8
        $region40: #{resnet1d_forward.1} parent=11 // pred_fallthru
          _
        // Predicated region
        $region41: #{resnet1d_forward.1} parent=11 // pred_check
          %p752 = pneg %p242
        $region42: #{resnet1d_forward.1} parent=11 // pred_check_branch
          %754 = sbr.rel (%p752) target = $region44
        $region43: #{resnet1d_forward.1} parent=11 // pred_region
          %s756 = ssub.s32 2048, 2048
          %757 = vsyncadd [#allocation20], %s756
          %s758 = sshll.u32 [#allocation19], 4
          %s759 = int_to_ptr.vmem [resolvable:$true] %s758
          %764 = dma.hbm_to_vmem [thread:$0]  %s8, 2048, %s759, [#allocation20], 128, 128, 8
        $region44: #{resnet1d_forward.1} parent=11 // pred_fallthru
          _
        // Predicated region
        $region45: #{resnet1d_forward.1} parent=11 // pred_check
          %p765 = pneg %p263
        $region46: #{resnet1d_forward.1} parent=11 // pred_check_branch
          %767 = sbr.rel (%p765) target = $region48
        $region47: #{resnet1d_forward.1} parent=11 // pred_region
          %s769 = ssub.s32 12288, 12288
          %770 = vsyncadd [#allocation20], %s769
          %s771 = sshll.u32 [#allocation21], 4
          %s772 = int_to_ptr.vmem [resolvable:$true] %s771
          %777 = dma.hbm_to_vmem [thread:$0]  %s9, 12288, %s772, [#allocation20], 128, 128, 8
        $region48: #{resnet1d_forward.1} parent=11 // pred_fallthru
          _
        // Predicated region
        $region49: #{resnet1d_forward.1} parent=11 // pred_check
          %p778 = pneg %p284
        $region50: #{resnet1d_forward.1} parent=11 // pred_check_branch
          %780 = sbr.rel (%p778) target = $region52
        $region51: #{resnet1d_forward.1} parent=11 // pred_region
          %s782 = ssub.s32 24576, 24576
          %783 = vsyncadd [#allocation23], %s782
          %s784 = sshll.u32 [#allocation22], 4
          %s785 = int_to_ptr.vmem [resolvable:$true] %s784
          %790 = dma.hbm_to_vmem [thread:$0]  %s10, 24576, %s785, [#allocation23], 256, 256, 16
        $region52: #{resnet1d_forward.1} parent=11 // pred_fallthru
          _
        // Predicated region
        $region53: #{resnet1d_forward.1} parent=11 // pred_check
          %p791 = pneg %p305
        $region54: #{resnet1d_forward.1} parent=11 // pred_check_branch
          %793 = sbr.rel (%p791) target = $region56
        $region55: #{resnet1d_forward.1} parent=11 // pred_region
          %s795 = ssub.s32 8192, 8192
          %796 = vsyncadd [#allocation23], %s795
          %s797 = sshll.u32 [#allocation24], 4
          %s798 = int_to_ptr.vmem [resolvable:$true] %s797
          %803 = dma.hbm_to_vmem [thread:$0]  %s11, 8192, %s798, [#allocation23], 256, 256, 16
        $region56: #{resnet1d_forward.1} parent=11 // pred_fallthru
          _
        // Predicated region
        $region57: #{resnet1d_forward.1} parent=11 // pred_check
          %p804 = pneg %p326
        $region58: #{resnet1d_forward.1} parent=11 // pred_check_branch
          %806 = sbr.rel (%p804) target = $region60
        $region59: #{resnet1d_forward.1} parent=11 // pred_region
          %s808 = ssub.s32 49152, 49152
          %809 = vsyncadd [#allocation26], %s808
          %s810 = sshll.u32 [#allocation25], 4
          %s811 = int_to_ptr.vmem [resolvable:$true] %s810
          %816 = dma.hbm_to_vmem [thread:$0]  %s12, 49152, %s811, [#allocation26], 256, 256, 16
        $region60: #{resnet1d_forward.1} parent=11 // pred_fallthru
          _
        // Predicated region
        $region61: #{resnet1d_forward.1} parent=11 // pred_check
          %p817 = pneg %p347
        $region62: #{resnet1d_forward.1} parent=11 // pred_check_branch
          %819 = sbr.rel (%p817) target = $region64
        $region63: #{resnet1d_forward.1} parent=11 // pred_region
          _
        $region64: #{resnet1d_forward.1} parent=11 // pred_fallthru
          _
        // Predicated region
        $region65: #{resnet1d_forward.1} parent=11 // pred_check
          %p820 = pneg %p368
        $region66: #{resnet1d_forward.1} parent=11 // pred_check_branch
          %822 = sbr.rel (%p820) target = $region68
        $region67: #{resnet1d_forward.1} parent=11 // pred_region
          %s824 = ssub.s32 16, 16
          %825 = vsyncadd [#allocation26], %s824
          %s827 = sshll.u32 [#allocation27], 4
          %s828 = int_to_ptr.vmem [resolvable:$true] %s827
          %830 = dma.hbm_to_vmem [thread:$0]  %s14, 16, %s828, [#allocation26]
        $region68: #{resnet1d_forward.1} parent=11 // pred_fallthru
          _
        // Predicated region
        $region69: #{resnet1d_forward.1} parent=11 // pred_check
          %p831 = pneg %p389
        $region70: #{resnet1d_forward.1} parent=11 // pred_check_branch
          %833 = sbr.rel (%p831) target = $region72
        $region71: #{resnet1d_forward.1} parent=11 // pred_region
          %s835 = ssub.s32 16, 16
          %836 = vsyncadd [#allocation29], %s835
          %s838 = sshll.u32 [#allocation28], 4
          %s839 = int_to_ptr.vmem [resolvable:$true] %s838
          %841 = dma.hbm_to_vmem [thread:$0]  %s15, 16, %s839, [#allocation29]
        $region72: #{resnet1d_forward.1} parent=11 // pred_fallthru
          _
        // Predicated region
        $region73: #{resnet1d_forward.1} parent=11 // pred_check
          %p842 = pneg %p410
        $region74: #{resnet1d_forward.1} parent=11 // pred_check_branch
          %844 = sbr.rel (%p842) target = $region76
        $region75: #{resnet1d_forward.1} parent=11 // pred_region
          %s846 = ssub.s32 16, 16
          %847 = vsyncadd [#allocation29], %s846
          %s849 = sshll.u32 [#allocation30], 4
          %s850 = int_to_ptr.vmem [resolvable:$true] %s849
          %852 = dma.hbm_to_vmem [thread:$0]  %s16, 16, %s850, [#allocation29]
        $region76: #{resnet1d_forward.1} parent=11 // pred_fallthru
          _
        // Predicated region
        $region77: #{resnet1d_forward.1} parent=11 // pred_check
          %p853 = pneg %p431
        $region78: #{resnet1d_forward.1} parent=11 // pred_check_branch
          %855 = sbr.rel (%p853) target = $region80
        $region79: #{resnet1d_forward.1} parent=11 // pred_region
          %s857 = ssub.s32 16, 16
          %858 = vsyncadd [#allocation32], %s857
          %s860 = sshll.u32 [#allocation31], 4
          %s861 = int_to_ptr.vmem [resolvable:$true] %s860
          %863 = dma.hbm_to_vmem [thread:$0]  %s17, 16, %s861, [#allocation32]
        $region80: #{resnet1d_forward.1} parent=11 // pred_fallthru
          _
        // Predicated region
        $region81: #{resnet1d_forward.1} parent=11 // pred_check
          %p864 = pneg %p452
        $region82: #{resnet1d_forward.1} parent=11 // pred_check_branch
          %866 = sbr.rel (%p864) target = $region84
        $region83: #{resnet1d_forward.1} parent=11 // pred_region
          %s868 = ssub.s32 16, 16
          %869 = vsyncadd [#allocation32], %s868
          %s871 = sshll.u32 [#allocation33], 4
          %s872 = int_to_ptr.vmem [resolvable:$true] %s871
          %874 = dma.hbm_to_vmem [thread:$0]  %s18, 16, %s872, [#allocation32]
        $region84: #{resnet1d_forward.1} parent=11 // pred_fallthru
          _
        // Predicated region
        $region85: #{resnet1d_forward.1} parent=11 // pred_check
          %p875 = pneg %p473
        $region86: #{resnet1d_forward.1} parent=11 // pred_check_branch
          %877 = sbr.rel (%p875) target = $region88
        $region87: #{resnet1d_forward.1} parent=11 // pred_region
          %s879 = ssub.s32 16, 16
          %880 = vsyncadd [#allocation35], %s879
          %s882 = sshll.u32 [#allocation34], 4
          %s883 = int_to_ptr.vmem [resolvable:$true] %s882
          %885 = dma.hbm_to_vmem [thread:$0]  %s19, 16, %s883, [#allocation35]
        $region88: #{resnet1d_forward.1} parent=11 // pred_fallthru
          _
        // Predicated region
        $region89: #{resnet1d_forward.1} parent=11 // pred_check
          %p886 = pneg %p494
        $region90: #{resnet1d_forward.1} parent=11 // pred_check_branch
          %888 = sbr.rel (%p886) target = $region92
        $region91: #{resnet1d_forward.1} parent=11 // pred_region
          %s890 = ssub.s32 32, 32
          %891 = vsyncadd [#allocation35], %s890
          %s893 = sshll.u32 [#allocation36], 4
          %s894 = int_to_ptr.vmem [resolvable:$true] %s893
          %896 = dma.hbm_to_vmem [thread:$0]  %s20, 32, %s894, [#allocation35]
        $region92: #{resnet1d_forward.1} parent=11 // pred_fallthru
          _
        // Predicated region
        $region93: #{resnet1d_forward.1} parent=11 // pred_check
          %p897 = pneg %p515
        $region94: #{resnet1d_forward.1} parent=11 // pred_check_branch
          %899 = sbr.rel (%p897) target = $region96
        $region95: #{resnet1d_forward.1} parent=11 // pred_region
          %s901 = ssub.s32 32, 32
          %902 = vsyncadd [#allocation38], %s901
          %s904 = sshll.u32 [#allocation37], 4
          %s905 = int_to_ptr.vmem [resolvable:$true] %s904
          %907 = dma.hbm_to_vmem [thread:$0]  %s21, 32, %s905, [#allocation38]
        $region96: #{resnet1d_forward.1} parent=11 // pred_fallthru
          _
        // Predicated region
        $region97: #{resnet1d_forward.1} parent=11 // pred_check
          %p908 = pneg %p536
        $region98: #{resnet1d_forward.1} parent=11 // pred_check_branch
          %910 = sbr.rel (%p908) target = $region100
        $region99: #{resnet1d_forward.1} parent=11 // pred_region
          %s912 = ssub.s32 32, 32
          %913 = vsyncadd [#allocation38], %s912
          %s915 = sshll.u32 [#allocation39], 4
          %s916 = int_to_ptr.vmem [resolvable:$true] %s915
          %918 = dma.hbm_to_vmem [thread:$0]  %s22, 32, %s916, [#allocation38]
        $region100: #{resnet1d_forward.1} parent=11 // pred_fallthru
          _
        // Predicated region
        $region101: #{resnet1d_forward.1} parent=11 // pred_check
          %p919 = pneg %p557
        $region102: #{resnet1d_forward.1} parent=11 // pred_check_branch
          %921 = sbr.rel (%p919) target = $region104
        $region103: #{resnet1d_forward.1} parent=11 // pred_region
          %s923 = ssub.s32 64, 64
          %924 = vsyncadd [#allocation41], %s923
          %s926 = sshll.u32 [#allocation40], 4
          %s927 = int_to_ptr.vmem [resolvable:$true] %s926
          %929 = dma.hbm_to_vmem [thread:$0]  %s23, 64, %s927, [#allocation41]
        $region104: #{resnet1d_forward.1} parent=11 // pred_fallthru
          _
        // Predicated region
        $region105: #{resnet1d_forward.1} parent=11 // pred_check
          %p930 = pneg %p578
        $region106: #{resnet1d_forward.1} parent=11 // pred_check_branch
          %932 = sbr.rel (%p930) target = $region108
        $region107: #{resnet1d_forward.1} parent=11 // pred_region
          %s934 = ssub.s32 64, 64
          %935 = vsyncadd [#allocation41], %s934
          %s937 = sshll.u32 [#allocation42], 4
          %s938 = int_to_ptr.vmem [resolvable:$true] %s937
          %940 = dma.hbm_to_vmem [thread:$0]  %s24, 64, %s938, [#allocation41]
        $region108: #{resnet1d_forward.1} parent=11 // pred_fallthru
          _
        // Predicated region
        $region109: #{resnet1d_forward.1} parent=11 // pred_check
          %p941 = pneg %p599
        $region110: #{resnet1d_forward.1} parent=11 // pred_check_branch
          %943 = sbr.rel (%p941) target = $region112
        $region111: #{resnet1d_forward.1} parent=11 // pred_region
          %s945 = ssub.s32 64, 64
          %946 = vsyncadd [#allocation44], %s945
          %s948 = sshll.u32 [#allocation43], 4
          %s949 = int_to_ptr.vmem [resolvable:$true] %s948
          %951 = dma.hbm_to_vmem [thread:$0]  %s25, 64, %s949, [#allocation44]
        $region112: #{resnet1d_forward.1} parent=11 // pred_fallthru
          _
        // Predicated region
        $region113: #{resnet1d_forward.1} parent=11 // pred_check
          %p952 = pneg %p620
        $region114: #{resnet1d_forward.1} parent=11 // pred_check_branch
          %954 = sbr.rel (%p952) target = $region116
        $region115: #{resnet1d_forward.1} parent=11 // pred_region
          _
        $region116: #{resnet1d_forward.1} parent=11 // pred_fallthru
          _
      $region12: #{resnet1d_forward.1} parent=5 // pred_fallthru
        _
      %p955 = scmp.lt.s32.totalorder %s48, 2
      // Predicated region
      $region117: #{resnet1d_forward.1} parent=5 // pred_check
        %p956 = pneg %p955
      $region118: #{resnet1d_forward.1} parent=5 // pred_check_branch
        %958 = sbr.rel (%p956) target = $region120
      $region119: #{resnet1d_forward.1} parent=5 // pred_region
        // Predicated region
        $region121: #{resnet1d_forward.1} parent=119 // pred_check
          %p959 = pneg %p68
        $region122: #{resnet1d_forward.1} parent=119 // pred_check_branch
          %961 = sbr.rel (%p959) target = $region124
        $region123: #{resnet1d_forward.1} parent=119 // pred_region
          %p962 = scmp.lt.s32.totalorder %s48, 1
          %s963 = scalar_select %p962, %s48, 1
          %s964 = smul.addr %s963, 9
          %s965 = smul.addr %s964, 8
          %s966 = scalar_lea.vmem %s0, %s965
        $region124: #{resnet1d_forward.1} parent=119 // pred_fallthru
          _
      $region120: #{resnet1d_forward.1} parent=5 // pred_fallthru
        _
      %p967 = scmp.le.s32.totalorder 1, %s48
      %p968 = scmp.lt.s32.totalorder %s48, 3
      %p969 = pnand %p967, %p968
      %p970 = pneg %p969
      // Predicated region
      $region125: #{resnet1d_forward.1} parent=5 // pred_check
        _
      $region126: #{resnet1d_forward.1} parent=5 // pred_check_branch
        %972 = sbr.rel (%p969) target = $region128
      $region127: #{resnet1d_forward.1} parent=5 // pred_region
        %s973 = ssub.s32 %s48, 1
        // Predicated region
        $region129: #{resnet1d_forward.1} parent=127 // pred_check
          %p974 = pneg %p95
        $region130: #{resnet1d_forward.1} parent=127 // pred_check_branch
          %976 = sbr.rel (%p974) target = $region132
        $region131: #{resnet1d_forward.1} parent=127 // pred_region
          %977 = dma.done [#allocation9], 224
        $region132: #{resnet1d_forward.1} parent=127 // pred_fallthru
          _
        // Predicated region
        $region133: #{resnet1d_forward.1} parent=127 // pred_check
          %p978 = pneg %p116
        $region134: #{resnet1d_forward.1} parent=127 // pred_check_branch
          %980 = sbr.rel (%p978) target = $region136
        $region135: #{resnet1d_forward.1} parent=127 // pred_region
          %981 = dma.done [#allocation11], 1536
        $region136: #{resnet1d_forward.1} parent=127 // pred_fallthru
          _
        // Predicated region
        $region137: #{resnet1d_forward.1} parent=127 // pred_check
          %p982 = pneg %p137
        $region138: #{resnet1d_forward.1} parent=127 // pred_check_branch
          %984 = sbr.rel (%p982) target = $region140
        $region139: #{resnet1d_forward.1} parent=127 // pred_region
          %985 = dma.done [#allocation11], 1536
        $region140: #{resnet1d_forward.1} parent=127 // pred_fallthru
          _
        // Predicated region
        $region141: #{resnet1d_forward.1} parent=127 // pred_check
          %p986 = pneg %p158
        $region142: #{resnet1d_forward.1} parent=127 // pred_check_branch
          %988 = sbr.rel (%p986) target = $region144
        $region143: #{resnet1d_forward.1} parent=127 // pred_region
          %989 = dma.done [#allocation14], 1536
        $region144: #{resnet1d_forward.1} parent=127 // pred_fallthru
          _
        // Predicated region
        $region145: #{resnet1d_forward.1} parent=127 // pred_check
          %p990 = pneg %p179
        $region146: #{resnet1d_forward.1} parent=127 // pred_check_branch
          %992 = sbr.rel (%p990) target = $region148
        $region147: #{resnet1d_forward.1} parent=127 // pred_region
          %993 = dma.done [#allocation14], 512
        $region148: #{resnet1d_forward.1} parent=127 // pred_fallthru
          _
        // Predicated region
        $region149: #{resnet1d_forward.1} parent=127 // pred_check
          %p994 = pneg %p200
        $region150: #{resnet1d_forward.1} parent=127 // pred_check_branch
          %996 = sbr.rel (%p994) target = $region152
        $region151: #{resnet1d_forward.1} parent=127 // pred_region
          %997 = dma.done [#allocation17], 3072
        $region152: #{resnet1d_forward.1} parent=127 // pred_fallthru
          _
        // Predicated region
        $region153: #{resnet1d_forward.1} parent=127 // pred_check
          %p998 = pneg %p221
        $region154: #{resnet1d_forward.1} parent=127 // pred_check_branch
          %1000 = sbr.rel (%p998) target = $region156
        $region155: #{resnet1d_forward.1} parent=127 // pred_region
          %1001 = dma.done [#allocation17], 6144
        $region156: #{resnet1d_forward.1} parent=127 // pred_fallthru
          _
        // Predicated region
        $region157: #{resnet1d_forward.1} parent=127 // pred_check
          %p1002 = pneg %p242
        $region158: #{resnet1d_forward.1} parent=127 // pred_check_branch
          %1004 = sbr.rel (%p1002) target = $region160
        $region159: #{resnet1d_forward.1} parent=127 // pred_region
          %1005 = dma.done [#allocation20], 2048
        $region160: #{resnet1d_forward.1} parent=127 // pred_fallthru
          _
        // Predicated region
        $region161: #{resnet1d_forward.1} parent=127 // pred_check
          %p1006 = pneg %p263
        $region162: #{resnet1d_forward.1} parent=127 // pred_check_branch
          %1008 = sbr.rel (%p1006) target = $region164
        $region163: #{resnet1d_forward.1} parent=127 // pred_region
          %1009 = dma.done [#allocation20], 12288
        $region164: #{resnet1d_forward.1} parent=127 // pred_fallthru
          _
        // Predicated region
        $region165: #{resnet1d_forward.1} parent=127 // pred_check
          %p1010 = pneg %p284
        $region166: #{resnet1d_forward.1} parent=127 // pred_check_branch
          %1012 = sbr.rel (%p1010) target = $region168
        $region167: #{resnet1d_forward.1} parent=127 // pred_region
          %1013 = dma.done [#allocation23], 24576
        $region168: #{resnet1d_forward.1} parent=127 // pred_fallthru
          _
        // Predicated region
        $region169: #{resnet1d_forward.1} parent=127 // pred_check
          %p1014 = pneg %p305
        $region170: #{resnet1d_forward.1} parent=127 // pred_check_branch
          %1016 = sbr.rel (%p1014) target = $region172
        $region171: #{resnet1d_forward.1} parent=127 // pred_region
          %1017 = dma.done [#allocation23], 8192
        $region172: #{resnet1d_forward.1} parent=127 // pred_fallthru
          _
        // Predicated region
        $region173: #{resnet1d_forward.1} parent=127 // pred_check
          %p1018 = pneg %p326
        $region174: #{resnet1d_forward.1} parent=127 // pred_check_branch
          %1020 = sbr.rel (%p1018) target = $region176
        $region175: #{resnet1d_forward.1} parent=127 // pred_region
          %1021 = dma.done [#allocation26], 49152
        $region176: #{resnet1d_forward.1} parent=127 // pred_fallthru
          _
        // Predicated region
        $region177: #{resnet1d_forward.1} parent=127 // pred_check
          %p1022 = pneg %p368
        $region178: #{resnet1d_forward.1} parent=127 // pred_check_branch
          %1024 = sbr.rel (%p1022) target = $region180
        $region179: #{resnet1d_forward.1} parent=127 // pred_region
          %1025 = dma.done [#allocation26], 16
        $region180: #{resnet1d_forward.1} parent=127 // pred_fallthru
          _
        // Predicated region
        $region181: #{resnet1d_forward.1} parent=127 // pred_check
          %p1026 = pneg %p389
        $region182: #{resnet1d_forward.1} parent=127 // pred_check_branch
          %1028 = sbr.rel (%p1026) target = $region184
        $region183: #{resnet1d_forward.1} parent=127 // pred_region
          %1029 = dma.done [#allocation29], 16
        $region184: #{resnet1d_forward.1} parent=127 // pred_fallthru
          _
        // Predicated region
        $region185: #{resnet1d_forward.1} parent=127 // pred_check
          %p1030 = pneg %p410
        $region186: #{resnet1d_forward.1} parent=127 // pred_check_branch
          %1032 = sbr.rel (%p1030) target = $region188
        $region187: #{resnet1d_forward.1} parent=127 // pred_region
          %1033 = dma.done [#allocation29], 16
        $region188: #{resnet1d_forward.1} parent=127 // pred_fallthru
          _
        // Predicated region
        $region189: #{resnet1d_forward.1} parent=127 // pred_check
          %p1034 = pneg %p431
        $region190: #{resnet1d_forward.1} parent=127 // pred_check_branch
          %1036 = sbr.rel (%p1034) target = $region192
        $region191: #{resnet1d_forward.1} parent=127 // pred_region
          %1037 = dma.done [#allocation32], 16
        $region192: #{resnet1d_forward.1} parent=127 // pred_fallthru
          _
        // Predicated region
        $region193: #{resnet1d_forward.1} parent=127 // pred_check
          %p1038 = pneg %p452
        $region194: #{resnet1d_forward.1} parent=127 // pred_check_branch
          %1040 = sbr.rel (%p1038) target = $region196
        $region195: #{resnet1d_forward.1} parent=127 // pred_region
          %1041 = dma.done [#allocation32], 16
        $region196: #{resnet1d_forward.1} parent=127 // pred_fallthru
          _
        // Predicated region
        $region197: #{resnet1d_forward.1} parent=127 // pred_check
          %p1042 = pneg %p473
        $region198: #{resnet1d_forward.1} parent=127 // pred_check_branch
          %1044 = sbr.rel (%p1042) target = $region200
        $region199: #{resnet1d_forward.1} parent=127 // pred_region
          %1045 = dma.done [#allocation35], 16
        $region200: #{resnet1d_forward.1} parent=127 // pred_fallthru
          _
        // Predicated region
        $region201: #{resnet1d_forward.1} parent=127 // pred_check
          %p1046 = pneg %p494
        $region202: #{resnet1d_forward.1} parent=127 // pred_check_branch
          %1048 = sbr.rel (%p1046) target = $region204
        $region203: #{resnet1d_forward.1} parent=127 // pred_region
          %1049 = dma.done [#allocation35], 32
        $region204: #{resnet1d_forward.1} parent=127 // pred_fallthru
          _
        // Predicated region
        $region205: #{resnet1d_forward.1} parent=127 // pred_check
          %p1050 = pneg %p515
        $region206: #{resnet1d_forward.1} parent=127 // pred_check_branch
          %1052 = sbr.rel (%p1050) target = $region208
        $region207: #{resnet1d_forward.1} parent=127 // pred_region
          %1053 = dma.done [#allocation38], 32
        $region208: #{resnet1d_forward.1} parent=127 // pred_fallthru
          _
        // Predicated region
        $region209: #{resnet1d_forward.1} parent=127 // pred_check
          %p1054 = pneg %p536
        $region210: #{resnet1d_forward.1} parent=127 // pred_check_branch
          %1056 = sbr.rel (%p1054) target = $region212
        $region211: #{resnet1d_forward.1} parent=127 // pred_region
          %1057 = dma.done [#allocation38], 32
        $region212: #{resnet1d_forward.1} parent=127 // pred_fallthru
          _
        // Predicated region
        $region213: #{resnet1d_forward.1} parent=127 // pred_check
          %p1058 = pneg %p557
        $region214: #{resnet1d_forward.1} parent=127 // pred_check_branch
          %1060 = sbr.rel (%p1058) target = $region216
        $region215: #{resnet1d_forward.1} parent=127 // pred_region
          %1061 = dma.done [#allocation41], 64
        $region216: #{resnet1d_forward.1} parent=127 // pred_fallthru
          _
        // Predicated region
        $region217: #{resnet1d_forward.1} parent=127 // pred_check
          %p1062 = pneg %p578
        $region218: #{resnet1d_forward.1} parent=127 // pred_check_branch
          %1064 = sbr.rel (%p1062) target = $region220
        $region219: #{resnet1d_forward.1} parent=127 // pred_region
          %1065 = dma.done [#allocation41], 64
        $region220: #{resnet1d_forward.1} parent=127 // pred_fallthru
          _
        // Predicated region
        $region221: #{resnet1d_forward.1} parent=127 // pred_check
          %p1066 = pneg %p599
        $region222: #{resnet1d_forward.1} parent=127 // pred_check_branch
          %1068 = sbr.rel (%p1066) target = $region224
        $region223: #{resnet1d_forward.1} parent=127 // pred_region
          %1069 = dma.done [#allocation44], 64
        $region224: #{resnet1d_forward.1} parent=127 // pred_fallthru
          _
        %p1070 = scmp.lt.s32.totalorder %s53, 1
        %s1071 = scalar_select %p1070, %s53, 1
        %s1072 = smul.addr %s1071, 9
        %s1073 = smul.addr %s1072, 8
        %s1074 = scalar_lea.vmem %s0, %s1073
        %p1075 = pneg %p74
        %p1076 = pneg %p71
        %p1077 = pneg %p95
        %p1078 = pneg %p92
        %p1079 = pneg %p116
        %p1080 = pneg %p113
        %p1081 = pneg %p137
        %p1082 = pneg %p134
        %p1083 = pneg %p158
        %p1084 = pneg %p155
        %p1085 = pneg %p179
        %p1086 = pneg %p176
        %p1087 = pneg %p200
        %p1088 = pneg %p197
        %p1089 = pneg %p221
        %p1090 = pneg %p218
        %p1091 = pneg %p242
        %p1092 = pneg %p239
        %p1093 = pneg %p263
        %p1094 = pneg %p260
        %p1095 = pneg %p284
        %p1096 = pneg %p281
        %p1097 = pneg %p305
        %p1098 = pneg %p302
        %p1099 = pneg %p326
        %p1100 = pneg %p323
        %p1101 = pneg %p347
        %p1102 = pneg %p344
        %p1103 = pneg %p368
        %p1104 = pneg %p365
        %p1105 = pneg %p389
        %p1106 = pneg %p386
        %p1107 = pneg %p410
        %p1108 = pneg %p407
        %p1109 = pneg %p431
        %p1110 = pneg %p428
        %p1111 = pneg %p452
        %p1112 = pneg %p449
        %p1113 = pneg %p473
        %p1114 = pneg %p470
        %p1115 = pneg %p494
        %p1116 = pneg %p491
        %p1117 = pneg %p515
        %p1118 = pneg %p512
        %p1119 = pneg %p536
        %p1120 = pneg %p533
        %p1121 = pneg %p557
        %p1122 = pneg %p554
        %p1123 = pneg %p578
        %p1124 = pneg %p575
        %p1125 = pneg %p599
        %p1126 = pneg %p596
        %p1127 = pneg %p620
        %p1128 = pneg %p617
        %p1129 = pneg %p646
        %p1130 = pneg %p643
        %p1131 = scmp.lt.s32.totalorder %s53, 1
        %s1132 = scalar_select %p1131, %s53, 1
        %s1133 = scalar_lea.vmem %s27, %s1132
        %p1134 = scmp.lt.s32.totalorder %s53, 1
        %s1135 = scalar_select %p1134, %s53, 1
        %s1136 = smul.addr %s1135, 9
        %s1137 = smul.addr %s1136, 8
        %s1138 = scalar_lea.vmem %s0, %s1137
        %p1139 = scmp.lt.s32.totalorder %s53, 1
        %s1140 = scalar_select %p1139, %s53, 1
        %s1141 = scalar_lea.vmem %s27, %s1140
        %vm1143 = vcmask 523264
        %1144 = vst.msk [vmem:[#allocation2] sm:$0xff] %vm1143, 0.0
        %1145 = vst.msk [vmem:[#allocation2 + $0x8] sm:$0xff] %vm1143, 0.0
        %1146 = vst.msk [vmem:[#allocation2 + $0x10] sm:$0xff] %vm1143, 0.0
        %1147 = vst.msk [vmem:[#allocation2 + $0x18] sm:$0xff] %vm1143, 0.0
        %1148 = vst.msk [vmem:[#allocation2 + $0x20] sm:$0xff] %vm1143, 0.0
        %1149 = vst.msk [vmem:[#allocation2 + $0x28] sm:$0xff] %vm1143, 0.0
        %1150 = vst.msk [vmem:[#allocation2 + $0x30] sm:$0xff] %vm1143, 0.0
        %1151 = vst.msk [vmem:[#allocation2 + $0x38] sm:$0xff] %vm1143, 0.0
        %vm1152 = vcmask 519168
        %1153 = vst.msk [vmem:[#allocation2 + $0x40] sm:$0xf] %vm1152, 0.0
        %1154 = vst.msk [vmem:[#allocation3] sm:$0xff] %vm1143, 0.0
        %1155 = vst.msk [vmem:[#allocation3 + $0x8] sm:$0xff] %vm1143, 0.0
        %vm1156 = vcmask 517120
        %1157 = vst.msk [vmem:[#allocation3 + $0x10] sm:$0x3] %vm1156, 0.0
        %1158 = vst [vmem:[#allocation4] sm:$0xff] 0.0
        %1159 = vst [vmem:[#allocation4 + $0x8] sm:$0x3] 0.0
        %1160 = vst [vmem:[#allocation5] sm:$0x3f] 0.0
        %1161 = vst [vmem:[#allocation5 + $0x8] sm:$0x3f] 0.0
        %1162 = vst [vmem:[#allocation6] sm:$0xff] 0.0
        %1163 = vst [vmem:[#allocation6 + $0x8] sm:$0xff] 0.0
        %v1164 = vld [vmem:[%s1138] sm:$0xff]
        %v1165 = vld [vmem:[%s1138 + $0x8] sm:$0xff]
        %v1166 = vld [vmem:[%s1138 + $0x10] sm:$0xff]
        %v1167 = vld [vmem:[%s1138 + $0x18] sm:$0xff]
        %v1168 = vld [vmem:[%s1138 + $0x20] sm:$0xff]
        %v1169 = vld [vmem:[%s1138 + $0x28] sm:$0xff]
        %v1170 = vld [vmem:[%s1138 + $0x30] sm:$0xff]
        %v1171 = vld [vmem:[%s1138 + $0x38] sm:$0xff]
        %v1172 = vld [vmem:[%s1138 + $0x40] sm:$0x3f]
        %v1173 = vpack.c.bf16 %v1165, %v1164
        %v1174 = vpack.c.bf16 %v1167, %v1166
        %v1175 = vpack.c.bf16 %v1169, %v1168
        %v1176 = vpack.c.bf16 %v1171, %v1170
        %v1177 = vld [vmem:[#allocation8] sm:$0x3]
        %v1178 = vpack.c.bf16 %v1172, %v1172
        %s1179 = scalar_lea.vmem [#allocation8], 2
        %v1180 = vld [vmem:[%s1179] sm:$0x3]
        %vm1181 = vsmask.f32 7424
        %v1183 = vshrl.u32 %v1173, 16
        %v1185 = vshll.u32 %v1173, 16
        %v1187 = vrot.slane %v1185, 1
        %v1188 = vor.u32 %v1183, %v1187
        %v1190 = vshll.u32 %v1174, 16
        %v1192 = vrot.slane %v1190, 1
        %v1193 = vsel %vm1181, %v1188, %v1192
        %v1194 = vshrl.u32 %v1174, 16
        %v1196 = vor.u32 %v1194, %v1192
        %v1198 = vshll.u32 %v1175, 16
        %v1200 = vrot.slane %v1198, 1
        %v1201 = vsel %vm1181, %v1196, %v1200
        %v1202 = vshrl.u32 %v1175, 16
        %v1204 = vor.u32 %v1202, %v1200
        %v1206 = vshll.u32 %v1176, 16
        %v1208 = vrot.slane %v1206, 1
        %v1209 = vsel %vm1181, %v1204, %v1208
        %v1210 = vshrl.u32 %v1176, 16
        %v1212 = vor.u32 %v1210, %v1208
        %v1214 = vshll.u32 %v1178, 16
        %v1216 = vrot.slane %v1214, 1
        %v1217 = vsel %vm1181, %v1212, %v1216
        %vm1218 = vcmask 31744
        %v1220 = vsel %vm1218, %v1193, 0
        %v1223 = vsel %vm1218, %v1201, 0
        %v1226 = vsel %vm1218, %v1209, 0
        %v1229 = vsel %vm1218, %v1217, 0
        %vm1231 = vcmask 1041408
        %v1233 = vsel %vm1231, %v1180, 0
        %1235 = vmatprep.subr.bf16.mxu0 0
        %1236 = vmatpush1.bf16.msra.mxu0 %v1233
        %1237 = vmatprep.subr.bf16.mxu0 0
        %1238 = vmatpush1.bf16.msra.mxu0 0
        %1239 = vmatprep.subr.bf16.mxu0 0
        %1240 = vmatpush1.bf16.msra.mxu0 0
        %1241 = vmatprep.subr.bf16.mxu0 0
        %1242 = vmatpush1.bf16.msra.mxu0 0
        %1243 = vmatprep.subr.bf16.mxu0 0
        %1244 = vmatpush1.bf16.msra.mxu0 0
        %1245 = vmatprep.subr.bf16.mxu0 0
        %1246 = vmatpush1.bf16.msra.mxu0 0
        %1247 = vmatprep.subr.bf16.mxu0 0
        %1248 = vmatpush1.bf16.msra.mxu0 0
        %1249 = vmatprep.subr.bf16.mxu0 0
        %1250 = vmatpush1.bf16.msra.mxu0 0
        %1251 = vmatprep.subr.bf16.mxu0 0
        %1252 = vmatpush1.bf16.msra.mxu0 0
        %1253 = vmatprep.subr.bf16.mxu0 0
        %1254 = vmatpush1.bf16.msra.mxu0 0
        %1255 = vmatprep.subr.bf16.mxu0 0
        %1256 = vmatpush1.bf16.msra.mxu0 0
        %1257 = vmatprep.subr.bf16.mxu0 0
        %1258 = vmatpush1.bf16.msra.mxu0 0
        %1259 = vmatprep.subr.bf16.mxu0 0
        %1260 = vmatpush1.bf16.msra.mxu0 0
        %1261 = vmatprep.subr.bf16.mxu0 0
        %1262 = vmatpush1.bf16.msra.mxu0 0
        %1263 = vmatprep.subr.bf16.mxu0 0
        %1264 = vmatpush1.bf16.msra.mxu0 0
        %1265 = vmatprep.subr.bf16.mxu0 0
        %1266 = vmatpush1.bf16.msra.mxu0 0
        %1267 = vmatprep.mubr.bf16.mxu0 0
        %1268 = vmatmul.mubr.bf16.gmra.mrb[0].mxu0 %v1220
        %v1269 = vpop.f32.mrb[0].mxu0
        %v1270 = vadd.f32 0.0, %v1269
        %v1271 = vpop.f32.mrb[0].mxu0
        %v1272 = vpop.f32.mrb[0].mxu0
        %v1273 = vadd.f32 0.0, %v1272
        %v1274 = vpop.f32.mrb[0].mxu0
        %1275 = vmatprep.mubr.bf16.mxu0 0
        %1276 = vmatmul.mubr.bf16.gmra.mrb[0].mxu0 %v1223
        %v1277 = vpop.f32.mrb[0].mxu0
        %v1278 = vadd.f32 0.0, %v1277
        %v1279 = vpop.f32.mrb[0].mxu0
        %v1280 = vpop.f32.mrb[0].mxu0
        %v1281 = vadd.f32 0.0, %v1280
        %v1282 = vpop.f32.mrb[0].mxu0
        %1283 = vmatprep.mubr.bf16.mxu0 0
        %1284 = vmatmul.mubr.bf16.gmra.mrb[0].mxu0 %v1226
        %v1285 = vpop.f32.mrb[0].mxu0
        %v1286 = vadd.f32 0.0, %v1285
        %v1287 = vpop.f32.mrb[0].mxu0
        %v1288 = vpop.f32.mrb[0].mxu0
        %v1289 = vadd.f32 0.0, %v1288
        %v1290 = vpop.f32.mrb[0].mxu0
        %1291 = vmatprep.mubr.bf16.mxu0 0
        %1292 = vmatmul.mubr.bf16.gmra.mrb[0].mxu0 %v1229
        %v1293 = vpop.f32.mrb[0].mxu0
        %v1294 = vadd.f32 0.0, %v1293
        %v1295 = vpop.f32.mrb[0].mxu0
        %v1296 = vpop.f32.mrb[0].mxu0
        %v1297 = vadd.f32 0.0, %v1296
        %v1298 = vpop.f32.mrb[0].mxu0
        %1299 = vdwg.mxu0
        %v1300 = vsel %vm1218, %v1173, 0
        %v1302 = vsel %vm1218, %v1174, 0
        %v1304 = vsel %vm1218, %v1175, 0
        %v1306 = vsel %vm1218, %v1176, 0
        %v1309 = vsel %vm1231, %v1177, 0
        %1311 = vmatprep.subr.bf16.mxu0 0
        %1312 = vmatpush1.bf16.msra.mxu0 %v1309
        %1313 = vmatprep.subr.bf16.mxu0 0
        %1314 = vmatpush1.bf16.msra.mxu0 0
        %1315 = vmatprep.subr.bf16.mxu0 0
        %1316 = vmatpush1.bf16.msra.mxu0 0
        %1317 = vmatprep.subr.bf16.mxu0 0
        %1318 = vmatpush1.bf16.msra.mxu0 0
        %1319 = vmatprep.subr.bf16.mxu0 0
        %1320 = vmatpush1.bf16.msra.mxu0 0
        %1321 = vmatprep.subr.bf16.mxu0 0
        %1322 = vmatpush1.bf16.msra.mxu0 0
        %1323 = vmatprep.subr.bf16.mxu0 0
        %1324 = vmatpush1.bf16.msra.mxu0 0
        %1325 = vmatprep.subr.bf16.mxu0 0
        %1326 = vmatpush1.bf16.msra.mxu0 0
        %1327 = vmatprep.subr.bf16.mxu0 0
        %1328 = vmatpush1.bf16.msra.mxu0 0
        %1329 = vmatprep.subr.bf16.mxu0 0
        %1330 = vmatpush1.bf16.msra.mxu0 0
        %1331 = vmatprep.subr.bf16.mxu0 0
        %1332 = vmatpush1.bf16.msra.mxu0 0
        %1333 = vmatprep.subr.bf16.mxu0 0
        %1334 = vmatpush1.bf16.msra.mxu0 0
        %1335 = vmatprep.subr.bf16.mxu0 0
        %1336 = vmatpush1.bf16.msra.mxu0 0
        %1337 = vmatprep.subr.bf16.mxu0 0
        %1338 = vmatpush1.bf16.msra.mxu0 0
        %1339 = vmatprep.subr.bf16.mxu0 0
        %1340 = vmatpush1.bf16.msra.mxu0 0
        %1341 = vmatprep.subr.bf16.mxu0 0
        %1342 = vmatpush1.bf16.msra.mxu0 0
        %1343 = vmatprep.mubr.bf16.mxu0 0
        %1344 = vmatmul.mubr.bf16.gmra.mrb[0].mxu0 %v1300
        %v1345 = vpop.f32.mrb[0].mxu0
        %v1346 = vadd.f32 %v1270, %v1345
        %v1347 = vpop.f32.mrb[0].mxu0
        %v1348 = vpop.f32.mrb[0].mxu0
        %v1349 = vadd.f32 %v1273, %v1348
        %v1350 = vpop.f32.mrb[0].mxu0
        %1351 = vmatprep.mubr.bf16.mxu0 0
        %1352 = vmatmul.mubr.bf16.gmra.mrb[0].mxu0 %v1302
        %v1353 = vpop.f32.mrb[0].mxu0
        %v1354 = vadd.f32 %v1278, %v1353
        %v1355 = vpop.f32.mrb[0].mxu0
        %v1356 = vpop.f32.mrb[0].mxu0
        %v1357 = vadd.f32 %v1281, %v1356
        %v1358 = vpop.f32.mrb[0].mxu0
        %1359 = vmatprep.mubr.bf16.mxu0 0
        %1360 = vmatmul.mubr.bf16.gmra.mrb[0].mxu0 %v1304
        %v1361 = vpop.f32.mrb[0].mxu0
        %v1362 = vadd.f32 %v1286, %v1361
        %v1363 = vpop.f32.mrb[0].mxu0
        %v1364 = vpop.f32.mrb[0].mxu0
        %v1365 = vadd.f32 %v1289, %v1364
        %v1366 = vpop.f32.mrb[0].mxu0
        %1367 = vmatprep.mubr.bf16.mxu0 0
        %1368 = vmatmul.mubr.bf16.gmra.mrb[0].mxu0 %v1306
        %v1369 = vpop.f32.mrb[0].mxu0
        %v1370 = vadd.f32 %v1294, %v1369
        %v1371 = vpop.f32.mrb[0].mxu0
        %v1372 = vpop.f32.mrb[0].mxu0
        %v1373 = vadd.f32 %v1297, %v1372
        %v1374 = vpop.f32.mrb[0].mxu0
        %1375 = vdwg.mxu0
        %s1376 = scalar_lea.vmem [#allocation8], 4
        %v1377 = vld [vmem:[%s1376] sm:$0x3]
        %vm1383 = vcmask 1046528
        %v1384 = vrot.slane %v1173, 1
        %v1385 = vrot.slane %v1174, 1
        %v1386 = vsel %vm1383, %v1384, %v1385
        %v1387 = vrot.slane %v1175, 1
        %v1388 = vsel %vm1383, %v1385, %v1387
        %v1389 = vrot.slane %v1176, 1
        %v1390 = vsel %vm1383, %v1387, %v1389
        %v1391 = vrot.slane %v1178, 1
        %v1392 = vsel %vm1383, %v1389, %v1391
        %v1394 = vsel %vm1218, %v1386, 0
        %v1397 = vsel %vm1218, %v1388, 0
        %v1400 = vsel %vm1218, %v1390, 0
        %v1403 = vsel %vm1218, %v1392, 0
        %v1406 = vsel %vm1231, %v1377, 0
        %1408 = vmatprep.subr.bf16.mxu0 0
        %1409 = vmatpush1.bf16.msra.mxu0 %v1406
        %1410 = vmatprep.subr.bf16.mxu0 0
        %1411 = vmatpush1.bf16.msra.mxu0 0
        %1412 = vmatprep.subr.bf16.mxu0 0
        %1413 = vmatpush1.bf16.msra.mxu0 0
        %1414 = vmatprep.subr.bf16.mxu0 0
        %1415 = vmatpush1.bf16.msra.mxu0 0
        %1416 = vmatprep.subr.bf16.mxu0 0
        %1417 = vmatpush1.bf16.msra.mxu0 0
        %1418 = vmatprep.subr.bf16.mxu0 0
        %1419 = vmatpush1.bf16.msra.mxu0 0
        %1420 = vmatprep.subr.bf16.mxu0 0
        %1421 = vmatpush1.bf16.msra.mxu0 0
        %1422 = vmatprep.subr.bf16.mxu0 0
        %1423 = vmatpush1.bf16.msra.mxu0 0
        %1424 = vmatprep.subr.bf16.mxu0 0
        %1425 = vmatpush1.bf16.msra.mxu0 0
        %1426 = vmatprep.subr.bf16.mxu0 0
        %1427 = vmatpush1.bf16.msra.mxu0 0
        %1428 = vmatprep.subr.bf16.mxu0 0
        %1429 = vmatpush1.bf16.msra.mxu0 0
        %1430 = vmatprep.subr.bf16.mxu0 0
        %1431 = vmatpush1.bf16.msra.mxu0 0
        %1432 = vmatprep.subr.bf16.mxu0 0
        %1433 = vmatpush1.bf16.msra.mxu0 0
        %1434 = vmatprep.subr.bf16.mxu0 0
        %1435 = vmatpush1.bf16.msra.mxu0 0
        %1436 = vmatprep.subr.bf16.mxu0 0
        %1437 = vmatpush1.bf16.msra.mxu0 0
        %1438 = vmatprep.subr.bf16.mxu0 0
        %1439 = vmatpush1.bf16.msra.mxu0 0
        %1440 = vmatprep.mubr.bf16.mxu0 0
        %1441 = vmatmul.mubr.bf16.gmra.mrb[0].mxu0 %v1394
        %v1442 = vpop.f32.mrb[0].mxu0
        %v1443 = vadd.f32 0.0, %v1442
        %v1444 = vpop.f32.mrb[0].mxu0
        %v1445 = vpop.f32.mrb[0].mxu0
        %v1446 = vadd.f32 0.0, %v1445
        %v1447 = vpop.f32.mrb[0].mxu0
        %1448 = vmatprep.mubr.bf16.mxu0 0
        %1449 = vmatmul.mubr.bf16.gmra.mrb[0].mxu0 %v1397
        %v1450 = vpop.f32.mrb[0].mxu0
        %v1451 = vadd.f32 0.0, %v1450
        %v1452 = vpop.f32.mrb[0].mxu0
        %v1453 = vpop.f32.mrb[0].mxu0
        %v1454 = vadd.f32 0.0, %v1453
        %v1455 = vpop.f32.mrb[0].mxu0
        %1456 = vmatprep.mubr.bf16.mxu0 0
        %1457 = vmatmul.mubr.bf16.gmra.mrb[0].mxu0 %v1400
        %v1458 = vpop.f32.mrb[0].mxu0
        %v1459 = vadd.f32 0.0, %v1458
        %v1460 = vpop.f32.mrb[0].mxu0
        %v1461 = vpop.f32.mrb[0].mxu0
        %v1462 = vadd.f32 0.0, %v1461
        %v1463 = vpop.f32.mrb[0].mxu0
        %1464 = vmatprep.mubr.bf16.mxu0 0
        %1465 = vmatmul.mubr.bf16.gmra.mrb[0].mxu0 %v1403
        %v1466 = vpop.f32.mrb[0].mxu0
        %v1467 = vadd.f32 0.0, %v1466
        %v1468 = vpop.f32.mrb[0].mxu0
        %v1469 = vpop.f32.mrb[0].mxu0
        %v1470 = vadd.f32 0.0, %v1469
        %v1471 = vpop.f32.mrb[0].mxu0
        %1472 = vdwg.mxu0
        %v1473 = vadd.f32 %v1346, %v1443
        %v1474 = vadd.f32 %v1349, %v1446
        %v1475 = vadd.f32 %v1354, %v1451
        %v1476 = vadd.f32 %v1357, %v1454
        %v1477 = vadd.f32 %v1362, %v1459
        %v1478 = vadd.f32 %v1365, %v1462
        %v1479 = vadd.f32 %v1370, %v1467
        %v1480 = vadd.f32 %v1373, %v1470
        %s1481 = scalar_lea.vmem [#allocation8], 6
        %v1482 = vld [vmem:[%s1481] sm:$0x3]
        %vm1483 = vsmask.f32 6400
        %v1484 = vrot.slane %v1183, 1
        %v1485 = vrot.slane %v1185, 2
        %v1486 = vor.u32 %v1484, %v1485
        %v1487 = vrot.slane %v1194, 1
        %v1488 = vrot.slane %v1190, 2
        %v1489 = vor.u32 %v1487, %v1488
        %v1490 = vsel %vm1483, %v1486, %v1489
        %v1491 = vrot.slane %v1202, 1
        %v1492 = vrot.slane %v1198, 2
        %v1493 = vor.u32 %v1491, %v1492
        %v1494 = vsel %vm1483, %v1489, %v1493
        %v1495 = vrot.slane %v1210, 1
        %v1496 = vrot.slane %v1206, 2
        %v1497 = vor.u32 %v1495, %v1496
        %v1498 = vsel %vm1483, %v1493, %v1497
        %v1499 = vshrl.u32 %v1178, 16
        %v1501 = vrot.slane %v1499, 1
        %v1502 = vrot.slane %v1214, 2
        %v1503 = vor.u32 %v1501, %v1502
        %v1504 = vsel %vm1483, %v1497, %v1503
        %v1506 = vsel %vm1218, %v1490, 0
        %v1509 = vsel %vm1218, %v1494, 0
        %v1512 = vsel %vm1218, %v1498, 0
        %v1515 = vsel %vm1218, %v1504, 0
        %v1518 = vsel %vm1231, %v1482, 0
        %1520 = vmatprep.subr.bf16.mxu0 0
        %1521 = vmatpush1.bf16.msra.mxu0 %v1518
        %1522 = vmatprep.subr.bf16.mxu0 0
        %1523 = vmatpush1.bf16.msra.mxu0 0
        %1524 = vmatprep.subr.bf16.mxu0 0
        %1525 = vmatpush1.bf16.msra.mxu0 0
        %1526 = vmatprep.subr.bf16.mxu0 0
        %1527 = vmatpush1.bf16.msra.mxu0 0
        %1528 = vmatprep.subr.bf16.mxu0 0
        %1529 = vmatpush1.bf16.msra.mxu0 0
        %1530 = vmatprep.subr.bf16.mxu0 0
        %1531 = vmatpush1.bf16.msra.mxu0 0
        %1532 = vmatprep.subr.bf16.mxu0 0
        %1533 = vmatpush1.bf16.msra.mxu0 0
        %1534 = vmatprep.subr.bf16.mxu0 0
        %1535 = vmatpush1.bf16.msra.mxu0 0
        %1536 = vmatprep.subr.bf16.mxu0 0
        %1537 = vmatpush1.bf16.msra.mxu0 0
        %1538 = vmatprep.subr.bf16.mxu0 0
        %1539 = vmatpush1.bf16.msra.mxu0 0
        %1540 = vmatprep.subr.bf16.mxu0 0
        %1541 = vmatpush1.bf16.msra.mxu0 0
        %1542 = vmatprep.subr.bf16.mxu0 0
        %1543 = vmatpush1.bf16.msra.mxu0 0
        %1544 = vmatprep.subr.bf16.mxu0 0
        %1545 = vmatpush1.bf16.msra.mxu0 0
        %1546 = vmatprep.subr.bf16.mxu0 0
        %1547 = vmatpush1.bf16.msra.mxu0 0
        %1548 = vmatprep.subr.bf16.mxu0 0
        %1549 = vmatpush1.bf16.msra.mxu0 0
        %1550 = vmatprep.subr.bf16.mxu0 0
        %1551 = vmatpush1.bf16.msra.mxu0 0
        %1552 = vmatprep.mubr.bf16.mxu0 0
        %1553 = vmatmul.mubr.bf16.gmra.mrb[0].mxu0 %v1506
        %v1554 = vpop.f32.mrb[0].mxu0
        %v1555 = vadd.f32 0.0, %v1554
        %v1556 = vpop.f32.mrb[0].mxu0
        %v1557 = vpop.f32.mrb[0].mxu0
        %v1558 = vadd.f32 0.0, %v1557
        %v1559 = vpop.f32.mrb[0].mxu0
        %1560 = vmatprep.mubr.bf16.mxu0 0
        %1561 = vmatmul.mubr.bf16.gmra.mrb[0].mxu0 %v1509
        %v1562 = vpop.f32.mrb[0].mxu0
        %v1563 = vadd.f32 0.0, %v1562
        %v1564 = vpop.f32.mrb[0].mxu0
        %v1565 = vpop.f32.mrb[0].mxu0
        %v1566 = vadd.f32 0.0, %v1565
        %v1567 = vpop.f32.mrb[0].mxu0
        %1568 = vmatprep.mubr.bf16.mxu0 0
        %1569 = vmatmul.mubr.bf16.gmra.mrb[0].mxu0 %v1512
        %v1570 = vpop.f32.mrb[0].mxu0
        %v1571 = vadd.f32 0.0, %v1570
        %v1572 = vpop.f32.mrb[0].mxu0
        %v1573 = vpop.f32.mrb[0].mxu0
        %v1574 = vadd.f32 0.0, %v1573
        %v1575 = vpop.f32.mrb[0].mxu0
        %1576 = vmatprep.mubr.bf16.mxu0 0
        %1577 = vmatmul.mubr.bf16.gmra.mrb[0].mxu0 %v1515
        %v1578 = vpop.f32.mrb[0].mxu0
        %v1579 = vadd.f32 0.0, %v1578
        %v1580 = vpop.f32.mrb[0].mxu0
        %v1581 = vpop.f32.mrb[0].mxu0
        %v1582 = vadd.f32 0.0, %v1581
        %v1583 = vpop.f32.mrb[0].mxu0
        %1584 = vdwg.mxu0
        %v1585 = vadd.f32 %v1473, %v1555
        %v1586 = vadd.f32 %v1474, %v1558
        %v1587 = vadd.f32 %v1475, %v1563
        %v1588 = vadd.f32 %v1476, %v1566
        %v1589 = vadd.f32 %v1477, %v1571
        %v1590 = vadd.f32 %v1478, %v1574
        %v1591 = vadd.f32 %v1479, %v1579
        %v1592 = vadd.f32 %v1480, %v1582
        %s1593 = scalar_lea.vmem [#allocation8], 8
        %v1594 = vld [vmem:[%s1593] sm:$0x3]
        %vm1595 = vcmask 1045504
        %v1596 = vrot.slane %v1173, 2
        %v1597 = vrot.slane %v1174, 2
        %v1598 = vsel %vm1595, %v1596, %v1597
        %v1599 = vrot.slane %v1175, 2
        %v1600 = vsel %vm1595, %v1597, %v1599
        %v1601 = vrot.slane %v1176, 2
        %v1602 = vsel %vm1595, %v1599, %v1601
        %v1603 = vrot.slane %v1178, 2
        %v1604 = vsel %vm1595, %v1601, %v1603
        %v1606 = vsel %vm1218, %v1598, 0
        %v1609 = vsel %vm1218, %v1600, 0
        %v1612 = vsel %vm1218, %v1602, 0
        %v1615 = vsel %vm1218, %v1604, 0
        %v1618 = vsel %vm1231, %v1594, 0
        %1620 = vmatprep.subr.bf16.mxu0 0
        %1621 = vmatpush1.bf16.msra.mxu0 %v1618
        %1622 = vmatprep.subr.bf16.mxu0 0
        %1623 = vmatpush1.bf16.msra.mxu0 0
        %1624 = vmatprep.subr.bf16.mxu0 0
        %1625 = vmatpush1.bf16.msra.mxu0 0
        %1626 = vmatprep.subr.bf16.mxu0 0
        %1627 = vmatpush1.bf16.msra.mxu0 0
        %1628 = vmatprep.subr.bf16.mxu0 0
        %1629 = vmatpush1.bf16.msra.mxu0 0
        %1630 = vmatprep.subr.bf16.mxu0 0
        %1631 = vmatpush1.bf16.msra.mxu0 0
        %1632 = vmatprep.subr.bf16.mxu0 0
        %1633 = vmatpush1.bf16.msra.mxu0 0
        %1634 = vmatprep.subr.bf16.mxu0 0
        %1635 = vmatpush1.bf16.msra.mxu0 0
        %1636 = vmatprep.subr.bf16.mxu0 0
        %1637 = vmatpush1.bf16.msra.mxu0 0
        %1638 = vmatprep.subr.bf16.mxu0 0
        %1639 = vmatpush1.bf16.msra.mxu0 0
        %1640 = vmatprep.subr.bf16.mxu0 0
        %1641 = vmatpush1.bf16.msra.mxu0 0
        %1642 = vmatprep.subr.bf16.mxu0 0
        %1643 = vmatpush1.bf16.msra.mxu0 0
        %1644 = vmatprep.subr.bf16.mxu0 0
        %1645 = vmatpush1.bf16.msra.mxu0 0
        %1646 = vmatprep.subr.bf16.mxu0 0
        %1647 = vmatpush1.bf16.msra.mxu0 0
        %1648 = vmatprep.subr.bf16.mxu0 0
        %1649 = vmatpush1.bf16.msra.mxu0 0
        %1650 = vmatprep.subr.bf16.mxu0 0
        %1651 = vmatpush1.bf16.msra.mxu0 0
        %1652 = vmatprep.mubr.bf16.mxu0 0
        %1653 = vmatmul.mubr.bf16.gmra.mrb[0].mxu0 %v1606
        %v1654 = vpop.f32.mrb[0].mxu0
        %v1655 = vadd.f32 0.0, %v1654
        %v1656 = vpop.f32.mrb[0].mxu0
        %v1657 = vpop.f32.mrb[0].mxu0
        %v1658 = vadd.f32 0.0, %v1657
        %v1659 = vpop.f32.mrb[0].mxu0
        %1660 = vmatprep.mubr.bf16.mxu0 0
        %1661 = vmatmul.mubr.bf16.gmra.mrb[0].mxu0 %v1609
        %v1662 = vpop.f32.mrb[0].mxu0
        %v1663 = vadd.f32 0.0, %v1662
        %v1664 = vpop.f32.mrb[0].mxu0
        %v1665 = vpop.f32.mrb[0].mxu0
        %v1666 = vadd.f32 0.0, %v1665
        %v1667 = vpop.f32.mrb[0].mxu0
        %1668 = vmatprep.mubr.bf16.mxu0 0
        %1669 = vmatmul.mubr.bf16.gmra.mrb[0].mxu0 %v1612
        %v1670 = vpop.f32.mrb[0].mxu0
        %v1671 = vadd.f32 0.0, %v1670
        %v1672 = vpop.f32.mrb[0].mxu0
        %v1673 = vpop.f32.mrb[0].mxu0
        %v1674 = vadd.f32 0.0, %v1673
        %v1675 = vpop.f32.mrb[0].mxu0
        %1676 = vmatprep.mubr.bf16.mxu0 0
        %1677 = vmatmul.mubr.bf16.gmra.mrb[0].mxu0 %v1615
        %v1678 = vpop.f32.mrb[0].mxu0
        %v1679 = vadd.f32 0.0, %v1678
        %v1680 = vpop.f32.mrb[0].mxu0
        %v1681 = vpop.f32.mrb[0].mxu0
        %v1682 = vadd.f32 0.0, %v1681
        %v1683 = vpop.f32.mrb[0].mxu0
        %1684 = vdwg.mxu0
        %v1685 = vadd.f32 %v1585, %v1655
        %v1686 = vadd.f32 %v1586, %v1658
        %v1687 = vadd.f32 %v1587, %v1663
        %v1688 = vadd.f32 %v1588, %v1666
        %v1689 = vadd.f32 %v1589, %v1671
        %v1690 = vadd.f32 %v1590, %v1674
        %v1691 = vadd.f32 %v1591, %v1679
        %v1692 = vadd.f32 %v1592, %v1682
        %s1693 = scalar_lea.vmem [#allocation8], 10
        %v1694 = vld [vmem:[%s1693] sm:$0x3]
        %vm1695 = vsmask.f32 5376
        %v1696 = vrot.slane %v1183, 2
        %v1697 = vrot.slane %v1185, 3
        %v1698 = vor.u32 %v1696, %v1697
        %v1699 = vrot.slane %v1194, 2
        %v1700 = vrot.slane %v1190, 3
        %v1701 = vor.u32 %v1699, %v1700
        %v1702 = vsel %vm1695, %v1698, %v1701
        %v1703 = vrot.slane %v1202, 2
        %v1704 = vrot.slane %v1198, 3
        %v1705 = vor.u32 %v1703, %v1704
        %v1706 = vsel %vm1695, %v1701, %v1705
        %v1707 = vrot.slane %v1210, 2
        %v1708 = vrot.slane %v1206, 3
        %v1709 = vor.u32 %v1707, %v1708
        %v1710 = vsel %vm1695, %v1705, %v1709
        %v1711 = vrot.slane %v1499, 2
        %v1712 = vrot.slane %v1214, 3
        %v1713 = vor.u32 %v1711, %v1712
        %v1714 = vsel %vm1695, %v1709, %v1713
        %v1716 = vsel %vm1218, %v1702, 0
        %v1719 = vsel %vm1218, %v1706, 0
        %v1722 = vsel %vm1218, %v1710, 0
        %v1725 = vsel %vm1218, %v1714, 0
        %v1728 = vsel %vm1231, %v1694, 0
        %1730 = vmatprep.subr.bf16.mxu0 0
        %1731 = vmatpush1.bf16.msra.mxu0 %v1728
        %1732 = vmatprep.subr.bf16.mxu0 0
        %1733 = vmatpush1.bf16.msra.mxu0 0
        %1734 = vmatprep.subr.bf16.mxu0 0
        %1735 = vmatpush1.bf16.msra.mxu0 0
        %1736 = vmatprep.subr.bf16.mxu0 0
        %1737 = vmatpush1.bf16.msra.mxu0 0
        %1738 = vmatprep.subr.bf16.mxu0 0
        %1739 = vmatpush1.bf16.msra.mxu0 0
        %1740 = vmatprep.subr.bf16.mxu0 0
        %1741 = vmatpush1.bf16.msra.mxu0 0
        %1742 = vmatprep.subr.bf16.mxu0 0
        %1743 = vmatpush1.bf16.msra.mxu0 0
        %1744 = vmatprep.subr.bf16.mxu0 0
        %1745 = vmatpush1.bf16.msra.mxu0 0
        %1746 = vmatprep.subr.bf16.mxu0 0
        %1747 = vmatpush1.bf16.msra.mxu0 0
        %1748 = vmatprep.subr.bf16.mxu0 0
        %1749 = vmatpush1.bf16.msra.mxu0 0
        %1750 = vmatprep.subr.bf16.mxu0 0
        %1751 = vmatpush1.bf16.msra.mxu0 0
        %1752 = vmatprep.subr.bf16.mxu0 0
        %1753 = vmatpush1.bf16.msra.mxu0 0
        %1754 = vmatprep.subr.bf16.mxu0 0
        %1755 = vmatpush1.bf16.msra.mxu0 0
        %1756 = vmatprep.subr.bf16.mxu0 0
        %1757 = vmatpush1.bf16.msra.mxu0 0
        %1758 = vmatprep.subr.bf16.mxu0 0
        %1759 = vmatpush1.bf16.msra.mxu0 0
        %1760 = vmatprep.subr.bf16.mxu0 0
        %1761 = vmatpush1.bf16.msra.mxu0 0
        %1762 = vmatprep.mubr.bf16.mxu0 0
        %1763 = vmatmul.mubr.bf16.gmra.mrb[0].mxu0 %v1716
        %v1764 = vpop.f32.mrb[0].mxu0
        %v1765 = vadd.f32 0.0, %v1764
        %v1766 = vpop.f32.mrb[0].mxu0
        %v1767 = vpop.f32.mrb[0].mxu0
        %v1768 = vadd.f32 0.0, %v1767
        %v1769 = vpop.f32.mrb[0].mxu0
        %1770 = vmatprep.mubr.bf16.mxu0 0
        %1771 = vmatmul.mubr.bf16.gmra.mrb[0].mxu0 %v1719
        %v1772 = vpop.f32.mrb[0].mxu0
        %v1773 = vadd.f32 0.0, %v1772
        %v1774 = vpop.f32.mrb[0].mxu0
        %v1775 = vpop.f32.mrb[0].mxu0
        %v1776 = vadd.f32 0.0, %v1775
        %v1777 = vpop.f32.mrb[0].mxu0
        %1778 = vmatprep.mubr.bf16.mxu0 0
        %1779 = vmatmul.mubr.bf16.gmra.mrb[0].mxu0 %v1722
        %v1780 = vpop.f32.mrb[0].mxu0
        %v1781 = vadd.f32 0.0, %v1780
        %v1782 = vpop.f32.mrb[0].mxu0
        %v1783 = vpop.f32.mrb[0].mxu0
        %v1784 = vadd.f32 0.0, %v1783
        %v1785 = vpop.f32.mrb[0].mxu0
        %1786 = vmatprep.mubr.bf16.mxu0 0
        %1787 = vmatmul.mubr.bf16.gmra.mrb[0].mxu0 %v1725
        %v1788 = vpop.f32.mrb[0].mxu0
        %v1789 = vadd.f32 0.0, %v1788
        %v1790 = vpop.f32.mrb[0].mxu0
        %v1791 = vpop.f32.mrb[0].mxu0
        %v1792 = vadd.f32 0.0, %v1791
        %v1793 = vpop.f32.mrb[0].mxu0
        %1794 = vdwg.mxu0
        %v1795 = vadd.f32 %v1685, %v1765
        %v1796 = vadd.f32 %v1686, %v1768
        %v1797 = vadd.f32 %v1687, %v1773
        %v1798 = vadd.f32 %v1688, %v1776
        %v1799 = vadd.f32 %v1689, %v1781
        %v1800 = vadd.f32 %v1690, %v1784
        %v1801 = vadd.f32 %v1691, %v1789
        %v1802 = vadd.f32 %v1692, %v1792
        %s1803 = scalar_lea.vmem [#allocation8], 12
        %v1804 = vld [vmem:[%s1803] sm:$0x3]
        %vm1805 = vcmask 1044480
        %v1806 = vrot.slane %v1173, 3
        %v1807 = vrot.slane %v1174, 3
        %v1808 = vsel %vm1805, %v1806, %v1807
        %v1809 = vrot.slane %v1175, 3
        %v1810 = vsel %vm1805, %v1807, %v1809
        %v1811 = vrot.slane %v1176, 3
        %v1812 = vsel %vm1805, %v1809, %v1811
        %v1813 = vrot.slane %v1178, 3
        %v1814 = vsel %vm1805, %v1811, %v1813
        %v1816 = vsel %vm1218, %v1808, 0
        %v1819 = vsel %vm1218, %v1810, 0
        %v1822 = vsel %vm1218, %v1812, 0
        %v1825 = vsel %vm1218, %v1814, 0
        %v1828 = vsel %vm1231, %v1804, 0
        %1830 = vmatprep.subr.bf16.mxu0 0
        %1831 = vmatpush1.bf16.msra.mxu0 %v1828
        %1832 = vmatprep.subr.bf16.mxu0 0
        %1833 = vmatpush1.bf16.msra.mxu0 0
        %1834 = vmatprep.subr.bf16.mxu0 0
        %1835 = vmatpush1.bf16.msra.mxu0 0
        %1836 = vmatprep.subr.bf16.mxu0 0
        %1837 = vmatpush1.bf16.msra.mxu0 0
        %1838 = vmatprep.subr.bf16.mxu0 0
        %1839 = vmatpush1.bf16.msra.mxu0 0
        %1840 = vmatprep.subr.bf16.mxu0 0
        %1841 = vmatpush1.bf16.msra.mxu0 0
        %1842 = vmatprep.subr.bf16.mxu0 0
        %1843 = vmatpush1.bf16.msra.mxu0 0
        %1844 = vmatprep.subr.bf16.mxu0 0
        %1845 = vmatpush1.bf16.msra.mxu0 0
        %1846 = vmatprep.subr.bf16.mxu0 0
        %1847 = vmatpush1.bf16.msra.mxu0 0
        %1848 = vmatprep.subr.bf16.mxu0 0
        %1849 = vmatpush1.bf16.msra.mxu0 0
        %1850 = vmatprep.subr.bf16.mxu0 0
        %1851 = vmatpush1.bf16.msra.mxu0 0
        %1852 = vmatprep.subr.bf16.mxu0 0
        %1853 = vmatpush1.bf16.msra.mxu0 0
        %1854 = vmatprep.subr.bf16.mxu0 0
        %1855 = vmatpush1.bf16.msra.mxu0 0
        %1856 = vmatprep.subr.bf16.mxu0 0
        %1857 = vmatpush1.bf16.msra.mxu0 0
        %1858 = vmatprep.subr.bf16.mxu0 0
        %1859 = vmatpush1.bf16.msra.mxu0 0
        %1860 = vmatprep.subr.bf16.mxu0 0
        %1861 = vmatpush1.bf16.msra.mxu0 0
        %1862 = vmatprep.mubr.bf16.mxu0 0
        %1863 = vmatmul.mubr.bf16.gmra.mrb[0].mxu0 %v1816
        %v1864 = vpop.f32.mrb[0].mxu0
        %v1865 = vadd.f32 0.0, %v1864
        %v1866 = vpop.f32.mrb[0].mxu0
        %v1867 = vpop.f32.mrb[0].mxu0
        %v1868 = vadd.f32 0.0, %v1867
        %v1869 = vpop.f32.mrb[0].mxu0
        %1870 = vmatprep.mubr.bf16.mxu0 0
        %1871 = vmatmul.mubr.bf16.gmra.mrb[0].mxu0 %v1819
        %v1872 = vpop.f32.mrb[0].mxu0
        %v1873 = vadd.f32 0.0, %v1872
        %v1874 = vpop.f32.mrb[0].mxu0
        %v1875 = vpop.f32.mrb[0].mxu0
        %v1876 = vadd.f32 0.0, %v1875
        %v1877 = vpop.f32.mrb[0].mxu0
        %1878 = vmatprep.mubr.bf16.mxu0 0
        %1879 = vmatmul.mubr.bf16.gmra.mrb[0].mxu0 %v1822
        %v1880 = vpop.f32.mrb[0].mxu0
        %v1881 = vadd.f32 0.0, %v1880
        %v1882 = vpop.f32.mrb[0].mxu0
        %v1883 = vpop.f32.mrb[0].mxu0
        %v1884 = vadd.f32 0.0, %v1883
        %v1885 = vpop.f32.mrb[0].mxu0
        %1886 = vmatprep.mubr.bf16.mxu0 0
        %1887 = vmatmul.mubr.bf16.gmra.mrb[0].mxu0 %v1825
        %v1888 = vpop.f32.mrb[0].mxu0
        %v1889 = vadd.f32 0.0, %v1888
        %v1890 = vpop.f32.mrb[0].mxu0
        %v1891 = vpop.f32.mrb[0].mxu0
        %v1892 = vadd.f32 0.0, %v1891
        %v1893 = vpop.f32.mrb[0].mxu0
        %1894 = vdwg.mxu0
        %v1895 = vadd.f32 %v1795, %v1865
        %v1896 = vadd.f32 %v1796, %v1868
        %v1897 = vadd.f32 %v1797, %v1873
        %v1898 = vadd.f32 %v1798, %v1876
        %v1899 = vadd.f32 %v1799, %v1881
        %v1900 = vadd.f32 %v1800, %v1884
        %v1901 = vadd.f32 %v1801, %v1889
        %v1902 = vadd.f32 %v1802, %v1892
        %v1903 = vld [vmem:[#allocation27] sm:$0x1]
        %v1905 = vlaneseq
        %v1906 = vshrl.u32 %v1905, 7
        %v1907 = vsub.s32 0, %v1906
        %v1908 = vrot.slane %v1903, %v1907
        %v1910 = vadd.f32 %v1895, %v1908
        %v1911 = vadd.f32 %v1896, %v1908
        %v1912 = vadd.f32 %v1897, %v1908
        %v1913 = vadd.f32 %v1898, %v1908
        %v1914 = vadd.f32 %v1899, %v1908
        %v1915 = vadd.f32 %v1900, %v1908
        %v1916 = vadd.f32 %v1901, %v1908
        %v1917 = vadd.f32 %v1902, %v1908
        %v1918 = vmax.f32 %v1910, 0.0
        %v1919 = vmax.f32 %v1911, 0.0
        %v1920 = vmax.f32 %v1912, 0.0
        %v1921 = vmax.f32 %v1913, 0.0
        %v1922 = vmax.f32 %v1914, 0.0
        %v1923 = vmax.f32 %v1915, 0.0
        %v1924 = vmax.f32 %v1916, 0.0
        %v1925 = vmax.f32 %v1917, 0.0
        %1926 = vst.msk [vmem:[#allocation2 + $0x2] sm:$0xff] %vm1143, %v1918
        %1927 = vst.msk [vmem:[#allocation2 + $0xa] sm:$0xff] %vm1143, %v1919
        %1928 = vst.msk [vmem:[#allocation2 + $0x12] sm:$0xff] %vm1143, %v1920
        %1929 = vst.msk [vmem:[#allocation2 + $0x1a] sm:$0xff] %vm1143, %v1921
        %1930 = vst.msk [vmem:[#allocation2 + $0x22] sm:$0xff] %vm1143, %v1922
        %1931 = vst.msk [vmem:[#allocation2 + $0x2a] sm:$0xff] %vm1143, %v1923
        %1932 = vst.msk [vmem:[#allocation2 + $0x32] sm:$0xff] %vm1143, %v1924
        %1933 = vst.msk [vmem:[#allocation2 + $0x3a] sm:$0xff] %vm1143, %v1925
        %v1934 = vld [vmem:[#allocation2] sm:$0xff]
        %v1935 = vld [vmem:[#allocation2 + $0x8] sm:$0xff]
        %v1936 = vld [vmem:[#allocation2 + $0x10] sm:$0xff]
        %v1937 = vld [vmem:[#allocation2 + $0x18] sm:$0xff]
        %v1938 = vld [vmem:[#allocation2 + $0x20] sm:$0xff]
        %v1939 = vld [vmem:[#allocation2 + $0x28] sm:$0xff]
        %v1940 = vld [vmem:[#allocation2 + $0x30] sm:$0xff]
        %v1941 = vld [vmem:[#allocation2 + $0x38] sm:$0xff]
        %v1942 = vmax.f32 %v1934, %v1918
        %v1943 = vmax.f32 %v1935, %v1919
        %v1944 = vmax.f32 %v1936, %v1920
        %v1945 = vmax.f32 %v1937, %v1921
        %v1946 = vmax.f32 %v1938, %v1922
        %v1947 = vmax.f32 %v1939, %v1923
        %v1948 = vmax.f32 %v1940, %v1924
        %v1949 = vmax.f32 %v1941, %v1925
        %v1950 = vld [vmem:[#allocation2 + $0x4] sm:$0xff]
        %v1951 = vld [vmem:[#allocation2 + $0xc] sm:$0xff]
        %v1952 = vld [vmem:[#allocation2 + $0x14] sm:$0xff]
        %v1953 = vld [vmem:[#allocation2 + $0x1c] sm:$0xff]
        %v1954 = vld [vmem:[#allocation2 + $0x24] sm:$0xff]
        %v1955 = vld [vmem:[#allocation2 + $0x2c] sm:$0xff]
        %v1956 = vld [vmem:[#allocation2 + $0x34] sm:$0xff]
        %v1957 = vld [vmem:[#allocation2 + $0x3c] sm:$0xff]
        %v1958 = vmax.f32 %v1942, %v1950
        %v1959 = vmax.f32 %v1943, %v1951
        %v1960 = vmax.f32 %v1944, %v1952
        %v1961 = vmax.f32 %v1945, %v1953
        %v1962 = vmax.f32 %v1946, %v1954
        %v1963 = vmax.f32 %v1947, %v1955
        %v1964 = vmax.f32 %v1948, %v1956
        %v1965 = vmax.f32 %v1949, %v1957
        %v1966 = vlaneseq
        %v1967 = vshrl.u32 %v1966, 7
        %v1968 = vadd.s32 %v1967, 8
        %v1969 = vlaneseq
        %v1970 = vand.u32 %v1969, 127
        %v1971 = vmul.u32 %v1967, 4
        %v1972 = vmul.u32 %v1968, 4
        %vm1973 = vcmp.eq.s32.totalorder %v1970, %v1971
        %vm1974 = vcmp.eq.s32.totalorder %v1970, %v1972
        %v1975 = vsel %vm1973, 1.0, 0.0
        %v1976 = vsel %vm1974, 1.0, 0.0
        %v1978 = vsel %vm1143, %v1975, 0
        %v1981 = vsel %vm1143, %v1976, 0
        %1983 = vmatprep.subr.mxu0 0.0
        %1984 = vmatpush1.msra.mxu0 %v1958
        %1985 = vmatprep.subr.mxu0 0.0
        %1986 = vmatpush1.msra.mxu0 %v1959
        %1987 = vmatprep.subr.mxu0 0.0
        %1988 = vmatpush1.msra.mxu0 %v1960
        %1989 = vmatprep.subr.mxu0 0.0
        %1990 = vmatpush1.msra.mxu0 %v1961
        %1991 = vmatprep.subr.mxu0 0.0
        %1992 = vmatpush1.msra.mxu0 %v1962
        %1993 = vmatprep.subr.mxu0 0.0
        %1994 = vmatpush1.msra.mxu0 %v1963
        %1995 = vmatprep.subr.mxu0 0.0
        %1996 = vmatpush1.msra.mxu0 %v1964
        %1997 = vmatprep.subr.mxu0 0.0
        %1998 = vmatpush1.msra.mxu0 %v1965
        %1999 = vmatprep.subr.mxu0 0.0
        %2000 = vmatpush1.msra.mxu0 0.0
        %2001 = vmatprep.subr.mxu0 0.0
        %2002 = vmatpush1.msra.mxu0 0.0
        %2003 = vmatprep.subr.mxu0 0.0
        %2004 = vmatpush1.msra.mxu0 0.0
        %2005 = vmatprep.subr.mxu0 0.0
        %2006 = vmatpush1.msra.mxu0 0.0
        %2007 = vmatprep.subr.mxu0 0.0
        %2008 = vmatpush1.msra.mxu0 0.0
        %2009 = vmatprep.subr.mxu0 0.0
        %2010 = vmatpush1.msra.mxu0 0.0
        %2011 = vmatprep.subr.mxu0 0.0
        %2012 = vmatpush1.msra.mxu0 0.0
        %2013 = vmatprep.subr.mxu0 0.0
        %2014 = vmatpush1.msra.mxu0 0.0
        %2015 = vmatprep.subr.mxu0 0.0
        %2016 = vmatpush1.msra.mxu0 0.0
        %2017 = vmatprep.subr.mxu0 0.0
        %2018 = vmatpush1.msra.mxu0 0.0
        %2019 = vmatprep.subr.mxu0 0.0
        %2020 = vmatpush1.msra.mxu0 0.0
        %2021 = vmatprep.subr.mxu0 0.0
        %2022 = vmatpush1.msra.mxu0 0.0
        %2023 = vmatprep.subr.mxu0 0.0
        %2024 = vmatpush1.msra.mxu0 0.0
        %2025 = vmatprep.subr.mxu0 0.0
        %2026 = vmatpush1.msra.mxu0 0.0
        %2027 = vmatprep.subr.mxu0 0.0
        %2028 = vmatpush1.msra.mxu0 0.0
        %2029 = vmatprep.subr.mxu0 0.0
        %2030 = vmatpush1.msra.mxu0 0.0
        %2031 = vmatprep.subr.mxu0 0.0
        %2032 = vmatpush1.msra.mxu0 0.0
        %2033 = vmatprep.subr.mxu0 0.0
        %2034 = vmatpush1.msra.mxu0 0.0
        %2035 = vmatprep.subr.mxu0 0.0
        %2036 = vmatpush1.msra.mxu0 0.0
        %2037 = vmatprep.subr.mxu0 0.0
        %2038 = vmatpush1.msra.mxu0 0.0
        %2039 = vmatprep.subr.mxu0 0.0
        %2040 = vmatpush1.msra.mxu0 0.0
        %2041 = vmatprep.subr.mxu0 0.0
        %2042 = vmatpush1.msra.mxu0 0.0
        %2043 = vmatprep.subr.mxu0 0.0
        %2044 = vmatpush1.msra.mxu0 0.0
        %2045 = vmatprep.subr.mxu0 0.0
        %2046 = vmatpush1.msra.mxu0 0.0
        %2047 = vmatprep.mubr.f32.mxu0 0.0
        %2048 = vmatmul.mubr.f32.gmra.mrb[0].mxu0 %v1978
        %v2049 = vpop.f32.mrb[0].mxu0
        %v2050 = vadd.f32 0.0, %v2049
        %v2051 = vpop.f32.mrb[0].mxu0
        %2052 = vmatprep.mubr.f32.mxu0 0.0
        %2053 = vmatmul.mubr.f32.gmra.mrb[0].mxu0 %v1981
        %v2054 = vpop.f32.mrb[0].mxu0
        %v2055 = vadd.f32 0.0, %v2054
        %v2056 = vpop.f32.mrb[0].mxu0
        %2057 = vdwg.mxu0
        %2058 = vst.msk [vmem:[#allocation3 + $0x1] sm:$0xff] %vm1143, %v2050
        %2059 = vst.msk [vmem:[#allocation3 + $0x9] sm:$0xff] %vm1143, %v2055
        %v2060 = vld [vmem:[#allocation3] sm:$0xff]
        %v2061 = vld [vmem:[#allocation3 + $0x8] sm:$0xff]
        %v2062 = vld [vmem:[#allocation3 + $0x1] sm:$0xff]
        %v2063 = vld [vmem:[#allocation3 + $0x9] sm:$0xff]
        %v2064 = vld [vmem:[#allocation3 + $0x2] sm:$0xff]
        %v2065 = vld [vmem:[#allocation3 + $0xa] sm:$0xff]
        %v2066 = vpack.c.bf16 %v2061, %v2060
        %v2067 = vld [vmem:[#allocation10] sm:$0xf]
        %v2068 = vld [vmem:[#allocation10 + $0x4] sm:$0xf]
        %v2069 = vld [vmem:[#allocation10 + $0x8] sm:$0xf]
        %v2070 = vld [vmem:[#allocation10 + $0xc] sm:$0xf]
        %v2071 = vld [vmem:[#allocation10 + $0x10] sm:$0xf]
        %v2072 = vld [vmem:[#allocation10 + $0x14] sm:$0xf]
        %v2073 = vld [vmem:[#allocation10 + $0x18] sm:$0xf]
        %v2074 = vld [vmem:[#allocation10 + $0x1c] sm:$0xf]
        %v2075 = vpack.c.bf16 %v2063, %v2062
        %s2076 = scalar_lea.vmem [#allocation10], 32
        %v2077 = vld [vmem:[%s2076] sm:$0xf]
        %v2078 = vld [vmem:[%s2076 + $0x4] sm:$0xf]
        %v2079 = vld [vmem:[%s2076 + $0x8] sm:$0xf]
        %v2080 = vld [vmem:[%s2076 + $0xc] sm:$0xf]
        %v2081 = vld [vmem:[%s2076 + $0x10] sm:$0xf]
        %v2082 = vld [vmem:[%s2076 + $0x14] sm:$0xf]
        %v2083 = vld [vmem:[%s2076 + $0x18] sm:$0xf]
        %v2084 = vld [vmem:[%s2076 + $0x1c] sm:$0xf]
        %v2093 = vunpack.c.l.b16 %v2077
        %v2094 = vunpack.c.l.b16 %v2078
        %v2095 = vunpack.c.l.b16 %v2079
        %v2096 = vunpack.c.l.b16 %v2080
        %v2097 = vunpack.c.l.b16 %v2081
        %v2098 = vunpack.c.l.b16 %v2082
        %v2099 = vunpack.c.l.b16 %v2083
        %v2100 = vunpack.c.l.b16 %v2084
        %v2101 = vpack.c.b16 %v2094, %v2093
        %v2102 = vpack.c.b16 %v2096, %v2095
        %v2103 = vpack.c.b16 %v2098, %v2097
        %v2104 = vpack.c.b16 %v2100, %v2099
        %v2110 = vsel %vm1143, %v2075, 0
        %2112 = vmatprep.subr.bf16.mxu0 0
        %2113 = vmatpush1.bf16.msra.mxu0 %v2101
        %2114 = vmatprep.subr.bf16.mxu0 0
        %2115 = vmatpush1.bf16.msra.mxu0 %v2102
        %2116 = vmatprep.subr.bf16.mxu0 0
        %2117 = vmatpush1.bf16.msra.mxu0 %v2103
        %2118 = vmatprep.subr.bf16.mxu0 0
        %2119 = vmatpush1.bf16.msra.mxu0 %v2104
        %2120 = vmatprep.subr.bf16.mxu0 0
        %2121 = vmatpush1.bf16.msra.mxu0 0
        %2122 = vmatprep.subr.bf16.mxu0 0
        %2123 = vmatpush1.bf16.msra.mxu0 0
        %2124 = vmatprep.subr.bf16.mxu0 0
        %2125 = vmatpush1.bf16.msra.mxu0 0
        %2126 = vmatprep.subr.bf16.mxu0 0
        %2127 = vmatpush1.bf16.msra.mxu0 0
        %2128 = vmatprep.subr.bf16.mxu0 0
        %2129 = vmatpush1.bf16.msra.mxu0 0
        %2130 = vmatprep.subr.bf16.mxu0 0
        %2131 = vmatpush1.bf16.msra.mxu0 0
        %2132 = vmatprep.subr.bf16.mxu0 0
        %2133 = vmatpush1.bf16.msra.mxu0 0
        %2134 = vmatprep.subr.bf16.mxu0 0
        %2135 = vmatpush1.bf16.msra.mxu0 0
        %2136 = vmatprep.subr.bf16.mxu0 0
        %2137 = vmatpush1.bf16.msra.mxu0 0
        %2138 = vmatprep.subr.bf16.mxu0 0
        %2139 = vmatpush1.bf16.msra.mxu0 0
        %2140 = vmatprep.subr.bf16.mxu0 0
        %2141 = vmatpush1.bf16.msra.mxu0 0
        %2142 = vmatprep.subr.bf16.mxu0 0
        %2143 = vmatpush1.bf16.msra.mxu0 0
        %2144 = vmatprep.mubr.bf16.mxu0 0
        %2145 = vmatmul.mubr.bf16.gmra.mrb[0].mxu0 %v2110
        %v2146 = vpop.f32.mrb[0].mxu0
        %v2147 = vadd.f32 0.0, %v2146
        %v2148 = vpop.f32.mrb[0].mxu0
        %v2149 = vpop.f32.mrb[0].mxu0
        %v2150 = vadd.f32 0.0, %v2149
        %v2151 = vpop.f32.mrb[0].mxu0
        %2152 = vdwg.mxu0
        %v2161 = vunpack.c.l.b16 %v2067
        %v2162 = vunpack.c.l.b16 %v2068
        %v2163 = vunpack.c.l.b16 %v2069
        %v2164 = vunpack.c.l.b16 %v2070
        %v2165 = vunpack.c.l.b16 %v2071
        %v2166 = vunpack.c.l.b16 %v2072
        %v2167 = vunpack.c.l.b16 %v2073
        %v2168 = vunpack.c.l.b16 %v2074
        %v2169 = vpack.c.b16 %v2162, %v2161
        %v2170 = vpack.c.b16 %v2164, %v2163
        %v2171 = vpack.c.b16 %v2166, %v2165
        %v2172 = vpack.c.b16 %v2168, %v2167
        %v2178 = vsel %vm1143, %v2066, 0
        %2180 = vmatprep.subr.bf16.mxu0 0
        %2181 = vmatpush1.bf16.msra.mxu0 %v2169
        %2182 = vmatprep.subr.bf16.mxu0 0
        %2183 = vmatpush1.bf16.msra.mxu0 %v2170
        %2184 = vmatprep.subr.bf16.mxu0 0
        %2185 = vmatpush1.bf16.msra.mxu0 %v2171
        %2186 = vmatprep.subr.bf16.mxu0 0
        %2187 = vmatpush1.bf16.msra.mxu0 %v2172
        %2188 = vmatprep.subr.bf16.mxu0 0
        %2189 = vmatpush1.bf16.msra.mxu0 0
        %2190 = vmatprep.subr.bf16.mxu0 0
        %2191 = vmatpush1.bf16.msra.mxu0 0
        %2192 = vmatprep.subr.bf16.mxu0 0
        %2193 = vmatpush1.bf16.msra.mxu0 0
        %2194 = vmatprep.subr.bf16.mxu0 0
        %2195 = vmatpush1.bf16.msra.mxu0 0
        %2196 = vmatprep.subr.bf16.mxu0 0
        %2197 = vmatpush1.bf16.msra.mxu0 0
        %2198 = vmatprep.subr.bf16.mxu0 0
        %2199 = vmatpush1.bf16.msra.mxu0 0
        %2200 = vmatprep.subr.bf16.mxu0 0
        %2201 = vmatpush1.bf16.msra.mxu0 0
        %2202 = vmatprep.subr.bf16.mxu0 0
        %2203 = vmatpush1.bf16.msra.mxu0 0
        %2204 = vmatprep.subr.bf16.mxu0 0
        %2205 = vmatpush1.bf16.msra.mxu0 0
        %2206 = vmatprep.subr.bf16.mxu0 0
        %2207 = vmatpush1.bf16.msra.mxu0 0
        %2208 = vmatprep.subr.bf16.mxu0 0
        %2209 = vmatpush1.bf16.msra.mxu0 0
        %2210 = vmatprep.subr.bf16.mxu0 0
        %2211 = vmatpush1.bf16.msra.mxu0 0
        %2212 = vmatprep.mubr.bf16.mxu0 0
        %2213 = vmatmul.mubr.bf16.gmra.mrb[0].mxu0 %v2178
        %v2214 = vpop.f32.mrb[0].mxu0
        %v2215 = vadd.f32 %v2147, %v2214
        %v2216 = vpop.f32.mrb[0].mxu0
        %v2217 = vpop.f32.mrb[0].mxu0
        %v2218 = vadd.f32 %v2150, %v2217
        %v2219 = vpop.f32.mrb[0].mxu0
        %2220 = vdwg.mxu0
        %v2221 = vpack.c.bf16 %v2065, %v2064
        %s2222 = scalar_lea.vmem [#allocation10], 64
        %v2223 = vld [vmem:[%s2222] sm:$0xf]
        %v2224 = vld [vmem:[%s2222 + $0x4] sm:$0xf]
        %v2225 = vld [vmem:[%s2222 + $0x8] sm:$0xf]
        %v2226 = vld [vmem:[%s2222 + $0xc] sm:$0xf]
        %v2227 = vld [vmem:[%s2222 + $0x10] sm:$0xf]
        %v2228 = vld [vmem:[%s2222 + $0x14] sm:$0xf]
        %v2229 = vld [vmem:[%s2222 + $0x18] sm:$0xf]
        %v2230 = vld [vmem:[%s2222 + $0x1c] sm:$0xf]
        %v2239 = vunpack.c.l.b16 %v2223
        %v2240 = vunpack.c.l.b16 %v2224
        %v2241 = vunpack.c.l.b16 %v2225
        %v2242 = vunpack.c.l.b16 %v2226
        %v2243 = vunpack.c.l.b16 %v2227
        %v2244 = vunpack.c.l.b16 %v2228
        %v2245 = vunpack.c.l.b16 %v2229
        %v2246 = vunpack.c.l.b16 %v2230
        %v2247 = vpack.c.b16 %v2240, %v2239
        %v2248 = vpack.c.b16 %v2242, %v2241
        %v2249 = vpack.c.b16 %v2244, %v2243
        %v2250 = vpack.c.b16 %v2246, %v2245
        %v2256 = vsel %vm1143, %v2221, 0
        %2258 = vmatprep.subr.bf16.mxu0 0
        %2259 = vmatpush1.bf16.msra.mxu0 %v2247
        %2260 = vmatprep.subr.bf16.mxu0 0
        %2261 = vmatpush1.bf16.msra.mxu0 %v2248
        %2262 = vmatprep.subr.bf16.mxu0 0
        %2263 = vmatpush1.bf16.msra.mxu0 %v2249
        %2264 = vmatprep.subr.bf16.mxu0 0
        %2265 = vmatpush1.bf16.msra.mxu0 %v2250
        %2266 = vmatprep.subr.bf16.mxu0 0
        %2267 = vmatpush1.bf16.msra.mxu0 0
        %2268 = vmatprep.subr.bf16.mxu0 0
        %2269 = vmatpush1.bf16.msra.mxu0 0
        %2270 = vmatprep.subr.bf16.mxu0 0
        %2271 = vmatpush1.bf16.msra.mxu0 0
        %2272 = vmatprep.subr.bf16.mxu0 0
        %2273 = vmatpush1.bf16.msra.mxu0 0
        %2274 = vmatprep.subr.bf16.mxu0 0
        %2275 = vmatpush1.bf16.msra.mxu0 0
        %2276 = vmatprep.subr.bf16.mxu0 0
        %2277 = vmatpush1.bf16.msra.mxu0 0
        %2278 = vmatprep.subr.bf16.mxu0 0
        %2279 = vmatpush1.bf16.msra.mxu0 0
        %2280 = vmatprep.subr.bf16.mxu0 0
        %2281 = vmatpush1.bf16.msra.mxu0 0
        %2282 = vmatprep.subr.bf16.mxu0 0
        %2283 = vmatpush1.bf16.msra.mxu0 0
        %2284 = vmatprep.subr.bf16.mxu0 0
        %2285 = vmatpush1.bf16.msra.mxu0 0
        %2286 = vmatprep.subr.bf16.mxu0 0
        %2287 = vmatpush1.bf16.msra.mxu0 0
        %2288 = vmatprep.subr.bf16.mxu0 0
        %2289 = vmatpush1.bf16.msra.mxu0 0
        %2290 = vmatprep.mubr.bf16.mxu0 0
        %2291 = vmatmul.mubr.bf16.gmra.mrb[0].mxu0 %v2256
        %v2292 = vpop.f32.mrb[0].mxu0
        %v2293 = vadd.f32 0.0, %v2292
        %v2294 = vpop.f32.mrb[0].mxu0
        %v2295 = vpop.f32.mrb[0].mxu0
        %v2296 = vadd.f32 0.0, %v2295
        %v2297 = vpop.f32.mrb[0].mxu0
        %2298 = vdwg.mxu0
        %v2299 = vadd.f32 %v2215, %v2293
        %v2300 = vadd.f32 %v2218, %v2296
        %v2301 = vld [vmem:[#allocation28] sm:$0x1]
        %v2303 = vlaneseq
        %v2304 = vshrl.u32 %v2303, 7
        %v2305 = vsub.s32 0, %v2304
        %v2306 = vrot.slane %v2301, %v2305
        %v2308 = vadd.f32 %v2299, %v2306
        %v2309 = vadd.f32 %v2300, %v2306
        %v2310 = vmax.f32 %v2308, 0.0
        %v2311 = vmax.f32 %v2309, 0.0
        %2312 = vst.msk [vmem:[#allocation3 + $0x1] sm:$0xff] %vm1143, %v2310
        %2313 = vst.msk [vmem:[#allocation3 + $0x9] sm:$0xff] %vm1143, %v2311
        %v2314 = vld [vmem:[#allocation3] sm:$0xff]
        %v2315 = vld [vmem:[#allocation3 + $0x8] sm:$0xff]
        %v2316 = vld [vmem:[#allocation3 + $0x1] sm:$0xff]
        %v2317 = vld [vmem:[#allocation3 + $0x9] sm:$0xff]
        %v2318 = vld [vmem:[#allocation3 + $0x2] sm:$0xff]
        %v2319 = vld [vmem:[#allocation3 + $0xa] sm:$0xff]
        %v2320 = vpack.c.bf16 %v2315, %v2314
        %v2321 = vld [vmem:[#allocation12] sm:$0xf]
        %v2322 = vld [vmem:[#allocation12 + $0x4] sm:$0xf]
        %v2323 = vld [vmem:[#allocation12 + $0x8] sm:$0xf]
        %v2324 = vld [vmem:[#allocation12 + $0xc] sm:$0xf]
        %v2325 = vld [vmem:[#allocation12 + $0x10] sm:$0xf]
        %v2326 = vld [vmem:[#allocation12 + $0x14] sm:$0xf]
        %v2327 = vld [vmem:[#allocation12 + $0x18] sm:$0xf]
        %v2328 = vld [vmem:[#allocation12 + $0x1c] sm:$0xf]
        %v2329 = vpack.c.bf16 %v2317, %v2316
        %s2330 = scalar_lea.vmem [#allocation12], 32
        %v2331 = vld [vmem:[%s2330] sm:$0xf]
        %v2332 = vld [vmem:[%s2330 + $0x4] sm:$0xf]
        %v2333 = vld [vmem:[%s2330 + $0x8] sm:$0xf]
        %v2334 = vld [vmem:[%s2330 + $0xc] sm:$0xf]
        %v2335 = vld [vmem:[%s2330 + $0x10] sm:$0xf]
        %v2336 = vld [vmem:[%s2330 + $0x14] sm:$0xf]
        %v2337 = vld [vmem:[%s2330 + $0x18] sm:$0xf]
        %v2338 = vld [vmem:[%s2330 + $0x1c] sm:$0xf]
        %v2347 = vunpack.c.l.b16 %v2331
        %v2348 = vunpack.c.l.b16 %v2332
        %v2349 = vunpack.c.l.b16 %v2333
        %v2350 = vunpack.c.l.b16 %v2334
        %v2351 = vunpack.c.l.b16 %v2335
        %v2352 = vunpack.c.l.b16 %v2336
        %v2353 = vunpack.c.l.b16 %v2337
        %v2354 = vunpack.c.l.b16 %v2338
        %v2355 = vpack.c.b16 %v2348, %v2347
        %v2356 = vpack.c.b16 %v2350, %v2349
        %v2357 = vpack.c.b16 %v2352, %v2351
        %v2358 = vpack.c.b16 %v2354, %v2353
        %v2364 = vsel %vm1143, %v2329, 0
        %2366 = vmatprep.subr.bf16.mxu0 0
        %2367 = vmatpush1.bf16.msra.mxu0 %v2355
        %2368 = vmatprep.subr.bf16.mxu0 0
        %2369 = vmatpush1.bf16.msra.mxu0 %v2356
        %2370 = vmatprep.subr.bf16.mxu0 0
        %2371 = vmatpush1.bf16.msra.mxu0 %v2357
        %2372 = vmatprep.subr.bf16.mxu0 0
        %2373 = vmatpush1.bf16.msra.mxu0 %v2358
        %2374 = vmatprep.subr.bf16.mxu0 0
        %2375 = vmatpush1.bf16.msra.mxu0 0
        %2376 = vmatprep.subr.bf16.mxu0 0
        %2377 = vmatpush1.bf16.msra.mxu0 0
        %2378 = vmatprep.subr.bf16.mxu0 0
        %2379 = vmatpush1.bf16.msra.mxu0 0
        %2380 = vmatprep.subr.bf16.mxu0 0
        %2381 = vmatpush1.bf16.msra.mxu0 0
        %2382 = vmatprep.subr.bf16.mxu0 0
        %2383 = vmatpush1.bf16.msra.mxu0 0
        %2384 = vmatprep.subr.bf16.mxu0 0
        %2385 = vmatpush1.bf16.msra.mxu0 0
        %2386 = vmatprep.subr.bf16.mxu0 0
        %2387 = vmatpush1.bf16.msra.mxu0 0
        %2388 = vmatprep.subr.bf16.mxu0 0
        %2389 = vmatpush1.bf16.msra.mxu0 0
        %2390 = vmatprep.subr.bf16.mxu0 0
        %2391 = vmatpush1.bf16.msra.mxu0 0
        %2392 = vmatprep.subr.bf16.mxu0 0
        %2393 = vmatpush1.bf16.msra.mxu0 0
        %2394 = vmatprep.subr.bf16.mxu0 0
        %2395 = vmatpush1.bf16.msra.mxu0 0
        %2396 = vmatprep.subr.bf16.mxu0 0
        %2397 = vmatpush1.bf16.msra.mxu0 0
        %2398 = vmatprep.mubr.bf16.mxu0 0
        %2399 = vmatmul.mubr.bf16.gmra.mrb[0].mxu0 %v2364
        %v2400 = vpop.f32.mrb[0].mxu0
        %v2401 = vadd.f32 0.0, %v2400
        %v2402 = vpop.f32.mrb[0].mxu0
        %v2403 = vpop.f32.mrb[0].mxu0
        %v2404 = vadd.f32 0.0, %v2403
        %v2405 = vpop.f32.mrb[0].mxu0
        %2406 = vdwg.mxu0
        %v2415 = vunpack.c.l.b16 %v2321
        %v2416 = vunpack.c.l.b16 %v2322
        %v2417 = vunpack.c.l.b16 %v2323
        %v2418 = vunpack.c.l.b16 %v2324
        %v2419 = vunpack.c.l.b16 %v2325
        %v2420 = vunpack.c.l.b16 %v2326
        %v2421 = vunpack.c.l.b16 %v2327
        %v2422 = vunpack.c.l.b16 %v2328
        %v2423 = vpack.c.b16 %v2416, %v2415
        %v2424 = vpack.c.b16 %v2418, %v2417
        %v2425 = vpack.c.b16 %v2420, %v2419
        %v2426 = vpack.c.b16 %v2422, %v2421
        %v2432 = vsel %vm1143, %v2320, 0
        %2434 = vmatprep.subr.bf16.mxu0 0
        %2435 = vmatpush1.bf16.msra.mxu0 %v2423
        %2436 = vmatprep.subr.bf16.mxu0 0
        %2437 = vmatpush1.bf16.msra.mxu0 %v2424
        %2438 = vmatprep.subr.bf16.mxu0 0
        %2439 = vmatpush1.bf16.msra.mxu0 %v2425
        %2440 = vmatprep.subr.bf16.mxu0 0
        %2441 = vmatpush1.bf16.msra.mxu0 %v2426
        %2442 = vmatprep.subr.bf16.mxu0 0
        %2443 = vmatpush1.bf16.msra.mxu0 0
        %2444 = vmatprep.subr.bf16.mxu0 0
        %2445 = vmatpush1.bf16.msra.mxu0 0
        %2446 = vmatprep.subr.bf16.mxu0 0
        %2447 = vmatpush1.bf16.msra.mxu0 0
        %2448 = vmatprep.subr.bf16.mxu0 0
        %2449 = vmatpush1.bf16.msra.mxu0 0
        %2450 = vmatprep.subr.bf16.mxu0 0
        %2451 = vmatpush1.bf16.msra.mxu0 0
        %2452 = vmatprep.subr.bf16.mxu0 0
        %2453 = vmatpush1.bf16.msra.mxu0 0
        %2454 = vmatprep.subr.bf16.mxu0 0
        %2455 = vmatpush1.bf16.msra.mxu0 0
        %2456 = vmatprep.subr.bf16.mxu0 0
        %2457 = vmatpush1.bf16.msra.mxu0 0
        %2458 = vmatprep.subr.bf16.mxu0 0
        %2459 = vmatpush1.bf16.msra.mxu0 0
        %2460 = vmatprep.subr.bf16.mxu0 0
        %2461 = vmatpush1.bf16.msra.mxu0 0
        %2462 = vmatprep.subr.bf16.mxu0 0
        %2463 = vmatpush1.bf16.msra.mxu0 0
        %2464 = vmatprep.subr.bf16.mxu0 0
        %2465 = vmatpush1.bf16.msra.mxu0 0
        %2466 = vmatprep.mubr.bf16.mxu0 0
        %2467 = vmatmul.mubr.bf16.gmra.mrb[0].mxu0 %v2432
        %v2468 = vpop.f32.mrb[0].mxu0
        %v2469 = vadd.f32 %v2401, %v2468
        %v2470 = vpop.f32.mrb[0].mxu0
        %v2471 = vpop.f32.mrb[0].mxu0
        %v2472 = vadd.f32 %v2404, %v2471
        %v2473 = vpop.f32.mrb[0].mxu0
        %2474 = vdwg.mxu0
        %v2475 = vpack.c.bf16 %v2319, %v2318
        %s2476 = scalar_lea.vmem [#allocation12], 64
        %v2477 = vld [vmem:[%s2476] sm:$0xf]
        %v2478 = vld [vmem:[%s2476 + $0x4] sm:$0xf]
        %v2479 = vld [vmem:[%s2476 + $0x8] sm:$0xf]
        %v2480 = vld [vmem:[%s2476 + $0xc] sm:$0xf]
        %v2481 = vld [vmem:[%s2476 + $0x10] sm:$0xf]
        %v2482 = vld [vmem:[%s2476 + $0x14] sm:$0xf]
        %v2483 = vld [vmem:[%s2476 + $0x18] sm:$0xf]
        %v2484 = vld [vmem:[%s2476 + $0x1c] sm:$0xf]
        %v2493 = vunpack.c.l.b16 %v2477
        %v2494 = vunpack.c.l.b16 %v2478
        %v2495 = vunpack.c.l.b16 %v2479
        %v2496 = vunpack.c.l.b16 %v2480
        %v2497 = vunpack.c.l.b16 %v2481
        %v2498 = vunpack.c.l.b16 %v2482
        %v2499 = vunpack.c.l.b16 %v2483
        %v2500 = vunpack.c.l.b16 %v2484
        %v2501 = vpack.c.b16 %v2494, %v2493
        %v2502 = vpack.c.b16 %v2496, %v2495
        %v2503 = vpack.c.b16 %v2498, %v2497
        %v2504 = vpack.c.b16 %v2500, %v2499
        %v2510 = vsel %vm1143, %v2475, 0
        %2512 = vmatprep.subr.bf16.mxu0 0
        %2513 = vmatpush1.bf16.msra.mxu0 %v2501
        %2514 = vmatprep.subr.bf16.mxu0 0
        %2515 = vmatpush1.bf16.msra.mxu0 %v2502
        %2516 = vmatprep.subr.bf16.mxu0 0
        %2517 = vmatpush1.bf16.msra.mxu0 %v2503
        %2518 = vmatprep.subr.bf16.mxu0 0
        %2519 = vmatpush1.bf16.msra.mxu0 %v2504
        %2520 = vmatprep.subr.bf16.mxu0 0
        %2521 = vmatpush1.bf16.msra.mxu0 0
        %2522 = vmatprep.subr.bf16.mxu0 0
        %2523 = vmatpush1.bf16.msra.mxu0 0
        %2524 = vmatprep.subr.bf16.mxu0 0
        %2525 = vmatpush1.bf16.msra.mxu0 0
        %2526 = vmatprep.subr.bf16.mxu0 0
        %2527 = vmatpush1.bf16.msra.mxu0 0
        %2528 = vmatprep.subr.bf16.mxu0 0
        %2529 = vmatpush1.bf16.msra.mxu0 0
        %2530 = vmatprep.subr.bf16.mxu0 0
        %2531 = vmatpush1.bf16.msra.mxu0 0
        %2532 = vmatprep.subr.bf16.mxu0 0
        %2533 = vmatpush1.bf16.msra.mxu0 0
        %2534 = vmatprep.subr.bf16.mxu0 0
        %2535 = vmatpush1.bf16.msra.mxu0 0
        %2536 = vmatprep.subr.bf16.mxu0 0
        %2537 = vmatpush1.bf16.msra.mxu0 0
        %2538 = vmatprep.subr.bf16.mxu0 0
        %2539 = vmatpush1.bf16.msra.mxu0 0
        %2540 = vmatprep.subr.bf16.mxu0 0
        %2541 = vmatpush1.bf16.msra.mxu0 0
        %2542 = vmatprep.subr.bf16.mxu0 0
        %2543 = vmatpush1.bf16.msra.mxu0 0
        %2544 = vmatprep.mubr.bf16.mxu0 0
        %2545 = vmatmul.mubr.bf16.gmra.mrb[0].mxu0 %v2510
        %v2546 = vpop.f32.mrb[0].mxu0
        %v2547 = vadd.f32 0.0, %v2546
        %v2548 = vpop.f32.mrb[0].mxu0
        %v2549 = vpop.f32.mrb[0].mxu0
        %v2550 = vadd.f32 0.0, %v2549
        %v2551 = vpop.f32.mrb[0].mxu0
        %2552 = vdwg.mxu0
        %v2553 = vadd.f32 %v2469, %v2547
        %v2554 = vadd.f32 %v2472, %v2550
        %v2555 = vld [vmem:[#allocation30] sm:$0x1]
        %v2557 = vlaneseq
        %v2558 = vshrl.u32 %v2557, 7
        %v2559 = vsub.s32 0, %v2558
        %v2560 = vrot.slane %v2555, %v2559
        %v2562 = vadd.f32 %v2553, %v2560
        %v2563 = vadd.f32 %v2554, %v2560
        %v2564 = vadd.f32 %v2562, %v2050
        %v2565 = vadd.f32 %v2563, %v2055
        %v2566 = vmax.f32 %v2564, 0.0
        %v2567 = vmax.f32 %v2565, 0.0
        %v2568 = vpack.c.bf16 %v2567, %v2566
        %v2569 = vld [vmem:[#allocation15] sm:$0xf]
        %v2570 = vld [vmem:[#allocation15 + $0x4] sm:$0xf]
        %v2571 = vld [vmem:[#allocation15 + $0x8] sm:$0xf]
        %v2572 = vld [vmem:[#allocation15 + $0xc] sm:$0xf]
        %v2573 = vld [vmem:[#allocation15 + $0x10] sm:$0xf]
        %v2574 = vld [vmem:[#allocation15 + $0x14] sm:$0xf]
        %v2575 = vld [vmem:[#allocation15 + $0x18] sm:$0xf]
        %v2576 = vld [vmem:[#allocation15 + $0x1c] sm:$0xf]
        %v2585 = vunpack.c.l.b16 %v2569
        %v2586 = vunpack.c.l.b16 %v2570
        %v2587 = vunpack.c.l.b16 %v2571
        %v2588 = vunpack.c.l.b16 %v2572
        %v2589 = vunpack.c.l.b16 %v2573
        %v2590 = vunpack.c.l.b16 %v2574
        %v2591 = vunpack.c.l.b16 %v2575
        %v2592 = vunpack.c.l.b16 %v2576
        %v2593 = vpack.c.b16 %v2586, %v2585
        %v2594 = vpack.c.b16 %v2588, %v2587
        %v2595 = vpack.c.b16 %v2590, %v2589
        %v2596 = vpack.c.b16 %v2592, %v2591
        %v2602 = vsel %vm1143, %v2568, 0
        %2604 = vmatprep.subr.bf16.mxu0 0
        %2605 = vmatpush1.bf16.msra.mxu0 %v2593
        %2606 = vmatprep.subr.bf16.mxu0 0
        %2607 = vmatpush1.bf16.msra.mxu0 %v2594
        %2608 = vmatprep.subr.bf16.mxu0 0
        %2609 = vmatpush1.bf16.msra.mxu0 %v2595
        %2610 = vmatprep.subr.bf16.mxu0 0
        %2611 = vmatpush1.bf16.msra.mxu0 %v2596
        %2612 = vmatprep.subr.bf16.mxu0 0
        %2613 = vmatpush1.bf16.msra.mxu0 0
        %2614 = vmatprep.subr.bf16.mxu0 0
        %2615 = vmatpush1.bf16.msra.mxu0 0
        %2616 = vmatprep.subr.bf16.mxu0 0
        %2617 = vmatpush1.bf16.msra.mxu0 0
        %2618 = vmatprep.subr.bf16.mxu0 0
        %2619 = vmatpush1.bf16.msra.mxu0 0
        %2620 = vmatprep.subr.bf16.mxu0 0
        %2621 = vmatpush1.bf16.msra.mxu0 0
        %2622 = vmatprep.subr.bf16.mxu0 0
        %2623 = vmatpush1.bf16.msra.mxu0 0
        %2624 = vmatprep.subr.bf16.mxu0 0
        %2625 = vmatpush1.bf16.msra.mxu0 0
        %2626 = vmatprep.subr.bf16.mxu0 0
        %2627 = vmatpush1.bf16.msra.mxu0 0
        %2628 = vmatprep.subr.bf16.mxu0 0
        %2629 = vmatpush1.bf16.msra.mxu0 0
        %2630 = vmatprep.subr.bf16.mxu0 0
        %2631 = vmatpush1.bf16.msra.mxu0 0
        %2632 = vmatprep.subr.bf16.mxu0 0
        %2633 = vmatpush1.bf16.msra.mxu0 0
        %2634 = vmatprep.subr.bf16.mxu0 0
        %2635 = vmatpush1.bf16.msra.mxu0 0
        %2636 = vmatprep.mubr.bf16.mxu0 0
        %2637 = vmatmul.mubr.bf16.gmra.mrb[0].mxu0 %v2602
        %v2638 = vpop.f32.mrb[0].mxu0
        %v2639 = vadd.f32 0.0, %v2638
        %v2640 = vpop.f32.mrb[0].mxu0
        %v2641 = vpop.f32.mrb[0].mxu0
        %v2642 = vadd.f32 0.0, %v2641
        %v2643 = vpop.f32.mrb[0].mxu0
        %2644 = vdwg.mxu0
        %v2645 = vmul.u32 %v1967, 2
        %vm2646 = vcmp.eq.s32.totalorder %v1970, %v2645
        %v2647 = vsel %vm2646, 1.0, 0.0
        %v2648 = vld [vmem:[#allocation33] sm:$0x1]
        %v2650 = vlaneseq
        %v2651 = vshrl.u32 %v2650, 7
        %v2652 = vsub.s32 0, %v2651
        %v2653 = vrot.slane %v2648, %v2652
        %vm2655 = vcmask 130048
        %v2657 = vsel %vm2655, %v2647, 0
        %2659 = vmatprep.subr.mxu0 0.0
        %2660 = vmatpush1.msra.mxu0 %v2639
        %2661 = vmatprep.subr.mxu0 0.0
        %2662 = vmatpush1.msra.mxu0 %v2642
        %2663 = vmatprep.subr.mxu0 0.0
        %2664 = vmatpush1.msra.mxu0 0.0
        %2665 = vmatprep.subr.mxu0 0.0
        %2666 = vmatpush1.msra.mxu0 0.0
        %2667 = vmatprep.subr.mxu0 0.0
        %2668 = vmatpush1.msra.mxu0 0.0
        %2669 = vmatprep.subr.mxu0 0.0
        %2670 = vmatpush1.msra.mxu0 0.0
        %2671 = vmatprep.subr.mxu0 0.0
        %2672 = vmatpush1.msra.mxu0 0.0
        %2673 = vmatprep.subr.mxu0 0.0
        %2674 = vmatpush1.msra.mxu0 0.0
        %2675 = vmatprep.subr.mxu0 0.0
        %2676 = vmatpush1.msra.mxu0 0.0
        %2677 = vmatprep.subr.mxu0 0.0
        %2678 = vmatpush1.msra.mxu0 0.0
        %2679 = vmatprep.subr.mxu0 0.0
        %2680 = vmatpush1.msra.mxu0 0.0
        %2681 = vmatprep.subr.mxu0 0.0
        %2682 = vmatpush1.msra.mxu0 0.0
        %2683 = vmatprep.subr.mxu0 0.0
        %2684 = vmatpush1.msra.mxu0 0.0
        %2685 = vmatprep.subr.mxu0 0.0
        %2686 = vmatpush1.msra.mxu0 0.0
        %2687 = vmatprep.subr.mxu0 0.0
        %2688 = vmatpush1.msra.mxu0 0.0
        %2689 = vmatprep.subr.mxu0 0.0
        %2690 = vmatpush1.msra.mxu0 0.0
        %2691 = vmatprep.subr.mxu0 0.0
        %2692 = vmatpush1.msra.mxu0 0.0
        %2693 = vmatprep.subr.mxu0 0.0
        %2694 = vmatpush1.msra.mxu0 0.0
        %2695 = vmatprep.subr.mxu0 0.0
        %2696 = vmatpush1.msra.mxu0 0.0
        %2697 = vmatprep.subr.mxu0 0.0
        %2698 = vmatpush1.msra.mxu0 0.0
        %2699 = vmatprep.subr.mxu0 0.0
        %2700 = vmatpush1.msra.mxu0 0.0
        %2701 = vmatprep.subr.mxu0 0.0
        %2702 = vmatpush1.msra.mxu0 0.0
        %2703 = vmatprep.subr.mxu0 0.0
        %2704 = vmatpush1.msra.mxu0 0.0
        %2705 = vmatprep.subr.mxu0 0.0
        %2706 = vmatpush1.msra.mxu0 0.0
        %2707 = vmatprep.subr.mxu0 0.0
        %2708 = vmatpush1.msra.mxu0 0.0
        %2709 = vmatprep.subr.mxu0 0.0
        %2710 = vmatpush1.msra.mxu0 0.0
        %2711 = vmatprep.subr.mxu0 0.0
        %2712 = vmatpush1.msra.mxu0 0.0
        %2713 = vmatprep.subr.mxu0 0.0
        %2714 = vmatpush1.msra.mxu0 0.0
        %2715 = vmatprep.subr.mxu0 0.0
        %2716 = vmatpush1.msra.mxu0 0.0
        %2717 = vmatprep.subr.mxu0 0.0
        %2718 = vmatpush1.msra.mxu0 0.0
        %2719 = vmatprep.subr.mxu0 0.0
        %2720 = vmatpush1.msra.mxu0 0.0
        %2721 = vmatprep.subr.mxu0 0.0
        %2722 = vmatpush1.msra.mxu0 0.0
        %2723 = vmatprep.mubr.f32.mxu0 0.0
        %2724 = vmatmul.mubr.f32.gmra.mrb[0].mxu0 %v2657
        %v2725 = vpop.f32.mrb[0].mxu0
        %v2726 = vadd.f32 %v2653, %v2725
        %v2727 = vpop.f32.mrb[0].mxu0
        %2728 = vdwg.mxu0
        %2729 = vst.msk [vmem:[#allocation3 + $0x1] sm:$0xff] %vm1143, %v2566
        %2730 = vst.msk [vmem:[#allocation3 + $0x9] sm:$0xff] %vm1143, %v2567
        %v2731 = vld [vmem:[#allocation3] sm:$0xff]
        %v2732 = vld [vmem:[#allocation3 + $0x8] sm:$0xff]
        %v2733 = vld [vmem:[#allocation3 + $0x1] sm:$0xff]
        %v2734 = vld [vmem:[#allocation3 + $0x9] sm:$0xff]
        %v2735 = vld [vmem:[#allocation3 + $0x2] sm:$0xff]
        %v2736 = vld [vmem:[#allocation3 + $0xa] sm:$0xff]
        %v2737 = vpack.c.bf16 %v2732, %v2731
        %v2738 = vld [vmem:[#allocation13] sm:$0xf]
        %v2739 = vld [vmem:[#allocation13 + $0x4] sm:$0xf]
        %v2740 = vld [vmem:[#allocation13 + $0x8] sm:$0xf]
        %v2741 = vld [vmem:[#allocation13 + $0xc] sm:$0xf]
        %v2742 = vld [vmem:[#allocation13 + $0x10] sm:$0xf]
        %v2743 = vld [vmem:[#allocation13 + $0x14] sm:$0xf]
        %v2744 = vld [vmem:[#allocation13 + $0x18] sm:$0xf]
        %v2745 = vld [vmem:[#allocation13 + $0x1c] sm:$0xf]
        %v2746 = vpack.c.bf16 %v2734, %v2733
        %s2747 = scalar_lea.vmem [#allocation13], 32
        %v2748 = vld [vmem:[%s2747] sm:$0xf]
        %v2749 = vld [vmem:[%s2747 + $0x4] sm:$0xf]
        %v2750 = vld [vmem:[%s2747 + $0x8] sm:$0xf]
        %v2751 = vld [vmem:[%s2747 + $0xc] sm:$0xf]
        %v2752 = vld [vmem:[%s2747 + $0x10] sm:$0xf]
        %v2753 = vld [vmem:[%s2747 + $0x14] sm:$0xf]
        %v2754 = vld [vmem:[%s2747 + $0x18] sm:$0xf]
        %v2755 = vld [vmem:[%s2747 + $0x1c] sm:$0xf]
        %v2764 = vunpack.c.l.b16 %v2748
        %v2765 = vunpack.c.l.b16 %v2749
        %v2766 = vunpack.c.l.b16 %v2750
        %v2767 = vunpack.c.l.b16 %v2751
        %v2768 = vunpack.c.l.b16 %v2752
        %v2769 = vunpack.c.l.b16 %v2753
        %v2770 = vunpack.c.l.b16 %v2754
        %v2771 = vunpack.c.l.b16 %v2755
        %v2772 = vpack.c.b16 %v2765, %v2764
        %v2773 = vpack.c.b16 %v2767, %v2766
        %v2774 = vpack.c.b16 %v2769, %v2768
        %v2775 = vpack.c.b16 %v2771, %v2770
        %v2781 = vsel %vm1143, %v2746, 0
        %2783 = vmatprep.subr.bf16.mxu0 0
        %2784 = vmatpush1.bf16.msra.mxu0 %v2772
        %2785 = vmatprep.subr.bf16.mxu0 0
        %2786 = vmatpush1.bf16.msra.mxu0 %v2773
        %2787 = vmatprep.subr.bf16.mxu0 0
        %2788 = vmatpush1.bf16.msra.mxu0 %v2774
        %2789 = vmatprep.subr.bf16.mxu0 0
        %2790 = vmatpush1.bf16.msra.mxu0 %v2775
        %2791 = vmatprep.subr.bf16.mxu0 0
        %2792 = vmatpush1.bf16.msra.mxu0 0
        %2793 = vmatprep.subr.bf16.mxu0 0
        %2794 = vmatpush1.bf16.msra.mxu0 0
        %2795 = vmatprep.subr.bf16.mxu0 0
        %2796 = vmatpush1.bf16.msra.mxu0 0
        %2797 = vmatprep.subr.bf16.mxu0 0
        %2798 = vmatpush1.bf16.msra.mxu0 0
        %2799 = vmatprep.subr.bf16.mxu0 0
        %2800 = vmatpush1.bf16.msra.mxu0 0
        %2801 = vmatprep.subr.bf16.mxu0 0
        %2802 = vmatpush1.bf16.msra.mxu0 0
        %2803 = vmatprep.subr.bf16.mxu0 0
        %2804 = vmatpush1.bf16.msra.mxu0 0
        %2805 = vmatprep.subr.bf16.mxu0 0
        %2806 = vmatpush1.bf16.msra.mxu0 0
        %2807 = vmatprep.subr.bf16.mxu0 0
        %2808 = vmatpush1.bf16.msra.mxu0 0
        %2809 = vmatprep.subr.bf16.mxu0 0
        %2810 = vmatpush1.bf16.msra.mxu0 0
        %2811 = vmatprep.subr.bf16.mxu0 0
        %2812 = vmatpush1.bf16.msra.mxu0 0
        %2813 = vmatprep.subr.bf16.mxu0 0
        %2814 = vmatpush1.bf16.msra.mxu0 0
        %2815 = vmatprep.mubr.bf16.mxu0 0
        %2816 = vmatmul.mubr.bf16.gmra.mrb[0].mxu0 %v2781
        %v2817 = vpop.f32.mrb[0].mxu0
        %v2818 = vadd.f32 0.0, %v2817
        %v2819 = vpop.f32.mrb[0].mxu0
        %v2820 = vpop.f32.mrb[0].mxu0
        %v2821 = vadd.f32 0.0, %v2820
        %v2822 = vpop.f32.mrb[0].mxu0
        %2823 = vdwg.mxu0
        %v2832 = vunpack.c.l.b16 %v2738
        %v2833 = vunpack.c.l.b16 %v2739
        %v2834 = vunpack.c.l.b16 %v2740
        %v2835 = vunpack.c.l.b16 %v2741
        %v2836 = vunpack.c.l.b16 %v2742
        %v2837 = vunpack.c.l.b16 %v2743
        %v2838 = vunpack.c.l.b16 %v2744
        %v2839 = vunpack.c.l.b16 %v2745
        %v2840 = vpack.c.b16 %v2833, %v2832
        %v2841 = vpack.c.b16 %v2835, %v2834
        %v2842 = vpack.c.b16 %v2837, %v2836
        %v2843 = vpack.c.b16 %v2839, %v2838
        %v2849 = vsel %vm1143, %v2737, 0
        %2851 = vmatprep.subr.bf16.mxu0 0
        %2852 = vmatpush1.bf16.msra.mxu0 %v2840
        %2853 = vmatprep.subr.bf16.mxu0 0
        %2854 = vmatpush1.bf16.msra.mxu0 %v2841
        %2855 = vmatprep.subr.bf16.mxu0 0
        %2856 = vmatpush1.bf16.msra.mxu0 %v2842
        %2857 = vmatprep.subr.bf16.mxu0 0
        %2858 = vmatpush1.bf16.msra.mxu0 %v2843
        %2859 = vmatprep.subr.bf16.mxu0 0
        %2860 = vmatpush1.bf16.msra.mxu0 0
        %2861 = vmatprep.subr.bf16.mxu0 0
        %2862 = vmatpush1.bf16.msra.mxu0 0
        %2863 = vmatprep.subr.bf16.mxu0 0
        %2864 = vmatpush1.bf16.msra.mxu0 0
        %2865 = vmatprep.subr.bf16.mxu0 0
        %2866 = vmatpush1.bf16.msra.mxu0 0
        %2867 = vmatprep.subr.bf16.mxu0 0
        %2868 = vmatpush1.bf16.msra.mxu0 0
        %2869 = vmatprep.subr.bf16.mxu0 0
        %2870 = vmatpush1.bf16.msra.mxu0 0
        %2871 = vmatprep.subr.bf16.mxu0 0
        %2872 = vmatpush1.bf16.msra.mxu0 0
        %2873 = vmatprep.subr.bf16.mxu0 0
        %2874 = vmatpush1.bf16.msra.mxu0 0
        %2875 = vmatprep.subr.bf16.mxu0 0
        %2876 = vmatpush1.bf16.msra.mxu0 0
        %2877 = vmatprep.subr.bf16.mxu0 0
        %2878 = vmatpush1.bf16.msra.mxu0 0
        %2879 = vmatprep.subr.bf16.mxu0 0
        %2880 = vmatpush1.bf16.msra.mxu0 0
        %2881 = vmatprep.subr.bf16.mxu0 0
        %2882 = vmatpush1.bf16.msra.mxu0 0
        %2883 = vmatprep.mubr.bf16.mxu0 0
        %2884 = vmatmul.mubr.bf16.gmra.mrb[0].mxu0 %v2849
        %v2885 = vpop.f32.mrb[0].mxu0
        %v2886 = vadd.f32 %v2818, %v2885
        %v2887 = vpop.f32.mrb[0].mxu0
        %v2888 = vpop.f32.mrb[0].mxu0
        %v2889 = vadd.f32 %v2821, %v2888
        %v2890 = vpop.f32.mrb[0].mxu0
        %2891 = vdwg.mxu0
        %v2892 = vpack.c.bf16 %v2736, %v2735
        %s2893 = scalar_lea.vmem [#allocation13], 64
        %v2894 = vld [vmem:[%s2893] sm:$0xf]
        %v2895 = vld [vmem:[%s2893 + $0x4] sm:$0xf]
        %v2896 = vld [vmem:[%s2893 + $0x8] sm:$0xf]
        %v2897 = vld [vmem:[%s2893 + $0xc] sm:$0xf]
        %v2898 = vld [vmem:[%s2893 + $0x10] sm:$0xf]
        %v2899 = vld [vmem:[%s2893 + $0x14] sm:$0xf]
        %v2900 = vld [vmem:[%s2893 + $0x18] sm:$0xf]
        %v2901 = vld [vmem:[%s2893 + $0x1c] sm:$0xf]
        %v2910 = vunpack.c.l.b16 %v2894
        %v2911 = vunpack.c.l.b16 %v2895
        %v2912 = vunpack.c.l.b16 %v2896
        %v2913 = vunpack.c.l.b16 %v2897
        %v2914 = vunpack.c.l.b16 %v2898
        %v2915 = vunpack.c.l.b16 %v2899
        %v2916 = vunpack.c.l.b16 %v2900
        %v2917 = vunpack.c.l.b16 %v2901
        %v2918 = vpack.c.b16 %v2911, %v2910
        %v2919 = vpack.c.b16 %v2913, %v2912
        %v2920 = vpack.c.b16 %v2915, %v2914
        %v2921 = vpack.c.b16 %v2917, %v2916
        %v2927 = vsel %vm1143, %v2892, 0
        %2929 = vmatprep.subr.bf16.mxu0 0
        %2930 = vmatpush1.bf16.msra.mxu0 %v2918
        %2931 = vmatprep.subr.bf16.mxu0 0
        %2932 = vmatpush1.bf16.msra.mxu0 %v2919
        %2933 = vmatprep.subr.bf16.mxu0 0
        %2934 = vmatpush1.bf16.msra.mxu0 %v2920
        %2935 = vmatprep.subr.bf16.mxu0 0
        %2936 = vmatpush1.bf16.msra.mxu0 %v2921
        %2937 = vmatprep.subr.bf16.mxu0 0
        %2938 = vmatpush1.bf16.msra.mxu0 0
        %2939 = vmatprep.subr.bf16.mxu0 0
        %2940 = vmatpush1.bf16.msra.mxu0 0
        %2941 = vmatprep.subr.bf16.mxu0 0
        %2942 = vmatpush1.bf16.msra.mxu0 0
        %2943 = vmatprep.subr.bf16.mxu0 0
        %2944 = vmatpush1.bf16.msra.mxu0 0
        %2945 = vmatprep.subr.bf16.mxu0 0
        %2946 = vmatpush1.bf16.msra.mxu0 0
        %2947 = vmatprep.subr.bf16.mxu0 0
        %2948 = vmatpush1.bf16.msra.mxu0 0
        %2949 = vmatprep.subr.bf16.mxu0 0
        %2950 = vmatpush1.bf16.msra.mxu0 0
        %2951 = vmatprep.subr.bf16.mxu0 0
        %2952 = vmatpush1.bf16.msra.mxu0 0
        %2953 = vmatprep.subr.bf16.mxu0 0
        %2954 = vmatpush1.bf16.msra.mxu0 0
        %2955 = vmatprep.subr.bf16.mxu0 0
        %2956 = vmatpush1.bf16.msra.mxu0 0
        %2957 = vmatprep.subr.bf16.mxu0 0
        %2958 = vmatpush1.bf16.msra.mxu0 0
        %2959 = vmatprep.subr.bf16.mxu0 0
        %2960 = vmatpush1.bf16.msra.mxu0 0
        %2961 = vmatprep.mubr.bf16.mxu0 0
        %2962 = vmatmul.mubr.bf16.gmra.mrb[0].mxu0 %v2927
        %v2963 = vpop.f32.mrb[0].mxu0
        %v2964 = vadd.f32 0.0, %v2963
        %v2965 = vpop.f32.mrb[0].mxu0
        %v2966 = vpop.f32.mrb[0].mxu0
        %v2967 = vadd.f32 0.0, %v2966
        %v2968 = vpop.f32.mrb[0].mxu0
        %2969 = vdwg.mxu0
        %v2970 = vadd.f32 %v2886, %v2964
        %v2971 = vadd.f32 %v2889, %v2967
        %v2972 = vld [vmem:[#allocation31] sm:$0x1]
        %v2974 = vlaneseq
        %v2975 = vshrl.u32 %v2974, 7
        %v2976 = vsub.s32 0, %v2975
        %v2977 = vrot.slane %v2972, %v2976
        %2979 = vmatprep.subr.mxu0 0.0
        %2980 = vmatpush1.msra.mxu0 %v2970
        %2981 = vmatprep.subr.mxu0 0.0
        %2982 = vmatpush1.msra.mxu0 %v2971
        %2983 = vmatprep.subr.mxu0 0.0
        %2984 = vmatpush1.msra.mxu0 0.0
        %2985 = vmatprep.subr.mxu0 0.0
        %2986 = vmatpush1.msra.mxu0 0.0
        %2987 = vmatprep.subr.mxu0 0.0
        %2988 = vmatpush1.msra.mxu0 0.0
        %2989 = vmatprep.subr.mxu0 0.0
        %2990 = vmatpush1.msra.mxu0 0.0
        %2991 = vmatprep.subr.mxu0 0.0
        %2992 = vmatpush1.msra.mxu0 0.0
        %2993 = vmatprep.subr.mxu0 0.0
        %2994 = vmatpush1.msra.mxu0 0.0
        %2995 = vmatprep.subr.mxu0 0.0
        %2996 = vmatpush1.msra.mxu0 0.0
        %2997 = vmatprep.subr.mxu0 0.0
        %2998 = vmatpush1.msra.mxu0 0.0
        %2999 = vmatprep.subr.mxu0 0.0
        %3000 = vmatpush1.msra.mxu0 0.0
        %3001 = vmatprep.subr.mxu0 0.0
        %3002 = vmatpush1.msra.mxu0 0.0
        %3003 = vmatprep.subr.mxu0 0.0
        %3004 = vmatpush1.msra.mxu0 0.0
        %3005 = vmatprep.subr.mxu0 0.0
        %3006 = vmatpush1.msra.mxu0 0.0
        %3007 = vmatprep.subr.mxu0 0.0
        %3008 = vmatpush1.msra.mxu0 0.0
        %3009 = vmatprep.subr.mxu0 0.0
        %3010 = vmatpush1.msra.mxu0 0.0
        %3011 = vmatprep.subr.mxu0 0.0
        %3012 = vmatpush1.msra.mxu0 0.0
        %3013 = vmatprep.subr.mxu0 0.0
        %3014 = vmatpush1.msra.mxu0 0.0
        %3015 = vmatprep.subr.mxu0 0.0
        %3016 = vmatpush1.msra.mxu0 0.0
        %3017 = vmatprep.subr.mxu0 0.0
        %3018 = vmatpush1.msra.mxu0 0.0
        %3019 = vmatprep.subr.mxu0 0.0
        %3020 = vmatpush1.msra.mxu0 0.0
        %3021 = vmatprep.subr.mxu0 0.0
        %3022 = vmatpush1.msra.mxu0 0.0
        %3023 = vmatprep.subr.mxu0 0.0
        %3024 = vmatpush1.msra.mxu0 0.0
        %3025 = vmatprep.subr.mxu0 0.0
        %3026 = vmatpush1.msra.mxu0 0.0
        %3027 = vmatprep.subr.mxu0 0.0
        %3028 = vmatpush1.msra.mxu0 0.0
        %3029 = vmatprep.subr.mxu0 0.0
        %3030 = vmatpush1.msra.mxu0 0.0
        %3031 = vmatprep.subr.mxu0 0.0
        %3032 = vmatpush1.msra.mxu0 0.0
        %3033 = vmatprep.subr.mxu0 0.0
        %3034 = vmatpush1.msra.mxu0 0.0
        %3035 = vmatprep.subr.mxu0 0.0
        %3036 = vmatpush1.msra.mxu0 0.0
        %3037 = vmatprep.subr.mxu0 0.0
        %3038 = vmatpush1.msra.mxu0 0.0
        %3039 = vmatprep.subr.mxu0 0.0
        %3040 = vmatpush1.msra.mxu0 0.0
        %3041 = vmatprep.subr.mxu0 0.0
        %3042 = vmatpush1.msra.mxu0 0.0
        %3043 = vmatprep.mubr.f32.mxu0 0.0
        %3044 = vmatmul.mubr.f32.gmra.mrb[0].mxu0 %v2657
        %v3045 = vpop.f32.mrb[0].mxu0
        %v3046 = vadd.f32 %v2977, %v3045
        %v3047 = vpop.f32.mrb[0].mxu0
        %3048 = vdwg.mxu0
        %v3049 = vmax.f32 %v3046, 0.0
        %3050 = vst [vmem:[#allocation4 + $0x1] sm:$0xff] %v3049
        %v3051 = vld [vmem:[#allocation4] sm:$0xff]
        %v3052 = vld [vmem:[#allocation4 + $0x1] sm:$0xff]
        %v3053 = vld [vmem:[#allocation4 + $0x2] sm:$0xff]
        %v3054 = vpack.c.bf16 %v3051, %v3051
        %v3055 = vld [vmem:[#allocation16] sm:$0xf]
        %v3056 = vld [vmem:[#allocation16 + $0x4] sm:$0xf]
        %v3057 = vld [vmem:[#allocation16 + $0x8] sm:$0xf]
        %v3058 = vld [vmem:[#allocation16 + $0xc] sm:$0xf]
        %v3059 = vld [vmem:[#allocation16 + $0x10] sm:$0xf]
        %v3060 = vld [vmem:[#allocation16 + $0x14] sm:$0xf]
        %v3061 = vld [vmem:[#allocation16 + $0x18] sm:$0xf]
        %v3062 = vld [vmem:[#allocation16 + $0x1c] sm:$0xf]
        %v3063 = vld [vmem:[#allocation16 + $0x20] sm:$0xf]
        %v3064 = vld [vmem:[#allocation16 + $0x24] sm:$0xf]
        %v3065 = vld [vmem:[#allocation16 + $0x28] sm:$0xf]
        %v3066 = vld [vmem:[#allocation16 + $0x2c] sm:$0xf]
        %v3067 = vld [vmem:[#allocation16 + $0x30] sm:$0xf]
        %v3068 = vld [vmem:[#allocation16 + $0x34] sm:$0xf]
        %v3069 = vld [vmem:[#allocation16 + $0x38] sm:$0xf]
        %v3070 = vld [vmem:[#allocation16 + $0x3c] sm:$0xf]
        %v3071 = vpack.c.bf16 %v3052, %v3052
        %s3072 = scalar_lea.vmem [#allocation16], 64
        %v3073 = vld [vmem:[%s3072] sm:$0xf]
        %v3074 = vld [vmem:[%s3072 + $0x4] sm:$0xf]
        %v3075 = vld [vmem:[%s3072 + $0x8] sm:$0xf]
        %v3076 = vld [vmem:[%s3072 + $0xc] sm:$0xf]
        %v3077 = vld [vmem:[%s3072 + $0x10] sm:$0xf]
        %v3078 = vld [vmem:[%s3072 + $0x14] sm:$0xf]
        %v3079 = vld [vmem:[%s3072 + $0x18] sm:$0xf]
        %v3080 = vld [vmem:[%s3072 + $0x1c] sm:$0xf]
        %v3081 = vld [vmem:[%s3072 + $0x20] sm:$0xf]
        %v3082 = vld [vmem:[%s3072 + $0x24] sm:$0xf]
        %v3083 = vld [vmem:[%s3072 + $0x28] sm:$0xf]
        %v3084 = vld [vmem:[%s3072 + $0x2c] sm:$0xf]
        %v3085 = vld [vmem:[%s3072 + $0x30] sm:$0xf]
        %v3086 = vld [vmem:[%s3072 + $0x34] sm:$0xf]
        %v3087 = vld [vmem:[%s3072 + $0x38] sm:$0xf]
        %v3088 = vld [vmem:[%s3072 + $0x3c] sm:$0xf]
        %v3105 = vunpack.c.l.b16 %v3073
        %v3106 = vunpack.c.l.b16 %v3074
        %v3107 = vunpack.c.l.b16 %v3075
        %v3108 = vunpack.c.l.b16 %v3076
        %v3109 = vunpack.c.l.b16 %v3077
        %v3110 = vunpack.c.l.b16 %v3078
        %v3111 = vunpack.c.l.b16 %v3079
        %v3112 = vunpack.c.l.b16 %v3080
        %v3113 = vunpack.c.l.b16 %v3081
        %v3114 = vunpack.c.l.b16 %v3082
        %v3115 = vunpack.c.l.b16 %v3083
        %v3116 = vunpack.c.l.b16 %v3084
        %v3117 = vunpack.c.l.b16 %v3085
        %v3118 = vunpack.c.l.b16 %v3086
        %v3119 = vunpack.c.l.b16 %v3087
        %v3120 = vunpack.c.l.b16 %v3088
        %v3121 = vpack.c.b16 %v3106, %v3105
        %v3122 = vpack.c.b16 %v3108, %v3107
        %v3123 = vpack.c.b16 %v3110, %v3109
        %v3124 = vpack.c.b16 %v3112, %v3111
        %v3125 = vpack.c.b16 %v3114, %v3113
        %v3126 = vpack.c.b16 %v3116, %v3115
        %v3127 = vpack.c.b16 %v3118, %v3117
        %v3128 = vpack.c.b16 %v3120, %v3119
        %3137 = vmatprep.subr.bf16.mxu0 0
        %3138 = vmatpush1.bf16.msra.mxu0 %v3121
        %3139 = vmatprep.subr.bf16.mxu0 0
        %3140 = vmatpush1.bf16.msra.mxu0 %v3122
        %3141 = vmatprep.subr.bf16.mxu0 0
        %3142 = vmatpush1.bf16.msra.mxu0 %v3123
        %3143 = vmatprep.subr.bf16.mxu0 0
        %3144 = vmatpush1.bf16.msra.mxu0 %v3124
        %3145 = vmatprep.subr.bf16.mxu0 0
        %3146 = vmatpush1.bf16.msra.mxu0 %v3125
        %3147 = vmatprep.subr.bf16.mxu0 0
        %3148 = vmatpush1.bf16.msra.mxu0 %v3126
        %3149 = vmatprep.subr.bf16.mxu0 0
        %3150 = vmatpush1.bf16.msra.mxu0 %v3127
        %3151 = vmatprep.subr.bf16.mxu0 0
        %3152 = vmatpush1.bf16.msra.mxu0 %v3128
        %3153 = vmatprep.subr.bf16.mxu0 0
        %3154 = vmatpush1.bf16.msra.mxu0 0
        %3155 = vmatprep.subr.bf16.mxu0 0
        %3156 = vmatpush1.bf16.msra.mxu0 0
        %3157 = vmatprep.subr.bf16.mxu0 0
        %3158 = vmatpush1.bf16.msra.mxu0 0
        %3159 = vmatprep.subr.bf16.mxu0 0
        %3160 = vmatpush1.bf16.msra.mxu0 0
        %3161 = vmatprep.subr.bf16.mxu0 0
        %3162 = vmatpush1.bf16.msra.mxu0 0
        %3163 = vmatprep.subr.bf16.mxu0 0
        %3164 = vmatpush1.bf16.msra.mxu0 0
        %3165 = vmatprep.subr.bf16.mxu0 0
        %3166 = vmatpush1.bf16.msra.mxu0 0
        %3167 = vmatprep.subr.bf16.mxu0 0
        %3168 = vmatpush1.bf16.msra.mxu0 0
        %3169 = vmatprep.mubr.bf16.mxu0 0
        %3170 = vmatmul.mubr.bf16.gmra.mrb[0].mxu0 %v3071
        %v3171 = vpop.f32.mrb[0].mxu0
        %v3172 = vadd.f32 0.0, %v3171
        %v3173 = vpop.f32.mrb[0].mxu0
        %v3174 = vpop.f32.mrb[0].mxu0
        %v3175 = vpop.f32.mrb[0].mxu0
        %3176 = vdwg.mxu0
        %v3193 = vunpack.c.l.b16 %v3055
        %v3194 = vunpack.c.l.b16 %v3056
        %v3195 = vunpack.c.l.b16 %v3057
        %v3196 = vunpack.c.l.b16 %v3058
        %v3197 = vunpack.c.l.b16 %v3059
        %v3198 = vunpack.c.l.b16 %v3060
        %v3199 = vunpack.c.l.b16 %v3061
        %v3200 = vunpack.c.l.b16 %v3062
        %v3201 = vunpack.c.l.b16 %v3063
        %v3202 = vunpack.c.l.b16 %v3064
        %v3203 = vunpack.c.l.b16 %v3065
        %v3204 = vunpack.c.l.b16 %v3066
        %v3205 = vunpack.c.l.b16 %v3067
        %v3206 = vunpack.c.l.b16 %v3068
        %v3207 = vunpack.c.l.b16 %v3069
        %v3208 = vunpack.c.l.b16 %v3070
        %v3209 = vpack.c.b16 %v3194, %v3193
        %v3210 = vpack.c.b16 %v3196, %v3195
        %v3211 = vpack.c.b16 %v3198, %v3197
        %v3212 = vpack.c.b16 %v3200, %v3199
        %v3213 = vpack.c.b16 %v3202, %v3201
        %v3214 = vpack.c.b16 %v3204, %v3203
        %v3215 = vpack.c.b16 %v3206, %v3205
        %v3216 = vpack.c.b16 %v3208, %v3207
        %3225 = vmatprep.subr.bf16.mxu0 0
        %3226 = vmatpush1.bf16.msra.mxu0 %v3209
        %3227 = vmatprep.subr.bf16.mxu0 0
        %3228 = vmatpush1.bf16.msra.mxu0 %v3210
        %3229 = vmatprep.subr.bf16.mxu0 0
        %3230 = vmatpush1.bf16.msra.mxu0 %v3211
        %3231 = vmatprep.subr.bf16.mxu0 0
        %3232 = vmatpush1.bf16.msra.mxu0 %v3212
        %3233 = vmatprep.subr.bf16.mxu0 0
        %3234 = vmatpush1.bf16.msra.mxu0 %v3213
        %3235 = vmatprep.subr.bf16.mxu0 0
        %3236 = vmatpush1.bf16.msra.mxu0 %v3214
        %3237 = vmatprep.subr.bf16.mxu0 0
        %3238 = vmatpush1.bf16.msra.mxu0 %v3215
        %3239 = vmatprep.subr.bf16.mxu0 0
        %3240 = vmatpush1.bf16.msra.mxu0 %v3216
        %3241 = vmatprep.subr.bf16.mxu0 0
        %3242 = vmatpush1.bf16.msra.mxu0 0
        %3243 = vmatprep.subr.bf16.mxu0 0
        %3244 = vmatpush1.bf16.msra.mxu0 0
        %3245 = vmatprep.subr.bf16.mxu0 0
        %3246 = vmatpush1.bf16.msra.mxu0 0
        %3247 = vmatprep.subr.bf16.mxu0 0
        %3248 = vmatpush1.bf16.msra.mxu0 0
        %3249 = vmatprep.subr.bf16.mxu0 0
        %3250 = vmatpush1.bf16.msra.mxu0 0
        %3251 = vmatprep.subr.bf16.mxu0 0
        %3252 = vmatpush1.bf16.msra.mxu0 0
        %3253 = vmatprep.subr.bf16.mxu0 0
        %3254 = vmatpush1.bf16.msra.mxu0 0
        %3255 = vmatprep.subr.bf16.mxu0 0
        %3256 = vmatpush1.bf16.msra.mxu0 0
        %3257 = vmatprep.mubr.bf16.mxu0 0
        %3258 = vmatmul.mubr.bf16.gmra.mrb[0].mxu0 %v3054
        %v3259 = vpop.f32.mrb[0].mxu0
        %v3260 = vadd.f32 %v3172, %v3259
        %v3261 = vpop.f32.mrb[0].mxu0
        %v3262 = vpop.f32.mrb[0].mxu0
        %v3263 = vpop.f32.mrb[0].mxu0
        %3264 = vdwg.mxu0
        %v3265 = vpack.c.bf16 %v3053, %v3053
        %s3266 = scalar_lea.vmem [#allocation16], 128
        %v3267 = vld [vmem:[%s3266] sm:$0xf]
        %v3268 = vld [vmem:[%s3266 + $0x4] sm:$0xf]
        %v3269 = vld [vmem:[%s3266 + $0x8] sm:$0xf]
        %v3270 = vld [vmem:[%s3266 + $0xc] sm:$0xf]
        %v3271 = vld [vmem:[%s3266 + $0x10] sm:$0xf]
        %v3272 = vld [vmem:[%s3266 + $0x14] sm:$0xf]
        %v3273 = vld [vmem:[%s3266 + $0x18] sm:$0xf]
        %v3274 = vld [vmem:[%s3266 + $0x1c] sm:$0xf]
        %v3275 = vld [vmem:[%s3266 + $0x20] sm:$0xf]
        %v3276 = vld [vmem:[%s3266 + $0x24] sm:$0xf]
        %v3277 = vld [vmem:[%s3266 + $0x28] sm:$0xf]
        %v3278 = vld [vmem:[%s3266 + $0x2c] sm:$0xf]
        %v3279 = vld [vmem:[%s3266 + $0x30] sm:$0xf]
        %v3280 = vld [vmem:[%s3266 + $0x34] sm:$0xf]
        %v3281 = vld [vmem:[%s3266 + $0x38] sm:$0xf]
        %v3282 = vld [vmem:[%s3266 + $0x3c] sm:$0xf]
        %v3299 = vunpack.c.l.b16 %v3267
        %v3300 = vunpack.c.l.b16 %v3268
        %v3301 = vunpack.c.l.b16 %v3269
        %v3302 = vunpack.c.l.b16 %v3270
        %v3303 = vunpack.c.l.b16 %v3271
        %v3304 = vunpack.c.l.b16 %v3272
        %v3305 = vunpack.c.l.b16 %v3273
        %v3306 = vunpack.c.l.b16 %v3274
        %v3307 = vunpack.c.l.b16 %v3275
        %v3308 = vunpack.c.l.b16 %v3276
        %v3309 = vunpack.c.l.b16 %v3277
        %v3310 = vunpack.c.l.b16 %v3278
        %v3311 = vunpack.c.l.b16 %v3279
        %v3312 = vunpack.c.l.b16 %v3280
        %v3313 = vunpack.c.l.b16 %v3281
        %v3314 = vunpack.c.l.b16 %v3282
        %v3315 = vpack.c.b16 %v3300, %v3299
        %v3316 = vpack.c.b16 %v3302, %v3301
        %v3317 = vpack.c.b16 %v3304, %v3303
        %v3318 = vpack.c.b16 %v3306, %v3305
        %v3319 = vpack.c.b16 %v3308, %v3307
        %v3320 = vpack.c.b16 %v3310, %v3309
        %v3321 = vpack.c.b16 %v3312, %v3311
        %v3322 = vpack.c.b16 %v3314, %v3313
        %3331 = vmatprep.subr.bf16.mxu0 0
        %3332 = vmatpush1.bf16.msra.mxu0 %v3315
        %3333 = vmatprep.subr.bf16.mxu0 0
        %3334 = vmatpush1.bf16.msra.mxu0 %v3316
        %3335 = vmatprep.subr.bf16.mxu0 0
        %3336 = vmatpush1.bf16.msra.mxu0 %v3317
        %3337 = vmatprep.subr.bf16.mxu0 0
        %3338 = vmatpush1.bf16.msra.mxu0 %v3318
        %3339 = vmatprep.subr.bf16.mxu0 0
        %3340 = vmatpush1.bf16.msra.mxu0 %v3319
        %3341 = vmatprep.subr.bf16.mxu0 0
        %3342 = vmatpush1.bf16.msra.mxu0 %v3320
        %3343 = vmatprep.subr.bf16.mxu0 0
        %3344 = vmatpush1.bf16.msra.mxu0 %v3321
        %3345 = vmatprep.subr.bf16.mxu0 0
        %3346 = vmatpush1.bf16.msra.mxu0 %v3322
        %3347 = vmatprep.subr.bf16.mxu0 0
        %3348 = vmatpush1.bf16.msra.mxu0 0
        %3349 = vmatprep.subr.bf16.mxu0 0
        %3350 = vmatpush1.bf16.msra.mxu0 0
        %3351 = vmatprep.subr.bf16.mxu0 0
        %3352 = vmatpush1.bf16.msra.mxu0 0
        %3353 = vmatprep.subr.bf16.mxu0 0
        %3354 = vmatpush1.bf16.msra.mxu0 0
        %3355 = vmatprep.subr.bf16.mxu0 0
        %3356 = vmatpush1.bf16.msra.mxu0 0
        %3357 = vmatprep.subr.bf16.mxu0 0
        %3358 = vmatpush1.bf16.msra.mxu0 0
        %3359 = vmatprep.subr.bf16.mxu0 0
        %3360 = vmatpush1.bf16.msra.mxu0 0
        %3361 = vmatprep.subr.bf16.mxu0 0
        %3362 = vmatpush1.bf16.msra.mxu0 0
        %3363 = vmatprep.mubr.bf16.mxu0 0
        %3364 = vmatmul.mubr.bf16.gmra.mrb[0].mxu0 %v3265
        %v3365 = vpop.f32.mrb[0].mxu0
        %v3366 = vadd.f32 0.0, %v3365
        %v3367 = vpop.f32.mrb[0].mxu0
        %v3368 = vpop.f32.mrb[0].mxu0
        %v3369 = vpop.f32.mrb[0].mxu0
        %3370 = vdwg.mxu0
        %v3371 = vadd.f32 %v3260, %v3366
        %v3372 = vld [vmem:[#allocation34] sm:$0x1]
        %v3374 = vlaneseq
        %v3375 = vshrl.u32 %v3374, 7
        %v3376 = vsub.s32 0, %v3375
        %v3377 = vrot.slane %v3372, %v3376
        %v3379 = vadd.f32 %v3371, %v3377
        %v3380 = vadd.f32 %v3379, %v2726
        %v3381 = vmax.f32 %v3380, 0.0
        %v3382 = vpack.c.bf16 %v3381, %v3381
        %v3383 = vld [vmem:[#allocation19] sm:$0xff]
        %v3384 = vld [vmem:[#allocation19 + $0x8] sm:$0xff]
        %v3385 = vld [vmem:[#allocation19 + $0x10] sm:$0xff]
        %v3386 = vld [vmem:[#allocation19 + $0x18] sm:$0xff]
        %v3387 = vld [vmem:[#allocation19 + $0x20] sm:$0xff]
        %v3388 = vld [vmem:[#allocation19 + $0x28] sm:$0xff]
        %v3389 = vld [vmem:[#allocation19 + $0x30] sm:$0xff]
        %v3390 = vld [vmem:[#allocation19 + $0x38] sm:$0xff]
        %v3391 = vld [vmem:[#allocation19 + $0x40] sm:$0xff]
        %v3392 = vld [vmem:[#allocation19 + $0x48] sm:$0xff]
        %v3393 = vld [vmem:[#allocation19 + $0x50] sm:$0xff]
        %v3394 = vld [vmem:[#allocation19 + $0x58] sm:$0xff]
        %v3395 = vld [vmem:[#allocation19 + $0x60] sm:$0xff]
        %v3396 = vld [vmem:[#allocation19 + $0x68] sm:$0xff]
        %v3397 = vld [vmem:[#allocation19 + $0x70] sm:$0xff]
        %v3398 = vld [vmem:[#allocation19 + $0x78] sm:$0xff]
        %v3415 = vunpack.c.l.b16 %v3383
        %v3416 = vunpack.c.h.b16 %v3383
        %v3417 = vunpack.c.l.b16 %v3384
        %v3418 = vunpack.c.h.b16 %v3384
        %v3419 = vunpack.c.l.b16 %v3385
        %v3420 = vunpack.c.h.b16 %v3385
        %v3421 = vunpack.c.l.b16 %v3386
        %v3422 = vunpack.c.h.b16 %v3386
        %v3423 = vunpack.c.l.b16 %v3387
        %v3424 = vunpack.c.h.b16 %v3387
        %v3425 = vunpack.c.l.b16 %v3388
        %v3426 = vunpack.c.h.b16 %v3388
        %v3427 = vunpack.c.l.b16 %v3389
        %v3428 = vunpack.c.h.b16 %v3389
        %v3429 = vunpack.c.l.b16 %v3390
        %v3430 = vunpack.c.h.b16 %v3390
        %v3431 = vunpack.c.l.b16 %v3391
        %v3432 = vunpack.c.h.b16 %v3391
        %v3433 = vunpack.c.l.b16 %v3392
        %v3434 = vunpack.c.h.b16 %v3392
        %v3435 = vunpack.c.l.b16 %v3393
        %v3436 = vunpack.c.h.b16 %v3393
        %v3437 = vunpack.c.l.b16 %v3394
        %v3438 = vunpack.c.h.b16 %v3394
        %v3439 = vunpack.c.l.b16 %v3395
        %v3440 = vunpack.c.h.b16 %v3395
        %v3441 = vunpack.c.l.b16 %v3396
        %v3442 = vunpack.c.h.b16 %v3396
        %v3443 = vunpack.c.l.b16 %v3397
        %v3444 = vunpack.c.h.b16 %v3397
        %v3445 = vunpack.c.l.b16 %v3398
        %v3446 = vunpack.c.h.b16 %v3398
        %v3447 = vpack.c.b16 %v3417, %v3415
        %v3448 = vpack.c.b16 %v3418, %v3416
        %v3449 = vpack.c.b16 %v3421, %v3419
        %v3450 = vpack.c.b16 %v3422, %v3420
        %v3451 = vpack.c.b16 %v3425, %v3423
        %v3452 = vpack.c.b16 %v3426, %v3424
        %v3453 = vpack.c.b16 %v3429, %v3427
        %v3454 = vpack.c.b16 %v3430, %v3428
        %v3455 = vpack.c.b16 %v3433, %v3431
        %v3456 = vpack.c.b16 %v3434, %v3432
        %v3457 = vpack.c.b16 %v3437, %v3435
        %v3458 = vpack.c.b16 %v3438, %v3436
        %v3459 = vpack.c.b16 %v3441, %v3439
        %v3460 = vpack.c.b16 %v3442, %v3440
        %v3461 = vpack.c.b16 %v3445, %v3443
        %v3462 = vpack.c.b16 %v3446, %v3444
        %3479 = vmatprep.subr.bf16.mxu0 %v3448
        %3480 = vmatpush1.bf16.msra.mxu0 %v3447
        %3481 = vmatprep.subr.bf16.mxu0 %v3450
        %3482 = vmatpush1.bf16.msra.mxu0 %v3449
        %3483 = vmatprep.subr.bf16.mxu0 %v3452
        %3484 = vmatpush1.bf16.msra.mxu0 %v3451
        %3485 = vmatprep.subr.bf16.mxu0 %v3454
        %3486 = vmatpush1.bf16.msra.mxu0 %v3453
        %3487 = vmatprep.subr.bf16.mxu0 %v3456
        %3488 = vmatpush1.bf16.msra.mxu0 %v3455
        %3489 = vmatprep.subr.bf16.mxu0 %v3458
        %3490 = vmatpush1.bf16.msra.mxu0 %v3457
        %3491 = vmatprep.subr.bf16.mxu0 %v3460
        %3492 = vmatpush1.bf16.msra.mxu0 %v3459
        %3493 = vmatprep.subr.bf16.mxu0 %v3462
        %3494 = vmatpush1.bf16.msra.mxu0 %v3461
        %3495 = vmatprep.subr.bf16.mxu0 0
        %3496 = vmatpush1.bf16.msra.mxu0 0
        %3497 = vmatprep.subr.bf16.mxu0 0
        %3498 = vmatpush1.bf16.msra.mxu0 0
        %3499 = vmatprep.subr.bf16.mxu0 0
        %3500 = vmatpush1.bf16.msra.mxu0 0
        %3501 = vmatprep.subr.bf16.mxu0 0
        %3502 = vmatpush1.bf16.msra.mxu0 0
        %3503 = vmatprep.subr.bf16.mxu0 0
        %3504 = vmatpush1.bf16.msra.mxu0 0
        %3505 = vmatprep.subr.bf16.mxu0 0
        %3506 = vmatpush1.bf16.msra.mxu0 0
        %3507 = vmatprep.subr.bf16.mxu0 0
        %3508 = vmatpush1.bf16.msra.mxu0 0
        %3509 = vmatprep.subr.bf16.mxu0 0
        %3510 = vmatpush1.bf16.msra.mxu0 0
        %3511 = vmatprep.mubr.bf16.mxu0 0
        %3512 = vmatmul.mubr.bf16.gmra.mrb[0].mxu0 %v3382
        %v3513 = vpop.f32.mrb[0].mxu0
        %v3514 = vadd.f32 0.0, %v3513
        %v3515 = vpop.f32.mrb[0].mxu0
        %v3516 = vadd.f32 0.0, %v3515
        %v3517 = vpop.f32.mrb[0].mxu0
        %v3518 = vpop.f32.mrb[0].mxu0
        %3519 = vdwg.mxu0
        %v3520 = vld [vmem:[#allocation37] sm:$0x3]
        %v3522 = vlaneseq
        %v3523 = vshrl.u32 %v3522, 7
        %v3524 = vsub.s32 0, %v3523
        %v3525 = vrot.slane %v3520, %v3524
        %v3526 = vlaneseq
        %v3527 = vshrl.u32 %v3526, 7
        %v3528 = vsub.s32 1, %v3527
        %v3529 = vrot.slane %v3520, %v3528
        %vm3532 = vcmask 64512
        %v3533 = vsel %vm3532, %v2647, 0
        %3535 = vmatprep.subr.mxu0 %v3516
        %3536 = vmatpush1.msra.mxu0 %v3514
        %3537 = vmatprep.subr.mxu0 0.0
        %3538 = vmatpush1.msra.mxu0 0.0
        %3539 = vmatprep.subr.mxu0 0.0
        %3540 = vmatpush1.msra.mxu0 0.0
        %3541 = vmatprep.subr.mxu0 0.0
        %3542 = vmatpush1.msra.mxu0 0.0
        %3543 = vmatprep.subr.mxu0 0.0
        %3544 = vmatpush1.msra.mxu0 0.0
        %3545 = vmatprep.subr.mxu0 0.0
        %3546 = vmatpush1.msra.mxu0 0.0
        %3547 = vmatprep.subr.mxu0 0.0
        %3548 = vmatpush1.msra.mxu0 0.0
        %3549 = vmatprep.subr.mxu0 0.0
        %3550 = vmatpush1.msra.mxu0 0.0
        %3551 = vmatprep.subr.mxu0 0.0
        %3552 = vmatpush1.msra.mxu0 0.0
        %3553 = vmatprep.subr.mxu0 0.0
        %3554 = vmatpush1.msra.mxu0 0.0
        %3555 = vmatprep.subr.mxu0 0.0
        %3556 = vmatpush1.msra.mxu0 0.0
        %3557 = vmatprep.subr.mxu0 0.0
        %3558 = vmatpush1.msra.mxu0 0.0
        %3559 = vmatprep.subr.mxu0 0.0
        %3560 = vmatpush1.msra.mxu0 0.0
        %3561 = vmatprep.subr.mxu0 0.0
        %3562 = vmatpush1.msra.mxu0 0.0
        %3563 = vmatprep.subr.mxu0 0.0
        %3564 = vmatpush1.msra.mxu0 0.0
        %3565 = vmatprep.subr.mxu0 0.0
        %3566 = vmatpush1.msra.mxu0 0.0
        %3567 = vmatprep.subr.mxu0 0.0
        %3568 = vmatpush1.msra.mxu0 0.0
        %3569 = vmatprep.subr.mxu0 0.0
        %3570 = vmatpush1.msra.mxu0 0.0
        %3571 = vmatprep.subr.mxu0 0.0
        %3572 = vmatpush1.msra.mxu0 0.0
        %3573 = vmatprep.subr.mxu0 0.0
        %3574 = vmatpush1.msra.mxu0 0.0
        %3575 = vmatprep.subr.mxu0 0.0
        %3576 = vmatpush1.msra.mxu0 0.0
        %3577 = vmatprep.subr.mxu0 0.0
        %3578 = vmatpush1.msra.mxu0 0.0
        %3579 = vmatprep.subr.mxu0 0.0
        %3580 = vmatpush1.msra.mxu0 0.0
        %3581 = vmatprep.subr.mxu0 0.0
        %3582 = vmatpush1.msra.mxu0 0.0
        %3583 = vmatprep.subr.mxu0 0.0
        %3584 = vmatpush1.msra.mxu0 0.0
        %3585 = vmatprep.subr.mxu0 0.0
        %3586 = vmatpush1.msra.mxu0 0.0
        %3587 = vmatprep.subr.mxu0 0.0
        %3588 = vmatpush1.msra.mxu0 0.0
        %3589 = vmatprep.subr.mxu0 0.0
        %3590 = vmatpush1.msra.mxu0 0.0
        %3591 = vmatprep.subr.mxu0 0.0
        %3592 = vmatpush1.msra.mxu0 0.0
        %3593 = vmatprep.subr.mxu0 0.0
        %3594 = vmatpush1.msra.mxu0 0.0
        %3595 = vmatprep.subr.mxu0 0.0
        %3596 = vmatpush1.msra.mxu0 0.0
        %3597 = vmatprep.subr.mxu0 0.0
        %3598 = vmatpush1.msra.mxu0 0.0
        %3599 = vmatprep.mubr.f32.mxu0 0.0
        %3600 = vmatmul.mubr.f32.gmra.mrb[0].mxu0 %v3533
        %v3601 = vpop.f32.mrb[0].mxu0
        %v3602 = vadd.f32 %v3525, %v3601
        %v3603 = vpop.f32.mrb[0].mxu0
        %v3604 = vadd.f32 %v3529, %v3603
        %3605 = vdwg.mxu0
        %3606 = vst [vmem:[#allocation4 + $0x1] sm:$0xff] %v3381
        %v3607 = vld [vmem:[#allocation4] sm:$0xff]
        %v3608 = vld [vmem:[#allocation4 + $0x1] sm:$0xff]
        %v3609 = vld [vmem:[#allocation4 + $0x2] sm:$0xff]
        %v3610 = vpack.c.bf16 %v3607, %v3607
        %v3611 = vld [vmem:[#allocation18] sm:$0xff]
        %v3612 = vld [vmem:[#allocation18 + $0x8] sm:$0xff]
        %v3613 = vld [vmem:[#allocation18 + $0x10] sm:$0xff]
        %v3614 = vld [vmem:[#allocation18 + $0x18] sm:$0xff]
        %v3615 = vld [vmem:[#allocation18 + $0x20] sm:$0xff]
        %v3616 = vld [vmem:[#allocation18 + $0x28] sm:$0xff]
        %v3617 = vld [vmem:[#allocation18 + $0x30] sm:$0xff]
        %v3618 = vld [vmem:[#allocation18 + $0x38] sm:$0xff]
        %v3619 = vld [vmem:[#allocation18 + $0x40] sm:$0xff]
        %v3620 = vld [vmem:[#allocation18 + $0x48] sm:$0xff]
        %v3621 = vld [vmem:[#allocation18 + $0x50] sm:$0xff]
        %v3622 = vld [vmem:[#allocation18 + $0x58] sm:$0xff]
        %v3623 = vld [vmem:[#allocation18 + $0x60] sm:$0xff]
        %v3624 = vld [vmem:[#allocation18 + $0x68] sm:$0xff]
        %v3625 = vld [vmem:[#allocation18 + $0x70] sm:$0xff]
        %v3626 = vld [vmem:[#allocation18 + $0x78] sm:$0xff]
        %v3627 = vpack.c.bf16 %v3608, %v3608
        %s3628 = scalar_lea.vmem [#allocation18], 128
        %v3629 = vld [vmem:[%s3628] sm:$0xff]
        %v3630 = vld [vmem:[%s3628 + $0x8] sm:$0xff]
        %v3631 = vld [vmem:[%s3628 + $0x10] sm:$0xff]
        %v3632 = vld [vmem:[%s3628 + $0x18] sm:$0xff]
        %v3633 = vld [vmem:[%s3628 + $0x20] sm:$0xff]
        %v3634 = vld [vmem:[%s3628 + $0x28] sm:$0xff]
        %v3635 = vld [vmem:[%s3628 + $0x30] sm:$0xff]
        %v3636 = vld [vmem:[%s3628 + $0x38] sm:$0xff]
        %v3637 = vld [vmem:[%s3628 + $0x40] sm:$0xff]
        %v3638 = vld [vmem:[%s3628 + $0x48] sm:$0xff]
        %v3639 = vld [vmem:[%s3628 + $0x50] sm:$0xff]
        %v3640 = vld [vmem:[%s3628 + $0x58] sm:$0xff]
        %v3641 = vld [vmem:[%s3628 + $0x60] sm:$0xff]
        %v3642 = vld [vmem:[%s3628 + $0x68] sm:$0xff]
        %v3643 = vld [vmem:[%s3628 + $0x70] sm:$0xff]
        %v3644 = vld [vmem:[%s3628 + $0x78] sm:$0xff]
        %v3661 = vunpack.c.l.b16 %v3629
        %v3662 = vunpack.c.h.b16 %v3629
        %v3663 = vunpack.c.l.b16 %v3630
        %v3664 = vunpack.c.h.b16 %v3630
        %v3665 = vunpack.c.l.b16 %v3631
        %v3666 = vunpack.c.h.b16 %v3631
        %v3667 = vunpack.c.l.b16 %v3632
        %v3668 = vunpack.c.h.b16 %v3632
        %v3669 = vunpack.c.l.b16 %v3633
        %v3670 = vunpack.c.h.b16 %v3633
        %v3671 = vunpack.c.l.b16 %v3634
        %v3672 = vunpack.c.h.b16 %v3634
        %v3673 = vunpack.c.l.b16 %v3635
        %v3674 = vunpack.c.h.b16 %v3635
        %v3675 = vunpack.c.l.b16 %v3636
        %v3676 = vunpack.c.h.b16 %v3636
        %v3677 = vunpack.c.l.b16 %v3637
        %v3678 = vunpack.c.h.b16 %v3637
        %v3679 = vunpack.c.l.b16 %v3638
        %v3680 = vunpack.c.h.b16 %v3638
        %v3681 = vunpack.c.l.b16 %v3639
        %v3682 = vunpack.c.h.b16 %v3639
        %v3683 = vunpack.c.l.b16 %v3640
        %v3684 = vunpack.c.h.b16 %v3640
        %v3685 = vunpack.c.l.b16 %v3641
        %v3686 = vunpack.c.h.b16 %v3641
        %v3687 = vunpack.c.l.b16 %v3642
        %v3688 = vunpack.c.h.b16 %v3642
        %v3689 = vunpack.c.l.b16 %v3643
        %v3690 = vunpack.c.h.b16 %v3643
        %v3691 = vunpack.c.l.b16 %v3644
        %v3692 = vunpack.c.h.b16 %v3644
        %v3693 = vpack.c.b16 %v3663, %v3661
        %v3694 = vpack.c.b16 %v3664, %v3662
        %v3695 = vpack.c.b16 %v3667, %v3665
        %v3696 = vpack.c.b16 %v3668, %v3666
        %v3697 = vpack.c.b16 %v3671, %v3669
        %v3698 = vpack.c.b16 %v3672, %v3670
        %v3699 = vpack.c.b16 %v3675, %v3673
        %v3700 = vpack.c.b16 %v3676, %v3674
        %v3701 = vpack.c.b16 %v3679, %v3677
        %v3702 = vpack.c.b16 %v3680, %v3678
        %v3703 = vpack.c.b16 %v3683, %v3681
        %v3704 = vpack.c.b16 %v3684, %v3682
        %v3705 = vpack.c.b16 %v3687, %v3685
        %v3706 = vpack.c.b16 %v3688, %v3686
        %v3707 = vpack.c.b16 %v3691, %v3689
        %v3708 = vpack.c.b16 %v3692, %v3690
        %3725 = vmatprep.subr.bf16.mxu0 %v3694
        %3726 = vmatpush1.bf16.msra.mxu0 %v3693
        %3727 = vmatprep.subr.bf16.mxu0 %v3696
        %3728 = vmatpush1.bf16.msra.mxu0 %v3695
        %3729 = vmatprep.subr.bf16.mxu0 %v3698
        %3730 = vmatpush1.bf16.msra.mxu0 %v3697
        %3731 = vmatprep.subr.bf16.mxu0 %v3700
        %3732 = vmatpush1.bf16.msra.mxu0 %v3699
        %3733 = vmatprep.subr.bf16.mxu0 %v3702
        %3734 = vmatpush1.bf16.msra.mxu0 %v3701
        %3735 = vmatprep.subr.bf16.mxu0 %v3704
        %3736 = vmatpush1.bf16.msra.mxu0 %v3703
        %3737 = vmatprep.subr.bf16.mxu0 %v3706
        %3738 = vmatpush1.bf16.msra.mxu0 %v3705
        %3739 = vmatprep.subr.bf16.mxu0 %v3708
        %3740 = vmatpush1.bf16.msra.mxu0 %v3707
        %3741 = vmatprep.subr.bf16.mxu0 0
        %3742 = vmatpush1.bf16.msra.mxu0 0
        %3743 = vmatprep.subr.bf16.mxu0 0
        %3744 = vmatpush1.bf16.msra.mxu0 0
        %3745 = vmatprep.subr.bf16.mxu0 0
        %3746 = vmatpush1.bf16.msra.mxu0 0
        %3747 = vmatprep.subr.bf16.mxu0 0
        %3748 = vmatpush1.bf16.msra.mxu0 0
        %3749 = vmatprep.subr.bf16.mxu0 0
        %3750 = vmatpush1.bf16.msra.mxu0 0
        %3751 = vmatprep.subr.bf16.mxu0 0
        %3752 = vmatpush1.bf16.msra.mxu0 0
        %3753 = vmatprep.subr.bf16.mxu0 0
        %3754 = vmatpush1.bf16.msra.mxu0 0
        %3755 = vmatprep.subr.bf16.mxu0 0
        %3756 = vmatpush1.bf16.msra.mxu0 0
        %3757 = vmatprep.mubr.bf16.mxu0 0
        %3758 = vmatmul.mubr.bf16.gmra.mrb[0].mxu0 %v3627
        %v3759 = vpop.f32.mrb[0].mxu0
        %v3760 = vadd.f32 0.0, %v3759
        %v3761 = vpop.f32.mrb[0].mxu0
        %v3762 = vadd.f32 0.0, %v3761
        %v3763 = vpop.f32.mrb[0].mxu0
        %v3764 = vpop.f32.mrb[0].mxu0
        %3765 = vdwg.mxu0
        %v3782 = vunpack.c.l.b16 %v3611
        %v3783 = vunpack.c.h.b16 %v3611
        %v3784 = vunpack.c.l.b16 %v3612
        %v3785 = vunpack.c.h.b16 %v3612
        %v3786 = vunpack.c.l.b16 %v3613
        %v3787 = vunpack.c.h.b16 %v3613
        %v3788 = vunpack.c.l.b16 %v3614
        %v3789 = vunpack.c.h.b16 %v3614
        %v3790 = vunpack.c.l.b16 %v3615
        %v3791 = vunpack.c.h.b16 %v3615
        %v3792 = vunpack.c.l.b16 %v3616
        %v3793 = vunpack.c.h.b16 %v3616
        %v3794 = vunpack.c.l.b16 %v3617
        %v3795 = vunpack.c.h.b16 %v3617
        %v3796 = vunpack.c.l.b16 %v3618
        %v3797 = vunpack.c.h.b16 %v3618
        %v3798 = vunpack.c.l.b16 %v3619
        %v3799 = vunpack.c.h.b16 %v3619
        %v3800 = vunpack.c.l.b16 %v3620
        %v3801 = vunpack.c.h.b16 %v3620
        %v3802 = vunpack.c.l.b16 %v3621
        %v3803 = vunpack.c.h.b16 %v3621
        %v3804 = vunpack.c.l.b16 %v3622
        %v3805 = vunpack.c.h.b16 %v3622
        %v3806 = vunpack.c.l.b16 %v3623
        %v3807 = vunpack.c.h.b16 %v3623
        %v3808 = vunpack.c.l.b16 %v3624
        %v3809 = vunpack.c.h.b16 %v3624
        %v3810 = vunpack.c.l.b16 %v3625
        %v3811 = vunpack.c.h.b16 %v3625
        %v3812 = vunpack.c.l.b16 %v3626
        %v3813 = vunpack.c.h.b16 %v3626
        %v3814 = vpack.c.b16 %v3784, %v3782
        %v3815 = vpack.c.b16 %v3785, %v3783
        %v3816 = vpack.c.b16 %v3788, %v3786
        %v3817 = vpack.c.b16 %v3789, %v3787
        %v3818 = vpack.c.b16 %v3792, %v3790
        %v3819 = vpack.c.b16 %v3793, %v3791
        %v3820 = vpack.c.b16 %v3796, %v3794
        %v3821 = vpack.c.b16 %v3797, %v3795
        %v3822 = vpack.c.b16 %v3800, %v3798
        %v3823 = vpack.c.b16 %v3801, %v3799
        %v3824 = vpack.c.b16 %v3804, %v3802
        %v3825 = vpack.c.b16 %v3805, %v3803
        %v3826 = vpack.c.b16 %v3808, %v3806
        %v3827 = vpack.c.b16 %v3809, %v3807
        %v3828 = vpack.c.b16 %v3812, %v3810
        %v3829 = vpack.c.b16 %v3813, %v3811
        %3846 = vmatprep.subr.bf16.mxu0 %v3815
        %3847 = vmatpush1.bf16.msra.mxu0 %v3814
        %3848 = vmatprep.subr.bf16.mxu0 %v3817
        %3849 = vmatpush1.bf16.msra.mxu0 %v3816
        %3850 = vmatprep.subr.bf16.mxu0 %v3819
        %3851 = vmatpush1.bf16.msra.mxu0 %v3818
        %3852 = vmatprep.subr.bf16.mxu0 %v3821
        %3853 = vmatpush1.bf16.msra.mxu0 %v3820
        %3854 = vmatprep.subr.bf16.mxu0 %v3823
        %3855 = vmatpush1.bf16.msra.mxu0 %v3822
        %3856 = vmatprep.subr.bf16.mxu0 %v3825
        %3857 = vmatpush1.bf16.msra.mxu0 %v3824
        %3858 = vmatprep.subr.bf16.mxu0 %v3827
        %3859 = vmatpush1.bf16.msra.mxu0 %v3826
        %3860 = vmatprep.subr.bf16.mxu0 %v3829
        %3861 = vmatpush1.bf16.msra.mxu0 %v3828
        %3862 = vmatprep.subr.bf16.mxu0 0
        %3863 = vmatpush1.bf16.msra.mxu0 0
        %3864 = vmatprep.subr.bf16.mxu0 0
        %3865 = vmatpush1.bf16.msra.mxu0 0
        %3866 = vmatprep.subr.bf16.mxu0 0
        %3867 = vmatpush1.bf16.msra.mxu0 0
        %3868 = vmatprep.subr.bf16.mxu0 0
        %3869 = vmatpush1.bf16.msra.mxu0 0
        %3870 = vmatprep.subr.bf16.mxu0 0
        %3871 = vmatpush1.bf16.msra.mxu0 0
        %3872 = vmatprep.subr.bf16.mxu0 0
        %3873 = vmatpush1.bf16.msra.mxu0 0
        %3874 = vmatprep.subr.bf16.mxu0 0
        %3875 = vmatpush1.bf16.msra.mxu0 0
        %3876 = vmatprep.subr.bf16.mxu0 0
        %3877 = vmatpush1.bf16.msra.mxu0 0
        %3878 = vmatprep.mubr.bf16.mxu0 0
        %3879 = vmatmul.mubr.bf16.gmra.mrb[0].mxu0 %v3610
        %v3880 = vpop.f32.mrb[0].mxu0
        %v3881 = vadd.f32 %v3760, %v3880
        %v3882 = vpop.f32.mrb[0].mxu0
        %v3883 = vadd.f32 %v3762, %v3882
        %v3884 = vpop.f32.mrb[0].mxu0
        %v3885 = vpop.f32.mrb[0].mxu0
        %3886 = vdwg.mxu0
        %v3887 = vpack.c.bf16 %v3609, %v3609
        %s3888 = scalar_lea.vmem [#allocation18], 256
        %v3889 = vld [vmem:[%s3888] sm:$0xff]
        %v3890 = vld [vmem:[%s3888 + $0x8] sm:$0xff]
        %v3891 = vld [vmem:[%s3888 + $0x10] sm:$0xff]
        %v3892 = vld [vmem:[%s3888 + $0x18] sm:$0xff]
        %v3893 = vld [vmem:[%s3888 + $0x20] sm:$0xff]
        %v3894 = vld [vmem:[%s3888 + $0x28] sm:$0xff]
        %v3895 = vld [vmem:[%s3888 + $0x30] sm:$0xff]
        %v3896 = vld [vmem:[%s3888 + $0x38] sm:$0xff]
        %v3897 = vld [vmem:[%s3888 + $0x40] sm:$0xff]
        %v3898 = vld [vmem:[%s3888 + $0x48] sm:$0xff]
        %v3899 = vld [vmem:[%s3888 + $0x50] sm:$0xff]
        %v3900 = vld [vmem:[%s3888 + $0x58] sm:$0xff]
        %v3901 = vld [vmem:[%s3888 + $0x60] sm:$0xff]
        %v3902 = vld [vmem:[%s3888 + $0x68] sm:$0xff]
        %v3903 = vld [vmem:[%s3888 + $0x70] sm:$0xff]
        %v3904 = vld [vmem:[%s3888 + $0x78] sm:$0xff]
        %v3921 = vunpack.c.l.b16 %v3889
        %v3922 = vunpack.c.h.b16 %v3889
        %v3923 = vunpack.c.l.b16 %v3890
        %v3924 = vunpack.c.h.b16 %v3890
        %v3925 = vunpack.c.l.b16 %v3891
        %v3926 = vunpack.c.h.b16 %v3891
        %v3927 = vunpack.c.l.b16 %v3892
        %v3928 = vunpack.c.h.b16 %v3892
        %v3929 = vunpack.c.l.b16 %v3893
        %v3930 = vunpack.c.h.b16 %v3893
        %v3931 = vunpack.c.l.b16 %v3894
        %v3932 = vunpack.c.h.b16 %v3894
        %v3933 = vunpack.c.l.b16 %v3895
        %v3934 = vunpack.c.h.b16 %v3895
        %v3935 = vunpack.c.l.b16 %v3896
        %v3936 = vunpack.c.h.b16 %v3896
        %v3937 = vunpack.c.l.b16 %v3897
        %v3938 = vunpack.c.h.b16 %v3897
        %v3939 = vunpack.c.l.b16 %v3898
        %v3940 = vunpack.c.h.b16 %v3898
        %v3941 = vunpack.c.l.b16 %v3899
        %v3942 = vunpack.c.h.b16 %v3899
        %v3943 = vunpack.c.l.b16 %v3900
        %v3944 = vunpack.c.h.b16 %v3900
        %v3945 = vunpack.c.l.b16 %v3901
        %v3946 = vunpack.c.h.b16 %v3901
        %v3947 = vunpack.c.l.b16 %v3902
        %v3948 = vunpack.c.h.b16 %v3902
        %v3949 = vunpack.c.l.b16 %v3903
        %v3950 = vunpack.c.h.b16 %v3903
        %v3951 = vunpack.c.l.b16 %v3904
        %v3952 = vunpack.c.h.b16 %v3904
        %v3953 = vpack.c.b16 %v3923, %v3921
        %v3954 = vpack.c.b16 %v3924, %v3922
        %v3955 = vpack.c.b16 %v3927, %v3925
        %v3956 = vpack.c.b16 %v3928, %v3926
        %v3957 = vpack.c.b16 %v3931, %v3929
        %v3958 = vpack.c.b16 %v3932, %v3930
        %v3959 = vpack.c.b16 %v3935, %v3933
        %v3960 = vpack.c.b16 %v3936, %v3934
        %v3961 = vpack.c.b16 %v3939, %v3937
        %v3962 = vpack.c.b16 %v3940, %v3938
        %v3963 = vpack.c.b16 %v3943, %v3941
        %v3964 = vpack.c.b16 %v3944, %v3942
        %v3965 = vpack.c.b16 %v3947, %v3945
        %v3966 = vpack.c.b16 %v3948, %v3946
        %v3967 = vpack.c.b16 %v3951, %v3949
        %v3968 = vpack.c.b16 %v3952, %v3950
        %3985 = vmatprep.subr.bf16.mxu0 %v3954
        %3986 = vmatpush1.bf16.msra.mxu0 %v3953
        %3987 = vmatprep.subr.bf16.mxu0 %v3956
        %3988 = vmatpush1.bf16.msra.mxu0 %v3955
        %3989 = vmatprep.subr.bf16.mxu0 %v3958
        %3990 = vmatpush1.bf16.msra.mxu0 %v3957
        %3991 = vmatprep.subr.bf16.mxu0 %v3960
        %3992 = vmatpush1.bf16.msra.mxu0 %v3959
        %3993 = vmatprep.subr.bf16.mxu0 %v3962
        %3994 = vmatpush1.bf16.msra.mxu0 %v3961
        %3995 = vmatprep.subr.bf16.mxu0 %v3964
        %3996 = vmatpush1.bf16.msra.mxu0 %v3963
        %3997 = vmatprep.subr.bf16.mxu0 %v3966
        %3998 = vmatpush1.bf16.msra.mxu0 %v3965
        %3999 = vmatprep.subr.bf16.mxu0 %v3968
        %4000 = vmatpush1.bf16.msra.mxu0 %v3967
        %4001 = vmatprep.subr.bf16.mxu0 0
        %4002 = vmatpush1.bf16.msra.mxu0 0
        %4003 = vmatprep.subr.bf16.mxu0 0
        %4004 = vmatpush1.bf16.msra.mxu0 0
        %4005 = vmatprep.subr.bf16.mxu0 0
        %4006 = vmatpush1.bf16.msra.mxu0 0
        %4007 = vmatprep.subr.bf16.mxu0 0
        %4008 = vmatpush1.bf16.msra.mxu0 0
        %4009 = vmatprep.subr.bf16.mxu0 0
        %4010 = vmatpush1.bf16.msra.mxu0 0
        %4011 = vmatprep.subr.bf16.mxu0 0
        %4012 = vmatpush1.bf16.msra.mxu0 0
        %4013 = vmatprep.subr.bf16.mxu0 0
        %4014 = vmatpush1.bf16.msra.mxu0 0
        %4015 = vmatprep.subr.bf16.mxu0 0
        %4016 = vmatpush1.bf16.msra.mxu0 0
        %4017 = vmatprep.mubr.bf16.mxu0 0
        %4018 = vmatmul.mubr.bf16.gmra.mrb[0].mxu0 %v3887
        %v4019 = vpop.f32.mrb[0].mxu0
        %v4020 = vadd.f32 0.0, %v4019
        %v4021 = vpop.f32.mrb[0].mxu0
        %v4022 = vadd.f32 0.0, %v4021
        %v4023 = vpop.f32.mrb[0].mxu0
        %v4024 = vpop.f32.mrb[0].mxu0
        %4025 = vdwg.mxu0
        %v4026 = vadd.f32 %v3881, %v4020
        %v4027 = vadd.f32 %v3883, %v4022
        %v4028 = vld [vmem:[#allocation36] sm:$0x3]
        %v4030 = vlaneseq
        %v4031 = vshrl.u32 %v4030, 7
        %v4032 = vsub.s32 0, %v4031
        %v4033 = vrot.slane %v4028, %v4032
        %v4034 = vlaneseq
        %v4035 = vshrl.u32 %v4034, 7
        %v4036 = vsub.s32 1, %v4035
        %v4037 = vrot.slane %v4028, %v4036
        %4040 = vmatprep.subr.mxu0 %v4027
        %4041 = vmatpush1.msra.mxu0 %v4026
        %4042 = vmatprep.subr.mxu0 0.0
        %4043 = vmatpush1.msra.mxu0 0.0
        %4044 = vmatprep.subr.mxu0 0.0
        %4045 = vmatpush1.msra.mxu0 0.0
        %4046 = vmatprep.subr.mxu0 0.0
        %4047 = vmatpush1.msra.mxu0 0.0
        %4048 = vmatprep.subr.mxu0 0.0
        %4049 = vmatpush1.msra.mxu0 0.0
        %4050 = vmatprep.subr.mxu0 0.0
        %4051 = vmatpush1.msra.mxu0 0.0
        %4052 = vmatprep.subr.mxu0 0.0
        %4053 = vmatpush1.msra.mxu0 0.0
        %4054 = vmatprep.subr.mxu0 0.0
        %4055 = vmatpush1.msra.mxu0 0.0
        %4056 = vmatprep.subr.mxu0 0.0
        %4057 = vmatpush1.msra.mxu0 0.0
        %4058 = vmatprep.subr.mxu0 0.0
        %4059 = vmatpush1.msra.mxu0 0.0
        %4060 = vmatprep.subr.mxu0 0.0
        %4061 = vmatpush1.msra.mxu0 0.0
        %4062 = vmatprep.subr.mxu0 0.0
        %4063 = vmatpush1.msra.mxu0 0.0
        %4064 = vmatprep.subr.mxu0 0.0
        %4065 = vmatpush1.msra.mxu0 0.0
        %4066 = vmatprep.subr.mxu0 0.0
        %4067 = vmatpush1.msra.mxu0 0.0
        %4068 = vmatprep.subr.mxu0 0.0
        %4069 = vmatpush1.msra.mxu0 0.0
        %4070 = vmatprep.subr.mxu0 0.0
        %4071 = vmatpush1.msra.mxu0 0.0
        %4072 = vmatprep.subr.mxu0 0.0
        %4073 = vmatpush1.msra.mxu0 0.0
        %4074 = vmatprep.subr.mxu0 0.0
        %4075 = vmatpush1.msra.mxu0 0.0
        %4076 = vmatprep.subr.mxu0 0.0
        %4077 = vmatpush1.msra.mxu0 0.0
        %4078 = vmatprep.subr.mxu0 0.0
        %4079 = vmatpush1.msra.mxu0 0.0
        %4080 = vmatprep.subr.mxu0 0.0
        %4081 = vmatpush1.msra.mxu0 0.0
        %4082 = vmatprep.subr.mxu0 0.0
        %4083 = vmatpush1.msra.mxu0 0.0
        %4084 = vmatprep.subr.mxu0 0.0
        %4085 = vmatpush1.msra.mxu0 0.0
        %4086 = vmatprep.subr.mxu0 0.0
        %4087 = vmatpush1.msra.mxu0 0.0
        %4088 = vmatprep.subr.mxu0 0.0
        %4089 = vmatpush1.msra.mxu0 0.0
        %4090 = vmatprep.subr.mxu0 0.0
        %4091 = vmatpush1.msra.mxu0 0.0
        %4092 = vmatprep.subr.mxu0 0.0
        %4093 = vmatpush1.msra.mxu0 0.0
        %4094 = vmatprep.subr.mxu0 0.0
        %4095 = vmatpush1.msra.mxu0 0.0
        %4096 = vmatprep.subr.mxu0 0.0
        %4097 = vmatpush1.msra.mxu0 0.0
        %4098 = vmatprep.subr.mxu0 0.0
        %4099 = vmatpush1.msra.mxu0 0.0
        %4100 = vmatprep.subr.mxu0 0.0
        %4101 = vmatpush1.msra.mxu0 0.0
        %4102 = vmatprep.subr.mxu0 0.0
        %4103 = vmatpush1.msra.mxu0 0.0
        %4104 = vmatprep.mubr.f32.mxu0 0.0
        %4105 = vmatmul.mubr.f32.gmra.mrb[0].mxu0 %v3533
        %v4106 = vpop.f32.mrb[0].mxu0
        %v4107 = vadd.f32 %v4033, %v4106
        %v4108 = vpop.f32.mrb[0].mxu0
        %v4109 = vadd.f32 %v4037, %v4108
        %4110 = vdwg.mxu0
        %v4111 = vmax.f32 %v4107, 0.0
        %v4112 = vmax.f32 %v4109, 0.0
        %v4115 = vrot.slane %v4111, 7
        %v4116 = vrot.slane %v4112, 7
        %4119 = vst [vmem:[#allocation5] sm:$0x1e] %v4115
        %4120 = vst [vmem:[#allocation5 + $0x8] sm:$0x1e] %v4116
        %v4121 = vld [vmem:[#allocation5] sm:$0xf]
        %v4122 = vld [vmem:[#allocation5 + $0x8] sm:$0xf]
        %v4123 = vld [vmem:[#allocation5] sm:$0x1e]
        %v4124 = vld [vmem:[#allocation5 + $0x8] sm:$0x1e]
        %v4125 = vld [vmem:[#allocation5] sm:$0x3c]
        %v4126 = vld [vmem:[#allocation5 + $0x8] sm:$0x3c]
        %v4127 = vpack.c.bf16 %v4121, %v4121
        %v4128 = vpack.c.bf16 %v4122, %v4122
        %v4129 = vld [vmem:[#allocation21] sm:$0xff]
        %v4130 = vld [vmem:[#allocation21 + $0x8] sm:$0xff]
        %v4131 = vld [vmem:[#allocation21 + $0x10] sm:$0xff]
        %v4132 = vld [vmem:[#allocation21 + $0x18] sm:$0xff]
        %v4133 = vld [vmem:[#allocation21 + $0x20] sm:$0xff]
        %v4134 = vld [vmem:[#allocation21 + $0x28] sm:$0xff]
        %v4135 = vld [vmem:[#allocation21 + $0x30] sm:$0xff]
        %v4136 = vld [vmem:[#allocation21 + $0x38] sm:$0xff]
        %v4137 = vld [vmem:[#allocation21 + $0x40] sm:$0xff]
        %v4138 = vld [vmem:[#allocation21 + $0x48] sm:$0xff]
        %v4139 = vld [vmem:[#allocation21 + $0x50] sm:$0xff]
        %v4140 = vld [vmem:[#allocation21 + $0x58] sm:$0xff]
        %v4141 = vld [vmem:[#allocation21 + $0x60] sm:$0xff]
        %v4142 = vld [vmem:[#allocation21 + $0x68] sm:$0xff]
        %v4143 = vld [vmem:[#allocation21 + $0x70] sm:$0xff]
        %v4144 = vld [vmem:[#allocation21 + $0x78] sm:$0xff]
        %v4145 = vld [vmem:[#allocation21 + $0x80] sm:$0xff]
        %v4146 = vld [vmem:[#allocation21 + $0x88] sm:$0xff]
        %v4147 = vld [vmem:[#allocation21 + $0x90] sm:$0xff]
        %v4148 = vld [vmem:[#allocation21 + $0x98] sm:$0xff]
        %v4149 = vld [vmem:[#allocation21 + $0xa0] sm:$0xff]
        %v4150 = vld [vmem:[#allocation21 + $0xa8] sm:$0xff]
        %v4151 = vld [vmem:[#allocation21 + $0xb0] sm:$0xff]
        %v4152 = vld [vmem:[#allocation21 + $0xb8] sm:$0xff]
        %v4153 = vld [vmem:[#allocation21 + $0xc0] sm:$0xff]
        %v4154 = vld [vmem:[#allocation21 + $0xc8] sm:$0xff]
        %v4155 = vld [vmem:[#allocation21 + $0xd0] sm:$0xff]
        %v4156 = vld [vmem:[#allocation21 + $0xd8] sm:$0xff]
        %v4157 = vld [vmem:[#allocation21 + $0xe0] sm:$0xff]
        %v4158 = vld [vmem:[#allocation21 + $0xe8] sm:$0xff]
        %v4159 = vld [vmem:[#allocation21 + $0xf0] sm:$0xff]
        %v4160 = vld [vmem:[#allocation21 + $0xf8] sm:$0xff]
        %v4161 = vpack.c.bf16 %v4123, %v4123
        %v4162 = vpack.c.bf16 %v4124, %v4124
        %s4163 = scalar_lea.vmem [#allocation21], 256
        %v4164 = vld [vmem:[%s4163] sm:$0xff]
        %v4165 = vld [vmem:[%s4163 + $0x8] sm:$0xff]
        %v4166 = vld [vmem:[%s4163 + $0x10] sm:$0xff]
        %v4167 = vld [vmem:[%s4163 + $0x18] sm:$0xff]
        %v4168 = vld [vmem:[%s4163 + $0x20] sm:$0xff]
        %v4169 = vld [vmem:[%s4163 + $0x28] sm:$0xff]
        %v4170 = vld [vmem:[%s4163 + $0x30] sm:$0xff]
        %v4171 = vld [vmem:[%s4163 + $0x38] sm:$0xff]
        %v4172 = vld [vmem:[%s4163 + $0x40] sm:$0xff]
        %v4173 = vld [vmem:[%s4163 + $0x48] sm:$0xff]
        %v4174 = vld [vmem:[%s4163 + $0x50] sm:$0xff]
        %v4175 = vld [vmem:[%s4163 + $0x58] sm:$0xff]
        %v4176 = vld [vmem:[%s4163 + $0x60] sm:$0xff]
        %v4177 = vld [vmem:[%s4163 + $0x68] sm:$0xff]
        %v4178 = vld [vmem:[%s4163 + $0x70] sm:$0xff]
        %v4179 = vld [vmem:[%s4163 + $0x78] sm:$0xff]
        %v4180 = vld [vmem:[%s4163 + $0x80] sm:$0xff]
        %v4181 = vld [vmem:[%s4163 + $0x88] sm:$0xff]
        %v4182 = vld [vmem:[%s4163 + $0x90] sm:$0xff]
        %v4183 = vld [vmem:[%s4163 + $0x98] sm:$0xff]
        %v4184 = vld [vmem:[%s4163 + $0xa0] sm:$0xff]
        %v4185 = vld [vmem:[%s4163 + $0xa8] sm:$0xff]
        %v4186 = vld [vmem:[%s4163 + $0xb0] sm:$0xff]
        %v4187 = vld [vmem:[%s4163 + $0xb8] sm:$0xff]
        %v4188 = vld [vmem:[%s4163 + $0xc0] sm:$0xff]
        %v4189 = vld [vmem:[%s4163 + $0xc8] sm:$0xff]
        %v4190 = vld [vmem:[%s4163 + $0xd0] sm:$0xff]
        %v4191 = vld [vmem:[%s4163 + $0xd8] sm:$0xff]
        %v4192 = vld [vmem:[%s4163 + $0xe0] sm:$0xff]
        %v4193 = vld [vmem:[%s4163 + $0xe8] sm:$0xff]
        %v4194 = vld [vmem:[%s4163 + $0xf0] sm:$0xff]
        %v4195 = vld [vmem:[%s4163 + $0xf8] sm:$0xff]
        %v4197 = vshrl.u32 %v4161, 16
        %v4199 = vshll.u32 %v4161, 16
        %v4201 = vrot.slane %v4199, 1
        %v4202 = vor.u32 %v4197, %v4201
        %v4204 = vshrl.u32 %v4162, 16
        %v4206 = vshll.u32 %v4162, 16
        %v4208 = vrot.slane %v4206, 1
        %v4209 = vor.u32 %v4204, %v4208
        %v4244 = vunpack.c.l.b16 %v4164
        %v4245 = vunpack.c.h.b16 %v4164
        %v4246 = vunpack.c.l.b16 %v4165
        %v4247 = vunpack.c.h.b16 %v4165
        %v4248 = vunpack.c.l.b16 %v4166
        %v4249 = vunpack.c.h.b16 %v4166
        %v4250 = vunpack.c.l.b16 %v4167
        %v4251 = vunpack.c.h.b16 %v4167
        %v4252 = vunpack.c.l.b16 %v4168
        %v4253 = vunpack.c.h.b16 %v4168
        %v4254 = vunpack.c.l.b16 %v4169
        %v4255 = vunpack.c.h.b16 %v4169
        %v4256 = vunpack.c.l.b16 %v4170
        %v4257 = vunpack.c.h.b16 %v4170
        %v4258 = vunpack.c.l.b16 %v4171
        %v4259 = vunpack.c.h.b16 %v4171
        %v4260 = vunpack.c.l.b16 %v4172
        %v4261 = vunpack.c.h.b16 %v4172
        %v4262 = vunpack.c.l.b16 %v4173
        %v4263 = vunpack.c.h.b16 %v4173
        %v4264 = vunpack.c.l.b16 %v4174
        %v4265 = vunpack.c.h.b16 %v4174
        %v4266 = vunpack.c.l.b16 %v4175
        %v4267 = vunpack.c.h.b16 %v4175
        %v4268 = vunpack.c.l.b16 %v4176
        %v4269 = vunpack.c.h.b16 %v4176
        %v4270 = vunpack.c.l.b16 %v4177
        %v4271 = vunpack.c.h.b16 %v4177
        %v4272 = vunpack.c.l.b16 %v4178
        %v4273 = vunpack.c.h.b16 %v4178
        %v4274 = vunpack.c.l.b16 %v4179
        %v4275 = vunpack.c.h.b16 %v4179
        %v4276 = vunpack.c.l.b16 %v4180
        %v4277 = vunpack.c.h.b16 %v4180
        %v4278 = vunpack.c.l.b16 %v4181
        %v4279 = vunpack.c.h.b16 %v4181
        %v4280 = vunpack.c.l.b16 %v4182
        %v4281 = vunpack.c.h.b16 %v4182
        %v4282 = vunpack.c.l.b16 %v4183
        %v4283 = vunpack.c.h.b16 %v4183
        %v4284 = vunpack.c.l.b16 %v4184
        %v4285 = vunpack.c.h.b16 %v4184
        %v4286 = vunpack.c.l.b16 %v4185
        %v4287 = vunpack.c.h.b16 %v4185
        %v4288 = vunpack.c.l.b16 %v4186
        %v4289 = vunpack.c.h.b16 %v4186
        %v4290 = vunpack.c.l.b16 %v4187
        %v4291 = vunpack.c.h.b16 %v4187
        %v4292 = vunpack.c.l.b16 %v4188
        %v4293 = vunpack.c.h.b16 %v4188
        %v4294 = vunpack.c.l.b16 %v4189
        %v4295 = vunpack.c.h.b16 %v4189
        %v4296 = vunpack.c.l.b16 %v4190
        %v4297 = vunpack.c.h.b16 %v4190
        %v4298 = vunpack.c.l.b16 %v4191
        %v4299 = vunpack.c.h.b16 %v4191
        %v4300 = vunpack.c.l.b16 %v4192
        %v4301 = vunpack.c.h.b16 %v4192
        %v4302 = vunpack.c.l.b16 %v4193
        %v4303 = vunpack.c.h.b16 %v4193
        %v4304 = vunpack.c.l.b16 %v4194
        %v4305 = vunpack.c.h.b16 %v4194
        %v4306 = vunpack.c.l.b16 %v4195
        %v4307 = vunpack.c.h.b16 %v4195
        %v4308 = vpack.c.b16 %v4246, %v4244
        %v4309 = vpack.c.b16 %v4247, %v4245
        %v4310 = vpack.c.b16 %v4250, %v4248
        %v4311 = vpack.c.b16 %v4251, %v4249
        %v4312 = vpack.c.b16 %v4254, %v4252
        %v4313 = vpack.c.b16 %v4255, %v4253
        %v4314 = vpack.c.b16 %v4258, %v4256
        %v4315 = vpack.c.b16 %v4259, %v4257
        %v4316 = vpack.c.b16 %v4262, %v4260
        %v4317 = vpack.c.b16 %v4263, %v4261
        %v4318 = vpack.c.b16 %v4266, %v4264
        %v4319 = vpack.c.b16 %v4267, %v4265
        %v4320 = vpack.c.b16 %v4270, %v4268
        %v4321 = vpack.c.b16 %v4271, %v4269
        %v4322 = vpack.c.b16 %v4274, %v4272
        %v4323 = vpack.c.b16 %v4275, %v4273
        %v4324 = vpack.c.b16 %v4278, %v4276
        %v4325 = vpack.c.b16 %v4279, %v4277
        %v4326 = vpack.c.b16 %v4282, %v4280
        %v4327 = vpack.c.b16 %v4283, %v4281
        %v4328 = vpack.c.b16 %v4286, %v4284
        %v4329 = vpack.c.b16 %v4287, %v4285
        %v4330 = vpack.c.b16 %v4290, %v4288
        %v4331 = vpack.c.b16 %v4291, %v4289
        %v4332 = vpack.c.b16 %v4294, %v4292
        %v4333 = vpack.c.b16 %v4295, %v4293
        %v4334 = vpack.c.b16 %v4298, %v4296
        %v4335 = vpack.c.b16 %v4299, %v4297
        %v4336 = vpack.c.b16 %v4302, %v4300
        %v4337 = vpack.c.b16 %v4303, %v4301
        %v4338 = vpack.c.b16 %v4306, %v4304
        %v4339 = vpack.c.b16 %v4307, %v4305
        %4372 = vmatprep.subr.bf16.mxu0 %v4309
        %4373 = vmatpush1.bf16.msra.mxu0 %v4308
        %4374 = vmatprep.subr.bf16.mxu0 %v4311
        %4375 = vmatpush1.bf16.msra.mxu0 %v4310
        %4376 = vmatprep.subr.bf16.mxu0 %v4313
        %4377 = vmatpush1.bf16.msra.mxu0 %v4312
        %4378 = vmatprep.subr.bf16.mxu0 %v4315
        %4379 = vmatpush1.bf16.msra.mxu0 %v4314
        %4380 = vmatprep.subr.bf16.mxu0 %v4317
        %4381 = vmatpush1.bf16.msra.mxu0 %v4316
        %4382 = vmatprep.subr.bf16.mxu0 %v4319
        %4383 = vmatpush1.bf16.msra.mxu0 %v4318
        %4384 = vmatprep.subr.bf16.mxu0 %v4321
        %4385 = vmatpush1.bf16.msra.mxu0 %v4320
        %4386 = vmatprep.subr.bf16.mxu0 %v4323
        %4387 = vmatpush1.bf16.msra.mxu0 %v4322
        %4388 = vmatprep.subr.bf16.mxu0 %v4325
        %4389 = vmatpush1.bf16.msra.mxu0 %v4324
        %4390 = vmatprep.subr.bf16.mxu0 %v4327
        %4391 = vmatpush1.bf16.msra.mxu0 %v4326
        %4392 = vmatprep.subr.bf16.mxu0 %v4329
        %4393 = vmatpush1.bf16.msra.mxu0 %v4328
        %4394 = vmatprep.subr.bf16.mxu0 %v4331
        %4395 = vmatpush1.bf16.msra.mxu0 %v4330
        %4396 = vmatprep.subr.bf16.mxu0 %v4333
        %4397 = vmatpush1.bf16.msra.mxu0 %v4332
        %4398 = vmatprep.subr.bf16.mxu0 %v4335
        %4399 = vmatpush1.bf16.msra.mxu0 %v4334
        %4400 = vmatprep.subr.bf16.mxu0 %v4337
        %4401 = vmatpush1.bf16.msra.mxu0 %v4336
        %4402 = vmatprep.subr.bf16.mxu0 %v4339
        %4403 = vmatpush1.bf16.msra.mxu0 %v4338
        %4404 = vmatprep.mubr.bf16.mxu0 %v4209
        %4405 = vmatmul.mubr.bf16.gmra.mrb[0].mxu0 %v4202
        %v4406 = vpop.f32.mrb[0].mxu0
        %v4407 = vadd.f32 0.0, %v4406
        %v4408 = vpop.f32.mrb[0].mxu0
        %v4409 = vadd.f32 0.0, %v4408
        %v4410 = vpop.f32.mrb[0].mxu0
        %v4411 = vpop.f32.mrb[0].mxu0
        %4412 = vdwg.mxu0
        %v4445 = vunpack.c.l.b16 %v4129
        %v4446 = vunpack.c.h.b16 %v4129
        %v4447 = vunpack.c.l.b16 %v4130
        %v4448 = vunpack.c.h.b16 %v4130
        %v4449 = vunpack.c.l.b16 %v4131
        %v4450 = vunpack.c.h.b16 %v4131
        %v4451 = vunpack.c.l.b16 %v4132
        %v4452 = vunpack.c.h.b16 %v4132
        %v4453 = vunpack.c.l.b16 %v4133
        %v4454 = vunpack.c.h.b16 %v4133
        %v4455 = vunpack.c.l.b16 %v4134
        %v4456 = vunpack.c.h.b16 %v4134
        %v4457 = vunpack.c.l.b16 %v4135
        %v4458 = vunpack.c.h.b16 %v4135
        %v4459 = vunpack.c.l.b16 %v4136
        %v4460 = vunpack.c.h.b16 %v4136
        %v4461 = vunpack.c.l.b16 %v4137
        %v4462 = vunpack.c.h.b16 %v4137
        %v4463 = vunpack.c.l.b16 %v4138
        %v4464 = vunpack.c.h.b16 %v4138
        %v4465 = vunpack.c.l.b16 %v4139
        %v4466 = vunpack.c.h.b16 %v4139
        %v4467 = vunpack.c.l.b16 %v4140
        %v4468 = vunpack.c.h.b16 %v4140
        %v4469 = vunpack.c.l.b16 %v4141
        %v4470 = vunpack.c.h.b16 %v4141
        %v4471 = vunpack.c.l.b16 %v4142
        %v4472 = vunpack.c.h.b16 %v4142
        %v4473 = vunpack.c.l.b16 %v4143
        %v4474 = vunpack.c.h.b16 %v4143
        %v4475 = vunpack.c.l.b16 %v4144
        %v4476 = vunpack.c.h.b16 %v4144
        %v4477 = vunpack.c.l.b16 %v4145
        %v4478 = vunpack.c.h.b16 %v4145
        %v4479 = vunpack.c.l.b16 %v4146
        %v4480 = vunpack.c.h.b16 %v4146
        %v4481 = vunpack.c.l.b16 %v4147
        %v4482 = vunpack.c.h.b16 %v4147
        %v4483 = vunpack.c.l.b16 %v4148
        %v4484 = vunpack.c.h.b16 %v4148
        %v4485 = vunpack.c.l.b16 %v4149
        %v4486 = vunpack.c.h.b16 %v4149
        %v4487 = vunpack.c.l.b16 %v4150
        %v4488 = vunpack.c.h.b16 %v4150
        %v4489 = vunpack.c.l.b16 %v4151
        %v4490 = vunpack.c.h.b16 %v4151
        %v4491 = vunpack.c.l.b16 %v4152
        %v4492 = vunpack.c.h.b16 %v4152
        %v4493 = vunpack.c.l.b16 %v4153
        %v4494 = vunpack.c.h.b16 %v4153
        %v4495 = vunpack.c.l.b16 %v4154
        %v4496 = vunpack.c.h.b16 %v4154
        %v4497 = vunpack.c.l.b16 %v4155
        %v4498 = vunpack.c.h.b16 %v4155
        %v4499 = vunpack.c.l.b16 %v4156
        %v4500 = vunpack.c.h.b16 %v4156
        %v4501 = vunpack.c.l.b16 %v4157
        %v4502 = vunpack.c.h.b16 %v4157
        %v4503 = vunpack.c.l.b16 %v4158
        %v4504 = vunpack.c.h.b16 %v4158
        %v4505 = vunpack.c.l.b16 %v4159
        %v4506 = vunpack.c.h.b16 %v4159
        %v4507 = vunpack.c.l.b16 %v4160
        %v4508 = vunpack.c.h.b16 %v4160
        %v4509 = vpack.c.b16 %v4447, %v4445
        %v4510 = vpack.c.b16 %v4448, %v4446
        %v4511 = vpack.c.b16 %v4451, %v4449
        %v4512 = vpack.c.b16 %v4452, %v4450
        %v4513 = vpack.c.b16 %v4455, %v4453
        %v4514 = vpack.c.b16 %v4456, %v4454
        %v4515 = vpack.c.b16 %v4459, %v4457
        %v4516 = vpack.c.b16 %v4460, %v4458
        %v4517 = vpack.c.b16 %v4463, %v4461
        %v4518 = vpack.c.b16 %v4464, %v4462
        %v4519 = vpack.c.b16 %v4467, %v4465
        %v4520 = vpack.c.b16 %v4468, %v4466
        %v4521 = vpack.c.b16 %v4471, %v4469
        %v4522 = vpack.c.b16 %v4472, %v4470
        %v4523 = vpack.c.b16 %v4475, %v4473
        %v4524 = vpack.c.b16 %v4476, %v4474
        %v4525 = vpack.c.b16 %v4479, %v4477
        %v4526 = vpack.c.b16 %v4480, %v4478
        %v4527 = vpack.c.b16 %v4483, %v4481
        %v4528 = vpack.c.b16 %v4484, %v4482
        %v4529 = vpack.c.b16 %v4487, %v4485
        %v4530 = vpack.c.b16 %v4488, %v4486
        %v4531 = vpack.c.b16 %v4491, %v4489
        %v4532 = vpack.c.b16 %v4492, %v4490
        %v4533 = vpack.c.b16 %v4495, %v4493
        %v4534 = vpack.c.b16 %v4496, %v4494
        %v4535 = vpack.c.b16 %v4499, %v4497
        %v4536 = vpack.c.b16 %v4500, %v4498
        %v4537 = vpack.c.b16 %v4503, %v4501
        %v4538 = vpack.c.b16 %v4504, %v4502
        %v4539 = vpack.c.b16 %v4507, %v4505
        %v4540 = vpack.c.b16 %v4508, %v4506
        %4573 = vmatprep.subr.bf16.mxu0 %v4510
        %4574 = vmatpush1.bf16.msra.mxu0 %v4509
        %4575 = vmatprep.subr.bf16.mxu0 %v4512
        %4576 = vmatpush1.bf16.msra.mxu0 %v4511
        %4577 = vmatprep.subr.bf16.mxu0 %v4514
        %4578 = vmatpush1.bf16.msra.mxu0 %v4513
        %4579 = vmatprep.subr.bf16.mxu0 %v4516
        %4580 = vmatpush1.bf16.msra.mxu0 %v4515
        %4581 = vmatprep.subr.bf16.mxu0 %v4518
        %4582 = vmatpush1.bf16.msra.mxu0 %v4517
        %4583 = vmatprep.subr.bf16.mxu0 %v4520
        %4584 = vmatpush1.bf16.msra.mxu0 %v4519
        %4585 = vmatprep.subr.bf16.mxu0 %v4522
        %4586 = vmatpush1.bf16.msra.mxu0 %v4521
        %4587 = vmatprep.subr.bf16.mxu0 %v4524
        %4588 = vmatpush1.bf16.msra.mxu0 %v4523
        %4589 = vmatprep.subr.bf16.mxu0 %v4526
        %4590 = vmatpush1.bf16.msra.mxu0 %v4525
        %4591 = vmatprep.subr.bf16.mxu0 %v4528
        %4592 = vmatpush1.bf16.msra.mxu0 %v4527
        %4593 = vmatprep.subr.bf16.mxu0 %v4530
        %4594 = vmatpush1.bf16.msra.mxu0 %v4529
        %4595 = vmatprep.subr.bf16.mxu0 %v4532
        %4596 = vmatpush1.bf16.msra.mxu0 %v4531
        %4597 = vmatprep.subr.bf16.mxu0 %v4534
        %4598 = vmatpush1.bf16.msra.mxu0 %v4533
        %4599 = vmatprep.subr.bf16.mxu0 %v4536
        %4600 = vmatpush1.bf16.msra.mxu0 %v4535
        %4601 = vmatprep.subr.bf16.mxu0 %v4538
        %4602 = vmatpush1.bf16.msra.mxu0 %v4537
        %4603 = vmatprep.subr.bf16.mxu0 %v4540
        %4604 = vmatpush1.bf16.msra.mxu0 %v4539
        %4605 = vmatprep.mubr.bf16.mxu0 %v4128
        %4606 = vmatmul.mubr.bf16.gmra.mrb[0].mxu0 %v4127
        %v4607 = vpop.f32.mrb[0].mxu0
        %v4608 = vadd.f32 %v4407, %v4607
        %v4609 = vpop.f32.mrb[0].mxu0
        %v4610 = vadd.f32 %v4409, %v4609
        %v4611 = vpop.f32.mrb[0].mxu0
        %v4612 = vpop.f32.mrb[0].mxu0
        %4613 = vdwg.mxu0
        %v4614 = vpack.c.bf16 %v4125, %v4125
        %v4615 = vpack.c.bf16 %v4126, %v4126
        %s4616 = scalar_lea.vmem [#allocation21], 512
        %v4617 = vld [vmem:[%s4616] sm:$0xff]
        %v4618 = vld [vmem:[%s4616 + $0x8] sm:$0xff]
        %v4619 = vld [vmem:[%s4616 + $0x10] sm:$0xff]
        %v4620 = vld [vmem:[%s4616 + $0x18] sm:$0xff]
        %v4621 = vld [vmem:[%s4616 + $0x20] sm:$0xff]
        %v4622 = vld [vmem:[%s4616 + $0x28] sm:$0xff]
        %v4623 = vld [vmem:[%s4616 + $0x30] sm:$0xff]
        %v4624 = vld [vmem:[%s4616 + $0x38] sm:$0xff]
        %v4625 = vld [vmem:[%s4616 + $0x40] sm:$0xff]
        %v4626 = vld [vmem:[%s4616 + $0x48] sm:$0xff]
        %v4627 = vld [vmem:[%s4616 + $0x50] sm:$0xff]
        %v4628 = vld [vmem:[%s4616 + $0x58] sm:$0xff]
        %v4629 = vld [vmem:[%s4616 + $0x60] sm:$0xff]
        %v4630 = vld [vmem:[%s4616 + $0x68] sm:$0xff]
        %v4631 = vld [vmem:[%s4616 + $0x70] sm:$0xff]
        %v4632 = vld [vmem:[%s4616 + $0x78] sm:$0xff]
        %v4633 = vld [vmem:[%s4616 + $0x80] sm:$0xff]
        %v4634 = vld [vmem:[%s4616 + $0x88] sm:$0xff]
        %v4635 = vld [vmem:[%s4616 + $0x90] sm:$0xff]
        %v4636 = vld [vmem:[%s4616 + $0x98] sm:$0xff]
        %v4637 = vld [vmem:[%s4616 + $0xa0] sm:$0xff]
        %v4638 = vld [vmem:[%s4616 + $0xa8] sm:$0xff]
        %v4639 = vld [vmem:[%s4616 + $0xb0] sm:$0xff]
        %v4640 = vld [vmem:[%s4616 + $0xb8] sm:$0xff]
        %v4641 = vld [vmem:[%s4616 + $0xc0] sm:$0xff]
        %v4642 = vld [vmem:[%s4616 + $0xc8] sm:$0xff]
        %v4643 = vld [vmem:[%s4616 + $0xd0] sm:$0xff]
        %v4644 = vld [vmem:[%s4616 + $0xd8] sm:$0xff]
        %v4645 = vld [vmem:[%s4616 + $0xe0] sm:$0xff]
        %v4646 = vld [vmem:[%s4616 + $0xe8] sm:$0xff]
        %v4647 = vld [vmem:[%s4616 + $0xf0] sm:$0xff]
        %v4648 = vld [vmem:[%s4616 + $0xf8] sm:$0xff]
        %v4651 = vrot.slane %v4614, 1
        %v4652 = vrot.slane %v4615, 1
        %v4687 = vunpack.c.l.b16 %v4617
        %v4688 = vunpack.c.h.b16 %v4617
        %v4689 = vunpack.c.l.b16 %v4618
        %v4690 = vunpack.c.h.b16 %v4618
        %v4691 = vunpack.c.l.b16 %v4619
        %v4692 = vunpack.c.h.b16 %v4619
        %v4693 = vunpack.c.l.b16 %v4620
        %v4694 = vunpack.c.h.b16 %v4620
        %v4695 = vunpack.c.l.b16 %v4621
        %v4696 = vunpack.c.h.b16 %v4621
        %v4697 = vunpack.c.l.b16 %v4622
        %v4698 = vunpack.c.h.b16 %v4622
        %v4699 = vunpack.c.l.b16 %v4623
        %v4700 = vunpack.c.h.b16 %v4623
        %v4701 = vunpack.c.l.b16 %v4624
        %v4702 = vunpack.c.h.b16 %v4624
        %v4703 = vunpack.c.l.b16 %v4625
        %v4704 = vunpack.c.h.b16 %v4625
        %v4705 = vunpack.c.l.b16 %v4626
        %v4706 = vunpack.c.h.b16 %v4626
        %v4707 = vunpack.c.l.b16 %v4627
        %v4708 = vunpack.c.h.b16 %v4627
        %v4709 = vunpack.c.l.b16 %v4628
        %v4710 = vunpack.c.h.b16 %v4628
        %v4711 = vunpack.c.l.b16 %v4629
        %v4712 = vunpack.c.h.b16 %v4629
        %v4713 = vunpack.c.l.b16 %v4630
        %v4714 = vunpack.c.h.b16 %v4630
        %v4715 = vunpack.c.l.b16 %v4631
        %v4716 = vunpack.c.h.b16 %v4631
        %v4717 = vunpack.c.l.b16 %v4632
        %v4718 = vunpack.c.h.b16 %v4632
        %v4719 = vunpack.c.l.b16 %v4633
        %v4720 = vunpack.c.h.b16 %v4633
        %v4721 = vunpack.c.l.b16 %v4634
        %v4722 = vunpack.c.h.b16 %v4634
        %v4723 = vunpack.c.l.b16 %v4635
        %v4724 = vunpack.c.h.b16 %v4635
        %v4725 = vunpack.c.l.b16 %v4636
        %v4726 = vunpack.c.h.b16 %v4636
        %v4727 = vunpack.c.l.b16 %v4637
        %v4728 = vunpack.c.h.b16 %v4637
        %v4729 = vunpack.c.l.b16 %v4638
        %v4730 = vunpack.c.h.b16 %v4638
        %v4731 = vunpack.c.l.b16 %v4639
        %v4732 = vunpack.c.h.b16 %v4639
        %v4733 = vunpack.c.l.b16 %v4640
        %v4734 = vunpack.c.h.b16 %v4640
        %v4735 = vunpack.c.l.b16 %v4641
        %v4736 = vunpack.c.h.b16 %v4641
        %v4737 = vunpack.c.l.b16 %v4642
        %v4738 = vunpack.c.h.b16 %v4642
        %v4739 = vunpack.c.l.b16 %v4643
        %v4740 = vunpack.c.h.b16 %v4643
        %v4741 = vunpack.c.l.b16 %v4644
        %v4742 = vunpack.c.h.b16 %v4644
        %v4743 = vunpack.c.l.b16 %v4645
        %v4744 = vunpack.c.h.b16 %v4645
        %v4745 = vunpack.c.l.b16 %v4646
        %v4746 = vunpack.c.h.b16 %v4646
        %v4747 = vunpack.c.l.b16 %v4647
        %v4748 = vunpack.c.h.b16 %v4647
        %v4749 = vunpack.c.l.b16 %v4648
        %v4750 = vunpack.c.h.b16 %v4648
        %v4751 = vpack.c.b16 %v4689, %v4687
        %v4752 = vpack.c.b16 %v4690, %v4688
        %v4753 = vpack.c.b16 %v4693, %v4691
        %v4754 = vpack.c.b16 %v4694, %v4692
        %v4755 = vpack.c.b16 %v4697, %v4695
        %v4756 = vpack.c.b16 %v4698, %v4696
        %v4757 = vpack.c.b16 %v4701, %v4699
        %v4758 = vpack.c.b16 %v4702, %v4700
        %v4759 = vpack.c.b16 %v4705, %v4703
        %v4760 = vpack.c.b16 %v4706, %v4704
        %v4761 = vpack.c.b16 %v4709, %v4707
        %v4762 = vpack.c.b16 %v4710, %v4708
        %v4763 = vpack.c.b16 %v4713, %v4711
        %v4764 = vpack.c.b16 %v4714, %v4712
        %v4765 = vpack.c.b16 %v4717, %v4715
        %v4766 = vpack.c.b16 %v4718, %v4716
        %v4767 = vpack.c.b16 %v4721, %v4719
        %v4768 = vpack.c.b16 %v4722, %v4720
        %v4769 = vpack.c.b16 %v4725, %v4723
        %v4770 = vpack.c.b16 %v4726, %v4724
        %v4771 = vpack.c.b16 %v4729, %v4727
        %v4772 = vpack.c.b16 %v4730, %v4728
        %v4773 = vpack.c.b16 %v4733, %v4731
        %v4774 = vpack.c.b16 %v4734, %v4732
        %v4775 = vpack.c.b16 %v4737, %v4735
        %v4776 = vpack.c.b16 %v4738, %v4736
        %v4777 = vpack.c.b16 %v4741, %v4739
        %v4778 = vpack.c.b16 %v4742, %v4740
        %v4779 = vpack.c.b16 %v4745, %v4743
        %v4780 = vpack.c.b16 %v4746, %v4744
        %v4781 = vpack.c.b16 %v4749, %v4747
        %v4782 = vpack.c.b16 %v4750, %v4748
        %4815 = vmatprep.subr.bf16.mxu0 %v4752
        %4816 = vmatpush1.bf16.msra.mxu0 %v4751
        %4817 = vmatprep.subr.bf16.mxu0 %v4754
        %4818 = vmatpush1.bf16.msra.mxu0 %v4753
        %4819 = vmatprep.subr.bf16.mxu0 %v4756
        %4820 = vmatpush1.bf16.msra.mxu0 %v4755
        %4821 = vmatprep.subr.bf16.mxu0 %v4758
        %4822 = vmatpush1.bf16.msra.mxu0 %v4757
        %4823 = vmatprep.subr.bf16.mxu0 %v4760
        %4824 = vmatpush1.bf16.msra.mxu0 %v4759
        %4825 = vmatprep.subr.bf16.mxu0 %v4762
        %4826 = vmatpush1.bf16.msra.mxu0 %v4761
        %4827 = vmatprep.subr.bf16.mxu0 %v4764
        %4828 = vmatpush1.bf16.msra.mxu0 %v4763
        %4829 = vmatprep.subr.bf16.mxu0 %v4766
        %4830 = vmatpush1.bf16.msra.mxu0 %v4765
        %4831 = vmatprep.subr.bf16.mxu0 %v4768
        %4832 = vmatpush1.bf16.msra.mxu0 %v4767
        %4833 = vmatprep.subr.bf16.mxu0 %v4770
        %4834 = vmatpush1.bf16.msra.mxu0 %v4769
        %4835 = vmatprep.subr.bf16.mxu0 %v4772
        %4836 = vmatpush1.bf16.msra.mxu0 %v4771
        %4837 = vmatprep.subr.bf16.mxu0 %v4774
        %4838 = vmatpush1.bf16.msra.mxu0 %v4773
        %4839 = vmatprep.subr.bf16.mxu0 %v4776
        %4840 = vmatpush1.bf16.msra.mxu0 %v4775
        %4841 = vmatprep.subr.bf16.mxu0 %v4778
        %4842 = vmatpush1.bf16.msra.mxu0 %v4777
        %4843 = vmatprep.subr.bf16.mxu0 %v4780
        %4844 = vmatpush1.bf16.msra.mxu0 %v4779
        %4845 = vmatprep.subr.bf16.mxu0 %v4782
        %4846 = vmatpush1.bf16.msra.mxu0 %v4781
        %4847 = vmatprep.mubr.bf16.mxu0 %v4652
        %4848 = vmatmul.mubr.bf16.gmra.mrb[0].mxu0 %v4651
        %v4849 = vpop.f32.mrb[0].mxu0
        %v4850 = vadd.f32 0.0, %v4849
        %v4851 = vpop.f32.mrb[0].mxu0
        %v4852 = vadd.f32 0.0, %v4851
        %v4853 = vpop.f32.mrb[0].mxu0
        %v4854 = vpop.f32.mrb[0].mxu0
        %4855 = vdwg.mxu0
        %v4856 = vadd.f32 %v4608, %v4850
        %v4857 = vadd.f32 %v4610, %v4852
        %v4858 = vld [vmem:[#allocation39] sm:$0x3]
        %v4860 = vlaneseq
        %v4861 = vshrl.u32 %v4860, 7
        %v4862 = vsub.s32 0, %v4861
        %v4863 = vrot.slane %v4858, %v4862
        %v4864 = vlaneseq
        %v4865 = vshrl.u32 %v4864, 7
        %v4866 = vsub.s32 1, %v4865
        %v4867 = vrot.slane %v4858, %v4866
        %v4870 = vadd.f32 %v4856, %v4863
        %v4871 = vadd.f32 %v4857, %v4867
        %v4872 = vadd.f32 %v4870, %v3602
        %v4873 = vadd.f32 %v4871, %v3604
        %v4874 = vmax.f32 %v4872, 0.0
        %v4875 = vmax.f32 %v4873, 0.0
        %v4876 = vpack.c.bf16 %v4874, %v4874
        %v4877 = vpack.c.bf16 %v4875, %v4875
        %v4878 = vld [vmem:[#allocation24] sm:$0xff]
        %v4879 = vld [vmem:[#allocation24 + $0x8] sm:$0xff]
        %v4880 = vld [vmem:[#allocation24 + $0x10] sm:$0xff]
        %v4881 = vld [vmem:[#allocation24 + $0x18] sm:$0xff]
        %v4882 = vld [vmem:[#allocation24 + $0x20] sm:$0xff]
        %v4883 = vld [vmem:[#allocation24 + $0x28] sm:$0xff]
        %v4884 = vld [vmem:[#allocation24 + $0x30] sm:$0xff]
        %v4885 = vld [vmem:[#allocation24 + $0x38] sm:$0xff]
        %v4886 = vld [vmem:[#allocation24 + $0x40] sm:$0xff]
        %v4887 = vld [vmem:[#allocation24 + $0x48] sm:$0xff]
        %v4888 = vld [vmem:[#allocation24 + $0x50] sm:$0xff]
        %v4889 = vld [vmem:[#allocation24 + $0x58] sm:$0xff]
        %v4890 = vld [vmem:[#allocation24 + $0x60] sm:$0xff]
        %v4891 = vld [vmem:[#allocation24 + $0x68] sm:$0xff]
        %v4892 = vld [vmem:[#allocation24 + $0x70] sm:$0xff]
        %v4893 = vld [vmem:[#allocation24 + $0x78] sm:$0xff]
        %v4894 = vld [vmem:[#allocation24 + $0x80] sm:$0xff]
        %v4895 = vld [vmem:[#allocation24 + $0x88] sm:$0xff]
        %v4896 = vld [vmem:[#allocation24 + $0x90] sm:$0xff]
        %v4897 = vld [vmem:[#allocation24 + $0x98] sm:$0xff]
        %v4898 = vld [vmem:[#allocation24 + $0xa0] sm:$0xff]
        %v4899 = vld [vmem:[#allocation24 + $0xa8] sm:$0xff]
        %v4900 = vld [vmem:[#allocation24 + $0xb0] sm:$0xff]
        %v4901 = vld [vmem:[#allocation24 + $0xb8] sm:$0xff]
        %v4902 = vld [vmem:[#allocation24 + $0xc0] sm:$0xff]
        %v4903 = vld [vmem:[#allocation24 + $0xc8] sm:$0xff]
        %v4904 = vld [vmem:[#allocation24 + $0xd0] sm:$0xff]
        %v4905 = vld [vmem:[#allocation24 + $0xd8] sm:$0xff]
        %v4906 = vld [vmem:[#allocation24 + $0xe0] sm:$0xff]
        %v4907 = vld [vmem:[#allocation24 + $0xe8] sm:$0xff]
        %v4908 = vld [vmem:[#allocation24 + $0xf0] sm:$0xff]
        %v4909 = vld [vmem:[#allocation24 + $0xf8] sm:$0xff]
        %v4910 = vld [vmem:[#allocation24 + $0x100] sm:$0xff]
        %v4911 = vld [vmem:[#allocation24 + $0x108] sm:$0xff]
        %v4912 = vld [vmem:[#allocation24 + $0x110] sm:$0xff]
        %v4913 = vld [vmem:[#allocation24 + $0x118] sm:$0xff]
        %v4914 = vld [vmem:[#allocation24 + $0x120] sm:$0xff]
        %v4915 = vld [vmem:[#allocation24 + $0x128] sm:$0xff]
        %v4916 = vld [vmem:[#allocation24 + $0x130] sm:$0xff]
        %v4917 = vld [vmem:[#allocation24 + $0x138] sm:$0xff]
        %v4918 = vld [vmem:[#allocation24 + $0x140] sm:$0xff]
        %v4919 = vld [vmem:[#allocation24 + $0x148] sm:$0xff]
        %v4920 = vld [vmem:[#allocation24 + $0x150] sm:$0xff]
        %v4921 = vld [vmem:[#allocation24 + $0x158] sm:$0xff]
        %v4922 = vld [vmem:[#allocation24 + $0x160] sm:$0xff]
        %v4923 = vld [vmem:[#allocation24 + $0x168] sm:$0xff]
        %v4924 = vld [vmem:[#allocation24 + $0x170] sm:$0xff]
        %v4925 = vld [vmem:[#allocation24 + $0x178] sm:$0xff]
        %v4926 = vld [vmem:[#allocation24 + $0x180] sm:$0xff]
        %v4927 = vld [vmem:[#allocation24 + $0x188] sm:$0xff]
        %v4928 = vld [vmem:[#allocation24 + $0x190] sm:$0xff]
        %v4929 = vld [vmem:[#allocation24 + $0x198] sm:$0xff]
        %v4930 = vld [vmem:[#allocation24 + $0x1a0] sm:$0xff]
        %v4931 = vld [vmem:[#allocation24 + $0x1a8] sm:$0xff]
        %v4932 = vld [vmem:[#allocation24 + $0x1b0] sm:$0xff]
        %v4933 = vld [vmem:[#allocation24 + $0x1b8] sm:$0xff]
        %v4934 = vld [vmem:[#allocation24 + $0x1c0] sm:$0xff]
        %v4935 = vld [vmem:[#allocation24 + $0x1c8] sm:$0xff]
        %v4936 = vld [vmem:[#allocation24 + $0x1d0] sm:$0xff]
        %v4937 = vld [vmem:[#allocation24 + $0x1d8] sm:$0xff]
        %v4938 = vld [vmem:[#allocation24 + $0x1e0] sm:$0xff]
        %v4939 = vld [vmem:[#allocation24 + $0x1e8] sm:$0xff]
        %v4940 = vld [vmem:[#allocation24 + $0x1f0] sm:$0xff]
        %v4941 = vld [vmem:[#allocation24 + $0x1f8] sm:$0xff]
        %v5006 = vunpack.c.l.b16 %v4878
        %v5007 = vunpack.c.h.b16 %v4878
        %v5008 = vunpack.c.l.b16 %v4879
        %v5009 = vunpack.c.h.b16 %v4879
        %v5010 = vunpack.c.l.b16 %v4880
        %v5011 = vunpack.c.h.b16 %v4880
        %v5012 = vunpack.c.l.b16 %v4881
        %v5013 = vunpack.c.h.b16 %v4881
        %v5014 = vunpack.c.l.b16 %v4882
        %v5015 = vunpack.c.h.b16 %v4882
        %v5016 = vunpack.c.l.b16 %v4883
        %v5017 = vunpack.c.h.b16 %v4883
        %v5018 = vunpack.c.l.b16 %v4884
        %v5019 = vunpack.c.h.b16 %v4884
        %v5020 = vunpack.c.l.b16 %v4885
        %v5021 = vunpack.c.h.b16 %v4885
        %v5022 = vunpack.c.l.b16 %v4886
        %v5023 = vunpack.c.h.b16 %v4886
        %v5024 = vunpack.c.l.b16 %v4887
        %v5025 = vunpack.c.h.b16 %v4887
        %v5026 = vunpack.c.l.b16 %v4888
        %v5027 = vunpack.c.h.b16 %v4888
        %v5028 = vunpack.c.l.b16 %v4889
        %v5029 = vunpack.c.h.b16 %v4889
        %v5030 = vunpack.c.l.b16 %v4890
        %v5031 = vunpack.c.h.b16 %v4890
        %v5032 = vunpack.c.l.b16 %v4891
        %v5033 = vunpack.c.h.b16 %v4891
        %v5034 = vunpack.c.l.b16 %v4892
        %v5035 = vunpack.c.h.b16 %v4892
        %v5036 = vunpack.c.l.b16 %v4893
        %v5037 = vunpack.c.h.b16 %v4893
        %v5038 = vunpack.c.l.b16 %v4894
        %v5039 = vunpack.c.h.b16 %v4894
        %v5040 = vunpack.c.l.b16 %v4895
        %v5041 = vunpack.c.h.b16 %v4895
        %v5042 = vunpack.c.l.b16 %v4896
        %v5043 = vunpack.c.h.b16 %v4896
        %v5044 = vunpack.c.l.b16 %v4897
        %v5045 = vunpack.c.h.b16 %v4897
        %v5046 = vunpack.c.l.b16 %v4898
        %v5047 = vunpack.c.h.b16 %v4898
        %v5048 = vunpack.c.l.b16 %v4899
        %v5049 = vunpack.c.h.b16 %v4899
        %v5050 = vunpack.c.l.b16 %v4900
        %v5051 = vunpack.c.h.b16 %v4900
        %v5052 = vunpack.c.l.b16 %v4901
        %v5053 = vunpack.c.h.b16 %v4901
        %v5054 = vunpack.c.l.b16 %v4902
        %v5055 = vunpack.c.h.b16 %v4902
        %v5056 = vunpack.c.l.b16 %v4903
        %v5057 = vunpack.c.h.b16 %v4903
        %v5058 = vunpack.c.l.b16 %v4904
        %v5059 = vunpack.c.h.b16 %v4904
        %v5060 = vunpack.c.l.b16 %v4905
        %v5061 = vunpack.c.h.b16 %v4905
        %v5062 = vunpack.c.l.b16 %v4906
        %v5063 = vunpack.c.h.b16 %v4906
        %v5064 = vunpack.c.l.b16 %v4907
        %v5065 = vunpack.c.h.b16 %v4907
        %v5066 = vunpack.c.l.b16 %v4908
        %v5067 = vunpack.c.h.b16 %v4908
        %v5068 = vunpack.c.l.b16 %v4909
        %v5069 = vunpack.c.h.b16 %v4909
        %v5070 = vunpack.c.l.b16 %v4910
        %v5071 = vunpack.c.h.b16 %v4910
        %v5072 = vunpack.c.l.b16 %v4911
        %v5073 = vunpack.c.h.b16 %v4911
        %v5074 = vunpack.c.l.b16 %v4912
        %v5075 = vunpack.c.h.b16 %v4912
        %v5076 = vunpack.c.l.b16 %v4913
        %v5077 = vunpack.c.h.b16 %v4913
        %v5078 = vunpack.c.l.b16 %v4914
        %v5079 = vunpack.c.h.b16 %v4914
        %v5080 = vunpack.c.l.b16 %v4915
        %v5081 = vunpack.c.h.b16 %v4915
        %v5082 = vunpack.c.l.b16 %v4916
        %v5083 = vunpack.c.h.b16 %v4916
        %v5084 = vunpack.c.l.b16 %v4917
        %v5085 = vunpack.c.h.b16 %v4917
        %v5086 = vunpack.c.l.b16 %v4918
        %v5087 = vunpack.c.h.b16 %v4918
        %v5088 = vunpack.c.l.b16 %v4919
        %v5089 = vunpack.c.h.b16 %v4919
        %v5090 = vunpack.c.l.b16 %v4920
        %v5091 = vunpack.c.h.b16 %v4920
        %v5092 = vunpack.c.l.b16 %v4921
        %v5093 = vunpack.c.h.b16 %v4921
        %v5094 = vunpack.c.l.b16 %v4922
        %v5095 = vunpack.c.h.b16 %v4922
        %v5096 = vunpack.c.l.b16 %v4923
        %v5097 = vunpack.c.h.b16 %v4923
        %v5098 = vunpack.c.l.b16 %v4924
        %v5099 = vunpack.c.h.b16 %v4924
        %v5100 = vunpack.c.l.b16 %v4925
        %v5101 = vunpack.c.h.b16 %v4925
        %v5102 = vunpack.c.l.b16 %v4926
        %v5103 = vunpack.c.h.b16 %v4926
        %v5104 = vunpack.c.l.b16 %v4927
        %v5105 = vunpack.c.h.b16 %v4927
        %v5106 = vunpack.c.l.b16 %v4928
        %v5107 = vunpack.c.h.b16 %v4928
        %v5108 = vunpack.c.l.b16 %v4929
        %v5109 = vunpack.c.h.b16 %v4929
        %v5110 = vunpack.c.l.b16 %v4930
        %v5111 = vunpack.c.h.b16 %v4930
        %v5112 = vunpack.c.l.b16 %v4931
        %v5113 = vunpack.c.h.b16 %v4931
        %v5114 = vunpack.c.l.b16 %v4932
        %v5115 = vunpack.c.h.b16 %v4932
        %v5116 = vunpack.c.l.b16 %v4933
        %v5117 = vunpack.c.h.b16 %v4933
        %v5118 = vunpack.c.l.b16 %v4934
        %v5119 = vunpack.c.h.b16 %v4934
        %v5120 = vunpack.c.l.b16 %v4935
        %v5121 = vunpack.c.h.b16 %v4935
        %v5122 = vunpack.c.l.b16 %v4936
        %v5123 = vunpack.c.h.b16 %v4936
        %v5124 = vunpack.c.l.b16 %v4937
        %v5125 = vunpack.c.h.b16 %v4937
        %v5126 = vunpack.c.l.b16 %v4938
        %v5127 = vunpack.c.h.b16 %v4938
        %v5128 = vunpack.c.l.b16 %v4939
        %v5129 = vunpack.c.h.b16 %v4939
        %v5130 = vunpack.c.l.b16 %v4940
        %v5131 = vunpack.c.h.b16 %v4940
        %v5132 = vunpack.c.l.b16 %v4941
        %v5133 = vunpack.c.h.b16 %v4941
        %v5134 = vpack.c.b16 %v5010, %v5006
        %v5135 = vpack.c.b16 %v5011, %v5007
        %v5136 = vpack.c.b16 %v5012, %v5008
        %v5137 = vpack.c.b16 %v5013, %v5009
        %v5138 = vpack.c.b16 %v5018, %v5014
        %v5139 = vpack.c.b16 %v5019, %v5015
        %v5140 = vpack.c.b16 %v5020, %v5016
        %v5141 = vpack.c.b16 %v5021, %v5017
        %v5142 = vpack.c.b16 %v5026, %v5022
        %v5143 = vpack.c.b16 %v5027, %v5023
        %v5144 = vpack.c.b16 %v5028, %v5024
        %v5145 = vpack.c.b16 %v5029, %v5025
        %v5146 = vpack.c.b16 %v5034, %v5030
        %v5147 = vpack.c.b16 %v5035, %v5031
        %v5148 = vpack.c.b16 %v5036, %v5032
        %v5149 = vpack.c.b16 %v5037, %v5033
        %v5150 = vpack.c.b16 %v5042, %v5038
        %v5151 = vpack.c.b16 %v5043, %v5039
        %v5152 = vpack.c.b16 %v5044, %v5040
        %v5153 = vpack.c.b16 %v5045, %v5041
        %v5154 = vpack.c.b16 %v5050, %v5046
        %v5155 = vpack.c.b16 %v5051, %v5047
        %v5156 = vpack.c.b16 %v5052, %v5048
        %v5157 = vpack.c.b16 %v5053, %v5049
        %v5158 = vpack.c.b16 %v5058, %v5054
        %v5159 = vpack.c.b16 %v5059, %v5055
        %v5160 = vpack.c.b16 %v5060, %v5056
        %v5161 = vpack.c.b16 %v5061, %v5057
        %v5162 = vpack.c.b16 %v5066, %v5062
        %v5163 = vpack.c.b16 %v5067, %v5063
        %v5164 = vpack.c.b16 %v5068, %v5064
        %v5165 = vpack.c.b16 %v5069, %v5065
        %v5166 = vpack.c.b16 %v5074, %v5070
        %v5167 = vpack.c.b16 %v5075, %v5071
        %v5168 = vpack.c.b16 %v5076, %v5072
        %v5169 = vpack.c.b16 %v5077, %v5073
        %v5170 = vpack.c.b16 %v5082, %v5078
        %v5171 = vpack.c.b16 %v5083, %v5079
        %v5172 = vpack.c.b16 %v5084, %v5080
        %v5173 = vpack.c.b16 %v5085, %v5081
        %v5174 = vpack.c.b16 %v5090, %v5086
        %v5175 = vpack.c.b16 %v5091, %v5087
        %v5176 = vpack.c.b16 %v5092, %v5088
        %v5177 = vpack.c.b16 %v5093, %v5089
        %v5178 = vpack.c.b16 %v5098, %v5094
        %v5179 = vpack.c.b16 %v5099, %v5095
        %v5180 = vpack.c.b16 %v5100, %v5096
        %v5181 = vpack.c.b16 %v5101, %v5097
        %v5182 = vpack.c.b16 %v5106, %v5102
        %v5183 = vpack.c.b16 %v5107, %v5103
        %v5184 = vpack.c.b16 %v5108, %v5104
        %v5185 = vpack.c.b16 %v5109, %v5105
        %v5186 = vpack.c.b16 %v5114, %v5110
        %v5187 = vpack.c.b16 %v5115, %v5111
        %v5188 = vpack.c.b16 %v5116, %v5112
        %v5189 = vpack.c.b16 %v5117, %v5113
        %v5190 = vpack.c.b16 %v5122, %v5118
        %v5191 = vpack.c.b16 %v5123, %v5119
        %v5192 = vpack.c.b16 %v5124, %v5120
        %v5193 = vpack.c.b16 %v5125, %v5121
        %v5194 = vpack.c.b16 %v5130, %v5126
        %v5195 = vpack.c.b16 %v5131, %v5127
        %v5196 = vpack.c.b16 %v5132, %v5128
        %v5197 = vpack.c.b16 %v5133, %v5129
        %5262 = vmatprep.subr.bf16.mxu0 %v5135
        %5263 = vmatpush1.bf16.msra.mxu0 %v5134
        %5264 = vmatprep.subr.bf16.mxu0 %v5139
        %5265 = vmatpush1.bf16.msra.mxu0 %v5138
        %5266 = vmatprep.subr.bf16.mxu0 %v5143
        %5267 = vmatpush1.bf16.msra.mxu0 %v5142
        %5268 = vmatprep.subr.bf16.mxu0 %v5147
        %5269 = vmatpush1.bf16.msra.mxu0 %v5146
        %5270 = vmatprep.subr.bf16.mxu0 %v5151
        %5271 = vmatpush1.bf16.msra.mxu0 %v5150
        %5272 = vmatprep.subr.bf16.mxu0 %v5155
        %5273 = vmatpush1.bf16.msra.mxu0 %v5154
        %5274 = vmatprep.subr.bf16.mxu0 %v5159
        %5275 = vmatpush1.bf16.msra.mxu0 %v5158
        %5276 = vmatprep.subr.bf16.mxu0 %v5163
        %5277 = vmatpush1.bf16.msra.mxu0 %v5162
        %5278 = vmatprep.subr.bf16.mxu0 %v5167
        %5279 = vmatpush1.bf16.msra.mxu0 %v5166
        %5280 = vmatprep.subr.bf16.mxu0 %v5171
        %5281 = vmatpush1.bf16.msra.mxu0 %v5170
        %5282 = vmatprep.subr.bf16.mxu0 %v5175
        %5283 = vmatpush1.bf16.msra.mxu0 %v5174
        %5284 = vmatprep.subr.bf16.mxu0 %v5179
        %5285 = vmatpush1.bf16.msra.mxu0 %v5178
        %5286 = vmatprep.subr.bf16.mxu0 %v5183
        %5287 = vmatpush1.bf16.msra.mxu0 %v5182
        %5288 = vmatprep.subr.bf16.mxu0 %v5187
        %5289 = vmatpush1.bf16.msra.mxu0 %v5186
        %5290 = vmatprep.subr.bf16.mxu0 %v5191
        %5291 = vmatpush1.bf16.msra.mxu0 %v5190
        %5292 = vmatprep.subr.bf16.mxu0 %v5195
        %5293 = vmatpush1.bf16.msra.mxu0 %v5194
        %5294 = vmatprep.mubr.bf16.mxu0 %v4877
        %5295 = vmatmul.mubr.bf16.gmra.mrb[0].mxu0 %v4876
        %v5296 = vpop.f32.mrb[0].mxu0
        %v5297 = vadd.f32 0.0, %v5296
        %v5298 = vpop.f32.mrb[0].mxu0
        %v5299 = vadd.f32 0.0, %v5298
        %v5300 = vpop.f32.mrb[0].mxu0
        %v5301 = vpop.f32.mrb[0].mxu0
        %5302 = vdwg.mxu0
        %5303 = vmatprep.subr.bf16.mxu0 %v5137
        %5304 = vmatpush1.bf16.msra.mxu0 %v5136
        %5305 = vmatprep.subr.bf16.mxu0 %v5141
        %5306 = vmatpush1.bf16.msra.mxu0 %v5140
        %5307 = vmatprep.subr.bf16.mxu0 %v5145
        %5308 = vmatpush1.bf16.msra.mxu0 %v5144
        %5309 = vmatprep.subr.bf16.mxu0 %v5149
        %5310 = vmatpush1.bf16.msra.mxu0 %v5148
        %5311 = vmatprep.subr.bf16.mxu0 %v5153
        %5312 = vmatpush1.bf16.msra.mxu0 %v5152
        %5313 = vmatprep.subr.bf16.mxu0 %v5157
        %5314 = vmatpush1.bf16.msra.mxu0 %v5156
        %5315 = vmatprep.subr.bf16.mxu0 %v5161
        %5316 = vmatpush1.bf16.msra.mxu0 %v5160
        %5317 = vmatprep.subr.bf16.mxu0 %v5165
        %5318 = vmatpush1.bf16.msra.mxu0 %v5164
        %5319 = vmatprep.subr.bf16.mxu0 %v5169
        %5320 = vmatpush1.bf16.msra.mxu0 %v5168
        %5321 = vmatprep.subr.bf16.mxu0 %v5173
        %5322 = vmatpush1.bf16.msra.mxu0 %v5172
        %5323 = vmatprep.subr.bf16.mxu0 %v5177
        %5324 = vmatpush1.bf16.msra.mxu0 %v5176
        %5325 = vmatprep.subr.bf16.mxu0 %v5181
        %5326 = vmatpush1.bf16.msra.mxu0 %v5180
        %5327 = vmatprep.subr.bf16.mxu0 %v5185
        %5328 = vmatpush1.bf16.msra.mxu0 %v5184
        %5329 = vmatprep.subr.bf16.mxu0 %v5189
        %5330 = vmatpush1.bf16.msra.mxu0 %v5188
        %5331 = vmatprep.subr.bf16.mxu0 %v5193
        %5332 = vmatpush1.bf16.msra.mxu0 %v5192
        %5333 = vmatprep.subr.bf16.mxu0 %v5197
        %5334 = vmatpush1.bf16.msra.mxu0 %v5196
        %5335 = vmatprep.mubr.bf16.mxu0 %v4877
        %5336 = vmatmul.mubr.bf16.gmra.mrb[0].mxu0 %v4876
        %v5337 = vpop.f32.mrb[0].mxu0
        %v5338 = vadd.f32 0.0, %v5337
        %v5339 = vpop.f32.mrb[0].mxu0
        %v5340 = vadd.f32 0.0, %v5339
        %v5341 = vpop.f32.mrb[0].mxu0
        %v5342 = vpop.f32.mrb[0].mxu0
        %5343 = vdwg.mxu0
        %v5344 = vld [vmem:[#allocation42] sm:$0xf]
        %v5346 = vlaneseq
        %v5347 = vshrl.u32 %v5346, 7
        %v5348 = vsub.s32 0, %v5347
        %v5349 = vrot.slane %v5344, %v5348
        %v5350 = vlaneseq
        %v5351 = vshrl.u32 %v5350, 7
        %v5352 = vsub.s32 1, %v5351
        %v5353 = vrot.slane %v5344, %v5352
        %v5354 = vlaneseq
        %v5355 = vshrl.u32 %v5354, 7
        %v5356 = vsub.s32 2, %v5355
        %v5357 = vrot.slane %v5344, %v5356
        %v5358 = vlaneseq
        %v5359 = vshrl.u32 %v5358, 7
        %v5360 = vsub.s32 3, %v5359
        %v5361 = vrot.slane %v5344, %v5360
        %v5366 = vsel %vm1218, %v2647, 0
        %vm5368 = vcmask 1043456
        %v5370 = vsel %vm5368, %v5297, 0
        %v5373 = vsel %vm5368, %v5299, 0
        %v5376 = vsel %vm5368, %v5338, 0
        %v5379 = vsel %vm5368, %v5340, 0
        %5381 = vmatprep.subr.mxu0 %v5373
        %5382 = vmatpush1.msra.mxu0 %v5370
        %5383 = vmatprep.subr.mxu0 0.0
        %5384 = vmatpush1.msra.mxu0 0.0
        %5385 = vmatprep.subr.mxu0 0.0
        %5386 = vmatpush1.msra.mxu0 0.0
        %5387 = vmatprep.subr.mxu0 0.0
        %5388 = vmatpush1.msra.mxu0 0.0
        %5389 = vmatprep.subr.mxu0 0.0
        %5390 = vmatpush1.msra.mxu0 0.0
        %5391 = vmatprep.subr.mxu0 0.0
        %5392 = vmatpush1.msra.mxu0 0.0
        %5393 = vmatprep.subr.mxu0 0.0
        %5394 = vmatpush1.msra.mxu0 0.0
        %5395 = vmatprep.subr.mxu0 0.0
        %5396 = vmatpush1.msra.mxu0 0.0
        %5397 = vmatprep.subr.mxu0 0.0
        %5398 = vmatpush1.msra.mxu0 0.0
        %5399 = vmatprep.subr.mxu0 0.0
        %5400 = vmatpush1.msra.mxu0 0.0
        %5401 = vmatprep.subr.mxu0 0.0
        %5402 = vmatpush1.msra.mxu0 0.0
        %5403 = vmatprep.subr.mxu0 0.0
        %5404 = vmatpush1.msra.mxu0 0.0
        %5405 = vmatprep.subr.mxu0 0.0
        %5406 = vmatpush1.msra.mxu0 0.0
        %5407 = vmatprep.subr.mxu0 0.0
        %5408 = vmatpush1.msra.mxu0 0.0
        %5409 = vmatprep.subr.mxu0 0.0
        %5410 = vmatpush1.msra.mxu0 0.0
        %5411 = vmatprep.subr.mxu0 0.0
        %5412 = vmatpush1.msra.mxu0 0.0
        %5413 = vmatprep.subr.mxu0 0.0
        %5414 = vmatpush1.msra.mxu0 0.0
        %5415 = vmatprep.subr.mxu0 0.0
        %5416 = vmatpush1.msra.mxu0 0.0
        %5417 = vmatprep.subr.mxu0 0.0
        %5418 = vmatpush1.msra.mxu0 0.0
        %5419 = vmatprep.subr.mxu0 0.0
        %5420 = vmatpush1.msra.mxu0 0.0
        %5421 = vmatprep.subr.mxu0 0.0
        %5422 = vmatpush1.msra.mxu0 0.0
        %5423 = vmatprep.subr.mxu0 0.0
        %5424 = vmatpush1.msra.mxu0 0.0
        %5425 = vmatprep.subr.mxu0 0.0
        %5426 = vmatpush1.msra.mxu0 0.0
        %5427 = vmatprep.subr.mxu0 0.0
        %5428 = vmatpush1.msra.mxu0 0.0
        %5429 = vmatprep.subr.mxu0 0.0
        %5430 = vmatpush1.msra.mxu0 0.0
        %5431 = vmatprep.subr.mxu0 0.0
        %5432 = vmatpush1.msra.mxu0 0.0
        %5433 = vmatprep.subr.mxu0 0.0
        %5434 = vmatpush1.msra.mxu0 0.0
        %5435 = vmatprep.subr.mxu0 0.0
        %5436 = vmatpush1.msra.mxu0 0.0
        %5437 = vmatprep.subr.mxu0 0.0
        %5438 = vmatpush1.msra.mxu0 0.0
        %5439 = vmatprep.subr.mxu0 0.0
        %5440 = vmatpush1.msra.mxu0 0.0
        %5441 = vmatprep.subr.mxu0 0.0
        %5442 = vmatpush1.msra.mxu0 0.0
        %5443 = vmatprep.subr.mxu0 0.0
        %5444 = vmatpush1.msra.mxu0 0.0
        %5445 = vmatprep.mubr.f32.mxu0 0.0
        %5446 = vmatmul.mubr.f32.gmra.mrb[0].mxu0 %v5366
        %v5447 = vpop.f32.mrb[0].mxu0
        %v5448 = vadd.f32 %v5349, %v5447
        %v5449 = vpop.f32.mrb[0].mxu0
        %v5450 = vadd.f32 %v5353, %v5449
        %5451 = vdwg.mxu0
        %5452 = vmatprep.subr.mxu0 %v5379
        %5453 = vmatpush1.msra.mxu0 %v5376
        %5454 = vmatprep.subr.mxu0 0.0
        %5455 = vmatpush1.msra.mxu0 0.0
        %5456 = vmatprep.subr.mxu0 0.0
        %5457 = vmatpush1.msra.mxu0 0.0
        %5458 = vmatprep.subr.mxu0 0.0
        %5459 = vmatpush1.msra.mxu0 0.0
        %5460 = vmatprep.subr.mxu0 0.0
        %5461 = vmatpush1.msra.mxu0 0.0
        %5462 = vmatprep.subr.mxu0 0.0
        %5463 = vmatpush1.msra.mxu0 0.0
        %5464 = vmatprep.subr.mxu0 0.0
        %5465 = vmatpush1.msra.mxu0 0.0
        %5466 = vmatprep.subr.mxu0 0.0
        %5467 = vmatpush1.msra.mxu0 0.0
        %5468 = vmatprep.subr.mxu0 0.0
        %5469 = vmatpush1.msra.mxu0 0.0
        %5470 = vmatprep.subr.mxu0 0.0
        %5471 = vmatpush1.msra.mxu0 0.0
        %5472 = vmatprep.subr.mxu0 0.0
        %5473 = vmatpush1.msra.mxu0 0.0
        %5474 = vmatprep.subr.mxu0 0.0
        %5475 = vmatpush1.msra.mxu0 0.0
        %5476 = vmatprep.subr.mxu0 0.0
        %5477 = vmatpush1.msra.mxu0 0.0
        %5478 = vmatprep.subr.mxu0 0.0
        %5479 = vmatpush1.msra.mxu0 0.0
        %5480 = vmatprep.subr.mxu0 0.0
        %5481 = vmatpush1.msra.mxu0 0.0
        %5482 = vmatprep.subr.mxu0 0.0
        %5483 = vmatpush1.msra.mxu0 0.0
        %5484 = vmatprep.subr.mxu0 0.0
        %5485 = vmatpush1.msra.mxu0 0.0
        %5486 = vmatprep.subr.mxu0 0.0
        %5487 = vmatpush1.msra.mxu0 0.0
        %5488 = vmatprep.subr.mxu0 0.0
        %5489 = vmatpush1.msra.mxu0 0.0
        %5490 = vmatprep.subr.mxu0 0.0
        %5491 = vmatpush1.msra.mxu0 0.0
        %5492 = vmatprep.subr.mxu0 0.0
        %5493 = vmatpush1.msra.mxu0 0.0
        %5494 = vmatprep.subr.mxu0 0.0
        %5495 = vmatpush1.msra.mxu0 0.0
        %5496 = vmatprep.subr.mxu0 0.0
        %5497 = vmatpush1.msra.mxu0 0.0
        %5498 = vmatprep.subr.mxu0 0.0
        %5499 = vmatpush1.msra.mxu0 0.0
        %5500 = vmatprep.subr.mxu0 0.0
        %5501 = vmatpush1.msra.mxu0 0.0
        %5502 = vmatprep.subr.mxu0 0.0
        %5503 = vmatpush1.msra.mxu0 0.0
        %5504 = vmatprep.subr.mxu0 0.0
        %5505 = vmatpush1.msra.mxu0 0.0
        %5506 = vmatprep.subr.mxu0 0.0
        %5507 = vmatpush1.msra.mxu0 0.0
        %5508 = vmatprep.subr.mxu0 0.0
        %5509 = vmatpush1.msra.mxu0 0.0
        %5510 = vmatprep.subr.mxu0 0.0
        %5511 = vmatpush1.msra.mxu0 0.0
        %5512 = vmatprep.subr.mxu0 0.0
        %5513 = vmatpush1.msra.mxu0 0.0
        %5514 = vmatprep.subr.mxu0 0.0
        %5515 = vmatpush1.msra.mxu0 0.0
        %5516 = vmatprep.mubr.f32.mxu0 0.0
        %5517 = vmatmul.mubr.f32.gmra.mrb[0].mxu0 %v5366
        %v5518 = vpop.f32.mrb[0].mxu0
        %v5519 = vadd.f32 %v5357, %v5518
        %v5520 = vpop.f32.mrb[0].mxu0
        %v5521 = vadd.f32 %v5361, %v5520
        %5522 = vdwg.mxu0
        %v5525 = vrot.slane %v4874, 7
        %v5526 = vrot.slane %v4875, 7
        %5529 = vst [vmem:[#allocation5] sm:$0x1e] %v5525
        %5530 = vst [vmem:[#allocation5 + $0x8] sm:$0x1e] %v5526
        %v5531 = vld [vmem:[#allocation5] sm:$0xf]
        %v5532 = vld [vmem:[#allocation5 + $0x8] sm:$0xf]
        %v5533 = vld [vmem:[#allocation5] sm:$0x1e]
        %v5534 = vld [vmem:[#allocation5 + $0x8] sm:$0x1e]
        %v5535 = vld [vmem:[#allocation5] sm:$0x3c]
        %v5536 = vld [vmem:[#allocation5 + $0x8] sm:$0x3c]
        %v5537 = vpack.c.bf16 %v5531, %v5531
        %v5538 = vpack.c.bf16 %v5532, %v5532
        %v5539 = vld [vmem:[#allocation22] sm:$0xff]
        %v5540 = vld [vmem:[#allocation22 + $0x8] sm:$0xff]
        %v5541 = vld [vmem:[#allocation22 + $0x10] sm:$0xff]
        %v5542 = vld [vmem:[#allocation22 + $0x18] sm:$0xff]
        %v5543 = vld [vmem:[#allocation22 + $0x20] sm:$0xff]
        %v5544 = vld [vmem:[#allocation22 + $0x28] sm:$0xff]
        %v5545 = vld [vmem:[#allocation22 + $0x30] sm:$0xff]
        %v5546 = vld [vmem:[#allocation22 + $0x38] sm:$0xff]
        %v5547 = vld [vmem:[#allocation22 + $0x40] sm:$0xff]
        %v5548 = vld [vmem:[#allocation22 + $0x48] sm:$0xff]
        %v5549 = vld [vmem:[#allocation22 + $0x50] sm:$0xff]
        %v5550 = vld [vmem:[#allocation22 + $0x58] sm:$0xff]
        %v5551 = vld [vmem:[#allocation22 + $0x60] sm:$0xff]
        %v5552 = vld [vmem:[#allocation22 + $0x68] sm:$0xff]
        %v5553 = vld [vmem:[#allocation22 + $0x70] sm:$0xff]
        %v5554 = vld [vmem:[#allocation22 + $0x78] sm:$0xff]
        %v5555 = vld [vmem:[#allocation22 + $0x80] sm:$0xff]
        %v5556 = vld [vmem:[#allocation22 + $0x88] sm:$0xff]
        %v5557 = vld [vmem:[#allocation22 + $0x90] sm:$0xff]
        %v5558 = vld [vmem:[#allocation22 + $0x98] sm:$0xff]
        %v5559 = vld [vmem:[#allocation22 + $0xa0] sm:$0xff]
        %v5560 = vld [vmem:[#allocation22 + $0xa8] sm:$0xff]
        %v5561 = vld [vmem:[#allocation22 + $0xb0] sm:$0xff]
        %v5562 = vld [vmem:[#allocation22 + $0xb8] sm:$0xff]
        %v5563 = vld [vmem:[#allocation22 + $0xc0] sm:$0xff]
        %v5564 = vld [vmem:[#allocation22 + $0xc8] sm:$0xff]
        %v5565 = vld [vmem:[#allocation22 + $0xd0] sm:$0xff]
        %v5566 = vld [vmem:[#allocation22 + $0xd8] sm:$0xff]
        %v5567 = vld [vmem:[#allocation22 + $0xe0] sm:$0xff]
        %v5568 = vld [vmem:[#allocation22 + $0xe8] sm:$0xff]
        %v5569 = vld [vmem:[#allocation22 + $0xf0] sm:$0xff]
        %v5570 = vld [vmem:[#allocation22 + $0xf8] sm:$0xff]
        %v5571 = vld [vmem:[#allocation22 + $0x100] sm:$0xff]
        %v5572 = vld [vmem:[#allocation22 + $0x108] sm:$0xff]
        %v5573 = vld [vmem:[#allocation22 + $0x110] sm:$0xff]
        %v5574 = vld [vmem:[#allocation22 + $0x118] sm:$0xff]
        %v5575 = vld [vmem:[#allocation22 + $0x120] sm:$0xff]
        %v5576 = vld [vmem:[#allocation22 + $0x128] sm:$0xff]
        %v5577 = vld [vmem:[#allocation22 + $0x130] sm:$0xff]
        %v5578 = vld [vmem:[#allocation22 + $0x138] sm:$0xff]
        %v5579 = vld [vmem:[#allocation22 + $0x140] sm:$0xff]
        %v5580 = vld [vmem:[#allocation22 + $0x148] sm:$0xff]
        %v5581 = vld [vmem:[#allocation22 + $0x150] sm:$0xff]
        %v5582 = vld [vmem:[#allocation22 + $0x158] sm:$0xff]
        %v5583 = vld [vmem:[#allocation22 + $0x160] sm:$0xff]
        %v5584 = vld [vmem:[#allocation22 + $0x168] sm:$0xff]
        %v5585 = vld [vmem:[#allocation22 + $0x170] sm:$0xff]
        %v5586 = vld [vmem:[#allocation22 + $0x178] sm:$0xff]
        %v5587 = vld [vmem:[#allocation22 + $0x180] sm:$0xff]
        %v5588 = vld [vmem:[#allocation22 + $0x188] sm:$0xff]
        %v5589 = vld [vmem:[#allocation22 + $0x190] sm:$0xff]
        %v5590 = vld [vmem:[#allocation22 + $0x198] sm:$0xff]
        %v5591 = vld [vmem:[#allocation22 + $0x1a0] sm:$0xff]
        %v5592 = vld [vmem:[#allocation22 + $0x1a8] sm:$0xff]
        %v5593 = vld [vmem:[#allocation22 + $0x1b0] sm:$0xff]
        %v5594 = vld [vmem:[#allocation22 + $0x1b8] sm:$0xff]
        %v5595 = vld [vmem:[#allocation22 + $0x1c0] sm:$0xff]
        %v5596 = vld [vmem:[#allocation22 + $0x1c8] sm:$0xff]
        %v5597 = vld [vmem:[#allocation22 + $0x1d0] sm:$0xff]
        %v5598 = vld [vmem:[#allocation22 + $0x1d8] sm:$0xff]
        %v5599 = vld [vmem:[#allocation22 + $0x1e0] sm:$0xff]
        %v5600 = vld [vmem:[#allocation22 + $0x1e8] sm:$0xff]
        %v5601 = vld [vmem:[#allocation22 + $0x1f0] sm:$0xff]
        %v5602 = vld [vmem:[#allocation22 + $0x1f8] sm:$0xff]
        %v5603 = vpack.c.bf16 %v5533, %v5533
        %v5604 = vpack.c.bf16 %v5534, %v5534
        %s5605 = scalar_lea.vmem [#allocation22], 512
        %v5606 = vld [vmem:[%s5605] sm:$0xff]
        %v5607 = vld [vmem:[%s5605 + $0x8] sm:$0xff]
        %v5608 = vld [vmem:[%s5605 + $0x10] sm:$0xff]
        %v5609 = vld [vmem:[%s5605 + $0x18] sm:$0xff]
        %v5610 = vld [vmem:[%s5605 + $0x20] sm:$0xff]
        %v5611 = vld [vmem:[%s5605 + $0x28] sm:$0xff]
        %v5612 = vld [vmem:[%s5605 + $0x30] sm:$0xff]
        %v5613 = vld [vmem:[%s5605 + $0x38] sm:$0xff]
        %v5614 = vld [vmem:[%s5605 + $0x40] sm:$0xff]
        %v5615 = vld [vmem:[%s5605 + $0x48] sm:$0xff]
        %v5616 = vld [vmem:[%s5605 + $0x50] sm:$0xff]
        %v5617 = vld [vmem:[%s5605 + $0x58] sm:$0xff]
        %v5618 = vld [vmem:[%s5605 + $0x60] sm:$0xff]
        %v5619 = vld [vmem:[%s5605 + $0x68] sm:$0xff]
        %v5620 = vld [vmem:[%s5605 + $0x70] sm:$0xff]
        %v5621 = vld [vmem:[%s5605 + $0x78] sm:$0xff]
        %v5622 = vld [vmem:[%s5605 + $0x80] sm:$0xff]
        %v5623 = vld [vmem:[%s5605 + $0x88] sm:$0xff]
        %v5624 = vld [vmem:[%s5605 + $0x90] sm:$0xff]
        %v5625 = vld [vmem:[%s5605 + $0x98] sm:$0xff]
        %v5626 = vld [vmem:[%s5605 + $0xa0] sm:$0xff]
        %v5627 = vld [vmem:[%s5605 + $0xa8] sm:$0xff]
        %v5628 = vld [vmem:[%s5605 + $0xb0] sm:$0xff]
        %v5629 = vld [vmem:[%s5605 + $0xb8] sm:$0xff]
        %v5630 = vld [vmem:[%s5605 + $0xc0] sm:$0xff]
        %v5631 = vld [vmem:[%s5605 + $0xc8] sm:$0xff]
        %v5632 = vld [vmem:[%s5605 + $0xd0] sm:$0xff]
        %v5633 = vld [vmem:[%s5605 + $0xd8] sm:$0xff]
        %v5634 = vld [vmem:[%s5605 + $0xe0] sm:$0xff]
        %v5635 = vld [vmem:[%s5605 + $0xe8] sm:$0xff]
        %v5636 = vld [vmem:[%s5605 + $0xf0] sm:$0xff]
        %v5637 = vld [vmem:[%s5605 + $0xf8] sm:$0xff]
        %v5638 = vld [vmem:[%s5605 + $0x100] sm:$0xff]
        %v5639 = vld [vmem:[%s5605 + $0x108] sm:$0xff]
        %v5640 = vld [vmem:[%s5605 + $0x110] sm:$0xff]
        %v5641 = vld [vmem:[%s5605 + $0x118] sm:$0xff]
        %v5642 = vld [vmem:[%s5605 + $0x120] sm:$0xff]
        %v5643 = vld [vmem:[%s5605 + $0x128] sm:$0xff]
        %v5644 = vld [vmem:[%s5605 + $0x130] sm:$0xff]
        %v5645 = vld [vmem:[%s5605 + $0x138] sm:$0xff]
        %v5646 = vld [vmem:[%s5605 + $0x140] sm:$0xff]
        %v5647 = vld [vmem:[%s5605 + $0x148] sm:$0xff]
        %v5648 = vld [vmem:[%s5605 + $0x150] sm:$0xff]
        %v5649 = vld [vmem:[%s5605 + $0x158] sm:$0xff]
        %v5650 = vld [vmem:[%s5605 + $0x160] sm:$0xff]
        %v5651 = vld [vmem:[%s5605 + $0x168] sm:$0xff]
        %v5652 = vld [vmem:[%s5605 + $0x170] sm:$0xff]
        %v5653 = vld [vmem:[%s5605 + $0x178] sm:$0xff]
        %v5654 = vld [vmem:[%s5605 + $0x180] sm:$0xff]
        %v5655 = vld [vmem:[%s5605 + $0x188] sm:$0xff]
        %v5656 = vld [vmem:[%s5605 + $0x190] sm:$0xff]
        %v5657 = vld [vmem:[%s5605 + $0x198] sm:$0xff]
        %v5658 = vld [vmem:[%s5605 + $0x1a0] sm:$0xff]
        %v5659 = vld [vmem:[%s5605 + $0x1a8] sm:$0xff]
        %v5660 = vld [vmem:[%s5605 + $0x1b0] sm:$0xff]
        %v5661 = vld [vmem:[%s5605 + $0x1b8] sm:$0xff]
        %v5662 = vld [vmem:[%s5605 + $0x1c0] sm:$0xff]
        %v5663 = vld [vmem:[%s5605 + $0x1c8] sm:$0xff]
        %v5664 = vld [vmem:[%s5605 + $0x1d0] sm:$0xff]
        %v5665 = vld [vmem:[%s5605 + $0x1d8] sm:$0xff]
        %v5666 = vld [vmem:[%s5605 + $0x1e0] sm:$0xff]
        %v5667 = vld [vmem:[%s5605 + $0x1e8] sm:$0xff]
        %v5668 = vld [vmem:[%s5605 + $0x1f0] sm:$0xff]
        %v5669 = vld [vmem:[%s5605 + $0x1f8] sm:$0xff]
        %v5671 = vshrl.u32 %v5603, 16
        %v5673 = vshll.u32 %v5603, 16
        %v5675 = vrot.slane %v5673, 1
        %v5676 = vor.u32 %v5671, %v5675
        %v5678 = vshrl.u32 %v5604, 16
        %v5680 = vshll.u32 %v5604, 16
        %v5682 = vrot.slane %v5680, 1
        %v5683 = vor.u32 %v5678, %v5682
        %v5750 = vunpack.c.l.b16 %v5606
        %v5751 = vunpack.c.h.b16 %v5606
        %v5752 = vunpack.c.l.b16 %v5607
        %v5753 = vunpack.c.h.b16 %v5607
        %v5754 = vunpack.c.l.b16 %v5608
        %v5755 = vunpack.c.h.b16 %v5608
        %v5756 = vunpack.c.l.b16 %v5609
        %v5757 = vunpack.c.h.b16 %v5609
        %v5758 = vunpack.c.l.b16 %v5610
        %v5759 = vunpack.c.h.b16 %v5610
        %v5760 = vunpack.c.l.b16 %v5611
        %v5761 = vunpack.c.h.b16 %v5611
        %v5762 = vunpack.c.l.b16 %v5612
        %v5763 = vunpack.c.h.b16 %v5612
        %v5764 = vunpack.c.l.b16 %v5613
        %v5765 = vunpack.c.h.b16 %v5613
        %v5766 = vunpack.c.l.b16 %v5614
        %v5767 = vunpack.c.h.b16 %v5614
        %v5768 = vunpack.c.l.b16 %v5615
        %v5769 = vunpack.c.h.b16 %v5615
        %v5770 = vunpack.c.l.b16 %v5616
        %v5771 = vunpack.c.h.b16 %v5616
        %v5772 = vunpack.c.l.b16 %v5617
        %v5773 = vunpack.c.h.b16 %v5617
        %v5774 = vunpack.c.l.b16 %v5618
        %v5775 = vunpack.c.h.b16 %v5618
        %v5776 = vunpack.c.l.b16 %v5619
        %v5777 = vunpack.c.h.b16 %v5619
        %v5778 = vunpack.c.l.b16 %v5620
        %v5779 = vunpack.c.h.b16 %v5620
        %v5780 = vunpack.c.l.b16 %v5621
        %v5781 = vunpack.c.h.b16 %v5621
        %v5782 = vunpack.c.l.b16 %v5622
        %v5783 = vunpack.c.h.b16 %v5622
        %v5784 = vunpack.c.l.b16 %v5623
        %v5785 = vunpack.c.h.b16 %v5623
        %v5786 = vunpack.c.l.b16 %v5624
        %v5787 = vunpack.c.h.b16 %v5624
        %v5788 = vunpack.c.l.b16 %v5625
        %v5789 = vunpack.c.h.b16 %v5625
        %v5790 = vunpack.c.l.b16 %v5626
        %v5791 = vunpack.c.h.b16 %v5626
        %v5792 = vunpack.c.l.b16 %v5627
        %v5793 = vunpack.c.h.b16 %v5627
        %v5794 = vunpack.c.l.b16 %v5628
        %v5795 = vunpack.c.h.b16 %v5628
        %v5796 = vunpack.c.l.b16 %v5629
        %v5797 = vunpack.c.h.b16 %v5629
        %v5798 = vunpack.c.l.b16 %v5630
        %v5799 = vunpack.c.h.b16 %v5630
        %v5800 = vunpack.c.l.b16 %v5631
        %v5801 = vunpack.c.h.b16 %v5631
        %v5802 = vunpack.c.l.b16 %v5632
        %v5803 = vunpack.c.h.b16 %v5632
        %v5804 = vunpack.c.l.b16 %v5633
        %v5805 = vunpack.c.h.b16 %v5633
        %v5806 = vunpack.c.l.b16 %v5634
        %v5807 = vunpack.c.h.b16 %v5634
        %v5808 = vunpack.c.l.b16 %v5635
        %v5809 = vunpack.c.h.b16 %v5635
        %v5810 = vunpack.c.l.b16 %v5636
        %v5811 = vunpack.c.h.b16 %v5636
        %v5812 = vunpack.c.l.b16 %v5637
        %v5813 = vunpack.c.h.b16 %v5637
        %v5814 = vunpack.c.l.b16 %v5638
        %v5815 = vunpack.c.h.b16 %v5638
        %v5816 = vunpack.c.l.b16 %v5639
        %v5817 = vunpack.c.h.b16 %v5639
        %v5818 = vunpack.c.l.b16 %v5640
        %v5819 = vunpack.c.h.b16 %v5640
        %v5820 = vunpack.c.l.b16 %v5641
        %v5821 = vunpack.c.h.b16 %v5641
        %v5822 = vunpack.c.l.b16 %v5642
        %v5823 = vunpack.c.h.b16 %v5642
        %v5824 = vunpack.c.l.b16 %v5643
        %v5825 = vunpack.c.h.b16 %v5643
        %v5826 = vunpack.c.l.b16 %v5644
        %v5827 = vunpack.c.h.b16 %v5644
        %v5828 = vunpack.c.l.b16 %v5645
        %v5829 = vunpack.c.h.b16 %v5645
        %v5830 = vunpack.c.l.b16 %v5646
        %v5831 = vunpack.c.h.b16 %v5646
        %v5832 = vunpack.c.l.b16 %v5647
        %v5833 = vunpack.c.h.b16 %v5647
        %v5834 = vunpack.c.l.b16 %v5648
        %v5835 = vunpack.c.h.b16 %v5648
        %v5836 = vunpack.c.l.b16 %v5649
        %v5837 = vunpack.c.h.b16 %v5649
        %v5838 = vunpack.c.l.b16 %v5650
        %v5839 = vunpack.c.h.b16 %v5650
        %v5840 = vunpack.c.l.b16 %v5651
        %v5841 = vunpack.c.h.b16 %v5651
        %v5842 = vunpack.c.l.b16 %v5652
        %v5843 = vunpack.c.h.b16 %v5652
        %v5844 = vunpack.c.l.b16 %v5653
        %v5845 = vunpack.c.h.b16 %v5653
        %v5846 = vunpack.c.l.b16 %v5654
        %v5847 = vunpack.c.h.b16 %v5654
        %v5848 = vunpack.c.l.b16 %v5655
        %v5849 = vunpack.c.h.b16 %v5655
        %v5850 = vunpack.c.l.b16 %v5656
        %v5851 = vunpack.c.h.b16 %v5656
        %v5852 = vunpack.c.l.b16 %v5657
        %v5853 = vunpack.c.h.b16 %v5657
        %v5854 = vunpack.c.l.b16 %v5658
        %v5855 = vunpack.c.h.b16 %v5658
        %v5856 = vunpack.c.l.b16 %v5659
        %v5857 = vunpack.c.h.b16 %v5659
        %v5858 = vunpack.c.l.b16 %v5660
        %v5859 = vunpack.c.h.b16 %v5660
        %v5860 = vunpack.c.l.b16 %v5661
        %v5861 = vunpack.c.h.b16 %v5661
        %v5862 = vunpack.c.l.b16 %v5662
        %v5863 = vunpack.c.h.b16 %v5662
        %v5864 = vunpack.c.l.b16 %v5663
        %v5865 = vunpack.c.h.b16 %v5663
        %v5866 = vunpack.c.l.b16 %v5664
        %v5867 = vunpack.c.h.b16 %v5664
        %v5868 = vunpack.c.l.b16 %v5665
        %v5869 = vunpack.c.h.b16 %v5665
        %v5870 = vunpack.c.l.b16 %v5666
        %v5871 = vunpack.c.h.b16 %v5666
        %v5872 = vunpack.c.l.b16 %v5667
        %v5873 = vunpack.c.h.b16 %v5667
        %v5874 = vunpack.c.l.b16 %v5668
        %v5875 = vunpack.c.h.b16 %v5668
        %v5876 = vunpack.c.l.b16 %v5669
        %v5877 = vunpack.c.h.b16 %v5669
        %v5878 = vpack.c.b16 %v5754, %v5750
        %v5879 = vpack.c.b16 %v5755, %v5751
        %v5880 = vpack.c.b16 %v5756, %v5752
        %v5881 = vpack.c.b16 %v5757, %v5753
        %v5882 = vpack.c.b16 %v5762, %v5758
        %v5883 = vpack.c.b16 %v5763, %v5759
        %v5884 = vpack.c.b16 %v5764, %v5760
        %v5885 = vpack.c.b16 %v5765, %v5761
        %v5886 = vpack.c.b16 %v5770, %v5766
        %v5887 = vpack.c.b16 %v5771, %v5767
        %v5888 = vpack.c.b16 %v5772, %v5768
        %v5889 = vpack.c.b16 %v5773, %v5769
        %v5890 = vpack.c.b16 %v5778, %v5774
        %v5891 = vpack.c.b16 %v5779, %v5775
        %v5892 = vpack.c.b16 %v5780, %v5776
        %v5893 = vpack.c.b16 %v5781, %v5777
        %v5894 = vpack.c.b16 %v5786, %v5782
        %v5895 = vpack.c.b16 %v5787, %v5783
        %v5896 = vpack.c.b16 %v5788, %v5784
        %v5897 = vpack.c.b16 %v5789, %v5785
        %v5898 = vpack.c.b16 %v5794, %v5790
        %v5899 = vpack.c.b16 %v5795, %v5791
        %v5900 = vpack.c.b16 %v5796, %v5792
        %v5901 = vpack.c.b16 %v5797, %v5793
        %v5902 = vpack.c.b16 %v5802, %v5798
        %v5903 = vpack.c.b16 %v5803, %v5799
        %v5904 = vpack.c.b16 %v5804, %v5800
        %v5905 = vpack.c.b16 %v5805, %v5801
        %v5906 = vpack.c.b16 %v5810, %v5806
        %v5907 = vpack.c.b16 %v5811, %v5807
        %v5908 = vpack.c.b16 %v5812, %v5808
        %v5909 = vpack.c.b16 %v5813, %v5809
        %v5910 = vpack.c.b16 %v5818, %v5814
        %v5911 = vpack.c.b16 %v5819, %v5815
        %v5912 = vpack.c.b16 %v5820, %v5816
        %v5913 = vpack.c.b16 %v5821, %v5817
        %v5914 = vpack.c.b16 %v5826, %v5822
        %v5915 = vpack.c.b16 %v5827, %v5823
        %v5916 = vpack.c.b16 %v5828, %v5824
        %v5917 = vpack.c.b16 %v5829, %v5825
        %v5918 = vpack.c.b16 %v5834, %v5830
        %v5919 = vpack.c.b16 %v5835, %v5831
        %v5920 = vpack.c.b16 %v5836, %v5832
        %v5921 = vpack.c.b16 %v5837, %v5833
        %v5922 = vpack.c.b16 %v5842, %v5838
        %v5923 = vpack.c.b16 %v5843, %v5839
        %v5924 = vpack.c.b16 %v5844, %v5840
        %v5925 = vpack.c.b16 %v5845, %v5841
        %v5926 = vpack.c.b16 %v5850, %v5846
        %v5927 = vpack.c.b16 %v5851, %v5847
        %v5928 = vpack.c.b16 %v5852, %v5848
        %v5929 = vpack.c.b16 %v5853, %v5849
        %v5930 = vpack.c.b16 %v5858, %v5854
        %v5931 = vpack.c.b16 %v5859, %v5855
        %v5932 = vpack.c.b16 %v5860, %v5856
        %v5933 = vpack.c.b16 %v5861, %v5857
        %v5934 = vpack.c.b16 %v5866, %v5862
        %v5935 = vpack.c.b16 %v5867, %v5863
        %v5936 = vpack.c.b16 %v5868, %v5864
        %v5937 = vpack.c.b16 %v5869, %v5865
        %v5938 = vpack.c.b16 %v5874, %v5870
        %v5939 = vpack.c.b16 %v5875, %v5871
        %v5940 = vpack.c.b16 %v5876, %v5872
        %v5941 = vpack.c.b16 %v5877, %v5873
        %6006 = vmatprep.subr.bf16.mxu0 %v5879
        %6007 = vmatpush1.bf16.msra.mxu0 %v5878
        %6008 = vmatprep.subr.bf16.mxu0 %v5883
        %6009 = vmatpush1.bf16.msra.mxu0 %v5882
        %6010 = vmatprep.subr.bf16.mxu0 %v5887
        %6011 = vmatpush1.bf16.msra.mxu0 %v5886
        %6012 = vmatprep.subr.bf16.mxu0 %v5891
        %6013 = vmatpush1.bf16.msra.mxu0 %v5890
        %6014 = vmatprep.subr.bf16.mxu0 %v5895
        %6015 = vmatpush1.bf16.msra.mxu0 %v5894
        %6016 = vmatprep.subr.bf16.mxu0 %v5899
        %6017 = vmatpush1.bf16.msra.mxu0 %v5898
        %6018 = vmatprep.subr.bf16.mxu0 %v5903
        %6019 = vmatpush1.bf16.msra.mxu0 %v5902
        %6020 = vmatprep.subr.bf16.mxu0 %v5907
        %6021 = vmatpush1.bf16.msra.mxu0 %v5906
        %6022 = vmatprep.subr.bf16.mxu0 %v5911
        %6023 = vmatpush1.bf16.msra.mxu0 %v5910
        %6024 = vmatprep.subr.bf16.mxu0 %v5915
        %6025 = vmatpush1.bf16.msra.mxu0 %v5914
        %6026 = vmatprep.subr.bf16.mxu0 %v5919
        %6027 = vmatpush1.bf16.msra.mxu0 %v5918
        %6028 = vmatprep.subr.bf16.mxu0 %v5923
        %6029 = vmatpush1.bf16.msra.mxu0 %v5922
        %6030 = vmatprep.subr.bf16.mxu0 %v5927
        %6031 = vmatpush1.bf16.msra.mxu0 %v5926
        %6032 = vmatprep.subr.bf16.mxu0 %v5931
        %6033 = vmatpush1.bf16.msra.mxu0 %v5930
        %6034 = vmatprep.subr.bf16.mxu0 %v5935
        %6035 = vmatpush1.bf16.msra.mxu0 %v5934
        %6036 = vmatprep.subr.bf16.mxu0 %v5939
        %6037 = vmatpush1.bf16.msra.mxu0 %v5938
        %6038 = vmatprep.mubr.bf16.mxu0 %v5683
        %6039 = vmatmul.mubr.bf16.gmra.mrb[0].mxu0 %v5676
        %v6040 = vpop.f32.mrb[0].mxu0
        %v6041 = vadd.f32 0.0, %v6040
        %v6042 = vpop.f32.mrb[0].mxu0
        %v6043 = vadd.f32 0.0, %v6042
        %v6044 = vpop.f32.mrb[0].mxu0
        %v6045 = vpop.f32.mrb[0].mxu0
        %6046 = vdwg.mxu0
        %6047 = vmatprep.subr.bf16.mxu0 %v5881
        %6048 = vmatpush1.bf16.msra.mxu0 %v5880
        %6049 = vmatprep.subr.bf16.mxu0 %v5885
        %6050 = vmatpush1.bf16.msra.mxu0 %v5884
        %6051 = vmatprep.subr.bf16.mxu0 %v5889
        %6052 = vmatpush1.bf16.msra.mxu0 %v5888
        %6053 = vmatprep.subr.bf16.mxu0 %v5893
        %6054 = vmatpush1.bf16.msra.mxu0 %v5892
        %6055 = vmatprep.subr.bf16.mxu0 %v5897
        %6056 = vmatpush1.bf16.msra.mxu0 %v5896
        %6057 = vmatprep.subr.bf16.mxu0 %v5901
        %6058 = vmatpush1.bf16.msra.mxu0 %v5900
        %6059 = vmatprep.subr.bf16.mxu0 %v5905
        %6060 = vmatpush1.bf16.msra.mxu0 %v5904
        %6061 = vmatprep.subr.bf16.mxu0 %v5909
        %6062 = vmatpush1.bf16.msra.mxu0 %v5908
        %6063 = vmatprep.subr.bf16.mxu0 %v5913
        %6064 = vmatpush1.bf16.msra.mxu0 %v5912
        %6065 = vmatprep.subr.bf16.mxu0 %v5917
        %6066 = vmatpush1.bf16.msra.mxu0 %v5916
        %6067 = vmatprep.subr.bf16.mxu0 %v5921
        %6068 = vmatpush1.bf16.msra.mxu0 %v5920
        %6069 = vmatprep.subr.bf16.mxu0 %v5925
        %6070 = vmatpush1.bf16.msra.mxu0 %v5924
        %6071 = vmatprep.subr.bf16.mxu0 %v5929
        %6072 = vmatpush1.bf16.msra.mxu0 %v5928
        %6073 = vmatprep.subr.bf16.mxu0 %v5933
        %6074 = vmatpush1.bf16.msra.mxu0 %v5932
        %6075 = vmatprep.subr.bf16.mxu0 %v5937
        %6076 = vmatpush1.bf16.msra.mxu0 %v5936
        %6077 = vmatprep.subr.bf16.mxu0 %v5941
        %6078 = vmatpush1.bf16.msra.mxu0 %v5940
        %6079 = vmatprep.mubr.bf16.mxu0 %v5683
        %6080 = vmatmul.mubr.bf16.gmra.mrb[0].mxu0 %v5676
        %v6081 = vpop.f32.mrb[0].mxu0
        %v6082 = vadd.f32 0.0, %v6081
        %v6083 = vpop.f32.mrb[0].mxu0
        %v6084 = vadd.f32 0.0, %v6083
        %v6085 = vpop.f32.mrb[0].mxu0
        %v6086 = vpop.f32.mrb[0].mxu0
        %6087 = vdwg.mxu0
        %v6152 = vunpack.c.l.b16 %v5539
        %v6153 = vunpack.c.h.b16 %v5539
        %v6154 = vunpack.c.l.b16 %v5540
        %v6155 = vunpack.c.h.b16 %v5540
        %v6156 = vunpack.c.l.b16 %v5541
        %v6157 = vunpack.c.h.b16 %v5541
        %v6158 = vunpack.c.l.b16 %v5542
        %v6159 = vunpack.c.h.b16 %v5542
        %v6160 = vunpack.c.l.b16 %v5543
        %v6161 = vunpack.c.h.b16 %v5543
        %v6162 = vunpack.c.l.b16 %v5544
        %v6163 = vunpack.c.h.b16 %v5544
        %v6164 = vunpack.c.l.b16 %v5545
        %v6165 = vunpack.c.h.b16 %v5545
        %v6166 = vunpack.c.l.b16 %v5546
        %v6167 = vunpack.c.h.b16 %v5546
        %v6168 = vunpack.c.l.b16 %v5547
        %v6169 = vunpack.c.h.b16 %v5547
        %v6170 = vunpack.c.l.b16 %v5548
        %v6171 = vunpack.c.h.b16 %v5548
        %v6172 = vunpack.c.l.b16 %v5549
        %v6173 = vunpack.c.h.b16 %v5549
        %v6174 = vunpack.c.l.b16 %v5550
        %v6175 = vunpack.c.h.b16 %v5550
        %v6176 = vunpack.c.l.b16 %v5551
        %v6177 = vunpack.c.h.b16 %v5551
        %v6178 = vunpack.c.l.b16 %v5552
        %v6179 = vunpack.c.h.b16 %v5552
        %v6180 = vunpack.c.l.b16 %v5553
        %v6181 = vunpack.c.h.b16 %v5553
        %v6182 = vunpack.c.l.b16 %v5554
        %v6183 = vunpack.c.h.b16 %v5554
        %v6184 = vunpack.c.l.b16 %v5555
        %v6185 = vunpack.c.h.b16 %v5555
        %v6186 = vunpack.c.l.b16 %v5556
        %v6187 = vunpack.c.h.b16 %v5556
        %v6188 = vunpack.c.l.b16 %v5557
        %v6189 = vunpack.c.h.b16 %v5557
        %v6190 = vunpack.c.l.b16 %v5558
        %v6191 = vunpack.c.h.b16 %v5558
        %v6192 = vunpack.c.l.b16 %v5559
        %v6193 = vunpack.c.h.b16 %v5559
        %v6194 = vunpack.c.l.b16 %v5560
        %v6195 = vunpack.c.h.b16 %v5560
        %v6196 = vunpack.c.l.b16 %v5561
        %v6197 = vunpack.c.h.b16 %v5561
        %v6198 = vunpack.c.l.b16 %v5562
        %v6199 = vunpack.c.h.b16 %v5562
        %v6200 = vunpack.c.l.b16 %v5563
        %v6201 = vunpack.c.h.b16 %v5563
        %v6202 = vunpack.c.l.b16 %v5564
        %v6203 = vunpack.c.h.b16 %v5564
        %v6204 = vunpack.c.l.b16 %v5565
        %v6205 = vunpack.c.h.b16 %v5565
        %v6206 = vunpack.c.l.b16 %v5566
        %v6207 = vunpack.c.h.b16 %v5566
        %v6208 = vunpack.c.l.b16 %v5567
        %v6209 = vunpack.c.h.b16 %v5567
        %v6210 = vunpack.c.l.b16 %v5568
        %v6211 = vunpack.c.h.b16 %v5568
        %v6212 = vunpack.c.l.b16 %v5569
        %v6213 = vunpack.c.h.b16 %v5569
        %v6214 = vunpack.c.l.b16 %v5570
        %v6215 = vunpack.c.h.b16 %v5570
        %v6216 = vunpack.c.l.b16 %v5571
        %v6217 = vunpack.c.h.b16 %v5571
        %v6218 = vunpack.c.l.b16 %v5572
        %v6219 = vunpack.c.h.b16 %v5572
        %v6220 = vunpack.c.l.b16 %v5573
        %v6221 = vunpack.c.h.b16 %v5573
        %v6222 = vunpack.c.l.b16 %v5574
        %v6223 = vunpack.c.h.b16 %v5574
        %v6224 = vunpack.c.l.b16 %v5575
        %v6225 = vunpack.c.h.b16 %v5575
        %v6226 = vunpack.c.l.b16 %v5576
        %v6227 = vunpack.c.h.b16 %v5576
        %v6228 = vunpack.c.l.b16 %v5577
        %v6229 = vunpack.c.h.b16 %v5577
        %v6230 = vunpack.c.l.b16 %v5578
        %v6231 = vunpack.c.h.b16 %v5578
        %v6232 = vunpack.c.l.b16 %v5579
        %v6233 = vunpack.c.h.b16 %v5579
        %v6234 = vunpack.c.l.b16 %v5580
        %v6235 = vunpack.c.h.b16 %v5580
        %v6236 = vunpack.c.l.b16 %v5581
        %v6237 = vunpack.c.h.b16 %v5581
        %v6238 = vunpack.c.l.b16 %v5582
        %v6239 = vunpack.c.h.b16 %v5582
        %v6240 = vunpack.c.l.b16 %v5583
        %v6241 = vunpack.c.h.b16 %v5583
        %v6242 = vunpack.c.l.b16 %v5584
        %v6243 = vunpack.c.h.b16 %v5584
        %v6244 = vunpack.c.l.b16 %v5585
        %v6245 = vunpack.c.h.b16 %v5585
        %v6246 = vunpack.c.l.b16 %v5586
        %v6247 = vunpack.c.h.b16 %v5586
        %v6248 = vunpack.c.l.b16 %v5587
        %v6249 = vunpack.c.h.b16 %v5587
        %v6250 = vunpack.c.l.b16 %v5588
        %v6251 = vunpack.c.h.b16 %v5588
        %v6252 = vunpack.c.l.b16 %v5589
        %v6253 = vunpack.c.h.b16 %v5589
        %v6254 = vunpack.c.l.b16 %v5590
        %v6255 = vunpack.c.h.b16 %v5590
        %v6256 = vunpack.c.l.b16 %v5591
        %v6257 = vunpack.c.h.b16 %v5591
        %v6258 = vunpack.c.l.b16 %v5592
        %v6259 = vunpack.c.h.b16 %v5592
        %v6260 = vunpack.c.l.b16 %v5593
        %v6261 = vunpack.c.h.b16 %v5593
        %v6262 = vunpack.c.l.b16 %v5594
        %v6263 = vunpack.c.h.b16 %v5594
        %v6264 = vunpack.c.l.b16 %v5595
        %v6265 = vunpack.c.h.b16 %v5595
        %v6266 = vunpack.c.l.b16 %v5596
        %v6267 = vunpack.c.h.b16 %v5596
        %v6268 = vunpack.c.l.b16 %v5597
        %v6269 = vunpack.c.h.b16 %v5597
        %v6270 = vunpack.c.l.b16 %v5598
        %v6271 = vunpack.c.h.b16 %v5598
        %v6272 = vunpack.c.l.b16 %v5599
        %v6273 = vunpack.c.h.b16 %v5599
        %v6274 = vunpack.c.l.b16 %v5600
        %v6275 = vunpack.c.h.b16 %v5600
        %v6276 = vunpack.c.l.b16 %v5601
        %v6277 = vunpack.c.h.b16 %v5601
        %v6278 = vunpack.c.l.b16 %v5602
        %v6279 = vunpack.c.h.b16 %v5602
        %v6280 = vpack.c.b16 %v6156, %v6152
        %v6281 = vpack.c.b16 %v6157, %v6153
        %v6282 = vpack.c.b16 %v6158, %v6154
        %v6283 = vpack.c.b16 %v6159, %v6155
        %v6284 = vpack.c.b16 %v6164, %v6160
        %v6285 = vpack.c.b16 %v6165, %v6161
        %v6286 = vpack.c.b16 %v6166, %v6162
        %v6287 = vpack.c.b16 %v6167, %v6163
        %v6288 = vpack.c.b16 %v6172, %v6168
        %v6289 = vpack.c.b16 %v6173, %v6169
        %v6290 = vpack.c.b16 %v6174, %v6170
        %v6291 = vpack.c.b16 %v6175, %v6171
        %v6292 = vpack.c.b16 %v6180, %v6176
        %v6293 = vpack.c.b16 %v6181, %v6177
        %v6294 = vpack.c.b16 %v6182, %v6178
        %v6295 = vpack.c.b16 %v6183, %v6179
        %v6296 = vpack.c.b16 %v6188, %v6184
        %v6297 = vpack.c.b16 %v6189, %v6185
        %v6298 = vpack.c.b16 %v6190, %v6186
        %v6299 = vpack.c.b16 %v6191, %v6187
        %v6300 = vpack.c.b16 %v6196, %v6192
        %v6301 = vpack.c.b16 %v6197, %v6193
        %v6302 = vpack.c.b16 %v6198, %v6194
        %v6303 = vpack.c.b16 %v6199, %v6195
        %v6304 = vpack.c.b16 %v6204, %v6200
        %v6305 = vpack.c.b16 %v6205, %v6201
        %v6306 = vpack.c.b16 %v6206, %v6202
        %v6307 = vpack.c.b16 %v6207, %v6203
        %v6308 = vpack.c.b16 %v6212, %v6208
        %v6309 = vpack.c.b16 %v6213, %v6209
        %v6310 = vpack.c.b16 %v6214, %v6210
        %v6311 = vpack.c.b16 %v6215, %v6211
        %v6312 = vpack.c.b16 %v6220, %v6216
        %v6313 = vpack.c.b16 %v6221, %v6217
        %v6314 = vpack.c.b16 %v6222, %v6218
        %v6315 = vpack.c.b16 %v6223, %v6219
        %v6316 = vpack.c.b16 %v6228, %v6224
        %v6317 = vpack.c.b16 %v6229, %v6225
        %v6318 = vpack.c.b16 %v6230, %v6226
        %v6319 = vpack.c.b16 %v6231, %v6227
        %v6320 = vpack.c.b16 %v6236, %v6232
        %v6321 = vpack.c.b16 %v6237, %v6233
        %v6322 = vpack.c.b16 %v6238, %v6234
        %v6323 = vpack.c.b16 %v6239, %v6235
        %v6324 = vpack.c.b16 %v6244, %v6240
        %v6325 = vpack.c.b16 %v6245, %v6241
        %v6326 = vpack.c.b16 %v6246, %v6242
        %v6327 = vpack.c.b16 %v6247, %v6243
        %v6328 = vpack.c.b16 %v6252, %v6248
        %v6329 = vpack.c.b16 %v6253, %v6249
        %v6330 = vpack.c.b16 %v6254, %v6250
        %v6331 = vpack.c.b16 %v6255, %v6251
        %v6332 = vpack.c.b16 %v6260, %v6256
        %v6333 = vpack.c.b16 %v6261, %v6257
        %v6334 = vpack.c.b16 %v6262, %v6258
        %v6335 = vpack.c.b16 %v6263, %v6259
        %v6336 = vpack.c.b16 %v6268, %v6264
        %v6337 = vpack.c.b16 %v6269, %v6265
        %v6338 = vpack.c.b16 %v6270, %v6266
        %v6339 = vpack.c.b16 %v6271, %v6267
        %v6340 = vpack.c.b16 %v6276, %v6272
        %v6341 = vpack.c.b16 %v6277, %v6273
        %v6342 = vpack.c.b16 %v6278, %v6274
        %v6343 = vpack.c.b16 %v6279, %v6275
        %6408 = vmatprep.subr.bf16.mxu0 %v6281
        %6409 = vmatpush1.bf16.msra.mxu0 %v6280
        %6410 = vmatprep.subr.bf16.mxu0 %v6285
        %6411 = vmatpush1.bf16.msra.mxu0 %v6284
        %6412 = vmatprep.subr.bf16.mxu0 %v6289
        %6413 = vmatpush1.bf16.msra.mxu0 %v6288
        %6414 = vmatprep.subr.bf16.mxu0 %v6293
        %6415 = vmatpush1.bf16.msra.mxu0 %v6292
        %6416 = vmatprep.subr.bf16.mxu0 %v6297
        %6417 = vmatpush1.bf16.msra.mxu0 %v6296
        %6418 = vmatprep.subr.bf16.mxu0 %v6301
        %6419 = vmatpush1.bf16.msra.mxu0 %v6300
        %6420 = vmatprep.subr.bf16.mxu0 %v6305
        %6421 = vmatpush1.bf16.msra.mxu0 %v6304
        %6422 = vmatprep.subr.bf16.mxu0 %v6309
        %6423 = vmatpush1.bf16.msra.mxu0 %v6308
        %6424 = vmatprep.subr.bf16.mxu0 %v6313
        %6425 = vmatpush1.bf16.msra.mxu0 %v6312
        %6426 = vmatprep.subr.bf16.mxu0 %v6317
        %6427 = vmatpush1.bf16.msra.mxu0 %v6316
        %6428 = vmatprep.subr.bf16.mxu0 %v6321
        %6429 = vmatpush1.bf16.msra.mxu0 %v6320
        %6430 = vmatprep.subr.bf16.mxu0 %v6325
        %6431 = vmatpush1.bf16.msra.mxu0 %v6324
        %6432 = vmatprep.subr.bf16.mxu0 %v6329
        %6433 = vmatpush1.bf16.msra.mxu0 %v6328
        %6434 = vmatprep.subr.bf16.mxu0 %v6333
        %6435 = vmatpush1.bf16.msra.mxu0 %v6332
        %6436 = vmatprep.subr.bf16.mxu0 %v6337
        %6437 = vmatpush1.bf16.msra.mxu0 %v6336
        %6438 = vmatprep.subr.bf16.mxu0 %v6341
        %6439 = vmatpush1.bf16.msra.mxu0 %v6340
        %6440 = vmatprep.mubr.bf16.mxu0 %v5538
        %6441 = vmatmul.mubr.bf16.gmra.mrb[0].mxu0 %v5537
        %v6442 = vpop.f32.mrb[0].mxu0
        %v6443 = vadd.f32 %v6041, %v6442
        %v6444 = vpop.f32.mrb[0].mxu0
        %v6445 = vadd.f32 %v6043, %v6444
        %v6446 = vpop.f32.mrb[0].mxu0
        %v6447 = vpop.f32.mrb[0].mxu0
        %6448 = vdwg.mxu0
        %6449 = vmatprep.subr.bf16.mxu0 %v6283
        %6450 = vmatpush1.bf16.msra.mxu0 %v6282
        %6451 = vmatprep.subr.bf16.mxu0 %v6287
        %6452 = vmatpush1.bf16.msra.mxu0 %v6286
        %6453 = vmatprep.subr.bf16.mxu0 %v6291
        %6454 = vmatpush1.bf16.msra.mxu0 %v6290
        %6455 = vmatprep.subr.bf16.mxu0 %v6295
        %6456 = vmatpush1.bf16.msra.mxu0 %v6294
        %6457 = vmatprep.subr.bf16.mxu0 %v6299
        %6458 = vmatpush1.bf16.msra.mxu0 %v6298
        %6459 = vmatprep.subr.bf16.mxu0 %v6303
        %6460 = vmatpush1.bf16.msra.mxu0 %v6302
        %6461 = vmatprep.subr.bf16.mxu0 %v6307
        %6462 = vmatpush1.bf16.msra.mxu0 %v6306
        %6463 = vmatprep.subr.bf16.mxu0 %v6311
        %6464 = vmatpush1.bf16.msra.mxu0 %v6310
        %6465 = vmatprep.subr.bf16.mxu0 %v6315
        %6466 = vmatpush1.bf16.msra.mxu0 %v6314
        %6467 = vmatprep.subr.bf16.mxu0 %v6319
        %6468 = vmatpush1.bf16.msra.mxu0 %v6318
        %6469 = vmatprep.subr.bf16.mxu0 %v6323
        %6470 = vmatpush1.bf16.msra.mxu0 %v6322
        %6471 = vmatprep.subr.bf16.mxu0 %v6327
        %6472 = vmatpush1.bf16.msra.mxu0 %v6326
        %6473 = vmatprep.subr.bf16.mxu0 %v6331
        %6474 = vmatpush1.bf16.msra.mxu0 %v6330
        %6475 = vmatprep.subr.bf16.mxu0 %v6335
        %6476 = vmatpush1.bf16.msra.mxu0 %v6334
        %6477 = vmatprep.subr.bf16.mxu0 %v6339
        %6478 = vmatpush1.bf16.msra.mxu0 %v6338
        %6479 = vmatprep.subr.bf16.mxu0 %v6343
        %6480 = vmatpush1.bf16.msra.mxu0 %v6342
        %6481 = vmatprep.mubr.bf16.mxu0 %v5538
        %6482 = vmatmul.mubr.bf16.gmra.mrb[0].mxu0 %v5537
        %v6483 = vpop.f32.mrb[0].mxu0
        %v6484 = vadd.f32 %v6082, %v6483
        %v6485 = vpop.f32.mrb[0].mxu0
        %v6486 = vadd.f32 %v6084, %v6485
        %v6487 = vpop.f32.mrb[0].mxu0
        %v6488 = vpop.f32.mrb[0].mxu0
        %6489 = vdwg.mxu0
        %v6490 = vpack.c.bf16 %v5535, %v5535
        %v6491 = vpack.c.bf16 %v5536, %v5536
        %s6492 = scalar_lea.vmem [#allocation22], 1024
        %v6493 = vld [vmem:[%s6492] sm:$0xff]
        %v6494 = vld [vmem:[%s6492 + $0x8] sm:$0xff]
        %v6495 = vld [vmem:[%s6492 + $0x10] sm:$0xff]
        %v6496 = vld [vmem:[%s6492 + $0x18] sm:$0xff]
        %v6497 = vld [vmem:[%s6492 + $0x20] sm:$0xff]
        %v6498 = vld [vmem:[%s6492 + $0x28] sm:$0xff]
        %v6499 = vld [vmem:[%s6492 + $0x30] sm:$0xff]
        %v6500 = vld [vmem:[%s6492 + $0x38] sm:$0xff]
        %v6501 = vld [vmem:[%s6492 + $0x40] sm:$0xff]
        %v6502 = vld [vmem:[%s6492 + $0x48] sm:$0xff]
        %v6503 = vld [vmem:[%s6492 + $0x50] sm:$0xff]
        %v6504 = vld [vmem:[%s6492 + $0x58] sm:$0xff]
        %v6505 = vld [vmem:[%s6492 + $0x60] sm:$0xff]
        %v6506 = vld [vmem:[%s6492 + $0x68] sm:$0xff]
        %v6507 = vld [vmem:[%s6492 + $0x70] sm:$0xff]
        %v6508 = vld [vmem:[%s6492 + $0x78] sm:$0xff]
        %v6509 = vld [vmem:[%s6492 + $0x80] sm:$0xff]
        %v6510 = vld [vmem:[%s6492 + $0x88] sm:$0xff]
        %v6511 = vld [vmem:[%s6492 + $0x90] sm:$0xff]
        %v6512 = vld [vmem:[%s6492 + $0x98] sm:$0xff]
        %v6513 = vld [vmem:[%s6492 + $0xa0] sm:$0xff]
        %v6514 = vld [vmem:[%s6492 + $0xa8] sm:$0xff]
        %v6515 = vld [vmem:[%s6492 + $0xb0] sm:$0xff]
        %v6516 = vld [vmem:[%s6492 + $0xb8] sm:$0xff]
        %v6517 = vld [vmem:[%s6492 + $0xc0] sm:$0xff]
        %v6518 = vld [vmem:[%s6492 + $0xc8] sm:$0xff]
        %v6519 = vld [vmem:[%s6492 + $0xd0] sm:$0xff]
        %v6520 = vld [vmem:[%s6492 + $0xd8] sm:$0xff]
        %v6521 = vld [vmem:[%s6492 + $0xe0] sm:$0xff]
        %v6522 = vld [vmem:[%s6492 + $0xe8] sm:$0xff]
        %v6523 = vld [vmem:[%s6492 + $0xf0] sm:$0xff]
        %v6524 = vld [vmem:[%s6492 + $0xf8] sm:$0xff]
        %v6525 = vld [vmem:[%s6492 + $0x100] sm:$0xff]
        %v6526 = vld [vmem:[%s6492 + $0x108] sm:$0xff]
        %v6527 = vld [vmem:[%s6492 + $0x110] sm:$0xff]
        %v6528 = vld [vmem:[%s6492 + $0x118] sm:$0xff]
        %v6529 = vld [vmem:[%s6492 + $0x120] sm:$0xff]
        %v6530 = vld [vmem:[%s6492 + $0x128] sm:$0xff]
        %v6531 = vld [vmem:[%s6492 + $0x130] sm:$0xff]
        %v6532 = vld [vmem:[%s6492 + $0x138] sm:$0xff]
        %v6533 = vld [vmem:[%s6492 + $0x140] sm:$0xff]
        %v6534 = vld [vmem:[%s6492 + $0x148] sm:$0xff]
        %v6535 = vld [vmem:[%s6492 + $0x150] sm:$0xff]
        %v6536 = vld [vmem:[%s6492 + $0x158] sm:$0xff]
        %v6537 = vld [vmem:[%s6492 + $0x160] sm:$0xff]
        %v6538 = vld [vmem:[%s6492 + $0x168] sm:$0xff]
        %v6539 = vld [vmem:[%s6492 + $0x170] sm:$0xff]
        %v6540 = vld [vmem:[%s6492 + $0x178] sm:$0xff]
        %v6541 = vld [vmem:[%s6492 + $0x180] sm:$0xff]
        %v6542 = vld [vmem:[%s6492 + $0x188] sm:$0xff]
        %v6543 = vld [vmem:[%s6492 + $0x190] sm:$0xff]
        %v6544 = vld [vmem:[%s6492 + $0x198] sm:$0xff]
        %v6545 = vld [vmem:[%s6492 + $0x1a0] sm:$0xff]
        %v6546 = vld [vmem:[%s6492 + $0x1a8] sm:$0xff]
        %v6547 = vld [vmem:[%s6492 + $0x1b0] sm:$0xff]
        %v6548 = vld [vmem:[%s6492 + $0x1b8] sm:$0xff]
        %v6549 = vld [vmem:[%s6492 + $0x1c0] sm:$0xff]
        %v6550 = vld [vmem:[%s6492 + $0x1c8] sm:$0xff]
        %v6551 = vld [vmem:[%s6492 + $0x1d0] sm:$0xff]
        %v6552 = vld [vmem:[%s6492 + $0x1d8] sm:$0xff]
        %v6553 = vld [vmem:[%s6492 + $0x1e0] sm:$0xff]
        %v6554 = vld [vmem:[%s6492 + $0x1e8] sm:$0xff]
        %v6555 = vld [vmem:[%s6492 + $0x1f0] sm:$0xff]
        %v6556 = vld [vmem:[%s6492 + $0x1f8] sm:$0xff]
        %v6559 = vrot.slane %v6490, 1
        %v6560 = vrot.slane %v6491, 1
        %v6627 = vunpack.c.l.b16 %v6493
        %v6628 = vunpack.c.h.b16 %v6493
        %v6629 = vunpack.c.l.b16 %v6494
        %v6630 = vunpack.c.h.b16 %v6494
        %v6631 = vunpack.c.l.b16 %v6495
        %v6632 = vunpack.c.h.b16 %v6495
        %v6633 = vunpack.c.l.b16 %v6496
        %v6634 = vunpack.c.h.b16 %v6496
        %v6635 = vunpack.c.l.b16 %v6497
        %v6636 = vunpack.c.h.b16 %v6497
        %v6637 = vunpack.c.l.b16 %v6498
        %v6638 = vunpack.c.h.b16 %v6498
        %v6639 = vunpack.c.l.b16 %v6499
        %v6640 = vunpack.c.h.b16 %v6499
        %v6641 = vunpack.c.l.b16 %v6500
        %v6642 = vunpack.c.h.b16 %v6500
        %v6643 = vunpack.c.l.b16 %v6501
        %v6644 = vunpack.c.h.b16 %v6501
        %v6645 = vunpack.c.l.b16 %v6502
        %v6646 = vunpack.c.h.b16 %v6502
        %v6647 = vunpack.c.l.b16 %v6503
        %v6648 = vunpack.c.h.b16 %v6503
        %v6649 = vunpack.c.l.b16 %v6504
        %v6650 = vunpack.c.h.b16 %v6504
        %v6651 = vunpack.c.l.b16 %v6505
        %v6652 = vunpack.c.h.b16 %v6505
        %v6653 = vunpack.c.l.b16 %v6506
        %v6654 = vunpack.c.h.b16 %v6506
        %v6655 = vunpack.c.l.b16 %v6507
        %v6656 = vunpack.c.h.b16 %v6507
        %v6657 = vunpack.c.l.b16 %v6508
        %v6658 = vunpack.c.h.b16 %v6508
        %v6659 = vunpack.c.l.b16 %v6509
        %v6660 = vunpack.c.h.b16 %v6509
        %v6661 = vunpack.c.l.b16 %v6510
        %v6662 = vunpack.c.h.b16 %v6510
        %v6663 = vunpack.c.l.b16 %v6511
        %v6664 = vunpack.c.h.b16 %v6511
        %v6665 = vunpack.c.l.b16 %v6512
        %v6666 = vunpack.c.h.b16 %v6512
        %v6667 = vunpack.c.l.b16 %v6513
        %v6668 = vunpack.c.h.b16 %v6513
        %v6669 = vunpack.c.l.b16 %v6514
        %v6670 = vunpack.c.h.b16 %v6514
        %v6671 = vunpack.c.l.b16 %v6515
        %v6672 = vunpack.c.h.b16 %v6515
        %v6673 = vunpack.c.l.b16 %v6516
        %v6674 = vunpack.c.h.b16 %v6516
        %v6675 = vunpack.c.l.b16 %v6517
        %v6676 = vunpack.c.h.b16 %v6517
        %v6677 = vunpack.c.l.b16 %v6518
        %v6678 = vunpack.c.h.b16 %v6518
        %v6679 = vunpack.c.l.b16 %v6519
        %v6680 = vunpack.c.h.b16 %v6519
        %v6681 = vunpack.c.l.b16 %v6520
        %v6682 = vunpack.c.h.b16 %v6520
        %v6683 = vunpack.c.l.b16 %v6521
        %v6684 = vunpack.c.h.b16 %v6521
        %v6685 = vunpack.c.l.b16 %v6522
        %v6686 = vunpack.c.h.b16 %v6522
        %v6687 = vunpack.c.l.b16 %v6523
        %v6688 = vunpack.c.h.b16 %v6523
        %v6689 = vunpack.c.l.b16 %v6524
        %v6690 = vunpack.c.h.b16 %v6524
        %v6691 = vunpack.c.l.b16 %v6525
        %v6692 = vunpack.c.h.b16 %v6525
        %v6693 = vunpack.c.l.b16 %v6526
        %v6694 = vunpack.c.h.b16 %v6526
        %v6695 = vunpack.c.l.b16 %v6527
        %v6696 = vunpack.c.h.b16 %v6527
        %v6697 = vunpack.c.l.b16 %v6528
        %v6698 = vunpack.c.h.b16 %v6528
        %v6699 = vunpack.c.l.b16 %v6529
        %v6700 = vunpack.c.h.b16 %v6529
        %v6701 = vunpack.c.l.b16 %v6530
        %v6702 = vunpack.c.h.b16 %v6530
        %v6703 = vunpack.c.l.b16 %v6531
        %v6704 = vunpack.c.h.b16 %v6531
        %v6705 = vunpack.c.l.b16 %v6532
        %v6706 = vunpack.c.h.b16 %v6532
        %v6707 = vunpack.c.l.b16 %v6533
        %v6708 = vunpack.c.h.b16 %v6533
        %v6709 = vunpack.c.l.b16 %v6534
        %v6710 = vunpack.c.h.b16 %v6534
        %v6711 = vunpack.c.l.b16 %v6535
        %v6712 = vunpack.c.h.b16 %v6535
        %v6713 = vunpack.c.l.b16 %v6536
        %v6714 = vunpack.c.h.b16 %v6536
        %v6715 = vunpack.c.l.b16 %v6537
        %v6716 = vunpack.c.h.b16 %v6537
        %v6717 = vunpack.c.l.b16 %v6538
        %v6718 = vunpack.c.h.b16 %v6538
        %v6719 = vunpack.c.l.b16 %v6539
        %v6720 = vunpack.c.h.b16 %v6539
        %v6721 = vunpack.c.l.b16 %v6540
        %v6722 = vunpack.c.h.b16 %v6540
        %v6723 = vunpack.c.l.b16 %v6541
        %v6724 = vunpack.c.h.b16 %v6541
        %v6725 = vunpack.c.l.b16 %v6542
        %v6726 = vunpack.c.h.b16 %v6542
        %v6727 = vunpack.c.l.b16 %v6543
        %v6728 = vunpack.c.h.b16 %v6543
        %v6729 = vunpack.c.l.b16 %v6544
        %v6730 = vunpack.c.h.b16 %v6544
        %v6731 = vunpack.c.l.b16 %v6545
        %v6732 = vunpack.c.h.b16 %v6545
        %v6733 = vunpack.c.l.b16 %v6546
        %v6734 = vunpack.c.h.b16 %v6546
        %v6735 = vunpack.c.l.b16 %v6547
        %v6736 = vunpack.c.h.b16 %v6547
        %v6737 = vunpack.c.l.b16 %v6548
        %v6738 = vunpack.c.h.b16 %v6548
        %v6739 = vunpack.c.l.b16 %v6549
        %v6740 = vunpack.c.h.b16 %v6549
        %v6741 = vunpack.c.l.b16 %v6550
        %v6742 = vunpack.c.h.b16 %v6550
        %v6743 = vunpack.c.l.b16 %v6551
        %v6744 = vunpack.c.h.b16 %v6551
        %v6745 = vunpack.c.l.b16 %v6552
        %v6746 = vunpack.c.h.b16 %v6552
        %v6747 = vunpack.c.l.b16 %v6553
        %v6748 = vunpack.c.h.b16 %v6553
        %v6749 = vunpack.c.l.b16 %v6554
        %v6750 = vunpack.c.h.b16 %v6554
        %v6751 = vunpack.c.l.b16 %v6555
        %v6752 = vunpack.c.h.b16 %v6555
        %v6753 = vunpack.c.l.b16 %v6556
        %v6754 = vunpack.c.h.b16 %v6556
        %v6755 = vpack.c.b16 %v6631, %v6627
        %v6756 = vpack.c.b16 %v6632, %v6628
        %v6757 = vpack.c.b16 %v6633, %v6629
        %v6758 = vpack.c.b16 %v6634, %v6630
        %v6759 = vpack.c.b16 %v6639, %v6635
        %v6760 = vpack.c.b16 %v6640, %v6636
        %v6761 = vpack.c.b16 %v6641, %v6637
        %v6762 = vpack.c.b16 %v6642, %v6638
        %v6763 = vpack.c.b16 %v6647, %v6643
        %v6764 = vpack.c.b16 %v6648, %v6644
        %v6765 = vpack.c.b16 %v6649, %v6645
        %v6766 = vpack.c.b16 %v6650, %v6646
        %v6767 = vpack.c.b16 %v6655, %v6651
        %v6768 = vpack.c.b16 %v6656, %v6652
        %v6769 = vpack.c.b16 %v6657, %v6653
        %v6770 = vpack.c.b16 %v6658, %v6654
        %v6771 = vpack.c.b16 %v6663, %v6659
        %v6772 = vpack.c.b16 %v6664, %v6660
        %v6773 = vpack.c.b16 %v6665, %v6661
        %v6774 = vpack.c.b16 %v6666, %v6662
        %v6775 = vpack.c.b16 %v6671, %v6667
        %v6776 = vpack.c.b16 %v6672, %v6668
        %v6777 = vpack.c.b16 %v6673, %v6669
        %v6778 = vpack.c.b16 %v6674, %v6670
        %v6779 = vpack.c.b16 %v6679, %v6675
        %v6780 = vpack.c.b16 %v6680, %v6676
        %v6781 = vpack.c.b16 %v6681, %v6677
        %v6782 = vpack.c.b16 %v6682, %v6678
        %v6783 = vpack.c.b16 %v6687, %v6683
        %v6784 = vpack.c.b16 %v6688, %v6684
        %v6785 = vpack.c.b16 %v6689, %v6685
        %v6786 = vpack.c.b16 %v6690, %v6686
        %v6787 = vpack.c.b16 %v6695, %v6691
        %v6788 = vpack.c.b16 %v6696, %v6692
        %v6789 = vpack.c.b16 %v6697, %v6693
        %v6790 = vpack.c.b16 %v6698, %v6694
        %v6791 = vpack.c.b16 %v6703, %v6699
        %v6792 = vpack.c.b16 %v6704, %v6700
        %v6793 = vpack.c.b16 %v6705, %v6701
        %v6794 = vpack.c.b16 %v6706, %v6702
        %v6795 = vpack.c.b16 %v6711, %v6707
        %v6796 = vpack.c.b16 %v6712, %v6708
        %v6797 = vpack.c.b16 %v6713, %v6709
        %v6798 = vpack.c.b16 %v6714, %v6710
        %v6799 = vpack.c.b16 %v6719, %v6715
        %v6800 = vpack.c.b16 %v6720, %v6716
        %v6801 = vpack.c.b16 %v6721, %v6717
        %v6802 = vpack.c.b16 %v6722, %v6718
        %v6803 = vpack.c.b16 %v6727, %v6723
        %v6804 = vpack.c.b16 %v6728, %v6724
        %v6805 = vpack.c.b16 %v6729, %v6725
        %v6806 = vpack.c.b16 %v6730, %v6726
        %v6807 = vpack.c.b16 %v6735, %v6731
        %v6808 = vpack.c.b16 %v6736, %v6732
        %v6809 = vpack.c.b16 %v6737, %v6733
        %v6810 = vpack.c.b16 %v6738, %v6734
        %v6811 = vpack.c.b16 %v6743, %v6739
        %v6812 = vpack.c.b16 %v6744, %v6740
        %v6813 = vpack.c.b16 %v6745, %v6741
        %v6814 = vpack.c.b16 %v6746, %v6742
        %v6815 = vpack.c.b16 %v6751, %v6747
        %v6816 = vpack.c.b16 %v6752, %v6748
        %v6817 = vpack.c.b16 %v6753, %v6749
        %v6818 = vpack.c.b16 %v6754, %v6750
        %6883 = vmatprep.subr.bf16.mxu0 %v6756
        %6884 = vmatpush1.bf16.msra.mxu0 %v6755
        %6885 = vmatprep.subr.bf16.mxu0 %v6760
        %6886 = vmatpush1.bf16.msra.mxu0 %v6759
        %6887 = vmatprep.subr.bf16.mxu0 %v6764
        %6888 = vmatpush1.bf16.msra.mxu0 %v6763
        %6889 = vmatprep.subr.bf16.mxu0 %v6768
        %6890 = vmatpush1.bf16.msra.mxu0 %v6767
        %6891 = vmatprep.subr.bf16.mxu0 %v6772
        %6892 = vmatpush1.bf16.msra.mxu0 %v6771
        %6893 = vmatprep.subr.bf16.mxu0 %v6776
        %6894 = vmatpush1.bf16.msra.mxu0 %v6775
        %6895 = vmatprep.subr.bf16.mxu0 %v6780
        %6896 = vmatpush1.bf16.msra.mxu0 %v6779
        %6897 = vmatprep.subr.bf16.mxu0 %v6784
        %6898 = vmatpush1.bf16.msra.mxu0 %v6783
        %6899 = vmatprep.subr.bf16.mxu0 %v6788
        %6900 = vmatpush1.bf16.msra.mxu0 %v6787
        %6901 = vmatprep.subr.bf16.mxu0 %v6792
        %6902 = vmatpush1.bf16.msra.mxu0 %v6791
        %6903 = vmatprep.subr.bf16.mxu0 %v6796
        %6904 = vmatpush1.bf16.msra.mxu0 %v6795
        %6905 = vmatprep.subr.bf16.mxu0 %v6800
        %6906 = vmatpush1.bf16.msra.mxu0 %v6799
        %6907 = vmatprep.subr.bf16.mxu0 %v6804
        %6908 = vmatpush1.bf16.msra.mxu0 %v6803
        %6909 = vmatprep.subr.bf16.mxu0 %v6808
        %6910 = vmatpush1.bf16.msra.mxu0 %v6807
        %6911 = vmatprep.subr.bf16.mxu0 %v6812
        %6912 = vmatpush1.bf16.msra.mxu0 %v6811
        %6913 = vmatprep.subr.bf16.mxu0 %v6816
        %6914 = vmatpush1.bf16.msra.mxu0 %v6815
        %6915 = vmatprep.mubr.bf16.mxu0 %v6560
        %6916 = vmatmul.mubr.bf16.gmra.mrb[0].mxu0 %v6559
        %v6917 = vpop.f32.mrb[0].mxu0
        %v6918 = vadd.f32 0.0, %v6917
        %v6919 = vpop.f32.mrb[0].mxu0
        %v6920 = vadd.f32 0.0, %v6919
        %v6921 = vpop.f32.mrb[0].mxu0
        %v6922 = vpop.f32.mrb[0].mxu0
        %6923 = vdwg.mxu0
        %6924 = vmatprep.subr.bf16.mxu0 %v6758
        %6925 = vmatpush1.bf16.msra.mxu0 %v6757
        %6926 = vmatprep.subr.bf16.mxu0 %v6762
        %6927 = vmatpush1.bf16.msra.mxu0 %v6761
        %6928 = vmatprep.subr.bf16.mxu0 %v6766
        %6929 = vmatpush1.bf16.msra.mxu0 %v6765
        %6930 = vmatprep.subr.bf16.mxu0 %v6770
        %6931 = vmatpush1.bf16.msra.mxu0 %v6769
        %6932 = vmatprep.subr.bf16.mxu0 %v6774
        %6933 = vmatpush1.bf16.msra.mxu0 %v6773
        %6934 = vmatprep.subr.bf16.mxu0 %v6778
        %6935 = vmatpush1.bf16.msra.mxu0 %v6777
        %6936 = vmatprep.subr.bf16.mxu0 %v6782
        %6937 = vmatpush1.bf16.msra.mxu0 %v6781
        %6938 = vmatprep.subr.bf16.mxu0 %v6786
        %6939 = vmatpush1.bf16.msra.mxu0 %v6785
        %6940 = vmatprep.subr.bf16.mxu0 %v6790
        %6941 = vmatpush1.bf16.msra.mxu0 %v6789
        %6942 = vmatprep.subr.bf16.mxu0 %v6794
        %6943 = vmatpush1.bf16.msra.mxu0 %v6793
        %6944 = vmatprep.subr.bf16.mxu0 %v6798
        %6945 = vmatpush1.bf16.msra.mxu0 %v6797
        %6946 = vmatprep.subr.bf16.mxu0 %v6802
        %6947 = vmatpush1.bf16.msra.mxu0 %v6801
        %6948 = vmatprep.subr.bf16.mxu0 %v6806
        %6949 = vmatpush1.bf16.msra.mxu0 %v6805
        %6950 = vmatprep.subr.bf16.mxu0 %v6810
        %6951 = vmatpush1.bf16.msra.mxu0 %v6809
        %6952 = vmatprep.subr.bf16.mxu0 %v6814
        %6953 = vmatpush1.bf16.msra.mxu0 %v6813
        %6954 = vmatprep.subr.bf16.mxu0 %v6818
        %6955 = vmatpush1.bf16.msra.mxu0 %v6817
        %6956 = vmatprep.mubr.bf16.mxu0 %v6560
        %6957 = vmatmul.mubr.bf16.gmra.mrb[0].mxu0 %v6559
        %v6958 = vpop.f32.mrb[0].mxu0
        %v6959 = vadd.f32 0.0, %v6958
        %v6960 = vpop.f32.mrb[0].mxu0
        %v6961 = vadd.f32 0.0, %v6960
        %v6962 = vpop.f32.mrb[0].mxu0
        %v6963 = vpop.f32.mrb[0].mxu0
        %6964 = vdwg.mxu0
        %v6965 = vadd.f32 %v6443, %v6918
        %v6966 = vadd.f32 %v6445, %v6920
        %v6967 = vadd.f32 %v6484, %v6959
        %v6968 = vadd.f32 %v6486, %v6961
        %v6969 = vld [vmem:[#allocation40] sm:$0xf]
        %v6971 = vlaneseq
        %v6972 = vshrl.u32 %v6971, 7
        %v6973 = vsub.s32 0, %v6972
        %v6974 = vrot.slane %v6969, %v6973
        %v6975 = vlaneseq
        %v6976 = vshrl.u32 %v6975, 7
        %v6977 = vsub.s32 1, %v6976
        %v6978 = vrot.slane %v6969, %v6977
        %v6979 = vlaneseq
        %v6980 = vshrl.u32 %v6979, 7
        %v6981 = vsub.s32 2, %v6980
        %v6982 = vrot.slane %v6969, %v6981
        %v6983 = vlaneseq
        %v6984 = vshrl.u32 %v6983, 7
        %v6985 = vsub.s32 3, %v6984
        %v6986 = vrot.slane %v6969, %v6985
        %v6992 = vsel %vm5368, %v6965, 0
        %v6995 = vsel %vm5368, %v6966, 0
        %v6998 = vsel %vm5368, %v6967, 0
        %v7001 = vsel %vm5368, %v6968, 0
        %7003 = vmatprep.subr.mxu0 %v6995
        %7004 = vmatpush1.msra.mxu0 %v6992
        %7005 = vmatprep.subr.mxu0 0.0
        %7006 = vmatpush1.msra.mxu0 0.0
        %7007 = vmatprep.subr.mxu0 0.0
        %7008 = vmatpush1.msra.mxu0 0.0
        %7009 = vmatprep.subr.mxu0 0.0
        %7010 = vmatpush1.msra.mxu0 0.0
        %7011 = vmatprep.subr.mxu0 0.0
        %7012 = vmatpush1.msra.mxu0 0.0
        %7013 = vmatprep.subr.mxu0 0.0
        %7014 = vmatpush1.msra.mxu0 0.0
        %7015 = vmatprep.subr.mxu0 0.0
        %7016 = vmatpush1.msra.mxu0 0.0
        %7017 = vmatprep.subr.mxu0 0.0
        %7018 = vmatpush1.msra.mxu0 0.0
        %7019 = vmatprep.subr.mxu0 0.0
        %7020 = vmatpush1.msra.mxu0 0.0
        %7021 = vmatprep.subr.mxu0 0.0
        %7022 = vmatpush1.msra.mxu0 0.0
        %7023 = vmatprep.subr.mxu0 0.0
        %7024 = vmatpush1.msra.mxu0 0.0
        %7025 = vmatprep.subr.mxu0 0.0
        %7026 = vmatpush1.msra.mxu0 0.0
        %7027 = vmatprep.subr.mxu0 0.0
        %7028 = vmatpush1.msra.mxu0 0.0
        %7029 = vmatprep.subr.mxu0 0.0
        %7030 = vmatpush1.msra.mxu0 0.0
        %7031 = vmatprep.subr.mxu0 0.0
        %7032 = vmatpush1.msra.mxu0 0.0
        %7033 = vmatprep.subr.mxu0 0.0
        %7034 = vmatpush1.msra.mxu0 0.0
        %7035 = vmatprep.subr.mxu0 0.0
        %7036 = vmatpush1.msra.mxu0 0.0
        %7037 = vmatprep.subr.mxu0 0.0
        %7038 = vmatpush1.msra.mxu0 0.0
        %7039 = vmatprep.subr.mxu0 0.0
        %7040 = vmatpush1.msra.mxu0 0.0
        %7041 = vmatprep.subr.mxu0 0.0
        %7042 = vmatpush1.msra.mxu0 0.0
        %7043 = vmatprep.subr.mxu0 0.0
        %7044 = vmatpush1.msra.mxu0 0.0
        %7045 = vmatprep.subr.mxu0 0.0
        %7046 = vmatpush1.msra.mxu0 0.0
        %7047 = vmatprep.subr.mxu0 0.0
        %7048 = vmatpush1.msra.mxu0 0.0
        %7049 = vmatprep.subr.mxu0 0.0
        %7050 = vmatpush1.msra.mxu0 0.0
        %7051 = vmatprep.subr.mxu0 0.0
        %7052 = vmatpush1.msra.mxu0 0.0
        %7053 = vmatprep.subr.mxu0 0.0
        %7054 = vmatpush1.msra.mxu0 0.0
        %7055 = vmatprep.subr.mxu0 0.0
        %7056 = vmatpush1.msra.mxu0 0.0
        %7057 = vmatprep.subr.mxu0 0.0
        %7058 = vmatpush1.msra.mxu0 0.0
        %7059 = vmatprep.subr.mxu0 0.0
        %7060 = vmatpush1.msra.mxu0 0.0
        %7061 = vmatprep.subr.mxu0 0.0
        %7062 = vmatpush1.msra.mxu0 0.0
        %7063 = vmatprep.subr.mxu0 0.0
        %7064 = vmatpush1.msra.mxu0 0.0
        %7065 = vmatprep.subr.mxu0 0.0
        %7066 = vmatpush1.msra.mxu0 0.0
        %7067 = vmatprep.mubr.f32.mxu0 0.0
        %7068 = vmatmul.mubr.f32.gmra.mrb[0].mxu0 %v5366
        %v7069 = vpop.f32.mrb[0].mxu0
        %v7070 = vadd.f32 %v6974, %v7069
        %v7071 = vpop.f32.mrb[0].mxu0
        %v7072 = vadd.f32 %v6978, %v7071
        %7073 = vdwg.mxu0
        %7074 = vmatprep.subr.mxu0 %v7001
        %7075 = vmatpush1.msra.mxu0 %v6998
        %7076 = vmatprep.subr.mxu0 0.0
        %7077 = vmatpush1.msra.mxu0 0.0
        %7078 = vmatprep.subr.mxu0 0.0
        %7079 = vmatpush1.msra.mxu0 0.0
        %7080 = vmatprep.subr.mxu0 0.0
        %7081 = vmatpush1.msra.mxu0 0.0
        %7082 = vmatprep.subr.mxu0 0.0
        %7083 = vmatpush1.msra.mxu0 0.0
        %7084 = vmatprep.subr.mxu0 0.0
        %7085 = vmatpush1.msra.mxu0 0.0
        %7086 = vmatprep.subr.mxu0 0.0
        %7087 = vmatpush1.msra.mxu0 0.0
        %7088 = vmatprep.subr.mxu0 0.0
        %7089 = vmatpush1.msra.mxu0 0.0
        %7090 = vmatprep.subr.mxu0 0.0
        %7091 = vmatpush1.msra.mxu0 0.0
        %7092 = vmatprep.subr.mxu0 0.0
        %7093 = vmatpush1.msra.mxu0 0.0
        %7094 = vmatprep.subr.mxu0 0.0
        %7095 = vmatpush1.msra.mxu0 0.0
        %7096 = vmatprep.subr.mxu0 0.0
        %7097 = vmatpush1.msra.mxu0 0.0
        %7098 = vmatprep.subr.mxu0 0.0
        %7099 = vmatpush1.msra.mxu0 0.0
        %7100 = vmatprep.subr.mxu0 0.0
        %7101 = vmatpush1.msra.mxu0 0.0
        %7102 = vmatprep.subr.mxu0 0.0
        %7103 = vmatpush1.msra.mxu0 0.0
        %7104 = vmatprep.subr.mxu0 0.0
        %7105 = vmatpush1.msra.mxu0 0.0
        %7106 = vmatprep.subr.mxu0 0.0
        %7107 = vmatpush1.msra.mxu0 0.0
        %7108 = vmatprep.subr.mxu0 0.0
        %7109 = vmatpush1.msra.mxu0 0.0
        %7110 = vmatprep.subr.mxu0 0.0
        %7111 = vmatpush1.msra.mxu0 0.0
        %7112 = vmatprep.subr.mxu0 0.0
        %7113 = vmatpush1.msra.mxu0 0.0
        %7114 = vmatprep.subr.mxu0 0.0
        %7115 = vmatpush1.msra.mxu0 0.0
        %7116 = vmatprep.subr.mxu0 0.0
        %7117 = vmatpush1.msra.mxu0 0.0
        %7118 = vmatprep.subr.mxu0 0.0
        %7119 = vmatpush1.msra.mxu0 0.0
        %7120 = vmatprep.subr.mxu0 0.0
        %7121 = vmatpush1.msra.mxu0 0.0
        %7122 = vmatprep.subr.mxu0 0.0
        %7123 = vmatpush1.msra.mxu0 0.0
        %7124 = vmatprep.subr.mxu0 0.0
        %7125 = vmatpush1.msra.mxu0 0.0
        %7126 = vmatprep.subr.mxu0 0.0
        %7127 = vmatpush1.msra.mxu0 0.0
        %7128 = vmatprep.subr.mxu0 0.0
        %7129 = vmatpush1.msra.mxu0 0.0
        %7130 = vmatprep.subr.mxu0 0.0
        %7131 = vmatpush1.msra.mxu0 0.0
        %7132 = vmatprep.subr.mxu0 0.0
        %7133 = vmatpush1.msra.mxu0 0.0
        %7134 = vmatprep.subr.mxu0 0.0
        %7135 = vmatpush1.msra.mxu0 0.0
        %7136 = vmatprep.subr.mxu0 0.0
        %7137 = vmatpush1.msra.mxu0 0.0
        %7138 = vmatprep.mubr.f32.mxu0 0.0
        %7139 = vmatmul.mubr.f32.gmra.mrb[0].mxu0 %v5366
        %v7140 = vpop.f32.mrb[0].mxu0
        %v7141 = vadd.f32 %v6982, %v7140
        %v7142 = vpop.f32.mrb[0].mxu0
        %v7143 = vadd.f32 %v6986, %v7142
        %7144 = vdwg.mxu0
        %v7145 = vmax.f32 %v7070, 0.0
        %v7146 = vmax.f32 %v7072, 0.0
        %v7147 = vmax.f32 %v7141, 0.0
        %v7148 = vmax.f32 %v7143, 0.0
        %v7153 = vcombine.low %v7145, %v7146
        %v7154 = vcombine.low %v7147, %v7148
        %v7155 = vrot.slane %v7153, 7
        %v7156 = vrot.slane %v7154, 7
        %7159 = vst [vmem:[#allocation6] sm:$0x66] %v7155
        %7160 = vst [vmem:[#allocation6 + $0x8] sm:$0x66] %v7156
        %v7161 = vld [vmem:[#allocation6] sm:$0x33]
        %v7162 = vld [vmem:[#allocation6 + $0x8] sm:$0x33]
        %v7163 = vld [vmem:[#allocation6] sm:$0x66]
        %v7164 = vld [vmem:[#allocation6 + $0x8] sm:$0x66]
        %v7165 = vld [vmem:[#allocation6] sm:$0xcc]
        %v7166 = vld [vmem:[#allocation6 + $0x8] sm:$0xcc]
        %v7169 = vcombine.high %v7161, %v7161
        %v7170 = vcombine.high %v7162, %v7162
        %v7173 = vpack.c.bf16 %v7161, %v7161
        %v7174 = vpack.c.bf16 %v7169, %v7169
        %v7175 = vpack.c.bf16 %v7162, %v7162
        %v7176 = vpack.c.bf16 %v7170, %v7170
        %v7177 = vld [vmem:[#allocation25] sm:$0xff]
        %v7178 = vld [vmem:[#allocation25 + $0x8] sm:$0xff]
        %v7179 = vld [vmem:[#allocation25 + $0x10] sm:$0xff]
        %v7180 = vld [vmem:[#allocation25 + $0x18] sm:$0xff]
        %v7181 = vld [vmem:[#allocation25 + $0x20] sm:$0xff]
        %v7182 = vld [vmem:[#allocation25 + $0x28] sm:$0xff]
        %v7183 = vld [vmem:[#allocation25 + $0x30] sm:$0xff]
        %v7184 = vld [vmem:[#allocation25 + $0x38] sm:$0xff]
        %v7185 = vld [vmem:[#allocation25 + $0x40] sm:$0xff]
        %v7186 = vld [vmem:[#allocation25 + $0x48] sm:$0xff]
        %v7187 = vld [vmem:[#allocation25 + $0x50] sm:$0xff]
        %v7188 = vld [vmem:[#allocation25 + $0x58] sm:$0xff]
        %v7189 = vld [vmem:[#allocation25 + $0x60] sm:$0xff]
        %v7190 = vld [vmem:[#allocation25 + $0x68] sm:$0xff]
        %v7191 = vld [vmem:[#allocation25 + $0x70] sm:$0xff]
        %v7192 = vld [vmem:[#allocation25 + $0x78] sm:$0xff]
        %v7193 = vld [vmem:[#allocation25 + $0x80] sm:$0xff]
        %v7194 = vld [vmem:[#allocation25 + $0x88] sm:$0xff]
        %v7195 = vld [vmem:[#allocation25 + $0x90] sm:$0xff]
        %v7196 = vld [vmem:[#allocation25 + $0x98] sm:$0xff]
        %v7197 = vld [vmem:[#allocation25 + $0xa0] sm:$0xff]
        %v7198 = vld [vmem:[#allocation25 + $0xa8] sm:$0xff]
        %v7199 = vld [vmem:[#allocation25 + $0xb0] sm:$0xff]
        %v7200 = vld [vmem:[#allocation25 + $0xb8] sm:$0xff]
        %v7201 = vld [vmem:[#allocation25 + $0xc0] sm:$0xff]
        %v7202 = vld [vmem:[#allocation25 + $0xc8] sm:$0xff]
        %v7203 = vld [vmem:[#allocation25 + $0xd0] sm:$0xff]
        %v7204 = vld [vmem:[#allocation25 + $0xd8] sm:$0xff]
        %v7205 = vld [vmem:[#allocation25 + $0xe0] sm:$0xff]
        %v7206 = vld [vmem:[#allocation25 + $0xe8] sm:$0xff]
        %v7207 = vld [vmem:[#allocation25 + $0xf0] sm:$0xff]
        %v7208 = vld [vmem:[#allocation25 + $0xf8] sm:$0xff]
        %v7209 = vld [vmem:[#allocation25 + $0x100] sm:$0xff]
        %v7210 = vld [vmem:[#allocation25 + $0x108] sm:$0xff]
        %v7211 = vld [vmem:[#allocation25 + $0x110] sm:$0xff]
        %v7212 = vld [vmem:[#allocation25 + $0x118] sm:$0xff]
        %v7213 = vld [vmem:[#allocation25 + $0x120] sm:$0xff]
        %v7214 = vld [vmem:[#allocation25 + $0x128] sm:$0xff]
        %v7215 = vld [vmem:[#allocation25 + $0x130] sm:$0xff]
        %v7216 = vld [vmem:[#allocation25 + $0x138] sm:$0xff]
        %v7217 = vld [vmem:[#allocation25 + $0x140] sm:$0xff]
        %v7218 = vld [vmem:[#allocation25 + $0x148] sm:$0xff]
        %v7219 = vld [vmem:[#allocation25 + $0x150] sm:$0xff]
        %v7220 = vld [vmem:[#allocation25 + $0x158] sm:$0xff]
        %v7221 = vld [vmem:[#allocation25 + $0x160] sm:$0xff]
        %v7222 = vld [vmem:[#allocation25 + $0x168] sm:$0xff]
        %v7223 = vld [vmem:[#allocation25 + $0x170] sm:$0xff]
        %v7224 = vld [vmem:[#allocation25 + $0x178] sm:$0xff]
        %v7225 = vld [vmem:[#allocation25 + $0x180] sm:$0xff]
        %v7226 = vld [vmem:[#allocation25 + $0x188] sm:$0xff]
        %v7227 = vld [vmem:[#allocation25 + $0x190] sm:$0xff]
        %v7228 = vld [vmem:[#allocation25 + $0x198] sm:$0xff]
        %v7229 = vld [vmem:[#allocation25 + $0x1a0] sm:$0xff]
        %v7230 = vld [vmem:[#allocation25 + $0x1a8] sm:$0xff]
        %v7231 = vld [vmem:[#allocation25 + $0x1b0] sm:$0xff]
        %v7232 = vld [vmem:[#allocation25 + $0x1b8] sm:$0xff]
        %v7233 = vld [vmem:[#allocation25 + $0x1c0] sm:$0xff]
        %v7234 = vld [vmem:[#allocation25 + $0x1c8] sm:$0xff]
        %v7235 = vld [vmem:[#allocation25 + $0x1d0] sm:$0xff]
        %v7236 = vld [vmem:[#allocation25 + $0x1d8] sm:$0xff]
        %v7237 = vld [vmem:[#allocation25 + $0x1e0] sm:$0xff]
        %v7238 = vld [vmem:[#allocation25 + $0x1e8] sm:$0xff]
        %v7239 = vld [vmem:[#allocation25 + $0x1f0] sm:$0xff]
        %v7240 = vld [vmem:[#allocation25 + $0x1f8] sm:$0xff]
        %v7241 = vld [vmem:[#allocation25 + $0x200] sm:$0xff]
        %v7242 = vld [vmem:[#allocation25 + $0x208] sm:$0xff]
        %v7243 = vld [vmem:[#allocation25 + $0x210] sm:$0xff]
        %v7244 = vld [vmem:[#allocation25 + $0x218] sm:$0xff]
        %v7245 = vld [vmem:[#allocation25 + $0x220] sm:$0xff]
        %v7246 = vld [vmem:[#allocation25 + $0x228] sm:$0xff]
        %v7247 = vld [vmem:[#allocation25 + $0x230] sm:$0xff]
        %v7248 = vld [vmem:[#allocation25 + $0x238] sm:$0xff]
        %v7249 = vld [vmem:[#allocation25 + $0x240] sm:$0xff]
        %v7250 = vld [vmem:[#allocation25 + $0x248] sm:$0xff]
        %v7251 = vld [vmem:[#allocation25 + $0x250] sm:$0xff]
        %v7252 = vld [vmem:[#allocation25 + $0x258] sm:$0xff]
        %v7253 = vld [vmem:[#allocation25 + $0x260] sm:$0xff]
        %v7254 = vld [vmem:[#allocation25 + $0x268] sm:$0xff]
        %v7255 = vld [vmem:[#allocation25 + $0x270] sm:$0xff]
        %v7256 = vld [vmem:[#allocation25 + $0x278] sm:$0xff]
        %v7257 = vld [vmem:[#allocation25 + $0x280] sm:$0xff]
        %v7258 = vld [vmem:[#allocation25 + $0x288] sm:$0xff]
        %v7259 = vld [vmem:[#allocation25 + $0x290] sm:$0xff]
        %v7260 = vld [vmem:[#allocation25 + $0x298] sm:$0xff]
        %v7261 = vld [vmem:[#allocation25 + $0x2a0] sm:$0xff]
        %v7262 = vld [vmem:[#allocation25 + $0x2a8] sm:$0xff]
        %v7263 = vld [vmem:[#allocation25 + $0x2b0] sm:$0xff]
        %v7264 = vld [vmem:[#allocation25 + $0x2b8] sm:$0xff]
        %v7265 = vld [vmem:[#allocation25 + $0x2c0] sm:$0xff]
        %v7266 = vld [vmem:[#allocation25 + $0x2c8] sm:$0xff]
        %v7267 = vld [vmem:[#allocation25 + $0x2d0] sm:$0xff]
        %v7268 = vld [vmem:[#allocation25 + $0x2d8] sm:$0xff]
        %v7269 = vld [vmem:[#allocation25 + $0x2e0] sm:$0xff]
        %v7270 = vld [vmem:[#allocation25 + $0x2e8] sm:$0xff]
        %v7271 = vld [vmem:[#allocation25 + $0x2f0] sm:$0xff]
        %v7272 = vld [vmem:[#allocation25 + $0x2f8] sm:$0xff]
        %v7273 = vld [vmem:[#allocation25 + $0x300] sm:$0xff]
        %v7274 = vld [vmem:[#allocation25 + $0x308] sm:$0xff]
        %v7275 = vld [vmem:[#allocation25 + $0x310] sm:$0xff]
        %v7276 = vld [vmem:[#allocation25 + $0x318] sm:$0xff]
        %v7277 = vld [vmem:[#allocation25 + $0x320] sm:$0xff]
        %v7278 = vld [vmem:[#allocation25 + $0x328] sm:$0xff]
        %v7279 = vld [vmem:[#allocation25 + $0x330] sm:$0xff]
        %v7280 = vld [vmem:[#allocation25 + $0x338] sm:$0xff]
        %v7281 = vld [vmem:[#allocation25 + $0x340] sm:$0xff]
        %v7282 = vld [vmem:[#allocation25 + $0x348] sm:$0xff]
        %v7283 = vld [vmem:[#allocation25 + $0x350] sm:$0xff]
        %v7284 = vld [vmem:[#allocation25 + $0x358] sm:$0xff]
        %v7285 = vld [vmem:[#allocation25 + $0x360] sm:$0xff]
        %v7286 = vld [vmem:[#allocation25 + $0x368] sm:$0xff]
        %v7287 = vld [vmem:[#allocation25 + $0x370] sm:$0xff]
        %v7288 = vld [vmem:[#allocation25 + $0x378] sm:$0xff]
        %v7289 = vld [vmem:[#allocation25 + $0x380] sm:$0xff]
        %v7290 = vld [vmem:[#allocation25 + $0x388] sm:$0xff]
        %v7291 = vld [vmem:[#allocation25 + $0x390] sm:$0xff]
        %v7292 = vld [vmem:[#allocation25 + $0x398] sm:$0xff]
        %v7293 = vld [vmem:[#allocation25 + $0x3a0] sm:$0xff]
        %v7294 = vld [vmem:[#allocation25 + $0x3a8] sm:$0xff]
        %v7295 = vld [vmem:[#allocation25 + $0x3b0] sm:$0xff]
        %v7296 = vld [vmem:[#allocation25 + $0x3b8] sm:$0xff]
        %v7297 = vld [vmem:[#allocation25 + $0x3c0] sm:$0xff]
        %v7298 = vld [vmem:[#allocation25 + $0x3c8] sm:$0xff]
        %v7299 = vld [vmem:[#allocation25 + $0x3d0] sm:$0xff]
        %v7300 = vld [vmem:[#allocation25 + $0x3d8] sm:$0xff]
        %v7301 = vld [vmem:[#allocation25 + $0x3e0] sm:$0xff]
        %v7302 = vld [vmem:[#allocation25 + $0x3e8] sm:$0xff]
        %v7303 = vld [vmem:[#allocation25 + $0x3f0] sm:$0xff]
        %v7304 = vld [vmem:[#allocation25 + $0x3f8] sm:$0xff]
        %v7307 = vcombine.high %v7163, %v7163
        %v7308 = vcombine.high %v7164, %v7164
        %v7311 = vpack.c.bf16 %v7163, %v7163
        %v7312 = vpack.c.bf16 %v7307, %v7307
        %v7313 = vpack.c.bf16 %v7164, %v7164
        %v7314 = vpack.c.bf16 %v7308, %v7308
        %s7315 = scalar_lea.vmem [#allocation25], 1024
        %v7316 = vld [vmem:[%s7315] sm:$0xff]
        %v7317 = vld [vmem:[%s7315 + $0x8] sm:$0xff]
        %v7318 = vld [vmem:[%s7315 + $0x10] sm:$0xff]
        %v7319 = vld [vmem:[%s7315 + $0x18] sm:$0xff]
        %v7320 = vld [vmem:[%s7315 + $0x20] sm:$0xff]
        %v7321 = vld [vmem:[%s7315 + $0x28] sm:$0xff]
        %v7322 = vld [vmem:[%s7315 + $0x30] sm:$0xff]
        %v7323 = vld [vmem:[%s7315 + $0x38] sm:$0xff]
        %v7324 = vld [vmem:[%s7315 + $0x40] sm:$0xff]
        %v7325 = vld [vmem:[%s7315 + $0x48] sm:$0xff]
        %v7326 = vld [vmem:[%s7315 + $0x50] sm:$0xff]
        %v7327 = vld [vmem:[%s7315 + $0x58] sm:$0xff]
        %v7328 = vld [vmem:[%s7315 + $0x60] sm:$0xff]
        %v7329 = vld [vmem:[%s7315 + $0x68] sm:$0xff]
        %v7330 = vld [vmem:[%s7315 + $0x70] sm:$0xff]
        %v7331 = vld [vmem:[%s7315 + $0x78] sm:$0xff]
        %v7332 = vld [vmem:[%s7315 + $0x80] sm:$0xff]
        %v7333 = vld [vmem:[%s7315 + $0x88] sm:$0xff]
        %v7334 = vld [vmem:[%s7315 + $0x90] sm:$0xff]
        %v7335 = vld [vmem:[%s7315 + $0x98] sm:$0xff]
        %v7336 = vld [vmem:[%s7315 + $0xa0] sm:$0xff]
        %v7337 = vld [vmem:[%s7315 + $0xa8] sm:$0xff]
        %v7338 = vld [vmem:[%s7315 + $0xb0] sm:$0xff]
        %v7339 = vld [vmem:[%s7315 + $0xb8] sm:$0xff]
        %v7340 = vld [vmem:[%s7315 + $0xc0] sm:$0xff]
        %v7341 = vld [vmem:[%s7315 + $0xc8] sm:$0xff]
        %v7342 = vld [vmem:[%s7315 + $0xd0] sm:$0xff]
        %v7343 = vld [vmem:[%s7315 + $0xd8] sm:$0xff]
        %v7344 = vld [vmem:[%s7315 + $0xe0] sm:$0xff]
        %v7345 = vld [vmem:[%s7315 + $0xe8] sm:$0xff]
        %v7346 = vld [vmem:[%s7315 + $0xf0] sm:$0xff]
        %v7347 = vld [vmem:[%s7315 + $0xf8] sm:$0xff]
        %v7348 = vld [vmem:[%s7315 + $0x100] sm:$0xff]
        %v7349 = vld [vmem:[%s7315 + $0x108] sm:$0xff]
        %v7350 = vld [vmem:[%s7315 + $0x110] sm:$0xff]
        %v7351 = vld [vmem:[%s7315 + $0x118] sm:$0xff]
        %v7352 = vld [vmem:[%s7315 + $0x120] sm:$0xff]
        %v7353 = vld [vmem:[%s7315 + $0x128] sm:$0xff]
        %v7354 = vld [vmem:[%s7315 + $0x130] sm:$0xff]
        %v7355 = vld [vmem:[%s7315 + $0x138] sm:$0xff]
        %v7356 = vld [vmem:[%s7315 + $0x140] sm:$0xff]
        %v7357 = vld [vmem:[%s7315 + $0x148] sm:$0xff]
        %v7358 = vld [vmem:[%s7315 + $0x150] sm:$0xff]
        %v7359 = vld [vmem:[%s7315 + $0x158] sm:$0xff]
        %v7360 = vld [vmem:[%s7315 + $0x160] sm:$0xff]
        %v7361 = vld [vmem:[%s7315 + $0x168] sm:$0xff]
        %v7362 = vld [vmem:[%s7315 + $0x170] sm:$0xff]
        %v7363 = vld [vmem:[%s7315 + $0x178] sm:$0xff]
        %v7364 = vld [vmem:[%s7315 + $0x180] sm:$0xff]
        %v7365 = vld [vmem:[%s7315 + $0x188] sm:$0xff]
        %v7366 = vld [vmem:[%s7315 + $0x190] sm:$0xff]
        %v7367 = vld [vmem:[%s7315 + $0x198] sm:$0xff]
        %v7368 = vld [vmem:[%s7315 + $0x1a0] sm:$0xff]
        %v7369 = vld [vmem:[%s7315 + $0x1a8] sm:$0xff]
        %v7370 = vld [vmem:[%s7315 + $0x1b0] sm:$0xff]
        %v7371 = vld [vmem:[%s7315 + $0x1b8] sm:$0xff]
        %v7372 = vld [vmem:[%s7315 + $0x1c0] sm:$0xff]
        %v7373 = vld [vmem:[%s7315 + $0x1c8] sm:$0xff]
        %v7374 = vld [vmem:[%s7315 + $0x1d0] sm:$0xff]
        %v7375 = vld [vmem:[%s7315 + $0x1d8] sm:$0xff]
        %v7376 = vld [vmem:[%s7315 + $0x1e0] sm:$0xff]
        %v7377 = vld [vmem:[%s7315 + $0x1e8] sm:$0xff]
        %v7378 = vld [vmem:[%s7315 + $0x1f0] sm:$0xff]
        %v7379 = vld [vmem:[%s7315 + $0x1f8] sm:$0xff]
        %v7380 = vld [vmem:[%s7315 + $0x200] sm:$0xff]
        %v7381 = vld [vmem:[%s7315 + $0x208] sm:$0xff]
        %v7382 = vld [vmem:[%s7315 + $0x210] sm:$0xff]
        %v7383 = vld [vmem:[%s7315 + $0x218] sm:$0xff]
        %v7384 = vld [vmem:[%s7315 + $0x220] sm:$0xff]
        %v7385 = vld [vmem:[%s7315 + $0x228] sm:$0xff]
        %v7386 = vld [vmem:[%s7315 + $0x230] sm:$0xff]
        %v7387 = vld [vmem:[%s7315 + $0x238] sm:$0xff]
        %v7388 = vld [vmem:[%s7315 + $0x240] sm:$0xff]
        %v7389 = vld [vmem:[%s7315 + $0x248] sm:$0xff]
        %v7390 = vld [vmem:[%s7315 + $0x250] sm:$0xff]
        %v7391 = vld [vmem:[%s7315 + $0x258] sm:$0xff]
        %v7392 = vld [vmem:[%s7315 + $0x260] sm:$0xff]
        %v7393 = vld [vmem:[%s7315 + $0x268] sm:$0xff]
        %v7394 = vld [vmem:[%s7315 + $0x270] sm:$0xff]
        %v7395 = vld [vmem:[%s7315 + $0x278] sm:$0xff]
        %v7396 = vld [vmem:[%s7315 + $0x280] sm:$0xff]
        %v7397 = vld [vmem:[%s7315 + $0x288] sm:$0xff]
        %v7398 = vld [vmem:[%s7315 + $0x290] sm:$0xff]
        %v7399 = vld [vmem:[%s7315 + $0x298] sm:$0xff]
        %v7400 = vld [vmem:[%s7315 + $0x2a0] sm:$0xff]
        %v7401 = vld [vmem:[%s7315 + $0x2a8] sm:$0xff]
        %v7402 = vld [vmem:[%s7315 + $0x2b0] sm:$0xff]
        %v7403 = vld [vmem:[%s7315 + $0x2b8] sm:$0xff]
        %v7404 = vld [vmem:[%s7315 + $0x2c0] sm:$0xff]
        %v7405 = vld [vmem:[%s7315 + $0x2c8] sm:$0xff]
        %v7406 = vld [vmem:[%s7315 + $0x2d0] sm:$0xff]
        %v7407 = vld [vmem:[%s7315 + $0x2d8] sm:$0xff]
        %v7408 = vld [vmem:[%s7315 + $0x2e0] sm:$0xff]
        %v7409 = vld [vmem:[%s7315 + $0x2e8] sm:$0xff]
        %v7410 = vld [vmem:[%s7315 + $0x2f0] sm:$0xff]
        %v7411 = vld [vmem:[%s7315 + $0x2f8] sm:$0xff]
        %v7412 = vld [vmem:[%s7315 + $0x300] sm:$0xff]
        %v7413 = vld [vmem:[%s7315 + $0x308] sm:$0xff]
        %v7414 = vld [vmem:[%s7315 + $0x310] sm:$0xff]
        %v7415 = vld [vmem:[%s7315 + $0x318] sm:$0xff]
        %v7416 = vld [vmem:[%s7315 + $0x320] sm:$0xff]
        %v7417 = vld [vmem:[%s7315 + $0x328] sm:$0xff]
        %v7418 = vld [vmem:[%s7315 + $0x330] sm:$0xff]
        %v7419 = vld [vmem:[%s7315 + $0x338] sm:$0xff]
        %v7420 = vld [vmem:[%s7315 + $0x340] sm:$0xff]
        %v7421 = vld [vmem:[%s7315 + $0x348] sm:$0xff]
        %v7422 = vld [vmem:[%s7315 + $0x350] sm:$0xff]
        %v7423 = vld [vmem:[%s7315 + $0x358] sm:$0xff]
        %v7424 = vld [vmem:[%s7315 + $0x360] sm:$0xff]
        %v7425 = vld [vmem:[%s7315 + $0x368] sm:$0xff]
        %v7426 = vld [vmem:[%s7315 + $0x370] sm:$0xff]
        %v7427 = vld [vmem:[%s7315 + $0x378] sm:$0xff]
        %v7428 = vld [vmem:[%s7315 + $0x380] sm:$0xff]
        %v7429 = vld [vmem:[%s7315 + $0x388] sm:$0xff]
        %v7430 = vld [vmem:[%s7315 + $0x390] sm:$0xff]
        %v7431 = vld [vmem:[%s7315 + $0x398] sm:$0xff]
        %v7432 = vld [vmem:[%s7315 + $0x3a0] sm:$0xff]
        %v7433 = vld [vmem:[%s7315 + $0x3a8] sm:$0xff]
        %v7434 = vld [vmem:[%s7315 + $0x3b0] sm:$0xff]
        %v7435 = vld [vmem:[%s7315 + $0x3b8] sm:$0xff]
        %v7436 = vld [vmem:[%s7315 + $0x3c0] sm:$0xff]
        %v7437 = vld [vmem:[%s7315 + $0x3c8] sm:$0xff]
        %v7438 = vld [vmem:[%s7315 + $0x3d0] sm:$0xff]
        %v7439 = vld [vmem:[%s7315 + $0x3d8] sm:$0xff]
        %v7440 = vld [vmem:[%s7315 + $0x3e0] sm:$0xff]
        %v7441 = vld [vmem:[%s7315 + $0x3e8] sm:$0xff]
        %v7442 = vld [vmem:[%s7315 + $0x3f0] sm:$0xff]
        %v7443 = vld [vmem:[%s7315 + $0x3f8] sm:$0xff]
        %v7445 = vshrl.u32 %v7311, 16
        %v7447 = vshll.u32 %v7311, 16
        %v7449 = vrot.slane %v7447, 1
        %v7450 = vor.u32 %v7445, %v7449
        %v7452 = vshrl.u32 %v7312, 16
        %v7454 = vshll.u32 %v7312, 16
        %v7456 = vrot.slane %v7454, 1
        %v7457 = vor.u32 %v7452, %v7456
        %v7459 = vshrl.u32 %v7313, 16
        %v7461 = vshll.u32 %v7313, 16
        %v7463 = vrot.slane %v7461, 1
        %v7464 = vor.u32 %v7459, %v7463
        %v7466 = vshrl.u32 %v7314, 16
        %v7468 = vshll.u32 %v7314, 16
        %v7470 = vrot.slane %v7468, 1
        %v7471 = vor.u32 %v7466, %v7470
        %v7604 = vunpack.c.l.b16 %v7316
        %v7605 = vunpack.c.h.b16 %v7316
        %v7606 = vunpack.c.l.b16 %v7317
        %v7607 = vunpack.c.h.b16 %v7317
        %v7608 = vunpack.c.l.b16 %v7318
        %v7609 = vunpack.c.h.b16 %v7318
        %v7610 = vunpack.c.l.b16 %v7319
        %v7611 = vunpack.c.h.b16 %v7319
        %v7612 = vunpack.c.l.b16 %v7320
        %v7613 = vunpack.c.h.b16 %v7320
        %v7614 = vunpack.c.l.b16 %v7321
        %v7615 = vunpack.c.h.b16 %v7321
        %v7616 = vunpack.c.l.b16 %v7322
        %v7617 = vunpack.c.h.b16 %v7322
        %v7618 = vunpack.c.l.b16 %v7323
        %v7619 = vunpack.c.h.b16 %v7323
        %v7620 = vunpack.c.l.b16 %v7324
        %v7621 = vunpack.c.h.b16 %v7324
        %v7622 = vunpack.c.l.b16 %v7325
        %v7623 = vunpack.c.h.b16 %v7325
        %v7624 = vunpack.c.l.b16 %v7326
        %v7625 = vunpack.c.h.b16 %v7326
        %v7626 = vunpack.c.l.b16 %v7327
        %v7627 = vunpack.c.h.b16 %v7327
        %v7628 = vunpack.c.l.b16 %v7328
        %v7629 = vunpack.c.h.b16 %v7328
        %v7630 = vunpack.c.l.b16 %v7329
        %v7631 = vunpack.c.h.b16 %v7329
        %v7632 = vunpack.c.l.b16 %v7330
        %v7633 = vunpack.c.h.b16 %v7330
        %v7634 = vunpack.c.l.b16 %v7331
        %v7635 = vunpack.c.h.b16 %v7331
        %v7636 = vunpack.c.l.b16 %v7332
        %v7637 = vunpack.c.h.b16 %v7332
        %v7638 = vunpack.c.l.b16 %v7333
        %v7639 = vunpack.c.h.b16 %v7333
        %v7640 = vunpack.c.l.b16 %v7334
        %v7641 = vunpack.c.h.b16 %v7334
        %v7642 = vunpack.c.l.b16 %v7335
        %v7643 = vunpack.c.h.b16 %v7335
        %v7644 = vunpack.c.l.b16 %v7336
        %v7645 = vunpack.c.h.b16 %v7336
        %v7646 = vunpack.c.l.b16 %v7337
        %v7647 = vunpack.c.h.b16 %v7337
        %v7648 = vunpack.c.l.b16 %v7338
        %v7649 = vunpack.c.h.b16 %v7338
        %v7650 = vunpack.c.l.b16 %v7339
        %v7651 = vunpack.c.h.b16 %v7339
        %v7652 = vunpack.c.l.b16 %v7340
        %v7653 = vunpack.c.h.b16 %v7340
        %v7654 = vunpack.c.l.b16 %v7341
        %v7655 = vunpack.c.h.b16 %v7341
        %v7656 = vunpack.c.l.b16 %v7342
        %v7657 = vunpack.c.h.b16 %v7342
        %v7658 = vunpack.c.l.b16 %v7343
        %v7659 = vunpack.c.h.b16 %v7343
        %v7660 = vunpack.c.l.b16 %v7344
        %v7661 = vunpack.c.h.b16 %v7344
        %v7662 = vunpack.c.l.b16 %v7345
        %v7663 = vunpack.c.h.b16 %v7345
        %v7664 = vunpack.c.l.b16 %v7346
        %v7665 = vunpack.c.h.b16 %v7346
        %v7666 = vunpack.c.l.b16 %v7347
        %v7667 = vunpack.c.h.b16 %v7347
        %v7668 = vunpack.c.l.b16 %v7348
        %v7669 = vunpack.c.h.b16 %v7348
        %v7670 = vunpack.c.l.b16 %v7349
        %v7671 = vunpack.c.h.b16 %v7349
        %v7672 = vunpack.c.l.b16 %v7350
        %v7673 = vunpack.c.h.b16 %v7350
        %v7674 = vunpack.c.l.b16 %v7351
        %v7675 = vunpack.c.h.b16 %v7351
        %v7676 = vunpack.c.l.b16 %v7352
        %v7677 = vunpack.c.h.b16 %v7352
        %v7678 = vunpack.c.l.b16 %v7353
        %v7679 = vunpack.c.h.b16 %v7353
        %v7680 = vunpack.c.l.b16 %v7354
        %v7681 = vunpack.c.h.b16 %v7354
        %v7682 = vunpack.c.l.b16 %v7355
        %v7683 = vunpack.c.h.b16 %v7355
        %v7684 = vunpack.c.l.b16 %v7356
        %v7685 = vunpack.c.h.b16 %v7356
        %v7686 = vunpack.c.l.b16 %v7357
        %v7687 = vunpack.c.h.b16 %v7357
        %v7688 = vunpack.c.l.b16 %v7358
        %v7689 = vunpack.c.h.b16 %v7358
        %v7690 = vunpack.c.l.b16 %v7359
        %v7691 = vunpack.c.h.b16 %v7359
        %v7692 = vunpack.c.l.b16 %v7360
        %v7693 = vunpack.c.h.b16 %v7360
        %v7694 = vunpack.c.l.b16 %v7361
        %v7695 = vunpack.c.h.b16 %v7361
        %v7696 = vunpack.c.l.b16 %v7362
        %v7697 = vunpack.c.h.b16 %v7362
        %v7698 = vunpack.c.l.b16 %v7363
        %v7699 = vunpack.c.h.b16 %v7363
        %v7700 = vunpack.c.l.b16 %v7364
        %v7701 = vunpack.c.h.b16 %v7364
        %v7702 = vunpack.c.l.b16 %v7365
        %v7703 = vunpack.c.h.b16 %v7365
        %v7704 = vunpack.c.l.b16 %v7366
        %v7705 = vunpack.c.h.b16 %v7366
        %v7706 = vunpack.c.l.b16 %v7367
        %v7707 = vunpack.c.h.b16 %v7367
        %v7708 = vunpack.c.l.b16 %v7368
        %v7709 = vunpack.c.h.b16 %v7368
        %v7710 = vunpack.c.l.b16 %v7369
        %v7711 = vunpack.c.h.b16 %v7369
        %v7712 = vunpack.c.l.b16 %v7370
        %v7713 = vunpack.c.h.b16 %v7370
        %v7714 = vunpack.c.l.b16 %v7371
        %v7715 = vunpack.c.h.b16 %v7371
        %v7716 = vunpack.c.l.b16 %v7372
        %v7717 = vunpack.c.h.b16 %v7372
        %v7718 = vunpack.c.l.b16 %v7373
        %v7719 = vunpack.c.h.b16 %v7373
        %v7720 = vunpack.c.l.b16 %v7374
        %v7721 = vunpack.c.h.b16 %v7374
        %v7722 = vunpack.c.l.b16 %v7375
        %v7723 = vunpack.c.h.b16 %v7375
        %v7724 = vunpack.c.l.b16 %v7376
        %v7725 = vunpack.c.h.b16 %v7376
        %v7726 = vunpack.c.l.b16 %v7377
        %v7727 = vunpack.c.h.b16 %v7377
        %v7728 = vunpack.c.l.b16 %v7378
        %v7729 = vunpack.c.h.b16 %v7378
        %v7730 = vunpack.c.l.b16 %v7379
        %v7731 = vunpack.c.h.b16 %v7379
        %v7732 = vunpack.c.l.b16 %v7380
        %v7733 = vunpack.c.h.b16 %v7380
        %v7734 = vunpack.c.l.b16 %v7381
        %v7735 = vunpack.c.h.b16 %v7381
        %v7736 = vunpack.c.l.b16 %v7382
        %v7737 = vunpack.c.h.b16 %v7382
        %v7738 = vunpack.c.l.b16 %v7383
        %v7739 = vunpack.c.h.b16 %v7383
        %v7740 = vunpack.c.l.b16 %v7384
        %v7741 = vunpack.c.h.b16 %v7384
        %v7742 = vunpack.c.l.b16 %v7385
        %v7743 = vunpack.c.h.b16 %v7385
        %v7744 = vunpack.c.l.b16 %v7386
        %v7745 = vunpack.c.h.b16 %v7386
        %v7746 = vunpack.c.l.b16 %v7387
        %v7747 = vunpack.c.h.b16 %v7387
        %v7748 = vunpack.c.l.b16 %v7388
        %v7749 = vunpack.c.h.b16 %v7388
        %v7750 = vunpack.c.l.b16 %v7389
        %v7751 = vunpack.c.h.b16 %v7389
        %v7752 = vunpack.c.l.b16 %v7390
        %v7753 = vunpack.c.h.b16 %v7390
        %v7754 = vunpack.c.l.b16 %v7391
        %v7755 = vunpack.c.h.b16 %v7391
        %v7756 = vunpack.c.l.b16 %v7392
        %v7757 = vunpack.c.h.b16 %v7392
        %v7758 = vunpack.c.l.b16 %v7393
        %v7759 = vunpack.c.h.b16 %v7393
        %v7760 = vunpack.c.l.b16 %v7394
        %v7761 = vunpack.c.h.b16 %v7394
        %v7762 = vunpack.c.l.b16 %v7395
        %v7763 = vunpack.c.h.b16 %v7395
        %v7764 = vunpack.c.l.b16 %v7396
        %v7765 = vunpack.c.h.b16 %v7396
        %v7766 = vunpack.c.l.b16 %v7397
        %v7767 = vunpack.c.h.b16 %v7397
        %v7768 = vunpack.c.l.b16 %v7398
        %v7769 = vunpack.c.h.b16 %v7398
        %v7770 = vunpack.c.l.b16 %v7399
        %v7771 = vunpack.c.h.b16 %v7399
        %v7772 = vunpack.c.l.b16 %v7400
        %v7773 = vunpack.c.h.b16 %v7400
        %v7774 = vunpack.c.l.b16 %v7401
        %v7775 = vunpack.c.h.b16 %v7401
        %v7776 = vunpack.c.l.b16 %v7402
        %v7777 = vunpack.c.h.b16 %v7402
        %v7778 = vunpack.c.l.b16 %v7403
        %v7779 = vunpack.c.h.b16 %v7403
        %v7780 = vunpack.c.l.b16 %v7404
        %v7781 = vunpack.c.h.b16 %v7404
        %v7782 = vunpack.c.l.b16 %v7405
        %v7783 = vunpack.c.h.b16 %v7405
        %v7784 = vunpack.c.l.b16 %v7406
        %v7785 = vunpack.c.h.b16 %v7406
        %v7786 = vunpack.c.l.b16 %v7407
        %v7787 = vunpack.c.h.b16 %v7407
        %v7788 = vunpack.c.l.b16 %v7408
        %v7789 = vunpack.c.h.b16 %v7408
        %v7790 = vunpack.c.l.b16 %v7409
        %v7791 = vunpack.c.h.b16 %v7409
        %v7792 = vunpack.c.l.b16 %v7410
        %v7793 = vunpack.c.h.b16 %v7410
        %v7794 = vunpack.c.l.b16 %v7411
        %v7795 = vunpack.c.h.b16 %v7411
        %v7796 = vunpack.c.l.b16 %v7412
        %v7797 = vunpack.c.h.b16 %v7412
        %v7798 = vunpack.c.l.b16 %v7413
        %v7799 = vunpack.c.h.b16 %v7413
        %v7800 = vunpack.c.l.b16 %v7414
        %v7801 = vunpack.c.h.b16 %v7414
        %v7802 = vunpack.c.l.b16 %v7415
        %v7803 = vunpack.c.h.b16 %v7415
        %v7804 = vunpack.c.l.b16 %v7416
        %v7805 = vunpack.c.h.b16 %v7416
        %v7806 = vunpack.c.l.b16 %v7417
        %v7807 = vunpack.c.h.b16 %v7417
        %v7808 = vunpack.c.l.b16 %v7418
        %v7809 = vunpack.c.h.b16 %v7418
        %v7810 = vunpack.c.l.b16 %v7419
        %v7811 = vunpack.c.h.b16 %v7419
        %v7812 = vunpack.c.l.b16 %v7420
        %v7813 = vunpack.c.h.b16 %v7420
        %v7814 = vunpack.c.l.b16 %v7421
        %v7815 = vunpack.c.h.b16 %v7421
        %v7816 = vunpack.c.l.b16 %v7422
        %v7817 = vunpack.c.h.b16 %v7422
        %v7818 = vunpack.c.l.b16 %v7423
        %v7819 = vunpack.c.h.b16 %v7423
        %v7820 = vunpack.c.l.b16 %v7424
        %v7821 = vunpack.c.h.b16 %v7424
        %v7822 = vunpack.c.l.b16 %v7425
        %v7823 = vunpack.c.h.b16 %v7425
        %v7824 = vunpack.c.l.b16 %v7426
        %v7825 = vunpack.c.h.b16 %v7426
        %v7826 = vunpack.c.l.b16 %v7427
        %v7827 = vunpack.c.h.b16 %v7427
        %v7828 = vunpack.c.l.b16 %v7428
        %v7829 = vunpack.c.h.b16 %v7428
        %v7830 = vunpack.c.l.b16 %v7429
        %v7831 = vunpack.c.h.b16 %v7429
        %v7832 = vunpack.c.l.b16 %v7430
        %v7833 = vunpack.c.h.b16 %v7430
        %v7834 = vunpack.c.l.b16 %v7431
        %v7835 = vunpack.c.h.b16 %v7431
        %v7836 = vunpack.c.l.b16 %v7432
        %v7837 = vunpack.c.h.b16 %v7432
        %v7838 = vunpack.c.l.b16 %v7433
        %v7839 = vunpack.c.h.b16 %v7433
        %v7840 = vunpack.c.l.b16 %v7434
        %v7841 = vunpack.c.h.b16 %v7434
        %v7842 = vunpack.c.l.b16 %v7435
        %v7843 = vunpack.c.h.b16 %v7435
        %v7844 = vunpack.c.l.b16 %v7436
        %v7845 = vunpack.c.h.b16 %v7436
        %v7846 = vunpack.c.l.b16 %v7437
        %v7847 = vunpack.c.h.b16 %v7437
        %v7848 = vunpack.c.l.b16 %v7438
        %v7849 = vunpack.c.h.b16 %v7438
        %v7850 = vunpack.c.l.b16 %v7439
        %v7851 = vunpack.c.h.b16 %v7439
        %v7852 = vunpack.c.l.b16 %v7440
        %v7853 = vunpack.c.h.b16 %v7440
        %v7854 = vunpack.c.l.b16 %v7441
        %v7855 = vunpack.c.h.b16 %v7441
        %v7856 = vunpack.c.l.b16 %v7442
        %v7857 = vunpack.c.h.b16 %v7442
        %v7858 = vunpack.c.l.b16 %v7443
        %v7859 = vunpack.c.h.b16 %v7443
        %v7860 = vpack.c.b16 %v7608, %v7604
        %v7861 = vpack.c.b16 %v7609, %v7605
        %v7862 = vpack.c.b16 %v7610, %v7606
        %v7863 = vpack.c.b16 %v7611, %v7607
        %v7864 = vpack.c.b16 %v7616, %v7612
        %v7865 = vpack.c.b16 %v7617, %v7613
        %v7866 = vpack.c.b16 %v7618, %v7614
        %v7867 = vpack.c.b16 %v7619, %v7615
        %v7868 = vpack.c.b16 %v7624, %v7620
        %v7869 = vpack.c.b16 %v7625, %v7621
        %v7870 = vpack.c.b16 %v7626, %v7622
        %v7871 = vpack.c.b16 %v7627, %v7623
        %v7872 = vpack.c.b16 %v7632, %v7628
        %v7873 = vpack.c.b16 %v7633, %v7629
        %v7874 = vpack.c.b16 %v7634, %v7630
        %v7875 = vpack.c.b16 %v7635, %v7631
        %v7876 = vpack.c.b16 %v7640, %v7636
        %v7877 = vpack.c.b16 %v7641, %v7637
        %v7878 = vpack.c.b16 %v7642, %v7638
        %v7879 = vpack.c.b16 %v7643, %v7639
        %v7880 = vpack.c.b16 %v7648, %v7644
        %v7881 = vpack.c.b16 %v7649, %v7645
        %v7882 = vpack.c.b16 %v7650, %v7646
        %v7883 = vpack.c.b16 %v7651, %v7647
        %v7884 = vpack.c.b16 %v7656, %v7652
        %v7885 = vpack.c.b16 %v7657, %v7653
        %v7886 = vpack.c.b16 %v7658, %v7654
        %v7887 = vpack.c.b16 %v7659, %v7655
        %v7888 = vpack.c.b16 %v7664, %v7660
        %v7889 = vpack.c.b16 %v7665, %v7661
        %v7890 = vpack.c.b16 %v7666, %v7662
        %v7891 = vpack.c.b16 %v7667, %v7663
        %v7892 = vpack.c.b16 %v7672, %v7668
        %v7893 = vpack.c.b16 %v7673, %v7669
        %v7894 = vpack.c.b16 %v7674, %v7670
        %v7895 = vpack.c.b16 %v7675, %v7671
        %v7896 = vpack.c.b16 %v7680, %v7676
        %v7897 = vpack.c.b16 %v7681, %v7677
        %v7898 = vpack.c.b16 %v7682, %v7678
        %v7899 = vpack.c.b16 %v7683, %v7679
        %v7900 = vpack.c.b16 %v7688, %v7684
        %v7901 = vpack.c.b16 %v7689, %v7685
        %v7902 = vpack.c.b16 %v7690, %v7686
        %v7903 = vpack.c.b16 %v7691, %v7687
        %v7904 = vpack.c.b16 %v7696, %v7692
        %v7905 = vpack.c.b16 %v7697, %v7693
        %v7906 = vpack.c.b16 %v7698, %v7694
        %v7907 = vpack.c.b16 %v7699, %v7695
        %v7908 = vpack.c.b16 %v7704, %v7700
        %v7909 = vpack.c.b16 %v7705, %v7701
        %v7910 = vpack.c.b16 %v7706, %v7702
        %v7911 = vpack.c.b16 %v7707, %v7703
        %v7912 = vpack.c.b16 %v7712, %v7708
        %v7913 = vpack.c.b16 %v7713, %v7709
        %v7914 = vpack.c.b16 %v7714, %v7710
        %v7915 = vpack.c.b16 %v7715, %v7711
        %v7916 = vpack.c.b16 %v7720, %v7716
        %v7917 = vpack.c.b16 %v7721, %v7717
        %v7918 = vpack.c.b16 %v7722, %v7718
        %v7919 = vpack.c.b16 %v7723, %v7719
        %v7920 = vpack.c.b16 %v7728, %v7724
        %v7921 = vpack.c.b16 %v7729, %v7725
        %v7922 = vpack.c.b16 %v7730, %v7726
        %v7923 = vpack.c.b16 %v7731, %v7727
        %v7924 = vpack.c.b16 %v7736, %v7732
        %v7925 = vpack.c.b16 %v7737, %v7733
        %v7926 = vpack.c.b16 %v7738, %v7734
        %v7927 = vpack.c.b16 %v7739, %v7735
        %v7928 = vpack.c.b16 %v7744, %v7740
        %v7929 = vpack.c.b16 %v7745, %v7741
        %v7930 = vpack.c.b16 %v7746, %v7742
        %v7931 = vpack.c.b16 %v7747, %v7743
        %v7932 = vpack.c.b16 %v7752, %v7748
        %v7933 = vpack.c.b16 %v7753, %v7749
        %v7934 = vpack.c.b16 %v7754, %v7750
        %v7935 = vpack.c.b16 %v7755, %v7751
        %v7936 = vpack.c.b16 %v7760, %v7756
        %v7937 = vpack.c.b16 %v7761, %v7757
        %v7938 = vpack.c.b16 %v7762, %v7758
        %v7939 = vpack.c.b16 %v7763, %v7759
        %v7940 = vpack.c.b16 %v7768, %v7764
        %v7941 = vpack.c.b16 %v7769, %v7765
        %v7942 = vpack.c.b16 %v7770, %v7766
        %v7943 = vpack.c.b16 %v7771, %v7767
        %v7944 = vpack.c.b16 %v7776, %v7772
        %v7945 = vpack.c.b16 %v7777, %v7773
        %v7946 = vpack.c.b16 %v7778, %v7774
        %v7947 = vpack.c.b16 %v7779, %v7775
        %v7948 = vpack.c.b16 %v7784, %v7780
        %v7949 = vpack.c.b16 %v7785, %v7781
        %v7950 = vpack.c.b16 %v7786, %v7782
        %v7951 = vpack.c.b16 %v7787, %v7783
        %v7952 = vpack.c.b16 %v7792, %v7788
        %v7953 = vpack.c.b16 %v7793, %v7789
        %v7954 = vpack.c.b16 %v7794, %v7790
        %v7955 = vpack.c.b16 %v7795, %v7791
        %v7956 = vpack.c.b16 %v7800, %v7796
        %v7957 = vpack.c.b16 %v7801, %v7797
        %v7958 = vpack.c.b16 %v7802, %v7798
        %v7959 = vpack.c.b16 %v7803, %v7799
        %v7960 = vpack.c.b16 %v7808, %v7804
        %v7961 = vpack.c.b16 %v7809, %v7805
        %v7962 = vpack.c.b16 %v7810, %v7806
        %v7963 = vpack.c.b16 %v7811, %v7807
        %v7964 = vpack.c.b16 %v7816, %v7812
        %v7965 = vpack.c.b16 %v7817, %v7813
        %v7966 = vpack.c.b16 %v7818, %v7814
        %v7967 = vpack.c.b16 %v7819, %v7815
        %v7968 = vpack.c.b16 %v7824, %v7820
        %v7969 = vpack.c.b16 %v7825, %v7821
        %v7970 = vpack.c.b16 %v7826, %v7822
        %v7971 = vpack.c.b16 %v7827, %v7823
        %v7972 = vpack.c.b16 %v7832, %v7828
        %v7973 = vpack.c.b16 %v7833, %v7829
        %v7974 = vpack.c.b16 %v7834, %v7830
        %v7975 = vpack.c.b16 %v7835, %v7831
        %v7976 = vpack.c.b16 %v7840, %v7836
        %v7977 = vpack.c.b16 %v7841, %v7837
        %v7978 = vpack.c.b16 %v7842, %v7838
        %v7979 = vpack.c.b16 %v7843, %v7839
        %v7980 = vpack.c.b16 %v7848, %v7844
        %v7981 = vpack.c.b16 %v7849, %v7845
        %v7982 = vpack.c.b16 %v7850, %v7846
        %v7983 = vpack.c.b16 %v7851, %v7847
        %v7984 = vpack.c.b16 %v7856, %v7852
        %v7985 = vpack.c.b16 %v7857, %v7853
        %v7986 = vpack.c.b16 %v7858, %v7854
        %v7987 = vpack.c.b16 %v7859, %v7855
        %8116 = vmatprep.subr.bf16.mxu0 %v7861
        %8117 = vmatpush1.bf16.msra.mxu0 %v7860
        %8118 = vmatprep.subr.bf16.mxu0 %v7865
        %8119 = vmatpush1.bf16.msra.mxu0 %v7864
        %8120 = vmatprep.subr.bf16.mxu0 %v7869
        %8121 = vmatpush1.bf16.msra.mxu0 %v7868
        %8122 = vmatprep.subr.bf16.mxu0 %v7873
        %8123 = vmatpush1.bf16.msra.mxu0 %v7872
        %8124 = vmatprep.subr.bf16.mxu0 %v7877
        %8125 = vmatpush1.bf16.msra.mxu0 %v7876
        %8126 = vmatprep.subr.bf16.mxu0 %v7881
        %8127 = vmatpush1.bf16.msra.mxu0 %v7880
        %8128 = vmatprep.subr.bf16.mxu0 %v7885
        %8129 = vmatpush1.bf16.msra.mxu0 %v7884
        %8130 = vmatprep.subr.bf16.mxu0 %v7889
        %8131 = vmatpush1.bf16.msra.mxu0 %v7888
        %8132 = vmatprep.subr.bf16.mxu0 %v7893
        %8133 = vmatpush1.bf16.msra.mxu0 %v7892
        %8134 = vmatprep.subr.bf16.mxu0 %v7897
        %8135 = vmatpush1.bf16.msra.mxu0 %v7896
        %8136 = vmatprep.subr.bf16.mxu0 %v7901
        %8137 = vmatpush1.bf16.msra.mxu0 %v7900
        %8138 = vmatprep.subr.bf16.mxu0 %v7905
        %8139 = vmatpush1.bf16.msra.mxu0 %v7904
        %8140 = vmatprep.subr.bf16.mxu0 %v7909
        %8141 = vmatpush1.bf16.msra.mxu0 %v7908
        %8142 = vmatprep.subr.bf16.mxu0 %v7913
        %8143 = vmatpush1.bf16.msra.mxu0 %v7912
        %8144 = vmatprep.subr.bf16.mxu0 %v7917
        %8145 = vmatpush1.bf16.msra.mxu0 %v7916
        %8146 = vmatprep.subr.bf16.mxu0 %v7921
        %8147 = vmatpush1.bf16.msra.mxu0 %v7920
        %8148 = vmatprep.mubr.bf16.mxu0 %v7457
        %8149 = vmatmul.mubr.bf16.gmra.mrb[0].mxu0 %v7450
        %v8150 = vpop.f32.mrb[0].mxu0
        %v8151 = vadd.f32 0.0, %v8150
        %v8152 = vpop.f32.mrb[0].mxu0
        %v8153 = vadd.f32 0.0, %v8152
        %v8154 = vpop.f32.mrb[0].mxu0
        %v8155 = vpop.f32.mrb[0].mxu0
        %8156 = vdwg.mxu0
        %8157 = vmatprep.subr.bf16.mxu0 %v7925
        %8158 = vmatpush1.bf16.msra.mxu0 %v7924
        %8159 = vmatprep.subr.bf16.mxu0 %v7929
        %8160 = vmatpush1.bf16.msra.mxu0 %v7928
        %8161 = vmatprep.subr.bf16.mxu0 %v7933
        %8162 = vmatpush1.bf16.msra.mxu0 %v7932
        %8163 = vmatprep.subr.bf16.mxu0 %v7937
        %8164 = vmatpush1.bf16.msra.mxu0 %v7936
        %8165 = vmatprep.subr.bf16.mxu0 %v7941
        %8166 = vmatpush1.bf16.msra.mxu0 %v7940
        %8167 = vmatprep.subr.bf16.mxu0 %v7945
        %8168 = vmatpush1.bf16.msra.mxu0 %v7944
        %8169 = vmatprep.subr.bf16.mxu0 %v7949
        %8170 = vmatpush1.bf16.msra.mxu0 %v7948
        %8171 = vmatprep.subr.bf16.mxu0 %v7953
        %8172 = vmatpush1.bf16.msra.mxu0 %v7952
        %8173 = vmatprep.subr.bf16.mxu0 %v7957
        %8174 = vmatpush1.bf16.msra.mxu0 %v7956
        %8175 = vmatprep.subr.bf16.mxu0 %v7961
        %8176 = vmatpush1.bf16.msra.mxu0 %v7960
        %8177 = vmatprep.subr.bf16.mxu0 %v7965
        %8178 = vmatpush1.bf16.msra.mxu0 %v7964
        %8179 = vmatprep.subr.bf16.mxu0 %v7969
        %8180 = vmatpush1.bf16.msra.mxu0 %v7968
        %8181 = vmatprep.subr.bf16.mxu0 %v7973
        %8182 = vmatpush1.bf16.msra.mxu0 %v7972
        %8183 = vmatprep.subr.bf16.mxu0 %v7977
        %8184 = vmatpush1.bf16.msra.mxu0 %v7976
        %8185 = vmatprep.subr.bf16.mxu0 %v7981
        %8186 = vmatpush1.bf16.msra.mxu0 %v7980
        %8187 = vmatprep.subr.bf16.mxu0 %v7985
        %8188 = vmatpush1.bf16.msra.mxu0 %v7984
        %8189 = vmatprep.mubr.bf16.mxu0 %v7471
        %8190 = vmatmul.mubr.bf16.gmra.mrb[0].mxu0 %v7464
        %v8191 = vpop.f32.mrb[0].mxu0
        %v8192 = vadd.f32 %v8151, %v8191
        %v8193 = vpop.f32.mrb[0].mxu0
        %v8194 = vadd.f32 %v8153, %v8193
        %v8195 = vpop.f32.mrb[0].mxu0
        %v8196 = vpop.f32.mrb[0].mxu0
        %8197 = vdwg.mxu0
        %8198 = vmatprep.subr.bf16.mxu0 %v7863
        %8199 = vmatpush1.bf16.msra.mxu0 %v7862
        %8200 = vmatprep.subr.bf16.mxu0 %v7867
        %8201 = vmatpush1.bf16.msra.mxu0 %v7866
        %8202 = vmatprep.subr.bf16.mxu0 %v7871
        %8203 = vmatpush1.bf16.msra.mxu0 %v7870
        %8204 = vmatprep.subr.bf16.mxu0 %v7875
        %8205 = vmatpush1.bf16.msra.mxu0 %v7874
        %8206 = vmatprep.subr.bf16.mxu0 %v7879
        %8207 = vmatpush1.bf16.msra.mxu0 %v7878
        %8208 = vmatprep.subr.bf16.mxu0 %v7883
        %8209 = vmatpush1.bf16.msra.mxu0 %v7882
        %8210 = vmatprep.subr.bf16.mxu0 %v7887
        %8211 = vmatpush1.bf16.msra.mxu0 %v7886
        %8212 = vmatprep.subr.bf16.mxu0 %v7891
        %8213 = vmatpush1.bf16.msra.mxu0 %v7890
        %8214 = vmatprep.subr.bf16.mxu0 %v7895
        %8215 = vmatpush1.bf16.msra.mxu0 %v7894
        %8216 = vmatprep.subr.bf16.mxu0 %v7899
        %8217 = vmatpush1.bf16.msra.mxu0 %v7898
        %8218 = vmatprep.subr.bf16.mxu0 %v7903
        %8219 = vmatpush1.bf16.msra.mxu0 %v7902
        %8220 = vmatprep.subr.bf16.mxu0 %v7907
        %8221 = vmatpush1.bf16.msra.mxu0 %v7906
        %8222 = vmatprep.subr.bf16.mxu0 %v7911
        %8223 = vmatpush1.bf16.msra.mxu0 %v7910
        %8224 = vmatprep.subr.bf16.mxu0 %v7915
        %8225 = vmatpush1.bf16.msra.mxu0 %v7914
        %8226 = vmatprep.subr.bf16.mxu0 %v7919
        %8227 = vmatpush1.bf16.msra.mxu0 %v7918
        %8228 = vmatprep.subr.bf16.mxu0 %v7923
        %8229 = vmatpush1.bf16.msra.mxu0 %v7922
        %8230 = vmatprep.mubr.bf16.mxu0 %v7457
        %8231 = vmatmul.mubr.bf16.gmra.mrb[0].mxu0 %v7450
        %v8232 = vpop.f32.mrb[0].mxu0
        %v8233 = vadd.f32 0.0, %v8232
        %v8234 = vpop.f32.mrb[0].mxu0
        %v8235 = vadd.f32 0.0, %v8234
        %v8236 = vpop.f32.mrb[0].mxu0
        %v8237 = vpop.f32.mrb[0].mxu0
        %8238 = vdwg.mxu0
        %8239 = vmatprep.subr.bf16.mxu0 %v7927
        %8240 = vmatpush1.bf16.msra.mxu0 %v7926
        %8241 = vmatprep.subr.bf16.mxu0 %v7931
        %8242 = vmatpush1.bf16.msra.mxu0 %v7930
        %8243 = vmatprep.subr.bf16.mxu0 %v7935
        %8244 = vmatpush1.bf16.msra.mxu0 %v7934
        %8245 = vmatprep.subr.bf16.mxu0 %v7939
        %8246 = vmatpush1.bf16.msra.mxu0 %v7938
        %8247 = vmatprep.subr.bf16.mxu0 %v7943
        %8248 = vmatpush1.bf16.msra.mxu0 %v7942
        %8249 = vmatprep.subr.bf16.mxu0 %v7947
        %8250 = vmatpush1.bf16.msra.mxu0 %v7946
        %8251 = vmatprep.subr.bf16.mxu0 %v7951
        %8252 = vmatpush1.bf16.msra.mxu0 %v7950
        %8253 = vmatprep.subr.bf16.mxu0 %v7955
        %8254 = vmatpush1.bf16.msra.mxu0 %v7954
        %8255 = vmatprep.subr.bf16.mxu0 %v7959
        %8256 = vmatpush1.bf16.msra.mxu0 %v7958
        %8257 = vmatprep.subr.bf16.mxu0 %v7963
        %8258 = vmatpush1.bf16.msra.mxu0 %v7962
        %8259 = vmatprep.subr.bf16.mxu0 %v7967
        %8260 = vmatpush1.bf16.msra.mxu0 %v7966
        %8261 = vmatprep.subr.bf16.mxu0 %v7971
        %8262 = vmatpush1.bf16.msra.mxu0 %v7970
        %8263 = vmatprep.subr.bf16.mxu0 %v7975
        %8264 = vmatpush1.bf16.msra.mxu0 %v7974
        %8265 = vmatprep.subr.bf16.mxu0 %v7979
        %8266 = vmatpush1.bf16.msra.mxu0 %v7978
        %8267 = vmatprep.subr.bf16.mxu0 %v7983
        %8268 = vmatpush1.bf16.msra.mxu0 %v7982
        %8269 = vmatprep.subr.bf16.mxu0 %v7987
        %8270 = vmatpush1.bf16.msra.mxu0 %v7986
        %8271 = vmatprep.mubr.bf16.mxu0 %v7471
        %8272 = vmatmul.mubr.bf16.gmra.mrb[0].mxu0 %v7464
        %v8273 = vpop.f32.mrb[0].mxu0
        %v8274 = vadd.f32 %v8233, %v8273
        %v8275 = vpop.f32.mrb[0].mxu0
        %v8276 = vadd.f32 %v8235, %v8275
        %v8277 = vpop.f32.mrb[0].mxu0
        %v8278 = vpop.f32.mrb[0].mxu0
        %8279 = vdwg.mxu0
        %v8408 = vunpack.c.l.b16 %v7177
        %v8409 = vunpack.c.h.b16 %v7177
        %v8410 = vunpack.c.l.b16 %v7178
        %v8411 = vunpack.c.h.b16 %v7178
        %v8412 = vunpack.c.l.b16 %v7179
        %v8413 = vunpack.c.h.b16 %v7179
        %v8414 = vunpack.c.l.b16 %v7180
        %v8415 = vunpack.c.h.b16 %v7180
        %v8416 = vunpack.c.l.b16 %v7181
        %v8417 = vunpack.c.h.b16 %v7181
        %v8418 = vunpack.c.l.b16 %v7182
        %v8419 = vunpack.c.h.b16 %v7182
        %v8420 = vunpack.c.l.b16 %v7183
        %v8421 = vunpack.c.h.b16 %v7183
        %v8422 = vunpack.c.l.b16 %v7184
        %v8423 = vunpack.c.h.b16 %v7184
        %v8424 = vunpack.c.l.b16 %v7185
        %v8425 = vunpack.c.h.b16 %v7185
        %v8426 = vunpack.c.l.b16 %v7186
        %v8427 = vunpack.c.h.b16 %v7186
        %v8428 = vunpack.c.l.b16 %v7187
        %v8429 = vunpack.c.h.b16 %v7187
        %v8430 = vunpack.c.l.b16 %v7188
        %v8431 = vunpack.c.h.b16 %v7188
        %v8432 = vunpack.c.l.b16 %v7189
        %v8433 = vunpack.c.h.b16 %v7189
        %v8434 = vunpack.c.l.b16 %v7190
        %v8435 = vunpack.c.h.b16 %v7190
        %v8436 = vunpack.c.l.b16 %v7191
        %v8437 = vunpack.c.h.b16 %v7191
        %v8438 = vunpack.c.l.b16 %v7192
        %v8439 = vunpack.c.h.b16 %v7192
        %v8440 = vunpack.c.l.b16 %v7193
        %v8441 = vunpack.c.h.b16 %v7193
        %v8442 = vunpack.c.l.b16 %v7194
        %v8443 = vunpack.c.h.b16 %v7194
        %v8444 = vunpack.c.l.b16 %v7195
        %v8445 = vunpack.c.h.b16 %v7195
        %v8446 = vunpack.c.l.b16 %v7196
        %v8447 = vunpack.c.h.b16 %v7196
        %v8448 = vunpack.c.l.b16 %v7197
        %v8449 = vunpack.c.h.b16 %v7197
        %v8450 = vunpack.c.l.b16 %v7198
        %v8451 = vunpack.c.h.b16 %v7198
        %v8452 = vunpack.c.l.b16 %v7199
        %v8453 = vunpack.c.h.b16 %v7199
        %v8454 = vunpack.c.l.b16 %v7200
        %v8455 = vunpack.c.h.b16 %v7200
        %v8456 = vunpack.c.l.b16 %v7201
        %v8457 = vunpack.c.h.b16 %v7201
        %v8458 = vunpack.c.l.b16 %v7202
        %v8459 = vunpack.c.h.b16 %v7202
        %v8460 = vunpack.c.l.b16 %v7203
        %v8461 = vunpack.c.h.b16 %v7203
        %v8462 = vunpack.c.l.b16 %v7204
        %v8463 = vunpack.c.h.b16 %v7204
        %v8464 = vunpack.c.l.b16 %v7205
        %v8465 = vunpack.c.h.b16 %v7205
        %v8466 = vunpack.c.l.b16 %v7206
        %v8467 = vunpack.c.h.b16 %v7206
        %v8468 = vunpack.c.l.b16 %v7207
        %v8469 = vunpack.c.h.b16 %v7207
        %v8470 = vunpack.c.l.b16 %v7208
        %v8471 = vunpack.c.h.b16 %v7208
        %v8472 = vunpack.c.l.b16 %v7209
        %v8473 = vunpack.c.h.b16 %v7209
        %v8474 = vunpack.c.l.b16 %v7210
        %v8475 = vunpack.c.h.b16 %v7210
        %v8476 = vunpack.c.l.b16 %v7211
        %v8477 = vunpack.c.h.b16 %v7211
        %v8478 = vunpack.c.l.b16 %v7212
        %v8479 = vunpack.c.h.b16 %v7212
        %v8480 = vunpack.c.l.b16 %v7213
        %v8481 = vunpack.c.h.b16 %v7213
        %v8482 = vunpack.c.l.b16 %v7214
        %v8483 = vunpack.c.h.b16 %v7214
        %v8484 = vunpack.c.l.b16 %v7215
        %v8485 = vunpack.c.h.b16 %v7215
        %v8486 = vunpack.c.l.b16 %v7216
        %v8487 = vunpack.c.h.b16 %v7216
        %v8488 = vunpack.c.l.b16 %v7217
        %v8489 = vunpack.c.h.b16 %v7217
        %v8490 = vunpack.c.l.b16 %v7218
        %v8491 = vunpack.c.h.b16 %v7218
        %v8492 = vunpack.c.l.b16 %v7219
        %v8493 = vunpack.c.h.b16 %v7219
        %v8494 = vunpack.c.l.b16 %v7220
        %v8495 = vunpack.c.h.b16 %v7220
        %v8496 = vunpack.c.l.b16 %v7221
        %v8497 = vunpack.c.h.b16 %v7221
        %v8498 = vunpack.c.l.b16 %v7222
        %v8499 = vunpack.c.h.b16 %v7222
        %v8500 = vunpack.c.l.b16 %v7223
        %v8501 = vunpack.c.h.b16 %v7223
        %v8502 = vunpack.c.l.b16 %v7224
        %v8503 = vunpack.c.h.b16 %v7224
        %v8504 = vunpack.c.l.b16 %v7225
        %v8505 = vunpack.c.h.b16 %v7225
        %v8506 = vunpack.c.l.b16 %v7226
        %v8507 = vunpack.c.h.b16 %v7226
        %v8508 = vunpack.c.l.b16 %v7227
        %v8509 = vunpack.c.h.b16 %v7227
        %v8510 = vunpack.c.l.b16 %v7228
        %v8511 = vunpack.c.h.b16 %v7228
        %v8512 = vunpack.c.l.b16 %v7229
        %v8513 = vunpack.c.h.b16 %v7229
        %v8514 = vunpack.c.l.b16 %v7230
        %v8515 = vunpack.c.h.b16 %v7230
        %v8516 = vunpack.c.l.b16 %v7231
        %v8517 = vunpack.c.h.b16 %v7231
        %v8518 = vunpack.c.l.b16 %v7232
        %v8519 = vunpack.c.h.b16 %v7232
        %v8520 = vunpack.c.l.b16 %v7233
        %v8521 = vunpack.c.h.b16 %v7233
        %v8522 = vunpack.c.l.b16 %v7234
        %v8523 = vunpack.c.h.b16 %v7234
        %v8524 = vunpack.c.l.b16 %v7235
        %v8525 = vunpack.c.h.b16 %v7235
        %v8526 = vunpack.c.l.b16 %v7236
        %v8527 = vunpack.c.h.b16 %v7236
        %v8528 = vunpack.c.l.b16 %v7237
        %v8529 = vunpack.c.h.b16 %v7237
        %v8530 = vunpack.c.l.b16 %v7238
        %v8531 = vunpack.c.h.b16 %v7238
        %v8532 = vunpack.c.l.b16 %v7239
        %v8533 = vunpack.c.h.b16 %v7239
        %v8534 = vunpack.c.l.b16 %v7240
        %v8535 = vunpack.c.h.b16 %v7240
        %v8536 = vunpack.c.l.b16 %v7241
        %v8537 = vunpack.c.h.b16 %v7241
        %v8538 = vunpack.c.l.b16 %v7242
        %v8539 = vunpack.c.h.b16 %v7242
        %v8540 = vunpack.c.l.b16 %v7243
        %v8541 = vunpack.c.h.b16 %v7243
        %v8542 = vunpack.c.l.b16 %v7244
        %v8543 = vunpack.c.h.b16 %v7244
        %v8544 = vunpack.c.l.b16 %v7245
        %v8545 = vunpack.c.h.b16 %v7245
        %v8546 = vunpack.c.l.b16 %v7246
        %v8547 = vunpack.c.h.b16 %v7246
        %v8548 = vunpack.c.l.b16 %v7247
        %v8549 = vunpack.c.h.b16 %v7247
        %v8550 = vunpack.c.l.b16 %v7248
        %v8551 = vunpack.c.h.b16 %v7248
        %v8552 = vunpack.c.l.b16 %v7249
        %v8553 = vunpack.c.h.b16 %v7249
        %v8554 = vunpack.c.l.b16 %v7250
        %v8555 = vunpack.c.h.b16 %v7250
        %v8556 = vunpack.c.l.b16 %v7251
        %v8557 = vunpack.c.h.b16 %v7251
        %v8558 = vunpack.c.l.b16 %v7252
        %v8559 = vunpack.c.h.b16 %v7252
        %v8560 = vunpack.c.l.b16 %v7253
        %v8561 = vunpack.c.h.b16 %v7253
        %v8562 = vunpack.c.l.b16 %v7254
        %v8563 = vunpack.c.h.b16 %v7254
        %v8564 = vunpack.c.l.b16 %v7255
        %v8565 = vunpack.c.h.b16 %v7255
        %v8566 = vunpack.c.l.b16 %v7256
        %v8567 = vunpack.c.h.b16 %v7256
        %v8568 = vunpack.c.l.b16 %v7257
        %v8569 = vunpack.c.h.b16 %v7257
        %v8570 = vunpack.c.l.b16 %v7258
        %v8571 = vunpack.c.h.b16 %v7258
        %v8572 = vunpack.c.l.b16 %v7259
        %v8573 = vunpack.c.h.b16 %v7259
        %v8574 = vunpack.c.l.b16 %v7260
        %v8575 = vunpack.c.h.b16 %v7260
        %v8576 = vunpack.c.l.b16 %v7261
        %v8577 = vunpack.c.h.b16 %v7261
        %v8578 = vunpack.c.l.b16 %v7262
        %v8579 = vunpack.c.h.b16 %v7262
        %v8580 = vunpack.c.l.b16 %v7263
        %v8581 = vunpack.c.h.b16 %v7263
        %v8582 = vunpack.c.l.b16 %v7264
        %v8583 = vunpack.c.h.b16 %v7264
        %v8584 = vunpack.c.l.b16 %v7265
        %v8585 = vunpack.c.h.b16 %v7265
        %v8586 = vunpack.c.l.b16 %v7266
        %v8587 = vunpack.c.h.b16 %v7266
        %v8588 = vunpack.c.l.b16 %v7267
        %v8589 = vunpack.c.h.b16 %v7267
        %v8590 = vunpack.c.l.b16 %v7268
        %v8591 = vunpack.c.h.b16 %v7268
        %v8592 = vunpack.c.l.b16 %v7269
        %v8593 = vunpack.c.h.b16 %v7269
        %v8594 = vunpack.c.l.b16 %v7270
        %v8595 = vunpack.c.h.b16 %v7270
        %v8596 = vunpack.c.l.b16 %v7271
        %v8597 = vunpack.c.h.b16 %v7271
        %v8598 = vunpack.c.l.b16 %v7272
        %v8599 = vunpack.c.h.b16 %v7272
        %v8600 = vunpack.c.l.b16 %v7273
        %v8601 = vunpack.c.h.b16 %v7273
        %v8602 = vunpack.c.l.b16 %v7274
        %v8603 = vunpack.c.h.b16 %v7274
        %v8604 = vunpack.c.l.b16 %v7275
        %v8605 = vunpack.c.h.b16 %v7275
        %v8606 = vunpack.c.l.b16 %v7276
        %v8607 = vunpack.c.h.b16 %v7276
        %v8608 = vunpack.c.l.b16 %v7277
        %v8609 = vunpack.c.h.b16 %v7277
        %v8610 = vunpack.c.l.b16 %v7278
        %v8611 = vunpack.c.h.b16 %v7278
        %v8612 = vunpack.c.l.b16 %v7279
        %v8613 = vunpack.c.h.b16 %v7279
        %v8614 = vunpack.c.l.b16 %v7280
        %v8615 = vunpack.c.h.b16 %v7280
        %v8616 = vunpack.c.l.b16 %v7281
        %v8617 = vunpack.c.h.b16 %v7281
        %v8618 = vunpack.c.l.b16 %v7282
        %v8619 = vunpack.c.h.b16 %v7282
        %v8620 = vunpack.c.l.b16 %v7283
        %v8621 = vunpack.c.h.b16 %v7283
        %v8622 = vunpack.c.l.b16 %v7284
        %v8623 = vunpack.c.h.b16 %v7284
        %v8624 = vunpack.c.l.b16 %v7285
        %v8625 = vunpack.c.h.b16 %v7285
        %v8626 = vunpack.c.l.b16 %v7286
        %v8627 = vunpack.c.h.b16 %v7286
        %v8628 = vunpack.c.l.b16 %v7287
        %v8629 = vunpack.c.h.b16 %v7287
        %v8630 = vunpack.c.l.b16 %v7288
        %v8631 = vunpack.c.h.b16 %v7288
        %v8632 = vunpack.c.l.b16 %v7289
        %v8633 = vunpack.c.h.b16 %v7289
        %v8634 = vunpack.c.l.b16 %v7290
        %v8635 = vunpack.c.h.b16 %v7290
        %v8636 = vunpack.c.l.b16 %v7291
        %v8637 = vunpack.c.h.b16 %v7291
        %v8638 = vunpack.c.l.b16 %v7292
        %v8639 = vunpack.c.h.b16 %v7292
        %v8640 = vunpack.c.l.b16 %v7293
        %v8641 = vunpack.c.h.b16 %v7293
        %v8642 = vunpack.c.l.b16 %v7294
        %v8643 = vunpack.c.h.b16 %v7294
        %v8644 = vunpack.c.l.b16 %v7295
        %v8645 = vunpack.c.h.b16 %v7295
        %v8646 = vunpack.c.l.b16 %v7296
        %v8647 = vunpack.c.h.b16 %v7296
        %v8648 = vunpack.c.l.b16 %v7297
        %v8649 = vunpack.c.h.b16 %v7297
        %v8650 = vunpack.c.l.b16 %v7298
        %v8651 = vunpack.c.h.b16 %v7298
        %v8652 = vunpack.c.l.b16 %v7299
        %v8653 = vunpack.c.h.b16 %v7299
        %v8654 = vunpack.c.l.b16 %v7300
        %v8655 = vunpack.c.h.b16 %v7300
        %v8656 = vunpack.c.l.b16 %v7301
        %v8657 = vunpack.c.h.b16 %v7301
        %v8658 = vunpack.c.l.b16 %v7302
        %v8659 = vunpack.c.h.b16 %v7302
        %v8660 = vunpack.c.l.b16 %v7303
        %v8661 = vunpack.c.h.b16 %v7303
        %v8662 = vunpack.c.l.b16 %v7304
        %v8663 = vunpack.c.h.b16 %v7304
        %v8664 = vpack.c.b16 %v8412, %v8408
        %v8665 = vpack.c.b16 %v8413, %v8409
        %v8666 = vpack.c.b16 %v8414, %v8410
        %v8667 = vpack.c.b16 %v8415, %v8411
        %v8668 = vpack.c.b16 %v8420, %v8416
        %v8669 = vpack.c.b16 %v8421, %v8417
        %v8670 = vpack.c.b16 %v8422, %v8418
        %v8671 = vpack.c.b16 %v8423, %v8419
        %v8672 = vpack.c.b16 %v8428, %v8424
        %v8673 = vpack.c.b16 %v8429, %v8425
        %v8674 = vpack.c.b16 %v8430, %v8426
        %v8675 = vpack.c.b16 %v8431, %v8427
        %v8676 = vpack.c.b16 %v8436, %v8432
        %v8677 = vpack.c.b16 %v8437, %v8433
        %v8678 = vpack.c.b16 %v8438, %v8434
        %v8679 = vpack.c.b16 %v8439, %v8435
        %v8680 = vpack.c.b16 %v8444, %v8440
        %v8681 = vpack.c.b16 %v8445, %v8441
        %v8682 = vpack.c.b16 %v8446, %v8442
        %v8683 = vpack.c.b16 %v8447, %v8443
        %v8684 = vpack.c.b16 %v8452, %v8448
        %v8685 = vpack.c.b16 %v8453, %v8449
        %v8686 = vpack.c.b16 %v8454, %v8450
        %v8687 = vpack.c.b16 %v8455, %v8451
        %v8688 = vpack.c.b16 %v8460, %v8456
        %v8689 = vpack.c.b16 %v8461, %v8457
        %v8690 = vpack.c.b16 %v8462, %v8458
        %v8691 = vpack.c.b16 %v8463, %v8459
        %v8692 = vpack.c.b16 %v8468, %v8464
        %v8693 = vpack.c.b16 %v8469, %v8465
        %v8694 = vpack.c.b16 %v8470, %v8466
        %v8695 = vpack.c.b16 %v8471, %v8467
        %v8696 = vpack.c.b16 %v8476, %v8472
        %v8697 = vpack.c.b16 %v8477, %v8473
        %v8698 = vpack.c.b16 %v8478, %v8474
        %v8699 = vpack.c.b16 %v8479, %v8475
        %v8700 = vpack.c.b16 %v8484, %v8480
        %v8701 = vpack.c.b16 %v8485, %v8481
        %v8702 = vpack.c.b16 %v8486, %v8482
        %v8703 = vpack.c.b16 %v8487, %v8483
        %v8704 = vpack.c.b16 %v8492, %v8488
        %v8705 = vpack.c.b16 %v8493, %v8489
        %v8706 = vpack.c.b16 %v8494, %v8490
        %v8707 = vpack.c.b16 %v8495, %v8491
        %v8708 = vpack.c.b16 %v8500, %v8496
        %v8709 = vpack.c.b16 %v8501, %v8497
        %v8710 = vpack.c.b16 %v8502, %v8498
        %v8711 = vpack.c.b16 %v8503, %v8499
        %v8712 = vpack.c.b16 %v8508, %v8504
        %v8713 = vpack.c.b16 %v8509, %v8505
        %v8714 = vpack.c.b16 %v8510, %v8506
        %v8715 = vpack.c.b16 %v8511, %v8507
        %v8716 = vpack.c.b16 %v8516, %v8512
        %v8717 = vpack.c.b16 %v8517, %v8513
        %v8718 = vpack.c.b16 %v8518, %v8514
        %v8719 = vpack.c.b16 %v8519, %v8515
        %v8720 = vpack.c.b16 %v8524, %v8520
        %v8721 = vpack.c.b16 %v8525, %v8521
        %v8722 = vpack.c.b16 %v8526, %v8522
        %v8723 = vpack.c.b16 %v8527, %v8523
        %v8724 = vpack.c.b16 %v8532, %v8528
        %v8725 = vpack.c.b16 %v8533, %v8529
        %v8726 = vpack.c.b16 %v8534, %v8530
        %v8727 = vpack.c.b16 %v8535, %v8531
        %v8728 = vpack.c.b16 %v8540, %v8536
        %v8729 = vpack.c.b16 %v8541, %v8537
        %v8730 = vpack.c.b16 %v8542, %v8538
        %v8731 = vpack.c.b16 %v8543, %v8539
        %v8732 = vpack.c.b16 %v8548, %v8544
        %v8733 = vpack.c.b16 %v8549, %v8545
        %v8734 = vpack.c.b16 %v8550, %v8546
        %v8735 = vpack.c.b16 %v8551, %v8547
        %v8736 = vpack.c.b16 %v8556, %v8552
        %v8737 = vpack.c.b16 %v8557, %v8553
        %v8738 = vpack.c.b16 %v8558, %v8554
        %v8739 = vpack.c.b16 %v8559, %v8555
        %v8740 = vpack.c.b16 %v8564, %v8560
        %v8741 = vpack.c.b16 %v8565, %v8561
        %v8742 = vpack.c.b16 %v8566, %v8562
        %v8743 = vpack.c.b16 %v8567, %v8563
        %v8744 = vpack.c.b16 %v8572, %v8568
        %v8745 = vpack.c.b16 %v8573, %v8569
        %v8746 = vpack.c.b16 %v8574, %v8570
        %v8747 = vpack.c.b16 %v8575, %v8571
        %v8748 = vpack.c.b16 %v8580, %v8576
        %v8749 = vpack.c.b16 %v8581, %v8577
        %v8750 = vpack.c.b16 %v8582, %v8578
        %v8751 = vpack.c.b16 %v8583, %v8579
        %v8752 = vpack.c.b16 %v8588, %v8584
        %v8753 = vpack.c.b16 %v8589, %v8585
        %v8754 = vpack.c.b16 %v8590, %v8586
        %v8755 = vpack.c.b16 %v8591, %v8587
        %v8756 = vpack.c.b16 %v8596, %v8592
        %v8757 = vpack.c.b16 %v8597, %v8593
        %v8758 = vpack.c.b16 %v8598, %v8594
        %v8759 = vpack.c.b16 %v8599, %v8595
        %v8760 = vpack.c.b16 %v8604, %v8600
        %v8761 = vpack.c.b16 %v8605, %v8601
        %v8762 = vpack.c.b16 %v8606, %v8602
        %v8763 = vpack.c.b16 %v8607, %v8603
        %v8764 = vpack.c.b16 %v8612, %v8608
        %v8765 = vpack.c.b16 %v8613, %v8609
        %v8766 = vpack.c.b16 %v8614, %v8610
        %v8767 = vpack.c.b16 %v8615, %v8611
        %v8768 = vpack.c.b16 %v8620, %v8616
        %v8769 = vpack.c.b16 %v8621, %v8617
        %v8770 = vpack.c.b16 %v8622, %v8618
        %v8771 = vpack.c.b16 %v8623, %v8619
        %v8772 = vpack.c.b16 %v8628, %v8624
        %v8773 = vpack.c.b16 %v8629, %v8625
        %v8774 = vpack.c.b16 %v8630, %v8626
        %v8775 = vpack.c.b16 %v8631, %v8627
        %v8776 = vpack.c.b16 %v8636, %v8632
        %v8777 = vpack.c.b16 %v8637, %v8633
        %v8778 = vpack.c.b16 %v8638, %v8634
        %v8779 = vpack.c.b16 %v8639, %v8635
        %v8780 = vpack.c.b16 %v8644, %v8640
        %v8781 = vpack.c.b16 %v8645, %v8641
        %v8782 = vpack.c.b16 %v8646, %v8642
        %v8783 = vpack.c.b16 %v8647, %v8643
        %v8784 = vpack.c.b16 %v8652, %v8648
        %v8785 = vpack.c.b16 %v8653, %v8649
        %v8786 = vpack.c.b16 %v8654, %v8650
        %v8787 = vpack.c.b16 %v8655, %v8651
        %v8788 = vpack.c.b16 %v8660, %v8656
        %v8789 = vpack.c.b16 %v8661, %v8657
        %v8790 = vpack.c.b16 %v8662, %v8658
        %v8791 = vpack.c.b16 %v8663, %v8659
        %8920 = vmatprep.subr.bf16.mxu0 %v8665
        %8921 = vmatpush1.bf16.msra.mxu0 %v8664
        %8922 = vmatprep.subr.bf16.mxu0 %v8669
        %8923 = vmatpush1.bf16.msra.mxu0 %v8668
        %8924 = vmatprep.subr.bf16.mxu0 %v8673
        %8925 = vmatpush1.bf16.msra.mxu0 %v8672
        %8926 = vmatprep.subr.bf16.mxu0 %v8677
        %8927 = vmatpush1.bf16.msra.mxu0 %v8676
        %8928 = vmatprep.subr.bf16.mxu0 %v8681
        %8929 = vmatpush1.bf16.msra.mxu0 %v8680
        %8930 = vmatprep.subr.bf16.mxu0 %v8685
        %8931 = vmatpush1.bf16.msra.mxu0 %v8684
        %8932 = vmatprep.subr.bf16.mxu0 %v8689
        %8933 = vmatpush1.bf16.msra.mxu0 %v8688
        %8934 = vmatprep.subr.bf16.mxu0 %v8693
        %8935 = vmatpush1.bf16.msra.mxu0 %v8692
        %8936 = vmatprep.subr.bf16.mxu0 %v8697
        %8937 = vmatpush1.bf16.msra.mxu0 %v8696
        %8938 = vmatprep.subr.bf16.mxu0 %v8701
        %8939 = vmatpush1.bf16.msra.mxu0 %v8700
        %8940 = vmatprep.subr.bf16.mxu0 %v8705
        %8941 = vmatpush1.bf16.msra.mxu0 %v8704
        %8942 = vmatprep.subr.bf16.mxu0 %v8709
        %8943 = vmatpush1.bf16.msra.mxu0 %v8708
        %8944 = vmatprep.subr.bf16.mxu0 %v8713
        %8945 = vmatpush1.bf16.msra.mxu0 %v8712
        %8946 = vmatprep.subr.bf16.mxu0 %v8717
        %8947 = vmatpush1.bf16.msra.mxu0 %v8716
        %8948 = vmatprep.subr.bf16.mxu0 %v8721
        %8949 = vmatpush1.bf16.msra.mxu0 %v8720
        %8950 = vmatprep.subr.bf16.mxu0 %v8725
        %8951 = vmatpush1.bf16.msra.mxu0 %v8724
        %8952 = vmatprep.mubr.bf16.mxu0 %v7174
        %8953 = vmatmul.mubr.bf16.gmra.mrb[0].mxu0 %v7173
        %v8954 = vpop.f32.mrb[0].mxu0
        %v8955 = vadd.f32 %v8192, %v8954
        %v8956 = vpop.f32.mrb[0].mxu0
        %v8957 = vadd.f32 %v8194, %v8956
        %v8958 = vpop.f32.mrb[0].mxu0
        %v8959 = vpop.f32.mrb[0].mxu0
        %8960 = vdwg.mxu0
        %8961 = vmatprep.subr.bf16.mxu0 %v8729
        %8962 = vmatpush1.bf16.msra.mxu0 %v8728
        %8963 = vmatprep.subr.bf16.mxu0 %v8733
        %8964 = vmatpush1.bf16.msra.mxu0 %v8732
        %8965 = vmatprep.subr.bf16.mxu0 %v8737
        %8966 = vmatpush1.bf16.msra.mxu0 %v8736
        %8967 = vmatprep.subr.bf16.mxu0 %v8741
        %8968 = vmatpush1.bf16.msra.mxu0 %v8740
        %8969 = vmatprep.subr.bf16.mxu0 %v8745
        %8970 = vmatpush1.bf16.msra.mxu0 %v8744
        %8971 = vmatprep.subr.bf16.mxu0 %v8749
        %8972 = vmatpush1.bf16.msra.mxu0 %v8748
        %8973 = vmatprep.subr.bf16.mxu0 %v8753
        %8974 = vmatpush1.bf16.msra.mxu0 %v8752
        %8975 = vmatprep.subr.bf16.mxu0 %v8757
        %8976 = vmatpush1.bf16.msra.mxu0 %v8756
        %8977 = vmatprep.subr.bf16.mxu0 %v8761
        %8978 = vmatpush1.bf16.msra.mxu0 %v8760
        %8979 = vmatprep.subr.bf16.mxu0 %v8765
        %8980 = vmatpush1.bf16.msra.mxu0 %v8764
        %8981 = vmatprep.subr.bf16.mxu0 %v8769
        %8982 = vmatpush1.bf16.msra.mxu0 %v8768
        %8983 = vmatprep.subr.bf16.mxu0 %v8773
        %8984 = vmatpush1.bf16.msra.mxu0 %v8772
        %8985 = vmatprep.subr.bf16.mxu0 %v8777
        %8986 = vmatpush1.bf16.msra.mxu0 %v8776
        %8987 = vmatprep.subr.bf16.mxu0 %v8781
        %8988 = vmatpush1.bf16.msra.mxu0 %v8780
        %8989 = vmatprep.subr.bf16.mxu0 %v8785
        %8990 = vmatpush1.bf16.msra.mxu0 %v8784
        %8991 = vmatprep.subr.bf16.mxu0 %v8789
        %8992 = vmatpush1.bf16.msra.mxu0 %v8788
        %8993 = vmatprep.mubr.bf16.mxu0 %v7176
        %8994 = vmatmul.mubr.bf16.gmra.mrb[0].mxu0 %v7175
        %v8995 = vpop.f32.mrb[0].mxu0
        %v8996 = vadd.f32 %v8955, %v8995
        %v8997 = vpop.f32.mrb[0].mxu0
        %v8998 = vadd.f32 %v8957, %v8997
        %v8999 = vpop.f32.mrb[0].mxu0
        %v9000 = vpop.f32.mrb[0].mxu0
        %9001 = vdwg.mxu0
        %9002 = vmatprep.subr.bf16.mxu0 %v8667
        %9003 = vmatpush1.bf16.msra.mxu0 %v8666
        %9004 = vmatprep.subr.bf16.mxu0 %v8671
        %9005 = vmatpush1.bf16.msra.mxu0 %v8670
        %9006 = vmatprep.subr.bf16.mxu0 %v8675
        %9007 = vmatpush1.bf16.msra.mxu0 %v8674
        %9008 = vmatprep.subr.bf16.mxu0 %v8679
        %9009 = vmatpush1.bf16.msra.mxu0 %v8678
        %9010 = vmatprep.subr.bf16.mxu0 %v8683
        %9011 = vmatpush1.bf16.msra.mxu0 %v8682
        %9012 = vmatprep.subr.bf16.mxu0 %v8687
        %9013 = vmatpush1.bf16.msra.mxu0 %v8686
        %9014 = vmatprep.subr.bf16.mxu0 %v8691
        %9015 = vmatpush1.bf16.msra.mxu0 %v8690
        %9016 = vmatprep.subr.bf16.mxu0 %v8695
        %9017 = vmatpush1.bf16.msra.mxu0 %v8694
        %9018 = vmatprep.subr.bf16.mxu0 %v8699
        %9019 = vmatpush1.bf16.msra.mxu0 %v8698
        %9020 = vmatprep.subr.bf16.mxu0 %v8703
        %9021 = vmatpush1.bf16.msra.mxu0 %v8702
        %9022 = vmatprep.subr.bf16.mxu0 %v8707
        %9023 = vmatpush1.bf16.msra.mxu0 %v8706
        %9024 = vmatprep.subr.bf16.mxu0 %v8711
        %9025 = vmatpush1.bf16.msra.mxu0 %v8710
        %9026 = vmatprep.subr.bf16.mxu0 %v8715
        %9027 = vmatpush1.bf16.msra.mxu0 %v8714
        %9028 = vmatprep.subr.bf16.mxu0 %v8719
        %9029 = vmatpush1.bf16.msra.mxu0 %v8718
        %9030 = vmatprep.subr.bf16.mxu0 %v8723
        %9031 = vmatpush1.bf16.msra.mxu0 %v8722
        %9032 = vmatprep.subr.bf16.mxu0 %v8727
        %9033 = vmatpush1.bf16.msra.mxu0 %v8726
        %9034 = vmatprep.mubr.bf16.mxu0 %v7174
        %9035 = vmatmul.mubr.bf16.gmra.mrb[0].mxu0 %v7173
        %v9036 = vpop.f32.mrb[0].mxu0
        %v9037 = vadd.f32 %v8274, %v9036
        %v9038 = vpop.f32.mrb[0].mxu0
        %v9039 = vadd.f32 %v8276, %v9038
        %v9040 = vpop.f32.mrb[0].mxu0
        %v9041 = vpop.f32.mrb[0].mxu0
        %9042 = vdwg.mxu0
        %9043 = vmatprep.subr.bf16.mxu0 %v8731
        %9044 = vmatpush1.bf16.msra.mxu0 %v8730
        %9045 = vmatprep.subr.bf16.mxu0 %v8735
        %9046 = vmatpush1.bf16.msra.mxu0 %v8734
        %9047 = vmatprep.subr.bf16.mxu0 %v8739
        %9048 = vmatpush1.bf16.msra.mxu0 %v8738
        %9049 = vmatprep.subr.bf16.mxu0 %v8743
        %9050 = vmatpush1.bf16.msra.mxu0 %v8742
        %9051 = vmatprep.subr.bf16.mxu0 %v8747
        %9052 = vmatpush1.bf16.msra.mxu0 %v8746
        %9053 = vmatprep.subr.bf16.mxu0 %v8751
        %9054 = vmatpush1.bf16.msra.mxu0 %v8750
        %9055 = vmatprep.subr.bf16.mxu0 %v8755
        %9056 = vmatpush1.bf16.msra.mxu0 %v8754
        %9057 = vmatprep.subr.bf16.mxu0 %v8759
        %9058 = vmatpush1.bf16.msra.mxu0 %v8758
        %9059 = vmatprep.subr.bf16.mxu0 %v8763
        %9060 = vmatpush1.bf16.msra.mxu0 %v8762
        %9061 = vmatprep.subr.bf16.mxu0 %v8767
        %9062 = vmatpush1.bf16.msra.mxu0 %v8766
        %9063 = vmatprep.subr.bf16.mxu0 %v8771
        %9064 = vmatpush1.bf16.msra.mxu0 %v8770
        %9065 = vmatprep.subr.bf16.mxu0 %v8775
        %9066 = vmatpush1.bf16.msra.mxu0 %v8774
        %9067 = vmatprep.subr.bf16.mxu0 %v8779
        %9068 = vmatpush1.bf16.msra.mxu0 %v8778
        %9069 = vmatprep.subr.bf16.mxu0 %v8783
        %9070 = vmatpush1.bf16.msra.mxu0 %v8782
        %9071 = vmatprep.subr.bf16.mxu0 %v8787
        %9072 = vmatpush1.bf16.msra.mxu0 %v8786
        %9073 = vmatprep.subr.bf16.mxu0 %v8791
        %9074 = vmatpush1.bf16.msra.mxu0 %v8790
        %9075 = vmatprep.mubr.bf16.mxu0 %v7176
        %9076 = vmatmul.mubr.bf16.gmra.mrb[0].mxu0 %v7175
        %v9077 = vpop.f32.mrb[0].mxu0
        %v9078 = vadd.f32 %v9037, %v9077
        %v9079 = vpop.f32.mrb[0].mxu0
        %v9080 = vadd.f32 %v9039, %v9079
        %v9081 = vpop.f32.mrb[0].mxu0
        %v9082 = vpop.f32.mrb[0].mxu0
        %9083 = vdwg.mxu0
        %v9086 = vcombine.high %v7165, %v7165
        %v9087 = vcombine.high %v7166, %v7166
        %v9090 = vpack.c.bf16 %v7165, %v7165
        %v9091 = vpack.c.bf16 %v9086, %v9086
        %v9092 = vpack.c.bf16 %v7166, %v7166
        %v9093 = vpack.c.bf16 %v9087, %v9087
        %s9094 = scalar_lea.vmem [#allocation25], 2048
        %v9095 = vld [vmem:[%s9094] sm:$0xff]
        %v9096 = vld [vmem:[%s9094 + $0x8] sm:$0xff]
        %v9097 = vld [vmem:[%s9094 + $0x10] sm:$0xff]
        %v9098 = vld [vmem:[%s9094 + $0x18] sm:$0xff]
        %v9099 = vld [vmem:[%s9094 + $0x20] sm:$0xff]
        %v9100 = vld [vmem:[%s9094 + $0x28] sm:$0xff]
        %v9101 = vld [vmem:[%s9094 + $0x30] sm:$0xff]
        %v9102 = vld [vmem:[%s9094 + $0x38] sm:$0xff]
        %v9103 = vld [vmem:[%s9094 + $0x40] sm:$0xff]
        %v9104 = vld [vmem:[%s9094 + $0x48] sm:$0xff]
        %v9105 = vld [vmem:[%s9094 + $0x50] sm:$0xff]
        %v9106 = vld [vmem:[%s9094 + $0x58] sm:$0xff]
        %v9107 = vld [vmem:[%s9094 + $0x60] sm:$0xff]
        %v9108 = vld [vmem:[%s9094 + $0x68] sm:$0xff]
        %v9109 = vld [vmem:[%s9094 + $0x70] sm:$0xff]
        %v9110 = vld [vmem:[%s9094 + $0x78] sm:$0xff]
        %v9111 = vld [vmem:[%s9094 + $0x80] sm:$0xff]
        %v9112 = vld [vmem:[%s9094 + $0x88] sm:$0xff]
        %v9113 = vld [vmem:[%s9094 + $0x90] sm:$0xff]
        %v9114 = vld [vmem:[%s9094 + $0x98] sm:$0xff]
        %v9115 = vld [vmem:[%s9094 + $0xa0] sm:$0xff]
        %v9116 = vld [vmem:[%s9094 + $0xa8] sm:$0xff]
        %v9117 = vld [vmem:[%s9094 + $0xb0] sm:$0xff]
        %v9118 = vld [vmem:[%s9094 + $0xb8] sm:$0xff]
        %v9119 = vld [vmem:[%s9094 + $0xc0] sm:$0xff]
        %v9120 = vld [vmem:[%s9094 + $0xc8] sm:$0xff]
        %v9121 = vld [vmem:[%s9094 + $0xd0] sm:$0xff]
        %v9122 = vld [vmem:[%s9094 + $0xd8] sm:$0xff]
        %v9123 = vld [vmem:[%s9094 + $0xe0] sm:$0xff]
        %v9124 = vld [vmem:[%s9094 + $0xe8] sm:$0xff]
        %v9125 = vld [vmem:[%s9094 + $0xf0] sm:$0xff]
        %v9126 = vld [vmem:[%s9094 + $0xf8] sm:$0xff]
        %v9127 = vld [vmem:[%s9094 + $0x100] sm:$0xff]
        %v9128 = vld [vmem:[%s9094 + $0x108] sm:$0xff]
        %v9129 = vld [vmem:[%s9094 + $0x110] sm:$0xff]
        %v9130 = vld [vmem:[%s9094 + $0x118] sm:$0xff]
        %v9131 = vld [vmem:[%s9094 + $0x120] sm:$0xff]
        %v9132 = vld [vmem:[%s9094 + $0x128] sm:$0xff]
        %v9133 = vld [vmem:[%s9094 + $0x130] sm:$0xff]
        %v9134 = vld [vmem:[%s9094 + $0x138] sm:$0xff]
        %v9135 = vld [vmem:[%s9094 + $0x140] sm:$0xff]
        %v9136 = vld [vmem:[%s9094 + $0x148] sm:$0xff]
        %v9137 = vld [vmem:[%s9094 + $0x150] sm:$0xff]
        %v9138 = vld [vmem:[%s9094 + $0x158] sm:$0xff]
        %v9139 = vld [vmem:[%s9094 + $0x160] sm:$0xff]
        %v9140 = vld [vmem:[%s9094 + $0x168] sm:$0xff]
        %v9141 = vld [vmem:[%s9094 + $0x170] sm:$0xff]
        %v9142 = vld [vmem:[%s9094 + $0x178] sm:$0xff]
        %v9143 = vld [vmem:[%s9094 + $0x180] sm:$0xff]
        %v9144 = vld [vmem:[%s9094 + $0x188] sm:$0xff]
        %v9145 = vld [vmem:[%s9094 + $0x190] sm:$0xff]
        %v9146 = vld [vmem:[%s9094 + $0x198] sm:$0xff]
        %v9147 = vld [vmem:[%s9094 + $0x1a0] sm:$0xff]
        %v9148 = vld [vmem:[%s9094 + $0x1a8] sm:$0xff]
        %v9149 = vld [vmem:[%s9094 + $0x1b0] sm:$0xff]
        %v9150 = vld [vmem:[%s9094 + $0x1b8] sm:$0xff]
        %v9151 = vld [vmem:[%s9094 + $0x1c0] sm:$0xff]
        %v9152 = vld [vmem:[%s9094 + $0x1c8] sm:$0xff]
        %v9153 = vld [vmem:[%s9094 + $0x1d0] sm:$0xff]
        %v9154 = vld [vmem:[%s9094 + $0x1d8] sm:$0xff]
        %v9155 = vld [vmem:[%s9094 + $0x1e0] sm:$0xff]
        %v9156 = vld [vmem:[%s9094 + $0x1e8] sm:$0xff]
        %v9157 = vld [vmem:[%s9094 + $0x1f0] sm:$0xff]
        %v9158 = vld [vmem:[%s9094 + $0x1f8] sm:$0xff]
        %v9159 = vld [vmem:[%s9094 + $0x200] sm:$0xff]
        %v9160 = vld [vmem:[%s9094 + $0x208] sm:$0xff]
        %v9161 = vld [vmem:[%s9094 + $0x210] sm:$0xff]
        %v9162 = vld [vmem:[%s9094 + $0x218] sm:$0xff]
        %v9163 = vld [vmem:[%s9094 + $0x220] sm:$0xff]
        %v9164 = vld [vmem:[%s9094 + $0x228] sm:$0xff]
        %v9165 = vld [vmem:[%s9094 + $0x230] sm:$0xff]
        %v9166 = vld [vmem:[%s9094 + $0x238] sm:$0xff]
        %v9167 = vld [vmem:[%s9094 + $0x240] sm:$0xff]
        %v9168 = vld [vmem:[%s9094 + $0x248] sm:$0xff]
        %v9169 = vld [vmem:[%s9094 + $0x250] sm:$0xff]
        %v9170 = vld [vmem:[%s9094 + $0x258] sm:$0xff]
        %v9171 = vld [vmem:[%s9094 + $0x260] sm:$0xff]
        %v9172 = vld [vmem:[%s9094 + $0x268] sm:$0xff]
        %v9173 = vld [vmem:[%s9094 + $0x270] sm:$0xff]
        %v9174 = vld [vmem:[%s9094 + $0x278] sm:$0xff]
        %v9175 = vld [vmem:[%s9094 + $0x280] sm:$0xff]
        %v9176 = vld [vmem:[%s9094 + $0x288] sm:$0xff]
        %v9177 = vld [vmem:[%s9094 + $0x290] sm:$0xff]
        %v9178 = vld [vmem:[%s9094 + $0x298] sm:$0xff]
        %v9179 = vld [vmem:[%s9094 + $0x2a0] sm:$0xff]
        %v9180 = vld [vmem:[%s9094 + $0x2a8] sm:$0xff]
        %v9181 = vld [vmem:[%s9094 + $0x2b0] sm:$0xff]
        %v9182 = vld [vmem:[%s9094 + $0x2b8] sm:$0xff]
        %v9183 = vld [vmem:[%s9094 + $0x2c0] sm:$0xff]
        %v9184 = vld [vmem:[%s9094 + $0x2c8] sm:$0xff]
        %v9185 = vld [vmem:[%s9094 + $0x2d0] sm:$0xff]
        %v9186 = vld [vmem:[%s9094 + $0x2d8] sm:$0xff]
        %v9187 = vld [vmem:[%s9094 + $0x2e0] sm:$0xff]
        %v9188 = vld [vmem:[%s9094 + $0x2e8] sm:$0xff]
        %v9189 = vld [vmem:[%s9094 + $0x2f0] sm:$0xff]
        %v9190 = vld [vmem:[%s9094 + $0x2f8] sm:$0xff]
        %v9191 = vld [vmem:[%s9094 + $0x300] sm:$0xff]
        %v9192 = vld [vmem:[%s9094 + $0x308] sm:$0xff]
        %v9193 = vld [vmem:[%s9094 + $0x310] sm:$0xff]
        %v9194 = vld [vmem:[%s9094 + $0x318] sm:$0xff]
        %v9195 = vld [vmem:[%s9094 + $0x320] sm:$0xff]
        %v9196 = vld [vmem:[%s9094 + $0x328] sm:$0xff]
        %v9197 = vld [vmem:[%s9094 + $0x330] sm:$0xff]
        %v9198 = vld [vmem:[%s9094 + $0x338] sm:$0xff]
        %v9199 = vld [vmem:[%s9094 + $0x340] sm:$0xff]
        %v9200 = vld [vmem:[%s9094 + $0x348] sm:$0xff]
        %v9201 = vld [vmem:[%s9094 + $0x350] sm:$0xff]
        %v9202 = vld [vmem:[%s9094 + $0x358] sm:$0xff]
        %v9203 = vld [vmem:[%s9094 + $0x360] sm:$0xff]
        %v9204 = vld [vmem:[%s9094 + $0x368] sm:$0xff]
        %v9205 = vld [vmem:[%s9094 + $0x370] sm:$0xff]
        %v9206 = vld [vmem:[%s9094 + $0x378] sm:$0xff]
        %v9207 = vld [vmem:[%s9094 + $0x380] sm:$0xff]
        %v9208 = vld [vmem:[%s9094 + $0x388] sm:$0xff]
        %v9209 = vld [vmem:[%s9094 + $0x390] sm:$0xff]
        %v9210 = vld [vmem:[%s9094 + $0x398] sm:$0xff]
        %v9211 = vld [vmem:[%s9094 + $0x3a0] sm:$0xff]
        %v9212 = vld [vmem:[%s9094 + $0x3a8] sm:$0xff]
        %v9213 = vld [vmem:[%s9094 + $0x3b0] sm:$0xff]
        %v9214 = vld [vmem:[%s9094 + $0x3b8] sm:$0xff]
        %v9215 = vld [vmem:[%s9094 + $0x3c0] sm:$0xff]
        %v9216 = vld [vmem:[%s9094 + $0x3c8] sm:$0xff]
        %v9217 = vld [vmem:[%s9094 + $0x3d0] sm:$0xff]
        %v9218 = vld [vmem:[%s9094 + $0x3d8] sm:$0xff]
        %v9219 = vld [vmem:[%s9094 + $0x3e0] sm:$0xff]
        %v9220 = vld [vmem:[%s9094 + $0x3e8] sm:$0xff]
        %v9221 = vld [vmem:[%s9094 + $0x3f0] sm:$0xff]
        %v9222 = vld [vmem:[%s9094 + $0x3f8] sm:$0xff]
        %v9227 = vrot.slane %v9090, 1
        %v9228 = vrot.slane %v9091, 1
        %v9229 = vrot.slane %v9092, 1
        %v9230 = vrot.slane %v9093, 1
        %v9363 = vunpack.c.l.b16 %v9095
        %v9364 = vunpack.c.h.b16 %v9095
        %v9365 = vunpack.c.l.b16 %v9096
        %v9366 = vunpack.c.h.b16 %v9096
        %v9367 = vunpack.c.l.b16 %v9097
        %v9368 = vunpack.c.h.b16 %v9097
        %v9369 = vunpack.c.l.b16 %v9098
        %v9370 = vunpack.c.h.b16 %v9098
        %v9371 = vunpack.c.l.b16 %v9099
        %v9372 = vunpack.c.h.b16 %v9099
        %v9373 = vunpack.c.l.b16 %v9100
        %v9374 = vunpack.c.h.b16 %v9100
        %v9375 = vunpack.c.l.b16 %v9101
        %v9376 = vunpack.c.h.b16 %v9101
        %v9377 = vunpack.c.l.b16 %v9102
        %v9378 = vunpack.c.h.b16 %v9102
        %v9379 = vunpack.c.l.b16 %v9103
        %v9380 = vunpack.c.h.b16 %v9103
        %v9381 = vunpack.c.l.b16 %v9104
        %v9382 = vunpack.c.h.b16 %v9104
        %v9383 = vunpack.c.l.b16 %v9105
        %v9384 = vunpack.c.h.b16 %v9105
        %v9385 = vunpack.c.l.b16 %v9106
        %v9386 = vunpack.c.h.b16 %v9106
        %v9387 = vunpack.c.l.b16 %v9107
        %v9388 = vunpack.c.h.b16 %v9107
        %v9389 = vunpack.c.l.b16 %v9108
        %v9390 = vunpack.c.h.b16 %v9108
        %v9391 = vunpack.c.l.b16 %v9109
        %v9392 = vunpack.c.h.b16 %v9109
        %v9393 = vunpack.c.l.b16 %v9110
        %v9394 = vunpack.c.h.b16 %v9110
        %v9395 = vunpack.c.l.b16 %v9111
        %v9396 = vunpack.c.h.b16 %v9111
        %v9397 = vunpack.c.l.b16 %v9112
        %v9398 = vunpack.c.h.b16 %v9112
        %v9399 = vunpack.c.l.b16 %v9113
        %v9400 = vunpack.c.h.b16 %v9113
        %v9401 = vunpack.c.l.b16 %v9114
        %v9402 = vunpack.c.h.b16 %v9114
        %v9403 = vunpack.c.l.b16 %v9115
        %v9404 = vunpack.c.h.b16 %v9115
        %v9405 = vunpack.c.l.b16 %v9116
        %v9406 = vunpack.c.h.b16 %v9116
        %v9407 = vunpack.c.l.b16 %v9117
        %v9408 = vunpack.c.h.b16 %v9117
        %v9409 = vunpack.c.l.b16 %v9118
        %v9410 = vunpack.c.h.b16 %v9118
        %v9411 = vunpack.c.l.b16 %v9119
        %v9412 = vunpack.c.h.b16 %v9119
        %v9413 = vunpack.c.l.b16 %v9120
        %v9414 = vunpack.c.h.b16 %v9120
        %v9415 = vunpack.c.l.b16 %v9121
        %v9416 = vunpack.c.h.b16 %v9121
        %v9417 = vunpack.c.l.b16 %v9122
        %v9418 = vunpack.c.h.b16 %v9122
        %v9419 = vunpack.c.l.b16 %v9123
        %v9420 = vunpack.c.h.b16 %v9123
        %v9421 = vunpack.c.l.b16 %v9124
        %v9422 = vunpack.c.h.b16 %v9124
        %v9423 = vunpack.c.l.b16 %v9125
        %v9424 = vunpack.c.h.b16 %v9125
        %v9425 = vunpack.c.l.b16 %v9126
        %v9426 = vunpack.c.h.b16 %v9126
        %v9427 = vunpack.c.l.b16 %v9127
        %v9428 = vunpack.c.h.b16 %v9127
        %v9429 = vunpack.c.l.b16 %v9128
        %v9430 = vunpack.c.h.b16 %v9128
        %v9431 = vunpack.c.l.b16 %v9129
        %v9432 = vunpack.c.h.b16 %v9129
        %v9433 = vunpack.c.l.b16 %v9130
        %v9434 = vunpack.c.h.b16 %v9130
        %v9435 = vunpack.c.l.b16 %v9131
        %v9436 = vunpack.c.h.b16 %v9131
        %v9437 = vunpack.c.l.b16 %v9132
        %v9438 = vunpack.c.h.b16 %v9132
        %v9439 = vunpack.c.l.b16 %v9133
        %v9440 = vunpack.c.h.b16 %v9133
        %v9441 = vunpack.c.l.b16 %v9134
        %v9442 = vunpack.c.h.b16 %v9134
        %v9443 = vunpack.c.l.b16 %v9135
        %v9444 = vunpack.c.h.b16 %v9135
        %v9445 = vunpack.c.l.b16 %v9136
        %v9446 = vunpack.c.h.b16 %v9136
        %v9447 = vunpack.c.l.b16 %v9137
        %v9448 = vunpack.c.h.b16 %v9137
        %v9449 = vunpack.c.l.b16 %v9138
        %v9450 = vunpack.c.h.b16 %v9138
        %v9451 = vunpack.c.l.b16 %v9139
        %v9452 = vunpack.c.h.b16 %v9139
        %v9453 = vunpack.c.l.b16 %v9140
        %v9454 = vunpack.c.h.b16 %v9140
        %v9455 = vunpack.c.l.b16 %v9141
        %v9456 = vunpack.c.h.b16 %v9141
        %v9457 = vunpack.c.l.b16 %v9142
        %v9458 = vunpack.c.h.b16 %v9142
        %v9459 = vunpack.c.l.b16 %v9143
        %v9460 = vunpack.c.h.b16 %v9143
        %v9461 = vunpack.c.l.b16 %v9144
        %v9462 = vunpack.c.h.b16 %v9144
        %v9463 = vunpack.c.l.b16 %v9145
        %v9464 = vunpack.c.h.b16 %v9145
        %v9465 = vunpack.c.l.b16 %v9146
        %v9466 = vunpack.c.h.b16 %v9146
        %v9467 = vunpack.c.l.b16 %v9147
        %v9468 = vunpack.c.h.b16 %v9147
        %v9469 = vunpack.c.l.b16 %v9148
        %v9470 = vunpack.c.h.b16 %v9148
        %v9471 = vunpack.c.l.b16 %v9149
        %v9472 = vunpack.c.h.b16 %v9149
        %v9473 = vunpack.c.l.b16 %v9150
        %v9474 = vunpack.c.h.b16 %v9150
        %v9475 = vunpack.c.l.b16 %v9151
        %v9476 = vunpack.c.h.b16 %v9151
        %v9477 = vunpack.c.l.b16 %v9152
        %v9478 = vunpack.c.h.b16 %v9152
        %v9479 = vunpack.c.l.b16 %v9153
        %v9480 = vunpack.c.h.b16 %v9153
        %v9481 = vunpack.c.l.b16 %v9154
        %v9482 = vunpack.c.h.b16 %v9154
        %v9483 = vunpack.c.l.b16 %v9155
        %v9484 = vunpack.c.h.b16 %v9155
        %v9485 = vunpack.c.l.b16 %v9156
        %v9486 = vunpack.c.h.b16 %v9156
        %v9487 = vunpack.c.l.b16 %v9157
        %v9488 = vunpack.c.h.b16 %v9157
        %v9489 = vunpack.c.l.b16 %v9158
        %v9490 = vunpack.c.h.b16 %v9158
        %v9491 = vunpack.c.l.b16 %v9159
        %v9492 = vunpack.c.h.b16 %v9159
        %v9493 = vunpack.c.l.b16 %v9160
        %v9494 = vunpack.c.h.b16 %v9160
        %v9495 = vunpack.c.l.b16 %v9161
        %v9496 = vunpack.c.h.b16 %v9161
        %v9497 = vunpack.c.l.b16 %v9162
        %v9498 = vunpack.c.h.b16 %v9162
        %v9499 = vunpack.c.l.b16 %v9163
        %v9500 = vunpack.c.h.b16 %v9163
        %v9501 = vunpack.c.l.b16 %v9164
        %v9502 = vunpack.c.h.b16 %v9164
        %v9503 = vunpack.c.l.b16 %v9165
        %v9504 = vunpack.c.h.b16 %v9165
        %v9505 = vunpack.c.l.b16 %v9166
        %v9506 = vunpack.c.h.b16 %v9166
        %v9507 = vunpack.c.l.b16 %v9167
        %v9508 = vunpack.c.h.b16 %v9167
        %v9509 = vunpack.c.l.b16 %v9168
        %v9510 = vunpack.c.h.b16 %v9168
        %v9511 = vunpack.c.l.b16 %v9169
        %v9512 = vunpack.c.h.b16 %v9169
        %v9513 = vunpack.c.l.b16 %v9170
        %v9514 = vunpack.c.h.b16 %v9170
        %v9515 = vunpack.c.l.b16 %v9171
        %v9516 = vunpack.c.h.b16 %v9171
        %v9517 = vunpack.c.l.b16 %v9172
        %v9518 = vunpack.c.h.b16 %v9172
        %v9519 = vunpack.c.l.b16 %v9173
        %v9520 = vunpack.c.h.b16 %v9173
        %v9521 = vunpack.c.l.b16 %v9174
        %v9522 = vunpack.c.h.b16 %v9174
        %v9523 = vunpack.c.l.b16 %v9175
        %v9524 = vunpack.c.h.b16 %v9175
        %v9525 = vunpack.c.l.b16 %v9176
        %v9526 = vunpack.c.h.b16 %v9176
        %v9527 = vunpack.c.l.b16 %v9177
        %v9528 = vunpack.c.h.b16 %v9177
        %v9529 = vunpack.c.l.b16 %v9178
        %v9530 = vunpack.c.h.b16 %v9178
        %v9531 = vunpack.c.l.b16 %v9179
        %v9532 = vunpack.c.h.b16 %v9179
        %v9533 = vunpack.c.l.b16 %v9180
        %v9534 = vunpack.c.h.b16 %v9180
        %v9535 = vunpack.c.l.b16 %v9181
        %v9536 = vunpack.c.h.b16 %v9181
        %v9537 = vunpack.c.l.b16 %v9182
        %v9538 = vunpack.c.h.b16 %v9182
        %v9539 = vunpack.c.l.b16 %v9183
        %v9540 = vunpack.c.h.b16 %v9183
        %v9541 = vunpack.c.l.b16 %v9184
        %v9542 = vunpack.c.h.b16 %v9184
        %v9543 = vunpack.c.l.b16 %v9185
        %v9544 = vunpack.c.h.b16 %v9185
        %v9545 = vunpack.c.l.b16 %v9186
        %v9546 = vunpack.c.h.b16 %v9186
        %v9547 = vunpack.c.l.b16 %v9187
        %v9548 = vunpack.c.h.b16 %v9187
        %v9549 = vunpack.c.l.b16 %v9188
        %v9550 = vunpack.c.h.b16 %v9188
        %v9551 = vunpack.c.l.b16 %v9189
        %v9552 = vunpack.c.h.b16 %v9189
        %v9553 = vunpack.c.l.b16 %v9190
        %v9554 = vunpack.c.h.b16 %v9190
        %v9555 = vunpack.c.l.b16 %v9191
        %v9556 = vunpack.c.h.b16 %v9191
        %v9557 = vunpack.c.l.b16 %v9192
        %v9558 = vunpack.c.h.b16 %v9192
        %v9559 = vunpack.c.l.b16 %v9193
        %v9560 = vunpack.c.h.b16 %v9193
        %v9561 = vunpack.c.l.b16 %v9194
        %v9562 = vunpack.c.h.b16 %v9194
        %v9563 = vunpack.c.l.b16 %v9195
        %v9564 = vunpack.c.h.b16 %v9195
        %v9565 = vunpack.c.l.b16 %v9196
        %v9566 = vunpack.c.h.b16 %v9196
        %v9567 = vunpack.c.l.b16 %v9197
        %v9568 = vunpack.c.h.b16 %v9197
        %v9569 = vunpack.c.l.b16 %v9198
        %v9570 = vunpack.c.h.b16 %v9198
        %v9571 = vunpack.c.l.b16 %v9199
        %v9572 = vunpack.c.h.b16 %v9199
        %v9573 = vunpack.c.l.b16 %v9200
        %v9574 = vunpack.c.h.b16 %v9200
        %v9575 = vunpack.c.l.b16 %v9201
        %v9576 = vunpack.c.h.b16 %v9201
        %v9577 = vunpack.c.l.b16 %v9202
        %v9578 = vunpack.c.h.b16 %v9202
        %v9579 = vunpack.c.l.b16 %v9203
        %v9580 = vunpack.c.h.b16 %v9203
        %v9581 = vunpack.c.l.b16 %v9204
        %v9582 = vunpack.c.h.b16 %v9204
        %v9583 = vunpack.c.l.b16 %v9205
        %v9584 = vunpack.c.h.b16 %v9205
        %v9585 = vunpack.c.l.b16 %v9206
        %v9586 = vunpack.c.h.b16 %v9206
        %v9587 = vunpack.c.l.b16 %v9207
        %v9588 = vunpack.c.h.b16 %v9207
        %v9589 = vunpack.c.l.b16 %v9208
        %v9590 = vunpack.c.h.b16 %v9208
        %v9591 = vunpack.c.l.b16 %v9209
        %v9592 = vunpack.c.h.b16 %v9209
        %v9593 = vunpack.c.l.b16 %v9210
        %v9594 = vunpack.c.h.b16 %v9210
        %v9595 = vunpack.c.l.b16 %v9211
        %v9596 = vunpack.c.h.b16 %v9211
        %v9597 = vunpack.c.l.b16 %v9212
        %v9598 = vunpack.c.h.b16 %v9212
        %v9599 = vunpack.c.l.b16 %v9213
        %v9600 = vunpack.c.h.b16 %v9213
        %v9601 = vunpack.c.l.b16 %v9214
        %v9602 = vunpack.c.h.b16 %v9214
        %v9603 = vunpack.c.l.b16 %v9215
        %v9604 = vunpack.c.h.b16 %v9215
        %v9605 = vunpack.c.l.b16 %v9216
        %v9606 = vunpack.c.h.b16 %v9216
        %v9607 = vunpack.c.l.b16 %v9217
        %v9608 = vunpack.c.h.b16 %v9217
        %v9609 = vunpack.c.l.b16 %v9218
        %v9610 = vunpack.c.h.b16 %v9218
        %v9611 = vunpack.c.l.b16 %v9219
        %v9612 = vunpack.c.h.b16 %v9219
        %v9613 = vunpack.c.l.b16 %v9220
        %v9614 = vunpack.c.h.b16 %v9220
        %v9615 = vunpack.c.l.b16 %v9221
        %v9616 = vunpack.c.h.b16 %v9221
        %v9617 = vunpack.c.l.b16 %v9222
        %v9618 = vunpack.c.h.b16 %v9222
        %v9619 = vpack.c.b16 %v9367, %v9363
        %v9620 = vpack.c.b16 %v9368, %v9364
        %v9621 = vpack.c.b16 %v9369, %v9365
        %v9622 = vpack.c.b16 %v9370, %v9366
        %v9623 = vpack.c.b16 %v9375, %v9371
        %v9624 = vpack.c.b16 %v9376, %v9372
        %v9625 = vpack.c.b16 %v9377, %v9373
        %v9626 = vpack.c.b16 %v9378, %v9374
        %v9627 = vpack.c.b16 %v9383, %v9379
        %v9628 = vpack.c.b16 %v9384, %v9380
        %v9629 = vpack.c.b16 %v9385, %v9381
        %v9630 = vpack.c.b16 %v9386, %v9382
        %v9631 = vpack.c.b16 %v9391, %v9387
        %v9632 = vpack.c.b16 %v9392, %v9388
        %v9633 = vpack.c.b16 %v9393, %v9389
        %v9634 = vpack.c.b16 %v9394, %v9390
        %v9635 = vpack.c.b16 %v9399, %v9395
        %v9636 = vpack.c.b16 %v9400, %v9396
        %v9637 = vpack.c.b16 %v9401, %v9397
        %v9638 = vpack.c.b16 %v9402, %v9398
        %v9639 = vpack.c.b16 %v9407, %v9403
        %v9640 = vpack.c.b16 %v9408, %v9404
        %v9641 = vpack.c.b16 %v9409, %v9405
        %v9642 = vpack.c.b16 %v9410, %v9406
        %v9643 = vpack.c.b16 %v9415, %v9411
        %v9644 = vpack.c.b16 %v9416, %v9412
        %v9645 = vpack.c.b16 %v9417, %v9413
        %v9646 = vpack.c.b16 %v9418, %v9414
        %v9647 = vpack.c.b16 %v9423, %v9419
        %v9648 = vpack.c.b16 %v9424, %v9420
        %v9649 = vpack.c.b16 %v9425, %v9421
        %v9650 = vpack.c.b16 %v9426, %v9422
        %v9651 = vpack.c.b16 %v9431, %v9427
        %v9652 = vpack.c.b16 %v9432, %v9428
        %v9653 = vpack.c.b16 %v9433, %v9429
        %v9654 = vpack.c.b16 %v9434, %v9430
        %v9655 = vpack.c.b16 %v9439, %v9435
        %v9656 = vpack.c.b16 %v9440, %v9436
        %v9657 = vpack.c.b16 %v9441, %v9437
        %v9658 = vpack.c.b16 %v9442, %v9438
        %v9659 = vpack.c.b16 %v9447, %v9443
        %v9660 = vpack.c.b16 %v9448, %v9444
        %v9661 = vpack.c.b16 %v9449, %v9445
        %v9662 = vpack.c.b16 %v9450, %v9446
        %v9663 = vpack.c.b16 %v9455, %v9451
        %v9664 = vpack.c.b16 %v9456, %v9452
        %v9665 = vpack.c.b16 %v9457, %v9453
        %v9666 = vpack.c.b16 %v9458, %v9454
        %v9667 = vpack.c.b16 %v9463, %v9459
        %v9668 = vpack.c.b16 %v9464, %v9460
        %v9669 = vpack.c.b16 %v9465, %v9461
        %v9670 = vpack.c.b16 %v9466, %v9462
        %v9671 = vpack.c.b16 %v9471, %v9467
        %v9672 = vpack.c.b16 %v9472, %v9468
        %v9673 = vpack.c.b16 %v9473, %v9469
        %v9674 = vpack.c.b16 %v9474, %v9470
        %v9675 = vpack.c.b16 %v9479, %v9475
        %v9676 = vpack.c.b16 %v9480, %v9476
        %v9677 = vpack.c.b16 %v9481, %v9477
        %v9678 = vpack.c.b16 %v9482, %v9478
        %v9679 = vpack.c.b16 %v9487, %v9483
        %v9680 = vpack.c.b16 %v9488, %v9484
        %v9681 = vpack.c.b16 %v9489, %v9485
        %v9682 = vpack.c.b16 %v9490, %v9486
        %v9683 = vpack.c.b16 %v9495, %v9491
        %v9684 = vpack.c.b16 %v9496, %v9492
        %v9685 = vpack.c.b16 %v9497, %v9493
        %v9686 = vpack.c.b16 %v9498, %v9494
        %v9687 = vpack.c.b16 %v9503, %v9499
        %v9688 = vpack.c.b16 %v9504, %v9500
        %v9689 = vpack.c.b16 %v9505, %v9501
        %v9690 = vpack.c.b16 %v9506, %v9502
        %v9691 = vpack.c.b16 %v9511, %v9507
        %v9692 = vpack.c.b16 %v9512, %v9508
        %v9693 = vpack.c.b16 %v9513, %v9509
        %v9694 = vpack.c.b16 %v9514, %v9510
        %v9695 = vpack.c.b16 %v9519, %v9515
        %v9696 = vpack.c.b16 %v9520, %v9516
        %v9697 = vpack.c.b16 %v9521, %v9517
        %v9698 = vpack.c.b16 %v9522, %v9518
        %v9699 = vpack.c.b16 %v9527, %v9523
        %v9700 = vpack.c.b16 %v9528, %v9524
        %v9701 = vpack.c.b16 %v9529, %v9525
        %v9702 = vpack.c.b16 %v9530, %v9526
        %v9703 = vpack.c.b16 %v9535, %v9531
        %v9704 = vpack.c.b16 %v9536, %v9532
        %v9705 = vpack.c.b16 %v9537, %v9533
        %v9706 = vpack.c.b16 %v9538, %v9534
        %v9707 = vpack.c.b16 %v9543, %v9539
        %v9708 = vpack.c.b16 %v9544, %v9540
        %v9709 = vpack.c.b16 %v9545, %v9541
        %v9710 = vpack.c.b16 %v9546, %v9542
        %v9711 = vpack.c.b16 %v9551, %v9547
        %v9712 = vpack.c.b16 %v9552, %v9548
        %v9713 = vpack.c.b16 %v9553, %v9549
        %v9714 = vpack.c.b16 %v9554, %v9550
        %v9715 = vpack.c.b16 %v9559, %v9555
        %v9716 = vpack.c.b16 %v9560, %v9556
        %v9717 = vpack.c.b16 %v9561, %v9557
        %v9718 = vpack.c.b16 %v9562, %v9558
        %v9719 = vpack.c.b16 %v9567, %v9563
        %v9720 = vpack.c.b16 %v9568, %v9564
        %v9721 = vpack.c.b16 %v9569, %v9565
        %v9722 = vpack.c.b16 %v9570, %v9566
        %v9723 = vpack.c.b16 %v9575, %v9571
        %v9724 = vpack.c.b16 %v9576, %v9572
        %v9725 = vpack.c.b16 %v9577, %v9573
        %v9726 = vpack.c.b16 %v9578, %v9574
        %v9727 = vpack.c.b16 %v9583, %v9579
        %v9728 = vpack.c.b16 %v9584, %v9580
        %v9729 = vpack.c.b16 %v9585, %v9581
        %v9730 = vpack.c.b16 %v9586, %v9582
        %v9731 = vpack.c.b16 %v9591, %v9587
        %v9732 = vpack.c.b16 %v9592, %v9588
        %v9733 = vpack.c.b16 %v9593, %v9589
        %v9734 = vpack.c.b16 %v9594, %v9590
        %v9735 = vpack.c.b16 %v9599, %v9595
        %v9736 = vpack.c.b16 %v9600, %v9596
        %v9737 = vpack.c.b16 %v9601, %v9597
        %v9738 = vpack.c.b16 %v9602, %v9598
        %v9739 = vpack.c.b16 %v9607, %v9603
        %v9740 = vpack.c.b16 %v9608, %v9604
        %v9741 = vpack.c.b16 %v9609, %v9605
        %v9742 = vpack.c.b16 %v9610, %v9606
        %v9743 = vpack.c.b16 %v9615, %v9611
        %v9744 = vpack.c.b16 %v9616, %v9612
        %v9745 = vpack.c.b16 %v9617, %v9613
        %v9746 = vpack.c.b16 %v9618, %v9614
        %9875 = vmatprep.subr.bf16.mxu0 %v9620
        %9876 = vmatpush1.bf16.msra.mxu0 %v9619
        %9877 = vmatprep.subr.bf16.mxu0 %v9624
        %9878 = vmatpush1.bf16.msra.mxu0 %v9623
        %9879 = vmatprep.subr.bf16.mxu0 %v9628
        %9880 = vmatpush1.bf16.msra.mxu0 %v9627
        %9881 = vmatprep.subr.bf16.mxu0 %v9632
        %9882 = vmatpush1.bf16.msra.mxu0 %v9631
        %9883 = vmatprep.subr.bf16.mxu0 %v9636
        %9884 = vmatpush1.bf16.msra.mxu0 %v9635
        %9885 = vmatprep.subr.bf16.mxu0 %v9640
        %9886 = vmatpush1.bf16.msra.mxu0 %v9639
        %9887 = vmatprep.subr.bf16.mxu0 %v9644
        %9888 = vmatpush1.bf16.msra.mxu0 %v9643
        %9889 = vmatprep.subr.bf16.mxu0 %v9648
        %9890 = vmatpush1.bf16.msra.mxu0 %v9647
        %9891 = vmatprep.subr.bf16.mxu0 %v9652
        %9892 = vmatpush1.bf16.msra.mxu0 %v9651
        %9893 = vmatprep.subr.bf16.mxu0 %v9656
        %9894 = vmatpush1.bf16.msra.mxu0 %v9655
        %9895 = vmatprep.subr.bf16.mxu0 %v9660
        %9896 = vmatpush1.bf16.msra.mxu0 %v9659
        %9897 = vmatprep.subr.bf16.mxu0 %v9664
        %9898 = vmatpush1.bf16.msra.mxu0 %v9663
        %9899 = vmatprep.subr.bf16.mxu0 %v9668
        %9900 = vmatpush1.bf16.msra.mxu0 %v9667
        %9901 = vmatprep.subr.bf16.mxu0 %v9672
        %9902 = vmatpush1.bf16.msra.mxu0 %v9671
        %9903 = vmatprep.subr.bf16.mxu0 %v9676
        %9904 = vmatpush1.bf16.msra.mxu0 %v9675
        %9905 = vmatprep.subr.bf16.mxu0 %v9680
        %9906 = vmatpush1.bf16.msra.mxu0 %v9679
        %9907 = vmatprep.mubr.bf16.mxu0 %v9228
        %9908 = vmatmul.mubr.bf16.gmra.mrb[0].mxu0 %v9227
        %v9909 = vpop.f32.mrb[0].mxu0
        %v9910 = vadd.f32 0.0, %v9909
        %v9911 = vpop.f32.mrb[0].mxu0
        %v9912 = vadd.f32 0.0, %v9911
        %v9913 = vpop.f32.mrb[0].mxu0
        %v9914 = vpop.f32.mrb[0].mxu0
        %9915 = vdwg.mxu0
        %9916 = vmatprep.subr.bf16.mxu0 %v9684
        %9917 = vmatpush1.bf16.msra.mxu0 %v9683
        %9918 = vmatprep.subr.bf16.mxu0 %v9688
        %9919 = vmatpush1.bf16.msra.mxu0 %v9687
        %9920 = vmatprep.subr.bf16.mxu0 %v9692
        %9921 = vmatpush1.bf16.msra.mxu0 %v9691
        %9922 = vmatprep.subr.bf16.mxu0 %v9696
        %9923 = vmatpush1.bf16.msra.mxu0 %v9695
        %9924 = vmatprep.subr.bf16.mxu0 %v9700
        %9925 = vmatpush1.bf16.msra.mxu0 %v9699
        %9926 = vmatprep.subr.bf16.mxu0 %v9704
        %9927 = vmatpush1.bf16.msra.mxu0 %v9703
        %9928 = vmatprep.subr.bf16.mxu0 %v9708
        %9929 = vmatpush1.bf16.msra.mxu0 %v9707
        %9930 = vmatprep.subr.bf16.mxu0 %v9712
        %9931 = vmatpush1.bf16.msra.mxu0 %v9711
        %9932 = vmatprep.subr.bf16.mxu0 %v9716
        %9933 = vmatpush1.bf16.msra.mxu0 %v9715
        %9934 = vmatprep.subr.bf16.mxu0 %v9720
        %9935 = vmatpush1.bf16.msra.mxu0 %v9719
        %9936 = vmatprep.subr.bf16.mxu0 %v9724
        %9937 = vmatpush1.bf16.msra.mxu0 %v9723
        %9938 = vmatprep.subr.bf16.mxu0 %v9728
        %9939 = vmatpush1.bf16.msra.mxu0 %v9727
        %9940 = vmatprep.subr.bf16.mxu0 %v9732
        %9941 = vmatpush1.bf16.msra.mxu0 %v9731
        %9942 = vmatprep.subr.bf16.mxu0 %v9736
        %9943 = vmatpush1.bf16.msra.mxu0 %v9735
        %9944 = vmatprep.subr.bf16.mxu0 %v9740
        %9945 = vmatpush1.bf16.msra.mxu0 %v9739
        %9946 = vmatprep.subr.bf16.mxu0 %v9744
        %9947 = vmatpush1.bf16.msra.mxu0 %v9743
        %9948 = vmatprep.mubr.bf16.mxu0 %v9230
        %9949 = vmatmul.mubr.bf16.gmra.mrb[0].mxu0 %v9229
        %v9950 = vpop.f32.mrb[0].mxu0
        %v9951 = vadd.f32 %v9910, %v9950
        %v9952 = vpop.f32.mrb[0].mxu0
        %v9953 = vadd.f32 %v9912, %v9952
        %v9954 = vpop.f32.mrb[0].mxu0
        %v9955 = vpop.f32.mrb[0].mxu0
        %9956 = vdwg.mxu0
        %9957 = vmatprep.subr.bf16.mxu0 %v9622
        %9958 = vmatpush1.bf16.msra.mxu0 %v9621
        %9959 = vmatprep.subr.bf16.mxu0 %v9626
        %9960 = vmatpush1.bf16.msra.mxu0 %v9625
        %9961 = vmatprep.subr.bf16.mxu0 %v9630
        %9962 = vmatpush1.bf16.msra.mxu0 %v9629
        %9963 = vmatprep.subr.bf16.mxu0 %v9634
        %9964 = vmatpush1.bf16.msra.mxu0 %v9633
        %9965 = vmatprep.subr.bf16.mxu0 %v9638
        %9966 = vmatpush1.bf16.msra.mxu0 %v9637
        %9967 = vmatprep.subr.bf16.mxu0 %v9642
        %9968 = vmatpush1.bf16.msra.mxu0 %v9641
        %9969 = vmatprep.subr.bf16.mxu0 %v9646
        %9970 = vmatpush1.bf16.msra.mxu0 %v9645
        %9971 = vmatprep.subr.bf16.mxu0 %v9650
        %9972 = vmatpush1.bf16.msra.mxu0 %v9649
        %9973 = vmatprep.subr.bf16.mxu0 %v9654
        %9974 = vmatpush1.bf16.msra.mxu0 %v9653
        %9975 = vmatprep.subr.bf16.mxu0 %v9658
        %9976 = vmatpush1.bf16.msra.mxu0 %v9657
        %9977 = vmatprep.subr.bf16.mxu0 %v9662
        %9978 = vmatpush1.bf16.msra.mxu0 %v9661
        %9979 = vmatprep.subr.bf16.mxu0 %v9666
        %9980 = vmatpush1.bf16.msra.mxu0 %v9665
        %9981 = vmatprep.subr.bf16.mxu0 %v9670
        %9982 = vmatpush1.bf16.msra.mxu0 %v9669
        %9983 = vmatprep.subr.bf16.mxu0 %v9674
        %9984 = vmatpush1.bf16.msra.mxu0 %v9673
        %9985 = vmatprep.subr.bf16.mxu0 %v9678
        %9986 = vmatpush1.bf16.msra.mxu0 %v9677
        %9987 = vmatprep.subr.bf16.mxu0 %v9682
        %9988 = vmatpush1.bf16.msra.mxu0 %v9681
        %9989 = vmatprep.mubr.bf16.mxu0 %v9228
        %9990 = vmatmul.mubr.bf16.gmra.mrb[0].mxu0 %v9227
        %v9991 = vpop.f32.mrb[0].mxu0
        %v9992 = vadd.f32 0.0, %v9991
        %v9993 = vpop.f32.mrb[0].mxu0
        %v9994 = vadd.f32 0.0, %v9993
        %v9995 = vpop.f32.mrb[0].mxu0
        %v9996 = vpop.f32.mrb[0].mxu0
        %9997 = vdwg.mxu0
        %9998 = vmatprep.subr.bf16.mxu0 %v9686
        %9999 = vmatpush1.bf16.msra.mxu0 %v9685
        %10000 = vmatprep.subr.bf16.mxu0 %v9690
        %10001 = vmatpush1.bf16.msra.mxu0 %v9689
        %10002 = vmatprep.subr.bf16.mxu0 %v9694
        %10003 = vmatpush1.bf16.msra.mxu0 %v9693
        %10004 = vmatprep.subr.bf16.mxu0 %v9698
        %10005 = vmatpush1.bf16.msra.mxu0 %v9697
        %10006 = vmatprep.subr.bf16.mxu0 %v9702
        %10007 = vmatpush1.bf16.msra.mxu0 %v9701
        %10008 = vmatprep.subr.bf16.mxu0 %v9706
        %10009 = vmatpush1.bf16.msra.mxu0 %v9705
        %10010 = vmatprep.subr.bf16.mxu0 %v9710
        %10011 = vmatpush1.bf16.msra.mxu0 %v9709
        %10012 = vmatprep.subr.bf16.mxu0 %v9714
        %10013 = vmatpush1.bf16.msra.mxu0 %v9713
        %10014 = vmatprep.subr.bf16.mxu0 %v9718
        %10015 = vmatpush1.bf16.msra.mxu0 %v9717
        %10016 = vmatprep.subr.bf16.mxu0 %v9722
        %10017 = vmatpush1.bf16.msra.mxu0 %v9721
        %10018 = vmatprep.subr.bf16.mxu0 %v9726
        %10019 = vmatpush1.bf16.msra.mxu0 %v9725
        %10020 = vmatprep.subr.bf16.mxu0 %v9730
        %10021 = vmatpush1.bf16.msra.mxu0 %v9729
        %10022 = vmatprep.subr.bf16.mxu0 %v9734
        %10023 = vmatpush1.bf16.msra.mxu0 %v9733
        %10024 = vmatprep.subr.bf16.mxu0 %v9738
        %10025 = vmatpush1.bf16.msra.mxu0 %v9737
        %10026 = vmatprep.subr.bf16.mxu0 %v9742
        %10027 = vmatpush1.bf16.msra.mxu0 %v9741
        %10028 = vmatprep.subr.bf16.mxu0 %v9746
        %10029 = vmatpush1.bf16.msra.mxu0 %v9745
        %10030 = vmatprep.mubr.bf16.mxu0 %v9230
        %10031 = vmatmul.mubr.bf16.gmra.mrb[0].mxu0 %v9229
        %v10032 = vpop.f32.mrb[0].mxu0
        %v10033 = vadd.f32 %v9992, %v10032
        %v10034 = vpop.f32.mrb[0].mxu0
        %v10035 = vadd.f32 %v9994, %v10034
        %v10036 = vpop.f32.mrb[0].mxu0
        %v10037 = vpop.f32.mrb[0].mxu0
        %10038 = vdwg.mxu0
        %v10039 = vadd.f32 %v8996, %v9951
        %v10040 = vadd.f32 %v8998, %v9953
        %v10041 = vadd.f32 %v9078, %v10033
        %v10042 = vadd.f32 %v9080, %v10035
        %v10043 = vld [vmem:[#allocation43] sm:$0xf]
        %v10045 = vlaneseq
        %v10046 = vshrl.u32 %v10045, 7
        %v10047 = vsub.s32 0, %v10046
        %v10048 = vrot.slane %v10043, %v10047
        %v10049 = vlaneseq
        %v10050 = vshrl.u32 %v10049, 7
        %v10051 = vsub.s32 1, %v10050
        %v10052 = vrot.slane %v10043, %v10051
        %v10053 = vlaneseq
        %v10054 = vshrl.u32 %v10053, 7
        %v10055 = vsub.s32 2, %v10054
        %v10056 = vrot.slane %v10043, %v10055
        %v10057 = vlaneseq
        %v10058 = vshrl.u32 %v10057, 7
        %v10059 = vsub.s32 3, %v10058
        %v10060 = vrot.slane %v10043, %v10059
        %v10065 = vadd.f32 %v10039, %v10048
        %v10066 = vadd.f32 %v10040, %v10052
        %v10067 = vadd.f32 %v10041, %v10056
        %v10068 = vadd.f32 %v10042, %v10060
        %v10069 = vadd.f32 %v10065, %v5448
        %v10070 = vadd.f32 %v10066, %v5450
        %v10071 = vadd.f32 %v10067, %v5519
        %v10072 = vadd.f32 %v10068, %v5521
        %v10073 = vmax.f32 %v10069, 0.0
        %v10074 = vmax.f32 %v10070, 0.0
        %v10075 = vmax.f32 %v10071, 0.0
        %v10076 = vmax.f32 %v10072, 0.0
        %v10077 = vpack.c.bf16 %v10073, %v10073
        %v10078 = vpack.c.bf16 %v10074, %v10074
        %v10079 = vpack.c.bf16 %v10075, %v10075
        %v10080 = vpack.c.bf16 %v10076, %v10076
        %v10081 = vld [vmem:[%s13] sm:$0xf]
        %v10082 = vld [vmem:[%s13 + $0x4] sm:$0xf]
        %v10083 = vld [vmem:[%s13 + $0x8] sm:$0xf]
        %v10084 = vld [vmem:[%s13 + $0xc] sm:$0xf]
        %v10085 = vld [vmem:[%s13 + $0x10] sm:$0xf]
        %v10086 = vld [vmem:[%s13 + $0x14] sm:$0xf]
        %v10087 = vld [vmem:[%s13 + $0x18] sm:$0xf]
        %v10088 = vld [vmem:[%s13 + $0x1c] sm:$0xf]
        %v10089 = vld [vmem:[%s13 + $0x20] sm:$0xf]
        %v10090 = vld [vmem:[%s13 + $0x24] sm:$0xf]
        %v10091 = vld [vmem:[%s13 + $0x28] sm:$0xf]
        %v10092 = vld [vmem:[%s13 + $0x2c] sm:$0xf]
        %v10093 = vld [vmem:[%s13 + $0x30] sm:$0xf]
        %v10094 = vld [vmem:[%s13 + $0x34] sm:$0xf]
        %v10095 = vld [vmem:[%s13 + $0x38] sm:$0xf]
        %v10096 = vld [vmem:[%s13 + $0x3c] sm:$0xf]
        %v10097 = vld [vmem:[%s13 + $0x40] sm:$0xf]
        %v10098 = vld [vmem:[%s13 + $0x44] sm:$0xf]
        %v10099 = vld [vmem:[%s13 + $0x48] sm:$0xf]
        %v10100 = vld [vmem:[%s13 + $0x4c] sm:$0xf]
        %v10101 = vld [vmem:[%s13 + $0x50] sm:$0xf]
        %v10102 = vld [vmem:[%s13 + $0x54] sm:$0xf]
        %v10103 = vld [vmem:[%s13 + $0x58] sm:$0xf]
        %v10104 = vld [vmem:[%s13 + $0x5c] sm:$0xf]
        %v10105 = vld [vmem:[%s13 + $0x60] sm:$0xf]
        %v10106 = vld [vmem:[%s13 + $0x64] sm:$0xf]
        %v10107 = vld [vmem:[%s13 + $0x68] sm:$0xf]
        %v10108 = vld [vmem:[%s13 + $0x6c] sm:$0xf]
        %v10109 = vld [vmem:[%s13 + $0x70] sm:$0xf]
        %v10110 = vld [vmem:[%s13 + $0x74] sm:$0xf]
        %v10111 = vld [vmem:[%s13 + $0x78] sm:$0xf]
        %v10112 = vld [vmem:[%s13 + $0x7c] sm:$0xf]
        %v10113 = vld [vmem:[%s13 + $0x80] sm:$0xf]
        %v10114 = vld [vmem:[%s13 + $0x84] sm:$0xf]
        %v10115 = vld [vmem:[%s13 + $0x88] sm:$0xf]
        %v10116 = vld [vmem:[%s13 + $0x8c] sm:$0xf]
        %v10117 = vld [vmem:[%s13 + $0x90] sm:$0xf]
        %v10118 = vld [vmem:[%s13 + $0x94] sm:$0xf]
        %v10119 = vld [vmem:[%s13 + $0x98] sm:$0xf]
        %v10120 = vld [vmem:[%s13 + $0x9c] sm:$0xf]
        %v10121 = vld [vmem:[%s13 + $0xa0] sm:$0xf]
        %v10122 = vld [vmem:[%s13 + $0xa4] sm:$0xf]
        %v10123 = vld [vmem:[%s13 + $0xa8] sm:$0xf]
        %v10124 = vld [vmem:[%s13 + $0xac] sm:$0xf]
        %v10125 = vld [vmem:[%s13 + $0xb0] sm:$0xf]
        %v10126 = vld [vmem:[%s13 + $0xb4] sm:$0xf]
        %v10127 = vld [vmem:[%s13 + $0xb8] sm:$0xf]
        %v10128 = vld [vmem:[%s13 + $0xbc] sm:$0xf]
        %v10129 = vld [vmem:[%s13 + $0xc0] sm:$0xf]
        %v10130 = vld [vmem:[%s13 + $0xc4] sm:$0xf]
        %v10131 = vld [vmem:[%s13 + $0xc8] sm:$0xf]
        %v10132 = vld [vmem:[%s13 + $0xcc] sm:$0xf]
        %v10133 = vld [vmem:[%s13 + $0xd0] sm:$0xf]
        %v10134 = vld [vmem:[%s13 + $0xd4] sm:$0xf]
        %v10135 = vld [vmem:[%s13 + $0xd8] sm:$0xf]
        %v10136 = vld [vmem:[%s13 + $0xdc] sm:$0xf]
        %v10137 = vld [vmem:[%s13 + $0xe0] sm:$0xf]
        %v10138 = vld [vmem:[%s13 + $0xe4] sm:$0xf]
        %v10139 = vld [vmem:[%s13 + $0xe8] sm:$0xf]
        %v10140 = vld [vmem:[%s13 + $0xec] sm:$0xf]
        %v10141 = vld [vmem:[%s13 + $0xf0] sm:$0xf]
        %v10142 = vld [vmem:[%s13 + $0xf4] sm:$0xf]
        %v10143 = vld [vmem:[%s13 + $0xf8] sm:$0xf]
        %v10144 = vld [vmem:[%s13 + $0xfc] sm:$0xf]
        %s10145 = scalar_lea.vmem %s13, 256
        %v10146 = vld [vmem:[%s10145] sm:$0xf]
        %v10147 = vld [vmem:[%s10145 + $0x4] sm:$0xf]
        %v10148 = vld [vmem:[%s10145 + $0x8] sm:$0xf]
        %v10149 = vld [vmem:[%s10145 + $0xc] sm:$0xf]
        %v10150 = vld [vmem:[%s10145 + $0x10] sm:$0xf]
        %v10151 = vld [vmem:[%s10145 + $0x14] sm:$0xf]
        %v10152 = vld [vmem:[%s10145 + $0x18] sm:$0xf]
        %v10153 = vld [vmem:[%s10145 + $0x1c] sm:$0xf]
        %v10154 = vld [vmem:[%s10145 + $0x20] sm:$0xf]
        %v10155 = vld [vmem:[%s10145 + $0x24] sm:$0xf]
        %v10156 = vld [vmem:[%s10145 + $0x28] sm:$0xf]
        %v10157 = vld [vmem:[%s10145 + $0x2c] sm:$0xf]
        %v10158 = vld [vmem:[%s10145 + $0x30] sm:$0xf]
        %v10159 = vld [vmem:[%s10145 + $0x34] sm:$0xf]
        %v10160 = vld [vmem:[%s10145 + $0x38] sm:$0xf]
        %v10161 = vld [vmem:[%s10145 + $0x3c] sm:$0xf]
        %v10162 = vld [vmem:[%s10145 + $0x40] sm:$0xf]
        %v10163 = vld [vmem:[%s10145 + $0x44] sm:$0xf]
        %v10164 = vld [vmem:[%s10145 + $0x48] sm:$0xf]
        %v10165 = vld [vmem:[%s10145 + $0x4c] sm:$0xf]
        %v10166 = vld [vmem:[%s10145 + $0x50] sm:$0xf]
        %v10167 = vld [vmem:[%s10145 + $0x54] sm:$0xf]
        %v10168 = vld [vmem:[%s10145 + $0x58] sm:$0xf]
        %v10169 = vld [vmem:[%s10145 + $0x5c] sm:$0xf]
        %v10170 = vld [vmem:[%s10145 + $0x60] sm:$0xf]
        %v10171 = vld [vmem:[%s10145 + $0x64] sm:$0xf]
        %v10172 = vld [vmem:[%s10145 + $0x68] sm:$0xf]
        %v10173 = vld [vmem:[%s10145 + $0x6c] sm:$0xf]
        %v10174 = vld [vmem:[%s10145 + $0x70] sm:$0xf]
        %v10175 = vld [vmem:[%s10145 + $0x74] sm:$0xf]
        %v10176 = vld [vmem:[%s10145 + $0x78] sm:$0xf]
        %v10177 = vld [vmem:[%s10145 + $0x7c] sm:$0xf]
        %v10178 = vld [vmem:[%s10145 + $0x80] sm:$0xf]
        %v10179 = vld [vmem:[%s10145 + $0x84] sm:$0xf]
        %v10180 = vld [vmem:[%s10145 + $0x88] sm:$0xf]
        %v10181 = vld [vmem:[%s10145 + $0x8c] sm:$0xf]
        %v10182 = vld [vmem:[%s10145 + $0x90] sm:$0xf]
        %v10183 = vld [vmem:[%s10145 + $0x94] sm:$0xf]
        %v10184 = vld [vmem:[%s10145 + $0x98] sm:$0xf]
        %v10185 = vld [vmem:[%s10145 + $0x9c] sm:$0xf]
        %v10186 = vld [vmem:[%s10145 + $0xa0] sm:$0xf]
        %v10187 = vld [vmem:[%s10145 + $0xa4] sm:$0xf]
        %v10188 = vld [vmem:[%s10145 + $0xa8] sm:$0xf]
        %v10189 = vld [vmem:[%s10145 + $0xac] sm:$0xf]
        %v10190 = vld [vmem:[%s10145 + $0xb0] sm:$0xf]
        %v10191 = vld [vmem:[%s10145 + $0xb4] sm:$0xf]
        %v10192 = vld [vmem:[%s10145 + $0xb8] sm:$0xf]
        %v10193 = vld [vmem:[%s10145 + $0xbc] sm:$0xf]
        %v10194 = vld [vmem:[%s10145 + $0xc0] sm:$0xf]
        %v10195 = vld [vmem:[%s10145 + $0xc4] sm:$0xf]
        %v10196 = vld [vmem:[%s10145 + $0xc8] sm:$0xf]
        %v10197 = vld [vmem:[%s10145 + $0xcc] sm:$0xf]
        %v10198 = vld [vmem:[%s10145 + $0xd0] sm:$0xf]
        %v10199 = vld [vmem:[%s10145 + $0xd4] sm:$0xf]
        %v10200 = vld [vmem:[%s10145 + $0xd8] sm:$0xf]
        %v10201 = vld [vmem:[%s10145 + $0xdc] sm:$0xf]
        %v10202 = vld [vmem:[%s10145 + $0xe0] sm:$0xf]
        %v10203 = vld [vmem:[%s10145 + $0xe4] sm:$0xf]
        %v10204 = vld [vmem:[%s10145 + $0xe8] sm:$0xf]
        %v10205 = vld [vmem:[%s10145 + $0xec] sm:$0xf]
        %v10206 = vld [vmem:[%s10145 + $0xf0] sm:$0xf]
        %v10207 = vld [vmem:[%s10145 + $0xf4] sm:$0xf]
        %v10208 = vld [vmem:[%s10145 + $0xf8] sm:$0xf]
        %v10209 = vld [vmem:[%s10145 + $0xfc] sm:$0xf]
        %v10211 = vshrl.u32 %v10077, 16
        %v10214 = vshrl.u32 %v10078, 16
        %v10217 = vshrl.u32 %v10079, 16
        %v10220 = vshrl.u32 %v10080, 16
        %v10290 = vunpack.c.l.b16 %v10146
        %v10291 = vunpack.c.l.b16 %v10147
        %v10292 = vunpack.c.l.b16 %v10148
        %v10293 = vunpack.c.l.b16 %v10149
        %v10294 = vunpack.c.l.b16 %v10150
        %v10295 = vunpack.c.l.b16 %v10151
        %v10296 = vunpack.c.l.b16 %v10152
        %v10297 = vunpack.c.l.b16 %v10153
        %v10298 = vunpack.c.l.b16 %v10154
        %v10299 = vunpack.c.l.b16 %v10155
        %v10300 = vunpack.c.l.b16 %v10156
        %v10301 = vunpack.c.l.b16 %v10157
        %v10302 = vunpack.c.l.b16 %v10158
        %v10303 = vunpack.c.l.b16 %v10159
        %v10304 = vunpack.c.l.b16 %v10160
        %v10305 = vunpack.c.l.b16 %v10161
        %v10306 = vunpack.c.l.b16 %v10162
        %v10307 = vunpack.c.l.b16 %v10163
        %v10308 = vunpack.c.l.b16 %v10164
        %v10309 = vunpack.c.l.b16 %v10165
        %v10310 = vunpack.c.l.b16 %v10166
        %v10311 = vunpack.c.l.b16 %v10167
        %v10312 = vunpack.c.l.b16 %v10168
        %v10313 = vunpack.c.l.b16 %v10169
        %v10314 = vunpack.c.l.b16 %v10170
        %v10315 = vunpack.c.l.b16 %v10171
        %v10316 = vunpack.c.l.b16 %v10172
        %v10317 = vunpack.c.l.b16 %v10173
        %v10318 = vunpack.c.l.b16 %v10174
        %v10319 = vunpack.c.l.b16 %v10175
        %v10320 = vunpack.c.l.b16 %v10176
        %v10321 = vunpack.c.l.b16 %v10177
        %v10322 = vunpack.c.l.b16 %v10178
        %v10323 = vunpack.c.l.b16 %v10179
        %v10324 = vunpack.c.l.b16 %v10180
        %v10325 = vunpack.c.l.b16 %v10181
        %v10326 = vunpack.c.l.b16 %v10182
        %v10327 = vunpack.c.l.b16 %v10183
        %v10328 = vunpack.c.l.b16 %v10184
        %v10329 = vunpack.c.l.b16 %v10185
        %v10330 = vunpack.c.l.b16 %v10186
        %v10331 = vunpack.c.l.b16 %v10187
        %v10332 = vunpack.c.l.b16 %v10188
        %v10333 = vunpack.c.l.b16 %v10189
        %v10334 = vunpack.c.l.b16 %v10190
        %v10335 = vunpack.c.l.b16 %v10191
        %v10336 = vunpack.c.l.b16 %v10192
        %v10337 = vunpack.c.l.b16 %v10193
        %v10338 = vunpack.c.l.b16 %v10194
        %v10339 = vunpack.c.l.b16 %v10195
        %v10340 = vunpack.c.l.b16 %v10196
        %v10341 = vunpack.c.l.b16 %v10197
        %v10342 = vunpack.c.l.b16 %v10198
        %v10343 = vunpack.c.l.b16 %v10199
        %v10344 = vunpack.c.l.b16 %v10200
        %v10345 = vunpack.c.l.b16 %v10201
        %v10346 = vunpack.c.l.b16 %v10202
        %v10347 = vunpack.c.l.b16 %v10203
        %v10348 = vunpack.c.l.b16 %v10204
        %v10349 = vunpack.c.l.b16 %v10205
        %v10350 = vunpack.c.l.b16 %v10206
        %v10351 = vunpack.c.l.b16 %v10207
        %v10352 = vunpack.c.l.b16 %v10208
        %v10353 = vunpack.c.l.b16 %v10209
        %v10354 = vpack.c.b16 %v10291, %v10290
        %v10355 = vpack.c.b16 %v10293, %v10292
        %v10356 = vpack.c.b16 %v10295, %v10294
        %v10357 = vpack.c.b16 %v10297, %v10296
        %v10358 = vpack.c.b16 %v10299, %v10298
        %v10359 = vpack.c.b16 %v10301, %v10300
        %v10360 = vpack.c.b16 %v10303, %v10302
        %v10361 = vpack.c.b16 %v10305, %v10304
        %v10362 = vpack.c.b16 %v10307, %v10306
        %v10363 = vpack.c.b16 %v10309, %v10308
        %v10364 = vpack.c.b16 %v10311, %v10310
        %v10365 = vpack.c.b16 %v10313, %v10312
        %v10366 = vpack.c.b16 %v10315, %v10314
        %v10367 = vpack.c.b16 %v10317, %v10316
        %v10368 = vpack.c.b16 %v10319, %v10318
        %v10369 = vpack.c.b16 %v10321, %v10320
        %v10370 = vpack.c.b16 %v10323, %v10322
        %v10371 = vpack.c.b16 %v10325, %v10324
        %v10372 = vpack.c.b16 %v10327, %v10326
        %v10373 = vpack.c.b16 %v10329, %v10328
        %v10374 = vpack.c.b16 %v10331, %v10330
        %v10375 = vpack.c.b16 %v10333, %v10332
        %v10376 = vpack.c.b16 %v10335, %v10334
        %v10377 = vpack.c.b16 %v10337, %v10336
        %v10378 = vpack.c.b16 %v10339, %v10338
        %v10379 = vpack.c.b16 %v10341, %v10340
        %v10380 = vpack.c.b16 %v10343, %v10342
        %v10381 = vpack.c.b16 %v10345, %v10344
        %v10382 = vpack.c.b16 %v10347, %v10346
        %v10383 = vpack.c.b16 %v10349, %v10348
        %v10384 = vpack.c.b16 %v10351, %v10350
        %v10385 = vpack.c.b16 %v10353, %v10352
        %10418 = vmatprep.subr.bf16.mxu0 0
        %10419 = vmatpush1.bf16.msra.mxu0 %v10354
        %10420 = vmatprep.subr.bf16.mxu0 0
        %10421 = vmatpush1.bf16.msra.mxu0 %v10355
        %10422 = vmatprep.subr.bf16.mxu0 0
        %10423 = vmatpush1.bf16.msra.mxu0 %v10356
        %10424 = vmatprep.subr.bf16.mxu0 0
        %10425 = vmatpush1.bf16.msra.mxu0 %v10357
        %10426 = vmatprep.subr.bf16.mxu0 0
        %10427 = vmatpush1.bf16.msra.mxu0 %v10358
        %10428 = vmatprep.subr.bf16.mxu0 0
        %10429 = vmatpush1.bf16.msra.mxu0 %v10359
        %10430 = vmatprep.subr.bf16.mxu0 0
        %10431 = vmatpush1.bf16.msra.mxu0 %v10360
        %10432 = vmatprep.subr.bf16.mxu0 0
        %10433 = vmatpush1.bf16.msra.mxu0 %v10361
        %10434 = vmatprep.subr.bf16.mxu0 0
        %10435 = vmatpush1.bf16.msra.mxu0 %v10362
        %10436 = vmatprep.subr.bf16.mxu0 0
        %10437 = vmatpush1.bf16.msra.mxu0 %v10363
        %10438 = vmatprep.subr.bf16.mxu0 0
        %10439 = vmatpush1.bf16.msra.mxu0 %v10364
        %10440 = vmatprep.subr.bf16.mxu0 0
        %10441 = vmatpush1.bf16.msra.mxu0 %v10365
        %10442 = vmatprep.subr.bf16.mxu0 0
        %10443 = vmatpush1.bf16.msra.mxu0 %v10366
        %10444 = vmatprep.subr.bf16.mxu0 0
        %10445 = vmatpush1.bf16.msra.mxu0 %v10367
        %10446 = vmatprep.subr.bf16.mxu0 0
        %10447 = vmatpush1.bf16.msra.mxu0 %v10368
        %10448 = vmatprep.subr.bf16.mxu0 0
        %10449 = vmatpush1.bf16.msra.mxu0 %v10369
        %10450 = vmatprep.mubr.bf16.mxu0 %v10214
        %10451 = vmatmul.mubr.bf16.gmra.mrb[0].mxu0 %v10211
        %v10452 = vpop.f32.mrb[0].mxu0
        %v10453 = vadd.f32 0.0, %v10452
        %v10454 = vpop.f32.mrb[0].mxu0
        %v10455 = vpop.f32.mrb[0].mxu0
        %v10456 = vpop.f32.mrb[0].mxu0
        %10457 = vdwg.mxu0
        %10458 = vmatprep.subr.bf16.mxu0 0
        %10459 = vmatpush1.bf16.msra.mxu0 %v10370
        %10460 = vmatprep.subr.bf16.mxu0 0
        %10461 = vmatpush1.bf16.msra.mxu0 %v10371
        %10462 = vmatprep.subr.bf16.mxu0 0
        %10463 = vmatpush1.bf16.msra.mxu0 %v10372
        %10464 = vmatprep.subr.bf16.mxu0 0
        %10465 = vmatpush1.bf16.msra.mxu0 %v10373
        %10466 = vmatprep.subr.bf16.mxu0 0
        %10467 = vmatpush1.bf16.msra.mxu0 %v10374
        %10468 = vmatprep.subr.bf16.mxu0 0
        %10469 = vmatpush1.bf16.msra.mxu0 %v10375
        %10470 = vmatprep.subr.bf16.mxu0 0
        %10471 = vmatpush1.bf16.msra.mxu0 %v10376
        %10472 = vmatprep.subr.bf16.mxu0 0
        %10473 = vmatpush1.bf16.msra.mxu0 %v10377
        %10474 = vmatprep.subr.bf16.mxu0 0
        %10475 = vmatpush1.bf16.msra.mxu0 %v10378
        %10476 = vmatprep.subr.bf16.mxu0 0
        %10477 = vmatpush1.bf16.msra.mxu0 %v10379
        %10478 = vmatprep.subr.bf16.mxu0 0
        %10479 = vmatpush1.bf16.msra.mxu0 %v10380
        %10480 = vmatprep.subr.bf16.mxu0 0
        %10481 = vmatpush1.bf16.msra.mxu0 %v10381
        %10482 = vmatprep.subr.bf16.mxu0 0
        %10483 = vmatpush1.bf16.msra.mxu0 %v10382
        %10484 = vmatprep.subr.bf16.mxu0 0
        %10485 = vmatpush1.bf16.msra.mxu0 %v10383
        %10486 = vmatprep.subr.bf16.mxu0 0
        %10487 = vmatpush1.bf16.msra.mxu0 %v10384
        %10488 = vmatprep.subr.bf16.mxu0 0
        %10489 = vmatpush1.bf16.msra.mxu0 %v10385
        %10490 = vmatprep.mubr.bf16.mxu0 %v10220
        %10491 = vmatmul.mubr.bf16.gmra.mrb[0].mxu0 %v10217
        %v10492 = vpop.f32.mrb[0].mxu0
        %v10493 = vadd.f32 %v10453, %v10492
        %v10494 = vpop.f32.mrb[0].mxu0
        %v10495 = vpop.f32.mrb[0].mxu0
        %v10496 = vpop.f32.mrb[0].mxu0
        %10497 = vdwg.mxu0
        %v10562 = vunpack.c.l.b16 %v10081
        %v10563 = vunpack.c.l.b16 %v10082
        %v10564 = vunpack.c.l.b16 %v10083
        %v10565 = vunpack.c.l.b16 %v10084
        %v10566 = vunpack.c.l.b16 %v10085
        %v10567 = vunpack.c.l.b16 %v10086
        %v10568 = vunpack.c.l.b16 %v10087
        %v10569 = vunpack.c.l.b16 %v10088
        %v10570 = vunpack.c.l.b16 %v10089
        %v10571 = vunpack.c.l.b16 %v10090
        %v10572 = vunpack.c.l.b16 %v10091
        %v10573 = vunpack.c.l.b16 %v10092
        %v10574 = vunpack.c.l.b16 %v10093
        %v10575 = vunpack.c.l.b16 %v10094
        %v10576 = vunpack.c.l.b16 %v10095
        %v10577 = vunpack.c.l.b16 %v10096
        %v10578 = vunpack.c.l.b16 %v10097
        %v10579 = vunpack.c.l.b16 %v10098
        %v10580 = vunpack.c.l.b16 %v10099
        %v10581 = vunpack.c.l.b16 %v10100
        %v10582 = vunpack.c.l.b16 %v10101
        %v10583 = vunpack.c.l.b16 %v10102
        %v10584 = vunpack.c.l.b16 %v10103
        %v10585 = vunpack.c.l.b16 %v10104
        %v10586 = vunpack.c.l.b16 %v10105
        %v10587 = vunpack.c.l.b16 %v10106
        %v10588 = vunpack.c.l.b16 %v10107
        %v10589 = vunpack.c.l.b16 %v10108
        %v10590 = vunpack.c.l.b16 %v10109
        %v10591 = vunpack.c.l.b16 %v10110
        %v10592 = vunpack.c.l.b16 %v10111
        %v10593 = vunpack.c.l.b16 %v10112
        %v10594 = vunpack.c.l.b16 %v10113
        %v10595 = vunpack.c.l.b16 %v10114
        %v10596 = vunpack.c.l.b16 %v10115
        %v10597 = vunpack.c.l.b16 %v10116
        %v10598 = vunpack.c.l.b16 %v10117
        %v10599 = vunpack.c.l.b16 %v10118
        %v10600 = vunpack.c.l.b16 %v10119
        %v10601 = vunpack.c.l.b16 %v10120
        %v10602 = vunpack.c.l.b16 %v10121
        %v10603 = vunpack.c.l.b16 %v10122
        %v10604 = vunpack.c.l.b16 %v10123
        %v10605 = vunpack.c.l.b16 %v10124
        %v10606 = vunpack.c.l.b16 %v10125
        %v10607 = vunpack.c.l.b16 %v10126
        %v10608 = vunpack.c.l.b16 %v10127
        %v10609 = vunpack.c.l.b16 %v10128
        %v10610 = vunpack.c.l.b16 %v10129
        %v10611 = vunpack.c.l.b16 %v10130
        %v10612 = vunpack.c.l.b16 %v10131
        %v10613 = vunpack.c.l.b16 %v10132
        %v10614 = vunpack.c.l.b16 %v10133
        %v10615 = vunpack.c.l.b16 %v10134
        %v10616 = vunpack.c.l.b16 %v10135
        %v10617 = vunpack.c.l.b16 %v10136
        %v10618 = vunpack.c.l.b16 %v10137
        %v10619 = vunpack.c.l.b16 %v10138
        %v10620 = vunpack.c.l.b16 %v10139
        %v10621 = vunpack.c.l.b16 %v10140
        %v10622 = vunpack.c.l.b16 %v10141
        %v10623 = vunpack.c.l.b16 %v10142
        %v10624 = vunpack.c.l.b16 %v10143
        %v10625 = vunpack.c.l.b16 %v10144
        %v10626 = vpack.c.b16 %v10563, %v10562
        %v10627 = vpack.c.b16 %v10565, %v10564
        %v10628 = vpack.c.b16 %v10567, %v10566
        %v10629 = vpack.c.b16 %v10569, %v10568
        %v10630 = vpack.c.b16 %v10571, %v10570
        %v10631 = vpack.c.b16 %v10573, %v10572
        %v10632 = vpack.c.b16 %v10575, %v10574
        %v10633 = vpack.c.b16 %v10577, %v10576
        %v10634 = vpack.c.b16 %v10579, %v10578
        %v10635 = vpack.c.b16 %v10581, %v10580
        %v10636 = vpack.c.b16 %v10583, %v10582
        %v10637 = vpack.c.b16 %v10585, %v10584
        %v10638 = vpack.c.b16 %v10587, %v10586
        %v10639 = vpack.c.b16 %v10589, %v10588
        %v10640 = vpack.c.b16 %v10591, %v10590
        %v10641 = vpack.c.b16 %v10593, %v10592
        %v10642 = vpack.c.b16 %v10595, %v10594
        %v10643 = vpack.c.b16 %v10597, %v10596
        %v10644 = vpack.c.b16 %v10599, %v10598
        %v10645 = vpack.c.b16 %v10601, %v10600
        %v10646 = vpack.c.b16 %v10603, %v10602
        %v10647 = vpack.c.b16 %v10605, %v10604
        %v10648 = vpack.c.b16 %v10607, %v10606
        %v10649 = vpack.c.b16 %v10609, %v10608
        %v10650 = vpack.c.b16 %v10611, %v10610
        %v10651 = vpack.c.b16 %v10613, %v10612
        %v10652 = vpack.c.b16 %v10615, %v10614
        %v10653 = vpack.c.b16 %v10617, %v10616
        %v10654 = vpack.c.b16 %v10619, %v10618
        %v10655 = vpack.c.b16 %v10621, %v10620
        %v10656 = vpack.c.b16 %v10623, %v10622
        %v10657 = vpack.c.b16 %v10625, %v10624
        %10690 = vmatprep.subr.bf16.mxu0 0
        %10691 = vmatpush1.bf16.msra.mxu0 %v10626
        %10692 = vmatprep.subr.bf16.mxu0 0
        %10693 = vmatpush1.bf16.msra.mxu0 %v10627
        %10694 = vmatprep.subr.bf16.mxu0 0
        %10695 = vmatpush1.bf16.msra.mxu0 %v10628
        %10696 = vmatprep.subr.bf16.mxu0 0
        %10697 = vmatpush1.bf16.msra.mxu0 %v10629
        %10698 = vmatprep.subr.bf16.mxu0 0
        %10699 = vmatpush1.bf16.msra.mxu0 %v10630
        %10700 = vmatprep.subr.bf16.mxu0 0
        %10701 = vmatpush1.bf16.msra.mxu0 %v10631
        %10702 = vmatprep.subr.bf16.mxu0 0
        %10703 = vmatpush1.bf16.msra.mxu0 %v10632
        %10704 = vmatprep.subr.bf16.mxu0 0
        %10705 = vmatpush1.bf16.msra.mxu0 %v10633
        %10706 = vmatprep.subr.bf16.mxu0 0
        %10707 = vmatpush1.bf16.msra.mxu0 %v10634
        %10708 = vmatprep.subr.bf16.mxu0 0
        %10709 = vmatpush1.bf16.msra.mxu0 %v10635
        %10710 = vmatprep.subr.bf16.mxu0 0
        %10711 = vmatpush1.bf16.msra.mxu0 %v10636
        %10712 = vmatprep.subr.bf16.mxu0 0
        %10713 = vmatpush1.bf16.msra.mxu0 %v10637
        %10714 = vmatprep.subr.bf16.mxu0 0
        %10715 = vmatpush1.bf16.msra.mxu0 %v10638
        %10716 = vmatprep.subr.bf16.mxu0 0
        %10717 = vmatpush1.bf16.msra.mxu0 %v10639
        %10718 = vmatprep.subr.bf16.mxu0 0
        %10719 = vmatpush1.bf16.msra.mxu0 %v10640
        %10720 = vmatprep.subr.bf16.mxu0 0
        %10721 = vmatpush1.bf16.msra.mxu0 %v10641
        %10722 = vmatprep.mubr.bf16.mxu0 %v10078
        %10723 = vmatmul.mubr.bf16.gmra.mrb[0].mxu0 %v10077
        %v10724 = vpop.f32.mrb[0].mxu0
        %v10725 = vadd.f32 %v10493, %v10724
        %v10726 = vpop.f32.mrb[0].mxu0
        %v10727 = vpop.f32.mrb[0].mxu0
        %v10728 = vpop.f32.mrb[0].mxu0
        %10729 = vdwg.mxu0
        %10730 = vmatprep.subr.bf16.mxu0 0
        %10731 = vmatpush1.bf16.msra.mxu0 %v10642
        %10732 = vmatprep.subr.bf16.mxu0 0
        %10733 = vmatpush1.bf16.msra.mxu0 %v10643
        %10734 = vmatprep.subr.bf16.mxu0 0
        %10735 = vmatpush1.bf16.msra.mxu0 %v10644
        %10736 = vmatprep.subr.bf16.mxu0 0
        %10737 = vmatpush1.bf16.msra.mxu0 %v10645
        %10738 = vmatprep.subr.bf16.mxu0 0
        %10739 = vmatpush1.bf16.msra.mxu0 %v10646
        %10740 = vmatprep.subr.bf16.mxu0 0
        %10741 = vmatpush1.bf16.msra.mxu0 %v10647
        %10742 = vmatprep.subr.bf16.mxu0 0
        %10743 = vmatpush1.bf16.msra.mxu0 %v10648
        %10744 = vmatprep.subr.bf16.mxu0 0
        %10745 = vmatpush1.bf16.msra.mxu0 %v10649
        %10746 = vmatprep.subr.bf16.mxu0 0
        %10747 = vmatpush1.bf16.msra.mxu0 %v10650
        %10748 = vmatprep.subr.bf16.mxu0 0
        %10749 = vmatpush1.bf16.msra.mxu0 %v10651
        %10750 = vmatprep.subr.bf16.mxu0 0
        %10751 = vmatpush1.bf16.msra.mxu0 %v10652
        %10752 = vmatprep.subr.bf16.mxu0 0
        %10753 = vmatpush1.bf16.msra.mxu0 %v10653
        %10754 = vmatprep.subr.bf16.mxu0 0
        %10755 = vmatpush1.bf16.msra.mxu0 %v10654
        %10756 = vmatprep.subr.bf16.mxu0 0
        %10757 = vmatpush1.bf16.msra.mxu0 %v10655
        %10758 = vmatprep.subr.bf16.mxu0 0
        %10759 = vmatpush1.bf16.msra.mxu0 %v10656
        %10760 = vmatprep.subr.bf16.mxu0 0
        %10761 = vmatpush1.bf16.msra.mxu0 %v10657
        %10762 = vmatprep.mubr.bf16.mxu0 %v10080
        %10763 = vmatmul.mubr.bf16.gmra.mrb[0].mxu0 %v10079
        %v10764 = vpop.f32.mrb[0].mxu0
        %v10765 = vadd.f32 %v10725, %v10764
        %v10766 = vpop.f32.mrb[0].mxu0
        %v10767 = vpop.f32.mrb[0].mxu0
        %v10768 = vpop.f32.mrb[0].mxu0
        %10769 = vdwg.mxu0
        %v10770 = vld [vmem:[#allocation7] sm:$0x1]
        %v10771 = vadd.f32 %v10765, %v10770
        %vm10772 = vcmask 0
        %10773 = vst.msk [vmem:[%s1141] sm:$0x1] %vm10772, %v10771
        %p10774 = scmp.lt.s32.totalorder %s53, 1
        %s10775 = scalar_select %p10774, %s53, 1
        %s10776 = scalar_lea.vmem %s27, %s10775
        // Predicated region
        $region225: #{resnet1d_forward.1} parent=127 // pred_check
          %p10777 = pneg %p643
        $region226: #{resnet1d_forward.1} parent=127 // pred_check_branch
          %10779 = sbr.rel (%p10777) target = $region228
        $region227: #{resnet1d_forward.1} parent=127 // pred_region
          _
        $region228: #{resnet1d_forward.1} parent=127 // pred_fallthru
          _
      $region128: #{resnet1d_forward.1} parent=5 // pred_fallthru
        _
      %p10780 = scmp.le.s32.totalorder 2, %s48
      // Predicated region
      $region229: #{resnet1d_forward.1} parent=5 // pred_check
        %p10781 = pneg %p10780
      $region230: #{resnet1d_forward.1} parent=5 // pred_check_branch
        %10783 = sbr.rel (%p10781) target = $region232
      $region231: #{resnet1d_forward.1} parent=5 // pred_region
        %s10784 = ssub.s32 %s48, 2
        // Predicated region
        $region233: #{resnet1d_forward.1} parent=231 // pred_check
          %p10785 = pneg %p649
        $region234: #{resnet1d_forward.1} parent=231 // pred_check_branch
          %10787 = sbr.rel (%p10785) target = $region236
        $region235: #{resnet1d_forward.1} parent=231 // pred_region
          %p10788 = scmp.lt.s32.totalorder %s54, 1
          %s10789 = scalar_select %p10788, %s54, 1
          %s10790 = scalar_lea.vmem %s27, %s10789
        $region236: #{resnet1d_forward.1} parent=231 // pred_fallthru
          _
      $region232: #{resnet1d_forward.1} parent=5 // pred_fallthru
        _
    $region6: #{resnet1d_forward.1} parent=1 // loop_footer
      %s52 = sadd.s32 1, %s48
    $region7: #{resnet1d_forward.1} parent=1 // loop_footer_branch
      %47 = sbr.rel target = $region3
    $region8: #{resnet1d_forward.1} parent=1 // loop_exit
      _
    %10791 = vsyncpa [#allocation9], 1
    %s10792 = scalar_lea.sflag [#allocation9], 1
    %10793 = vsyncpa %s10792, 1
    %10794 = vsyncpa [#allocation11], 1
    %10795 = vsyncpa [#allocation14], 1
    %10796 = vsyncpa [#allocation17], 1
    %10797 = vsyncpa [#allocation20], 1
    %10798 = vsyncpa [#allocation23], 1
    %10799 = vsyncpa [#allocation26], 1
    %10800 = vsyncpa [#allocation29], 1
    %10801 = vsyncpa [#allocation32], 1
    %10802 = vsyncpa [#allocation35], 1
    %10803 = vsyncpa [#allocation38], 1
    %10804 = vsyncpa [#allocation41], 1
    %10805 = vsyncpa [#allocation44], 1

</llo_original>
